<compile_context>
chip_gen: v7x
topology: tpu7x:2x2x1
jax: 0.10.0
libtpu: 0.0.40
codegen_flags: <defaults>
</compile_context>

<pallas_src>
import functools

import jax
import jax.numpy as jnp
from jax.experimental import pallas as pl
from jax.experimental.pallas import tpu as pltpu


def _round_up(x, m):
    return ((x + m - 1) // m) * m


def _pad2d(x, rows, cols):
    return jnp.pad(x, ((0, rows - x.shape[0]), (0, cols - x.shape[1])))


def _pick_tile(padded_dim, max_tile, min_steps=1):
    """Largest 128-multiple tile that divides padded_dim, is <= max_tile, and
    (when possible) leaves at least `min_steps` grid steps (v7x megacore)."""
    blocks = padded_dim // 128
    best = 128
    for g in range(1, blocks + 1):
        if blocks % g != 0:
            continue
        tile = 128 * g
        if tile > max_tile:
            continue
        steps = blocks // g
        if steps < min_steps and blocks >= min_steps:
            continue
        best = tile
    return best


def _vmem_limit_bytes():
    """Generation-aware VMEM budget: ~3/4 of physical, capped at 96 MiB
    (v5e/v6e have 128 MiB, v7x only 64 MiB per TensorCore)."""
    cap = None
    try:
        cap = getattr(pltpu.get_tpu_info(), "vmem_capacity_bytes", None)
    except Exception:
        cap = None
    if not cap:
        return 48 * 1024 * 1024          # safe on every generation
    return int(min((cap * 3) // 4, 96 * 1024 * 1024))


def _hop_kernel(net_ref, x_ref, other_ref, w1_ref, w2_ref, b_ref, conv_in_ref,
                korder_ref, korder_bf_ref, conv_ref):
    """One (row-tile, contraction-tile) step of one graph_inception hop/side.

    net_ref      : (TR, TC)  bf16 tile of adjacency
    x_ref        : (TC, Dp)  bf16 tile of the other side's Korder (streamed)
    other_ref    : (TR, Dp)  f32  this side's Korder (Multiply branch)
    w1_ref       : (Dp, Op)  bf16 lin1 weight (in x out)
    w2_ref       : (Dp, Op)  bf16 lin2 weight (in x out)
    b_ref        : (1, Op)   f32  b1 + b2
    conv_in_ref  : (TR, Op)  f32  conv accumulated over previous hops
    korder_ref   : (TR, Dp)  f32 out: K accumulator, finally K + K*other
    korder_bf_ref: (TR, Dp)  bf16 out: same Korder, pre-cast for next hop
    conv_ref     : (TR, Op)  f32 out: conv_in + lin1(K) + lin2(K*other)
    """
    c = pl.program_id(1)

    # graph propagation: K += net_tile @ x_tile  (bf16 MXU, f32 accumulate)
    prod = jnp.dot(net_ref[...], x_ref[...],
                   preferred_element_type=jnp.float32)

    @pl.when(c == 0)
    def _():
        korder_ref[...] = prod            # no zero-fill pass

    @pl.when(c > 0)
    def _():
        korder_ref[...] += prod           # output block is resident across c

    @pl.when(c == pl.num_programs(1) - 1)
    def _():
        k = korder_ref[...]
        mul = k * other_ref[...]
        # lin1(K) + lin2(K*other): two bf16 MXU dots (no concat temp)
        lin = (jnp.dot(k.astype(jnp.bfloat16), w1_ref[...],
                       preferred_element_type=jnp.float32)
               + jnp.dot(mul.astype(jnp.bfloat16), w2_ref[...],
                         preferred_element_type=jnp.float32)
               + b_ref[...])
        new_k = k + mul
        korder_ref[...] = new_k
        korder_bf_ref[...] = new_k.astype(korder_bf_ref.dtype)
        conv_ref[...] = conv_in_ref[...] + lin


def hop_step(net, x_bf, other, w1p, w2p, b_sum, conv_prev, *, tr, tc,
             vmem_limit):
    """One hop for one side, tiled over (rows, contraction).

    net      : (Rp, Cp) bf16   x_bf : (Cp, Dp) bf16   other : (Rp, Dp) f32
    w1p,w2p  : (Dp, Op) bf16   b_sum : (1, Op) f32
    conv_prev: (Rp, Op) f32 (aliased with the conv output)
    Returns (new_korder f32 (Rp,Dp), new_korder bf16 (Rp,Dp), conv f32 (Rp,Op)).
    """
    Rp, Cp = net.shape
    Dp = x_bf.shape[1]
    Op = w1p.shape[1]
    assert Rp % tr == 0 and Cp % tc == 0        # guaranteed by wrapper padding
    grid = (Rp // tr, Cp // tc)

    flops = 2 * Rp * Cp * Dp + 4 * Rp * Dp * Op
    bytes_accessed = (net.size * 2                      # adjacency tiles
                      + (Rp // tr) * Cp * Dp * 2        # x re-read per row tile
                      + other.size * 4
                      + w1p.size * 2 + w2p.size * 2 + b_sum.size * 4
                      + conv_prev.size * 4
                      + Rp * Dp * 4 + Rp * Dp * 2 + Rp * Op * 4)

    return pl.pallas_call(
        _hop_kernel,
        out_shape=(
            jax.ShapeDtypeStruct((Rp, Dp), jnp.float32),   # new Korder (f32)
            jax.ShapeDtypeStruct((Rp, Dp), jnp.bfloat16),  # new Korder (bf16)
            jax.ShapeDtypeStruct((Rp, Op), jnp.float32),   # accumulated conv
        ),
        grid_spec=pltpu.PrefetchScalarGridSpec(
            num_scalar_prefetch=0,
            grid=grid,
            in_specs=[
                pl.BlockSpec((tr, tc), lambda i, c: (i, c)),     # net tile
                pl.BlockSpec((tc, Dp), lambda i, c: (c, 0)),     # x tile
                pl.BlockSpec((tr, Dp), lambda i, c: (i, 0)),     # other rows
                pl.BlockSpec((Dp, Op), lambda i, c: (0, 0)),     # W1
                pl.BlockSpec((Dp, Op), lambda i, c: (0, 0)),     # W2
                pl.BlockSpec((1, Op), lambda i, c: (0, 0)),      # b1 + b2
                pl.BlockSpec((tr, Op), lambda i, c: (i, 0)),     # conv so far
            ],
            out_specs=[
                pl.BlockSpec((tr, Dp), lambda i, c: (i, 0)),
                pl.BlockSpec((tr, Dp), lambda i, c: (i, 0)),
                pl.BlockSpec((tr, Op), lambda i, c: (i, 0)),
            ],
        ),
        compiler_params=pltpu.CompilerParams(
            dimension_semantics=("parallel", "arbitrary"),
            vmem_limit_bytes=vmem_limit),
        cost_estimate=pl.CostEstimate(flops=flops, transcendentals=0,
                                      bytes_accessed=bytes_accessed),
        input_output_aliases={6: 2},   # conv_prev buffer aliases conv output
    )(net, x_bf, other, w1p, w2p, b_sum, conv_prev)


@functools.partial(jax.jit,
                   static_argnames=("hop", "max_row_tile", "max_ctr_tile"))
def _forward_jit(l_feat, r_feat, network, w1, b1, w2, b2, *,
                 hop, max_row_tile=512, max_ctr_tile=512):
    A, D = l_feat.shape
    B = r_feat.shape[0]
    O = w1.shape[1]

    # lane-dense feature dims, 128-granular row padding
    Dp = _round_up(D, 128)
    Op = _round_up(O, 128)
    Ap = _round_up(A, 128)
    Bp = _round_up(B, 128)

    # row tiles: keep >=2 "parallel" grid steps when possible (v7x megacore);
    # contraction tiles: as large as allowed.
    tr_l = _pick_tile(Ap, max_row_tile, min_steps=2)
    tr_r = _pick_tile(Bp, max_row_tile, min_steps=2)
    tc_l = _pick_tile(Bp, max_ctr_tile, min_steps=1)
    tc_r = _pick_tile(Ap, max_ctr_tile, min_steps=1)

    vmem_limit = _vmem_limit_bytes()

    net_f32 = _pad2d(network.astype(jnp.float32), Ap, Bp)
    net_l = net_f32.astype(jnp.bfloat16)            # (Ap, Bp)
    net_r = net_f32.T.astype(jnp.bfloat16)          # (Bp, Ap)

    # Linear weights / biases (zero padded -> padded lanes stay zero)
    w1p = jnp.zeros((Dp, Op), jnp.bfloat16).at[:D, :O].set(
        w1.astype(jnp.bfloat16))
    w2p = jnp.zeros((Dp, Op), jnp.bfloat16).at[:D, :O].set(
        w2.astype(jnp.bfloat16))
    b_sum = jnp.zeros((1, Op), jnp.float32).at[0, :O].set(
        (b1 + b2).astype(jnp.float32))

    kl = _pad2d(l_feat.astype(jnp.float32), Ap, Dp)   # l-side Korder (f32)
    kr = _pad2d(r_feat.astype(jnp.float32), Bp, Dp)   # r-side Korder (f32)
    kl_bf = kl.astype(jnp.bfloat16)                   # streamed copies (bf16)
    kr_bf = kr.astype(jnp.bfloat16)
    conv_l = jnp.zeros((Ap, Op), jnp.float32)
    conv_r = jnp.zeros((Bp, Op), jnp.float32)

    for _ in range(hop):
        # dropout == identity in eval mode
        new_kl, new_kl_bf, conv_l = hop_step(
            net_l, kr_bf, kl, w1p, w2p, b_sum, conv_l,
            tr=tr_l, tc=tc_l, vmem_limit=vmem_limit)
        new_kr, new_kr_bf, conv_r = hop_step(
            net_r, kl_bf, kr, w1p, w2p, b_sum, conv_r,
            tr=tr_r, tc=tc_r, vmem_limit=vmem_limit)
        kl, kr = new_kl, new_kr
        kl_bf, kr_bf = new_kl_bf, new_kr_bf

    return conv_l[:A, :O], conv_r[:B, :O]


def graph_inception_forward(l_feat, r_feat, network, hop, w1, b1, w2, b2,
                            *, max_row_tile=512, max_ctr_tile=512):
    """JAX/Pallas equivalent of graph_inception.forward (eval mode).

    l_feat : (A, inputdims)   r_feat : (B, inputdims)
    network: (A, B) dense adjacency (network_l); network_r = network.T
    w1, w2 : (inputdims, outputdims) -- torch Linear weights, pre-transposed
    Returns [final_conv_l (A, outputdims), final_conv_r (B, outputdims)].
    """
    conv_l, conv_r = _forward_jit(l_feat, r_feat, network, w1, b1, w2, b2,
                                  hop=hop, max_row_tile=max_row_tile,
                                  max_ctr_tile=max_ctr_tile)
    return [conv_l, conv_r]


def _reference_forward(l_feat, r_feat, network, hop, w1, b1, w2, b2):
    """Pure-jnp f32 reference mirroring the PyTorch forward."""
    net_l, net_r = network, network.T
    kl, kr = l_feat, r_feat
    conv_l = jnp.zeros((l_feat.shape[0], w1.shape[1]), jnp.float32)
    conv_r = jnp.zeros((r_feat.shape[0], w1.shape[1]), jnp.float32)
    for _ in range(hop):
        x0, x1 = kr, kl
        klk = net_l @ x0
        krk = net_r @ x1
        mul_l = klk * x1
        mul_r = krk * x0
        conv_l = conv_l + (klk @ w1 + b1) + (mul_l @ w2 + b2)
        conv_r = conv_r + (krk @ w1 + b1) + (mul_r @ w2 + b2)
        kl = klk + mul_l
        kr = krk + mul_r
    return conv_l, conv_r


if __name__ == "__main__":
    # Small synthetic bipartite graph; node counts deliberately NOT tile
    # multiples to exercise the padding path, and A large enough that the row
    # grid takes more than one step.
    A, B = 300, 150
    inputdims, outputdims = 48, 40
    hop = 2

    key = jax.random.PRNGKey(0)
    k1, k2, k3, k4, k5, k6, k7 = jax.random.split(key, 7)

    l_feat = jax.random.normal(k1, (A, inputdims), dtype=jnp.float32)
    r_feat = jax.random.normal(k2, (B, inputdims), dtype=jnp.float32)
    # dense (normalized) adjacency standing in for the torch.sparse matrix
    network = jax.random.uniform(k3, (A, B), dtype=jnp.float32) / jnp.sqrt(
        jnp.float32(B))

    # torch.nn.Linear stores weight as (out, in); keep it transposed (in, out).
    w1 = (jax.random.normal(k4, (outputdims, inputdims), dtype=jnp.float32)
          * 0.1).T
    b1 = jax.random.normal(k5, (outputdims,), dtype=jnp.float32) * 0.1
    w2 = (jax.random.normal(k6, (outputdims, inputdims), dtype=jnp.float32)
          * 0.1).T
    b2 = jax.random.normal(k7, (outputdims,), dtype=jnp.float32) * 0.1

    out_l, out_r = graph_inception_forward(
        l_feat, r_feat, network, hop, w1, b1, w2, b2)
    out_l = jax.block_until_ready(out_l)
    out_r = jax.block_until_ready(out_r)

    ref_l, ref_r = _reference_forward(
        l_feat, r_feat, network, hop, w1, b1, w2, b2)

    assert out_l.shape == (A, outputdims) and out_r.shape == (B, outputdims)

    def _rel_err(a, b):
        return float(jnp.max(jnp.abs(a - b)) / (jnp.max(jnp.abs(b)) + 1e-6))

    # bf16 MXU inputs with f32 accumulation -> compare with a bf16-level bound.
    assert _rel_err(out_l, ref_l) < 5e-2, _rel_err(out_l, ref_l)
    assert _rel_err(out_r, ref_r) < 5e-2, _rel_err(out_r, ref_r)

    print("KERNEL_OK")
</pallas_src>

<mosaic_0001>
module attributes {stable_mosaic.version = 11 : i64} {
  func.func @_hop_kernel(%arg0: i32, %arg1: i32, %arg2: memref<128x256xbf16, #tpu.memory_space<vmem>>, %arg3: memref<256x128xbf16, #tpu.memory_space<vmem>>, %arg4: memref<128x128xf32, #tpu.memory_space<vmem>>, %arg5: memref<128x128xbf16, #tpu.memory_space<vmem>>, %arg6: memref<128x128xbf16, #tpu.memory_space<vmem>>, %arg7: memref<1x128xf32, #tpu.memory_space<vmem>>, %arg8: memref<128x128xf32, #tpu.memory_space<vmem>>, %arg9: memref<128x128xf32, #tpu.memory_space<vmem>>, %arg10: memref<128x128xbf16, #tpu.memory_space<vmem>>, %arg11: memref<128x128xf32, #tpu.memory_space<vmem>>) attributes {dimension_semantics = [#tpu.dimension_semantics<parallel>, #tpu.dimension_semantics<arbitrary>], iteration_bounds = array<i64: 3, 1>, scalar_prefetch = 0 : i64, scratch_operands = 0 : i64, tpu.core_type = #tpu.core_type<tc>, window_params = [{transform_indices = @transform_0, window_bounds = array<i64: 128, 256>}, {transform_indices = @transform_1, window_bounds = array<i64: 256, 128>}, {transform_indices = @transform_2, window_bounds = array<i64: 128, 128>}, {pipeline_mode = #tpu.pipeline_mode<synchronous>, transform_indices = @transform_3, window_bounds = array<i64: 128, 128>}, {pipeline_mode = #tpu.pipeline_mode<synchronous>, transform_indices = @transform_4, window_bounds = array<i64: 128, 128>}, {pipeline_mode = #tpu.pipeline_mode<synchronous>, transform_indices = @transform_5, window_bounds = array<i64: 1, 128>}, {transform_indices = @transform_6, window_bounds = array<i64: 128, 128>}, {transform_indices = @transform_7, window_bounds = array<i64: 128, 128>}, {transform_indices = @transform_8, window_bounds = array<i64: 128, 128>}, {transform_indices = @transform_9, window_bounds = array<i64: 128, 128>}]} {
    %c0 = arith.constant 0 : index
    %c0_0 = arith.constant 0 : index
    %0 = vector.load %arg2[%c0, %c0_0] : memref<128x256xbf16, #tpu.memory_space<vmem>>, vector<128x256xbf16>
    %c0_1 = arith.constant 0 : index
    %c0_2 = arith.constant 0 : index
    %1 = vector.load %arg3[%c0_1, %c0_2] : memref<256x128xbf16, #tpu.memory_space<vmem>>, vector<256x128xbf16>
    %cst = arith.constant dense<0.000000e+00> : vector<128x128xf32>
    %2 = tpu.matmul %0, %1, %cst {dimension_numbers = #tpu.dot_dimension_numbers<[1], [0], [0], [1], [0, 0, 1, 1], [], []>} : vector<128x256xbf16>, vector<256x128xbf16>, vector<128x128xf32> -> vector<128x128xf32>
    %c0_i32 = arith.constant 0 : i32
    %3 = arith.cmpi eq, %arg1, %c0_i32 : i32
    %4 = arith.extui %3 : i1 to i32
    %c0_i32_3 = arith.constant 0 : i32
    %5 = arith.cmpi ne, %4, %c0_i32_3 : i32
    scf.if %5 {
      %c0_8 = arith.constant 0 : index
      %c0_9 = arith.constant 0 : index
      %12 = vector.load %arg9[%c0_8, %c0_9] : memref<128x128xf32, #tpu.memory_space<vmem>>, vector<128x128xf32>
      tpu.vector_store %arg9[%c0_8, %c0_9], %2 {strides = array<i32>} : memref<128x128xf32, #tpu.memory_space<vmem>>, vector<128x128xf32>,
    } else {
    }
    %c0_i32_4 = arith.constant 0 : i32
    %6 = arith.cmpi sgt, %arg1, %c0_i32_4 : i32
    %7 = arith.extui %6 : i1 to i32
    %c0_i32_5 = arith.constant 0 : i32
    %8 = arith.cmpi ne, %7, %c0_i32_5 : i32
    scf.if %8 {
      %c0_8 = arith.constant 0 : index
      %c0_9 = arith.constant 0 : index
      %12 = vector.load %arg9[%c0_8, %c0_9] : memref<128x128xf32, #tpu.memory_space<vmem>>, vector<128x128xf32>
      %13 = arith.addf %12, %2 : vector<128x128xf32>
      %c0_10 = arith.constant 0 : index
      %c0_11 = arith.constant 0 : index
      %14 = vector.load %arg9[%c0_10, %c0_11] : memref<128x128xf32, #tpu.memory_space<vmem>>, vector<128x128xf32>
      tpu.vector_store %arg9[%c0_10, %c0_11], %13 {strides = array<i32>} : memref<128x128xf32, #tpu.memory_space<vmem>>, vector<128x128xf32>,
    } else {
    }
    %c0_i32_6 = arith.constant 0 : i32
    %9 = arith.cmpi eq, %arg1, %c0_i32_6 : i32
    %10 = arith.extui %9 : i1 to i32
    %c0_i32_7 = arith.constant 0 : i32
    %11 = arith.cmpi ne, %10, %c0_i32_7 : i32
    scf.if %11 {
      %c0_8 = arith.constant 0 : index
      %c0_9 = arith.constant 0 : index
      %12 = vector.load %arg9[%c0_8, %c0_9] : memref<128x128xf32, #tpu.memory_space<vmem>>, vector<128x128xf32>
      %c0_10 = arith.constant 0 : index
      %c0_11 = arith.constant 0 : index
      %13 = vector.load %arg4[%c0_10, %c0_11] : memref<128x128xf32, #tpu.memory_space<vmem>>, vector<128x128xf32>
      %14 = arith.mulf %12, %13 : vector<128x128xf32>
      %15 = arith.truncf %12 : vector<128x128xf32> to vector<128x128xbf16>
      %c0_12 = arith.constant 0 : index
      %c0_13 = arith.constant 0 : index
      %16 = vector.load %arg5[%c0_12, %c0_13] : memref<128x128xbf16, #tpu.memory_space<vmem>>, vector<128x128xbf16>
      %cst_14 = arith.constant dense<0.000000e+00> : vector<128x128xf32>
      %17 = tpu.matmul %15, %16, %cst_14 {dimension_numbers = #tpu.dot_dimension_numbers<[1], [0], [0], [1], [0, 0, 1, 1], [], []>} : vector<128x128xbf16>, vector<128x128xbf16>, vector<128x128xf32> -> vector<128x128xf32>
      %18 = arith.truncf %14 : vector<128x128xf32> to vector<128x128xbf16>
      %c0_15 = arith.constant 0 : index
      %c0_16 = arith.constant 0 : index
      %19 = vector.load %arg6[%c0_15, %c0_16] : memref<128x128xbf16, #tpu.memory_space<vmem>>, vector<128x128xbf16>
      %cst_17 = arith.constant dense<0.000000e+00> : vector<128x128xf32>
      %20 = tpu.matmul %18, %19, %cst_17 {dimension_numbers = #tpu.dot_dimension_numbers<[1], [0], [0], [1], [0, 0, 1, 1], [], []>} : vector<128x128xbf16>, vector<128x128xbf16>, vector<128x128xf32> -> vector<128x128xf32>
      %21 = arith.addf %17, %20 : vector<128x128xf32>
      %c0_18 = arith.constant 0 : index
      %c0_19 = arith.constant 0 : index
      %22 = vector.load %arg7[%c0_18, %c0_19] : memref<1x128xf32, #tpu.memory_space<vmem>>, vector<1x128xf32>
      %23 = vector.broadcast %22 : vector<1x128xf32> to vector<128x128xf32>
      %24 = arith.addf %21, %23 : vector<128x128xf32>
      %25 = arith.addf %12, %14 : vector<128x128xf32>
      %c0_20 = arith.constant 0 : index
      %c0_21 = arith.constant 0 : index
      %26 = vector.load %arg9[%c0_20, %c0_21] : memref<128x128xf32, #tpu.memory_space<vmem>>, vector<128x128xf32>
      tpu.vector_store %arg9[%c0_20, %c0_21], %25 {strides = array<i32>} : memref<128x128xf32, #tpu.memory_space<vmem>>, vector<128x128xf32>,
      %27 = arith.truncf %25 : vector<128x128xf32> to vector<128x128xbf16>
      %c0_22 = arith.constant 0 : index
      %c0_23 = arith.constant 0 : index
      %28 = vector.load %arg10[%c0_22, %c0_23] : memref<128x128xbf16, #tpu.memory_space<vmem>>, vector<128x128xbf16>
      tpu.vector_store %arg10[%c0_22, %c0_23], %27 {strides = array<i32>} : memref<128x128xbf16, #tpu.memory_space<vmem>>, vector<128x128xbf16>,
      %c0_24 = arith.constant 0 : index
      %c0_25 = arith.constant 0 : index
      %29 = vector.load %arg8[%c0_24, %c0_25] : memref<128x128xf32, #tpu.memory_space<vmem>>, vector<128x128xf32>
      %30 = arith.addf %29, %24 : vector<128x128xf32>
      %c0_26 = arith.constant 0 : index
      %c0_27 = arith.constant 0 : index
      %31 = vector.load %arg11[%c0_26, %c0_27] : memref<128x128xf32, #tpu.memory_space<vmem>>, vector<128x128xf32>
      tpu.vector_store %arg11[%c0_26, %c0_27], %30 {strides = array<i32>} : memref<128x128xf32, #tpu.memory_space<vmem>>, vector<128x128xf32>,
    } else {
    }
    return
  }
  func.func @transform_0(%arg0: i32, %arg1: i32) -> (i32, i32) {
    %c0_i32 = arith.constant 0 : i32
    return %arg0, %arg1 : i32, i32
  }
  func.func @transform_1(%arg0: i32, %arg1: i32) -> (i32, i32) {
    %c0_i32 = arith.constant 0 : i32
    %c0_i32_0 = arith.constant 0 : i32
    return %arg1, %c0_i32 : i32, i32
  }
  func.func @transform_2(%arg0: i32, %arg1: i32) -> (i32, i32) {
    %c0_i32 = arith.constant 0 : i32
    %c0_i32_0 = arith.constant 0 : i32
    return %arg0, %c0_i32 : i32, i32
  }
  func.func @transform_3(%arg0: i32, %arg1: i32) -> (i32, i32) {
    %c0_i32 = arith.constant 0 : i32
    %c0_i32_0 = arith.constant 0 : i32
    %c0_i32_1 = arith.constant 0 : i32
    return %c0_i32, %c0_i32_0 : i32, i32
  }
  func.func @transform_4(%arg0: i32, %arg1: i32) -> (i32, i32) {
    %c0_i32 = arith.constant 0 : i32
    %c0_i32_0 = arith.constant 0 : i32
    %c0_i32_1 = arith.constant 0 : i32
    return %c0_i32, %c0_i32_0 : i32, i32
  }
  func.func @transform_5(%arg0: i32, %arg1: i32) -> (i32, i32) {
    %c0_i32 = arith.constant 0 : i32
    %c0_i32_0 = arith.constant 0 : i32
    %c0_i32_1 = arith.constant 0 : i32
    return %c0_i32, %c0_i32_0 : i32, i32
  }
  func.func @transform_6(%arg0: i32, %arg1: i32) -> (i32, i32) {
    %c0_i32 = arith.constant 0 : i32
    %c0_i32_0 = arith.constant 0 : i32
    return %arg0, %c0_i32 : i32, i32
  }
  func.func @transform_7(%arg0: i32, %arg1: i32) -> (i32, i32) {
    %c0_i32 = arith.constant 0 : i32
    %c0_i32_0 = arith.constant 0 : i32
    return %arg0, %c0_i32 : i32, i32
  }
  func.func @transform_8(%arg0: i32, %arg1: i32) -> (i32, i32) {
    %c0_i32 = arith.constant 0 : i32
    %c0_i32_0 = arith.constant 0 : i32
    return %arg0, %c0_i32 : i32, i32
  }
  func.func @transform_9(%arg0: i32, %arg1: i32) -> (i32, i32) {
    %c0_i32 = arith.constant 0 : i32
    %c0_i32_0 = arith.constant 0 : i32
    return %arg0, %c0_i32 : i32, i32
  }
}

module attributes {stable_mosaic.version = 11 : i64} {
  func.func @_hop_kernel(%arg0: i32, %arg1: i32, %arg2: memref<128x384xbf16, #tpu.memory_space<vmem>>, %arg3: memref<384x128xbf16, #tpu.memory_space<vmem>>, %arg4: memref<128x128xf32, #tpu.memory_space<vmem>>, %arg5: memref<128x128xbf16, #tpu.memory_space<vmem>>, %arg6: memref<128x128xbf16, #tpu.memory_space<vmem>>, %arg7: memref<1x128xf32, #tpu.memory_space<vmem>>, %arg8: memref<128x128xf32, #tpu.memory_space<vmem>>, %arg9: memref<128x128xf32, #tpu.memory_space<vmem>>, %arg10: memref<128x128xbf16, #tpu.memory_space<vmem>>, %arg11: memref<128x128xf32, #tpu.memory_space<vmem>>) attributes {dimension_semantics = [#tpu.dimension_semantics<parallel>, #tpu.dimension_semantics<arbitrary>], iteration_bounds = array<i64: 2, 1>, scalar_prefetch = 0 : i64, scratch_operands = 0 : i64, tpu.core_type = #tpu.core_type<tc>, window_params = [{transform_indices = @transform_0, window_bounds = array<i64: 128, 384>}, {transform_indices = @transform_1, window_bounds = array<i64: 384, 128>}, {transform_indices = @transform_2, window_bounds = array<i64: 128, 128>}, {pipeline_mode = #tpu.pipeline_mode<synchronous>, transform_indices = @transform_3, window_bounds = array<i64: 128, 128>}, {pipeline_mode = #tpu.pipeline_mode<synchronous>, transform_indices = @transform_4, window_bounds = array<i64: 128, 128>}, {pipeline_mode = #tpu.pipeline_mode<synchronous>, transform_indices = @transform_5, window_bounds = array<i64: 1, 128>}, {transform_indices = @transform_6, window_bounds = array<i64: 128, 128>}, {transform_indices = @transform_7, window_bounds = array<i64: 128, 128>}, {transform_indices = @transform_8, window_bounds = array<i64: 128, 128>}, {transform_indices = @transform_9, window_bounds = array<i64: 128, 128>}]} {
    %c0 = arith.constant 0 : index
    %c0_0 = arith.constant 0 : index
    %0 = vector.load %arg2[%c0, %c0_0] : memref<128x384xbf16, #tpu.memory_space<vmem>>, vector<128x384xbf16>
    %c0_1 = arith.constant 0 : index
    %c0_2 = arith.constant 0 : index
    %1 = vector.load %arg3[%c0_1, %c0_2] : memref<384x128xbf16, #tpu.memory_space<vmem>>, vector<384x128xbf16>
    %cst = arith.constant dense<0.000000e+00> : vector<128x128xf32>
    %2 = tpu.matmul %0, %1, %cst {dimension_numbers = #tpu.dot_dimension_numbers<[1], [0], [0], [1], [0, 0, 1, 1], [], []>} : vector<128x384xbf16>, vector<384x128xbf16>, vector<128x128xf32> -> vector<128x128xf32>
    %c0_i32 = arith.constant 0 : i32
    %3 = arith.cmpi eq, %arg1, %c0_i32 : i32
    %4 = arith.extui %3 : i1 to i32
    %c0_i32_3 = arith.constant 0 : i32
    %5 = arith.cmpi ne, %4, %c0_i32_3 : i32
    scf.if %5 {
      %c0_8 = arith.constant 0 : index
      %c0_9 = arith.constant 0 : index
      %12 = vector.load %arg9[%c0_8, %c0_9] : memref<128x128xf32, #tpu.memory_space<vmem>>, vector<128x128xf32>
      tpu.vector_store %arg9[%c0_8, %c0_9], %2 {strides = array<i32>} : memref<128x128xf32, #tpu.memory_space<vmem>>, vector<128x128xf32>,
    } else {
    }
    %c0_i32_4 = arith.constant 0 : i32
    %6 = arith.cmpi sgt, %arg1, %c0_i32_4 : i32
    %7 = arith.extui %6 : i1 to i32
    %c0_i32_5 = arith.constant 0 : i32
    %8 = arith.cmpi ne, %7, %c0_i32_5 : i32
    scf.if %8 {
      %c0_8 = arith.constant 0 : index
      %c0_9 = arith.constant 0 : index
      %12 = vector.load %arg9[%c0_8, %c0_9] : memref<128x128xf32, #tpu.memory_space<vmem>>, vector<128x128xf32>
      %13 = arith.addf %12, %2 : vector<128x128xf32>
      %c0_10 = arith.constant 0 : index
      %c0_11 = arith.constant 0 : index
      %14 = vector.load %arg9[%c0_10, %c0_11] : memref<128x128xf32, #tpu.memory_space<vmem>>, vector<128x128xf32>
      tpu.vector_store %arg9[%c0_10, %c0_11], %13 {strides = array<i32>} : memref<128x128xf32, #tpu.memory_space<vmem>>, vector<128x128xf32>,
    } else {
    }
    %c0_i32_6 = arith.constant 0 : i32
    %9 = arith.cmpi eq, %arg1, %c0_i32_6 : i32
    %10 = arith.extui %9 : i1 to i32
    %c0_i32_7 = arith.constant 0 : i32
    %11 = arith.cmpi ne, %10, %c0_i32_7 : i32
    scf.if %11 {
      %c0_8 = arith.constant 0 : index
      %c0_9 = arith.constant 0 : index
      %12 = vector.load %arg9[%c0_8, %c0_9] : memref<128x128xf32, #tpu.memory_space<vmem>>, vector<128x128xf32>
      %c0_10 = arith.constant 0 : index
      %c0_11 = arith.constant 0 : index
      %13 = vector.load %arg4[%c0_10, %c0_11] : memref<128x128xf32, #tpu.memory_space<vmem>>, vector<128x128xf32>
      %14 = arith.mulf %12, %13 : vector<128x128xf32>
      %15 = arith.truncf %12 : vector<128x128xf32> to vector<128x128xbf16>
      %c0_12 = arith.constant 0 : index
      %c0_13 = arith.constant 0 : index
      %16 = vector.load %arg5[%c0_12, %c0_13] : memref<128x128xbf16, #tpu.memory_space<vmem>>, vector<128x128xbf16>
      %cst_14 = arith.constant dense<0.000000e+00> : vector<128x128xf32>
      %17 = tpu.matmul %15, %16, %cst_14 {dimension_numbers = #tpu.dot_dimension_numbers<[1], [0], [0], [1], [0, 0, 1, 1], [], []>} : vector<128x128xbf16>, vector<128x128xbf16>, vector<128x128xf32> -> vector<128x128xf32>
      %18 = arith.truncf %14 : vector<128x128xf32> to vector<128x128xbf16>
      %c0_15 = arith.constant 0 : index
      %c0_16 = arith.constant 0 : index
      %19 = vector.load %arg6[%c0_15, %c0_16] : memref<128x128xbf16, #tpu.memory_space<vmem>>, vector<128x128xbf16>
      %cst_17 = arith.constant dense<0.000000e+00> : vector<128x128xf32>
      %20 = tpu.matmul %18, %19, %cst_17 {dimension_numbers = #tpu.dot_dimension_numbers<[1], [0], [0], [1], [0, 0, 1, 1], [], []>} : vector<128x128xbf16>, vector<128x128xbf16>, vector<128x128xf32> -> vector<128x128xf32>
      %21 = arith.addf %17, %20 : vector<128x128xf32>
      %c0_18 = arith.constant 0 : index
      %c0_19 = arith.constant 0 : index
      %22 = vector.load %arg7[%c0_18, %c0_19] : memref<1x128xf32, #tpu.memory_space<vmem>>, vector<1x128xf32>
      %23 = vector.broadcast %22 : vector<1x128xf32> to vector<128x128xf32>
      %24 = arith.addf %21, %23 : vector<128x128xf32>
      %25 = arith.addf %12, %14 : vector<128x128xf32>
      %c0_20 = arith.constant 0 : index
      %c0_21 = arith.constant 0 : index
      %26 = vector.load %arg9[%c0_20, %c0_21] : memref<128x128xf32, #tpu.memory_space<vmem>>, vector<128x128xf32>
      tpu.vector_store %arg9[%c0_20, %c0_21], %25 {strides = array<i32>} : memref<128x128xf32, #tpu.memory_space<vmem>>, vector<128x128xf32>,
      %27 = arith.truncf %25 : vector<128x128xf32> to vector<128x128xbf16>
      %c0_22 = arith.constant 0 : index
      %c0_23 = arith.constant 0 : index
      %28 = vector.load %arg10[%c0_22, %c0_23] : memref<128x128xbf16, #tpu.memory_space<vmem>>, vector<128x128xbf16>
      tpu.vector_store %arg10[%c0_22, %c0_23], %27 {strides = array<i32>} : memref<128x128xbf16, #tpu.memory_space<vmem>>, vector<128x128xbf16>,
      %c0_24 = arith.constant 0 : index
      %c0_25 = arith.constant 0 : index
      %29 = vector.load %arg8[%c0_24, %c0_25] : memref<128x128xf32, #tpu.memory_space<vmem>>, vector<128x128xf32>
      %30 = arith.addf %29, %24 : vector<128x128xf32>
      %c0_26 = arith.constant 0 : index
      %c0_27 = arith.constant 0 : index
      %31 = vector.load %arg11[%c0_26, %c0_27] : memref<128x128xf32, #tpu.memory_space<vmem>>, vector<128x128xf32>
      tpu.vector_store %arg11[%c0_26, %c0_27], %30 {strides = array<i32>} : memref<128x128xf32, #tpu.memory_space<vmem>>, vector<128x128xf32>,
    } else {
    }
    return
  }
  func.func @transform_0(%arg0: i32, %arg1: i32) -> (i32, i32) {
    %c0_i32 = arith.constant 0 : i32
    return %arg0, %arg1 : i32, i32
  }
  func.func @transform_1(%arg0: i32, %arg1: i32) -> (i32, i32) {
    %c0_i32 = arith.constant 0 : i32
    %c0_i32_0 = arith.constant 0 : i32
    return %arg1, %c0_i32 : i32, i32
  }
  func.func @transform_2(%arg0: i32, %arg1: i32) -> (i32, i32) {
    %c0_i32 = arith.constant 0 : i32
    %c0_i32_0 = arith.constant 0 : i32
    return %arg0, %c0_i32 : i32, i32
  }
  func.func @transform_3(%arg0: i32, %arg1: i32) -> (i32, i32) {
    %c0_i32 = arith.constant 0 : i32
    %c0_i32_0 = arith.constant 0 : i32
    %c0_i32_1 = arith.constant 0 : i32
    return %c0_i32, %c0_i32_0 : i32, i32
  }
  func.func @transform_4(%arg0: i32, %arg1: i32) -> (i32, i32) {
    %c0_i32 = arith.constant 0 : i32
    %c0_i32_0 = arith.constant 0 : i32
    %c0_i32_1 = arith.constant 0 : i32
    return %c0_i32, %c0_i32_0 : i32, i32
  }
  func.func @transform_5(%arg0: i32, %arg1: i32) -> (i32, i32) {
    %c0_i32 = arith.constant 0 : i32
    %c0_i32_0 = arith.constant 0 : i32
    %c0_i32_1 = arith.constant 0 : i32
    return %c0_i32, %c0_i32_0 : i32, i32
  }
  func.func @transform_6(%arg0: i32, %arg1: i32) -> (i32, i32) {
    %c0_i32 = arith.constant 0 : i32
    %c0_i32_0 = arith.constant 0 : i32
    return %arg0, %c0_i32 : i32, i32
  }
  func.func @transform_7(%arg0: i32, %arg1: i32) -> (i32, i32) {
    %c0_i32 = arith.constant 0 : i32
    %c0_i32_0 = arith.constant 0 : i32
    return %arg0, %c0_i32 : i32, i32
  }
  func.func @transform_8(%arg0: i32, %arg1: i32) -> (i32, i32) {
    %c0_i32 = arith.constant 0 : i32
    %c0_i32_0 = arith.constant 0 : i32
    return %arg0, %c0_i32 : i32, i32
  }
  func.func @transform_9(%arg0: i32, %arg1: i32) -> (i32, i32) {
    %c0_i32 = arith.constant 0 : i32
    %c0_i32_0 = arith.constant 0 : i32
    return %arg0, %c0_i32 : i32, i32
  }
}

module attributes {stable_mosaic.version = 11 : i64} {
  func.func @_hop_kernel(%arg0: i32, %arg1: i32, %arg2: memref<128x384xbf16, #tpu.memory_space<vmem>>, %arg3: memref<384x128xbf16, #tpu.memory_space<vmem>>, %arg4: memref<128x128xf32, #tpu.memory_space<vmem>>, %arg5: memref<128x128xbf16, #tpu.memory_space<vmem>>, %arg6: memref<128x128xbf16, #tpu.memory_space<vmem>>, %arg7: memref<1x128xf32, #tpu.memory_space<vmem>>, %arg8: memref<128x128xf32, #tpu.memory_space<vmem>>, %arg9: memref<128x128xf32, #tpu.memory_space<vmem>>, %arg10: memref<128x128xbf16, #tpu.memory_space<vmem>>, %arg11: memref<128x128xf32, #tpu.memory_space<vmem>>) attributes {dimension_semantics = [#tpu.dimension_semantics<parallel>, #tpu.dimension_semantics<arbitrary>], iteration_bounds = array<i64: 2, 1>, scalar_prefetch = 0 : i64, scratch_operands = 0 : i64, tpu.core_type = #tpu.core_type<tc>, window_params = [{transform_indices = @transform_0, window_bounds = array<i64: 128, 384>}, {transform_indices = @transform_1, window_bounds = array<i64: 384, 128>}, {transform_indices = @transform_2, window_bounds = array<i64: 128, 128>}, {pipeline_mode = #tpu.pipeline_mode<synchronous>, transform_indices = @transform_3, window_bounds = array<i64: 128, 128>}, {pipeline_mode = #tpu.pipeline_mode<synchronous>, transform_indices = @transform_4, window_bounds = array<i64: 128, 128>}, {pipeline_mode = #tpu.pipeline_mode<synchronous>, transform_indices = @transform_5, window_bounds = array<i64: 1, 128>}, {transform_indices = @transform_6, window_bounds = array<i64: 128, 128>}, {transform_indices = @transform_7, window_bounds = array<i64: 128, 128>}, {transform_indices = @transform_8, window_bounds = array<i64: 128, 128>}, {transform_indices = @transform_9, window_bounds = array<i64: 128, 128>}]} {
    %c0 = arith.constant 0 : index
    %c0_0 = arith.constant 0 : index
    %0 = vector.load %arg2[%c0, %c0_0] : memref<128x384xbf16, #tpu.memory_space<vmem>>, vector<128x384xbf16>
    %c0_1 = arith.constant 0 : index
    %c0_2 = arith.constant 0 : index
    %1 = vector.load %arg3[%c0_1, %c0_2] : memref<384x128xbf16, #tpu.memory_space<vmem>>, vector<384x128xbf16>
    %cst = arith.constant dense<0.000000e+00> : vector<128x128xf32>
    %2 = tpu.matmul %0, %1, %cst {dimension_numbers = #tpu.dot_dimension_numbers<[1], [0], [0], [1], [0, 0, 1, 1], [], []>} : vector<128x384xbf16>, vector<384x128xbf16>, vector<128x128xf32> -> vector<128x128xf32>
    %c0_i32 = arith.constant 0 : i32
    %3 = arith.cmpi eq, %arg1, %c0_i32 : i32
    %4 = arith.extui %3 : i1 to i32
    %c0_i32_3 = arith.constant 0 : i32
    %5 = arith.cmpi ne, %4, %c0_i32_3 : i32
    scf.if %5 {
      %c0_8 = arith.constant 0 : index
      %c0_9 = arith.constant 0 : index
      %12 = vector.load %arg9[%c0_8, %c0_9] : memref<128x128xf32, #tpu.memory_space<vmem>>, vector<128x128xf32>
      tpu.vector_store %arg9[%c0_8, %c0_9], %2 {strides = array<i32>} : memref<128x128xf32, #tpu.memory_space<vmem>>, vector<128x128xf32>,
    } else {
    }
    %c0_i32_4 = arith.constant 0 : i32
    %6 = arith.cmpi sgt, %arg1, %c0_i32_4 : i32
    %7 = arith.extui %6 : i1 to i32
    %c0_i32_5 = arith.constant 0 : i32
    %8 = arith.cmpi ne, %7, %c0_i32_5 : i32
    scf.if %8 {
      %c0_8 = arith.constant 0 : index
      %c0_9 = arith.constant 0 : index
      %12 = vector.load %arg9[%c0_8, %c0_9] : memref<128x128xf32, #tpu.memory_space<vmem>>, vector<128x128xf32>
      %13 = arith.addf %12, %2 : vector<128x128xf32>
      %c0_10 = arith.constant 0 : index
      %c0_11 = arith.constant 0 : index
      %14 = vector.load %arg9[%c0_10, %c0_11] : memref<128x128xf32, #tpu.memory_space<vmem>>, vector<128x128xf32>
      tpu.vector_store %arg9[%c0_10, %c0_11], %13 {strides = array<i32>} : memref<128x128xf32, #tpu.memory_space<vmem>>, vector<128x128xf32>,
    } else {
    }
    %c0_i32_6 = arith.constant 0 : i32
    %9 = arith.cmpi eq, %arg1, %c0_i32_6 : i32
    %10 = arith.extui %9 : i1 to i32
    %c0_i32_7 = arith.constant 0 : i32
    %11 = arith.cmpi ne, %10, %c0_i32_7 : i32
    scf.if %11 {
      %c0_8 = arith.constant 0 : index
      %c0_9 = arith.constant 0 : index
      %12 = vector.load %arg9[%c0_8, %c0_9] : memref<128x128xf32, #tpu.memory_space<vmem>>, vector<128x128xf32>
      %c0_10 = arith.constant 0 : index
      %c0_11 = arith.constant 0 : index
      %13 = vector.load %arg4[%c0_10, %c0_11] : memref<128x128xf32, #tpu.memory_space<vmem>>, vector<128x128xf32>
      %14 = arith.mulf %12, %13 : vector<128x128xf32>
      %15 = arith.truncf %12 : vector<128x128xf32> to vector<128x128xbf16>
      %c0_12 = arith.constant 0 : index
      %c0_13 = arith.constant 0 : index
      %16 = vector.load %arg5[%c0_12, %c0_13] : memref<128x128xbf16, #tpu.memory_space<vmem>>, vector<128x128xbf16>
      %cst_14 = arith.constant dense<0.000000e+00> : vector<128x128xf32>
      %17 = tpu.matmul %15, %16, %cst_14 {dimension_numbers = #tpu.dot_dimension_numbers<[1], [0], [0], [1], [0, 0, 1, 1], [], []>} : vector<128x128xbf16>, vector<128x128xbf16>, vector<128x128xf32> -> vector<128x128xf32>
      %18 = arith.truncf %14 : vector<128x128xf32> to vector<128x128xbf16>
      %c0_15 = arith.constant 0 : index
      %c0_16 = arith.constant 0 : index
      %19 = vector.load %arg6[%c0_15, %c0_16] : memref<128x128xbf16, #tpu.memory_space<vmem>>, vector<128x128xbf16>
      %cst_17 = arith.constant dense<0.000000e+00> : vector<128x128xf32>
      %20 = tpu.matmul %18, %19, %cst_17 {dimension_numbers = #tpu.dot_dimension_numbers<[1], [0], [0], [1], [0, 0, 1, 1], [], []>} : vector<128x128xbf16>, vector<128x128xbf16>, vector<128x128xf32> -> vector<128x128xf32>
      %21 = arith.addf %17, %20 : vector<128x128xf32>
      %c0_18 = arith.constant 0 : index
      %c0_19 = arith.constant 0 : index
      %22 = vector.load %arg7[%c0_18, %c0_19] : memref<1x128xf32, #tpu.memory_space<vmem>>, vector<1x128xf32>
      %23 = vector.broadcast %22 : vector<1x128xf32> to vector<128x128xf32>
      %24 = arith.addf %21, %23 : vector<128x128xf32>
      %25 = arith.addf %12, %14 : vector<128x128xf32>
      %c0_20 = arith.constant 0 : index
      %c0_21 = arith.constant 0 : index
      %26 = vector.load %arg9[%c0_20, %c0_21] : memref<128x128xf32, #tpu.memory_space<vmem>>, vector<128x128xf32>
      tpu.vector_store %arg9[%c0_20, %c0_21], %25 {strides = array<i32>} : memref<128x128xf32, #tpu.memory_space<vmem>>, vector<128x128xf32>,
      %27 = arith.truncf %25 : vector<128x128xf32> to vector<128x128xbf16>
      %c0_22 = arith.constant 0 : index
      %c0_23 = arith.constant 0 : index
      %28 = vector.load %arg10[%c0_22, %c0_23] : memref<128x128xbf16, #tpu.memory_space<vmem>>, vector<128x128xbf16>
      tpu.vector_store %arg10[%c0_22, %c0_23], %27 {strides = array<i32>} : memref<128x128xbf16, #tpu.memory_space<vmem>>, vector<128x128xbf16>,
      %c0_24 = arith.constant 0 : index
      %c0_25 = arith.constant 0 : index
      %29 = vector.load %arg8[%c0_24, %c0_25] : memref<128x128xf32, #tpu.memory_space<vmem>>, vector<128x128xf32>
      %30 = arith.addf %29, %24 : vector<128x128xf32>
      %c0_26 = arith.constant 0 : index
      %c0_27 = arith.constant 0 : index
      %31 = vector.load %arg11[%c0_26, %c0_27] : memref<128x128xf32, #tpu.memory_space<vmem>>, vector<128x128xf32>
      tpu.vector_store %arg11[%c0_26, %c0_27], %30 {strides = array<i32>} : memref<128x128xf32, #tpu.memory_space<vmem>>, vector<128x128xf32>,
    } else {
    }
    return
  }
  func.func @transform_0(%arg0: i32, %arg1: i32) -> (i32, i32) {
    %c0_i32 = arith.constant 0 : i32
    return %arg0, %arg1 : i32, i32
  }
  func.func @transform_1(%arg0: i32, %arg1: i32) -> (i32, i32) {
    %c0_i32 = arith.constant 0 : i32
    %c0_i32_0 = arith.constant 0 : i32
    return %arg1, %c0_i32 : i32, i32
  }
  func.func @transform_2(%arg0: i32, %arg1: i32) -> (i32, i32) {
    %c0_i32 = arith.constant 0 : i32
    %c0_i32_0 = arith.constant 0 : i32
    return %arg0, %c0_i32 : i32, i32
  }
  func.func @transform_3(%arg0: i32, %arg1: i32) -> (i32, i32) {
    %c0_i32 = arith.constant 0 : i32
    %c0_i32_0 = arith.constant 0 : i32
    %c0_i32_1 = arith.constant 0 : i32
    return %c0_i32, %c0_i32_0 : i32, i32
  }
  func.func @transform_4(%arg0: i32, %arg1: i32) -> (i32, i32) {
    %c0_i32 = arith.constant 0 : i32
    %c0_i32_0 = arith.constant 0 : i32
    %c0_i32_1 = arith.constant 0 : i32
    return %c0_i32, %c0_i32_0 : i32, i32
  }
  func.func @transform_5(%arg0: i32, %arg1: i32) -> (i32, i32) {
    %c0_i32 = arith.constant 0 : i32
    %c0_i32_0 = arith.constant 0 : i32
    %c0_i32_1 = arith.constant 0 : i32
    return %c0_i32, %c0_i32_0 : i32, i32
  }
  func.func @transform_6(%arg0: i32, %arg1: i32) -> (i32, i32) {
    %c0_i32 = arith.constant 0 : i32
    %c0_i32_0 = arith.constant 0 : i32
    return %arg0, %c0_i32 : i32, i32
  }
  func.func @transform_7(%arg0: i32, %arg1: i32) -> (i32, i32) {
    %c0_i32 = arith.constant 0 : i32
    %c0_i32_0 = arith.constant 0 : i32
    return %arg0, %c0_i32 : i32, i32
  }
  func.func @transform_8(%arg0: i32, %arg1: i32) -> (i32, i32) {
    %c0_i32 = arith.constant 0 : i32
    %c0_i32_0 = arith.constant 0 : i32
    return %arg0, %c0_i32 : i32, i32
  }
  func.func @transform_9(%arg0: i32, %arg1: i32) -> (i32, i32) {
    %c0_i32 = arith.constant 0 : i32
    %c0_i32_0 = arith.constant 0 : i32
    return %arg0, %c0_i32 : i32, i32
  }
}

module attributes {stable_mosaic.version = 11 : i64} {
  func.func @_hop_kernel(%arg0: i32, %arg1: i32, %arg2: memref<128x256xbf16, #tpu.memory_space<vmem>>, %arg3: memref<256x128xbf16, #tpu.memory_space<vmem>>, %arg4: memref<128x128xf32, #tpu.memory_space<vmem>>, %arg5: memref<128x128xbf16, #tpu.memory_space<vmem>>, %arg6: memref<128x128xbf16, #tpu.memory_space<vmem>>, %arg7: memref<1x128xf32, #tpu.memory_space<vmem>>, %arg8: memref<128x128xf32, #tpu.memory_space<vmem>>, %arg9: memref<128x128xf32, #tpu.memory_space<vmem>>, %arg10: memref<128x128xbf16, #tpu.memory_space<vmem>>, %arg11: memref<128x128xf32, #tpu.memory_space<vmem>>) attributes {dimension_semantics = [#tpu.dimension_semantics<parallel>, #tpu.dimension_semantics<arbitrary>], iteration_bounds = array<i64: 3, 1>, scalar_prefetch = 0 : i64, scratch_operands = 0 : i64, tpu.core_type = #tpu.core_type<tc>, window_params = [{transform_indices = @transform_0, window_bounds = array<i64: 128, 256>}, {transform_indices = @transform_1, window_bounds = array<i64: 256, 128>}, {transform_indices = @transform_2, window_bounds = array<i64: 128, 128>}, {pipeline_mode = #tpu.pipeline_mode<synchronous>, transform_indices = @transform_3, window_bounds = array<i64: 128, 128>}, {pipeline_mode = #tpu.pipeline_mode<synchronous>, transform_indices = @transform_4, window_bounds = array<i64: 128, 128>}, {pipeline_mode = #tpu.pipeline_mode<synchronous>, transform_indices = @transform_5, window_bounds = array<i64: 1, 128>}, {transform_indices = @transform_6, window_bounds = array<i64: 128, 128>}, {transform_indices = @transform_7, window_bounds = array<i64: 128, 128>}, {transform_indices = @transform_8, window_bounds = array<i64: 128, 128>}, {transform_indices = @transform_9, window_bounds = array<i64: 128, 128>}]} {
    %c0 = arith.constant 0 : index
    %c0_0 = arith.constant 0 : index
    %0 = vector.load %arg2[%c0, %c0_0] : memref<128x256xbf16, #tpu.memory_space<vmem>>, vector<128x256xbf16>
    %c0_1 = arith.constant 0 : index
    %c0_2 = arith.constant 0 : index
    %1 = vector.load %arg3[%c0_1, %c0_2] : memref<256x128xbf16, #tpu.memory_space<vmem>>, vector<256x128xbf16>
    %cst = arith.constant dense<0.000000e+00> : vector<128x128xf32>
    %2 = tpu.matmul %0, %1, %cst {dimension_numbers = #tpu.dot_dimension_numbers<[1], [0], [0], [1], [0, 0, 1, 1], [], []>} : vector<128x256xbf16>, vector<256x128xbf16>, vector<128x128xf32> -> vector<128x128xf32>
    %c0_i32 = arith.constant 0 : i32
    %3 = arith.cmpi eq, %arg1, %c0_i32 : i32
    %4 = arith.extui %3 : i1 to i32
    %c0_i32_3 = arith.constant 0 : i32
    %5 = arith.cmpi ne, %4, %c0_i32_3 : i32
    scf.if %5 {
      %c0_8 = arith.constant 0 : index
      %c0_9 = arith.constant 0 : index
      %12 = vector.load %arg9[%c0_8, %c0_9] : memref<128x128xf32, #tpu.memory_space<vmem>>, vector<128x128xf32>
      tpu.vector_store %arg9[%c0_8, %c0_9], %2 {strides = array<i32>} : memref<128x128xf32, #tpu.memory_space<vmem>>, vector<128x128xf32>,
    } else {
    }
    %c0_i32_4 = arith.constant 0 : i32
    %6 = arith.cmpi sgt, %arg1, %c0_i32_4 : i32
    %7 = arith.extui %6 : i1 to i32
    %c0_i32_5 = arith.constant 0 : i32
    %8 = arith.cmpi ne, %7, %c0_i32_5 : i32
    scf.if %8 {
      %c0_8 = arith.constant 0 : index
      %c0_9 = arith.constant 0 : index
      %12 = vector.load %arg9[%c0_8, %c0_9] : memref<128x128xf32, #tpu.memory_space<vmem>>, vector<128x128xf32>
      %13 = arith.addf %12, %2 : vector<128x128xf32>
      %c0_10 = arith.constant 0 : index
      %c0_11 = arith.constant 0 : index
      %14 = vector.load %arg9[%c0_10, %c0_11] : memref<128x128xf32, #tpu.memory_space<vmem>>, vector<128x128xf32>
      tpu.vector_store %arg9[%c0_10, %c0_11], %13 {strides = array<i32>} : memref<128x128xf32, #tpu.memory_space<vmem>>, vector<128x128xf32>,
    } else {
    }
    %c0_i32_6 = arith.constant 0 : i32
    %9 = arith.cmpi eq, %arg1, %c0_i32_6 : i32
    %10 = arith.extui %9 : i1 to i32
    %c0_i32_7 = arith.constant 0 : i32
    %11 = arith.cmpi ne, %10, %c0_i32_7 : i32
    scf.if %11 {
      %c0_8 = arith.constant 0 : index
      %c0_9 = arith.constant 0 : index
      %12 = vector.load %arg9[%c0_8, %c0_9] : memref<128x128xf32, #tpu.memory_space<vmem>>, vector<128x128xf32>
      %c0_10 = arith.constant 0 : index
      %c0_11 = arith.constant 0 : index
      %13 = vector.load %arg4[%c0_10, %c0_11] : memref<128x128xf32, #tpu.memory_space<vmem>>, vector<128x128xf32>
      %14 = arith.mulf %12, %13 : vector<128x128xf32>
      %15 = arith.truncf %12 : vector<128x128xf32> to vector<128x128xbf16>
      %c0_12 = arith.constant 0 : index
      %c0_13 = arith.constant 0 : index
      %16 = vector.load %arg5[%c0_12, %c0_13] : memref<128x128xbf16, #tpu.memory_space<vmem>>, vector<128x128xbf16>
      %cst_14 = arith.constant dense<0.000000e+00> : vector<128x128xf32>
      %17 = tpu.matmul %15, %16, %cst_14 {dimension_numbers = #tpu.dot_dimension_numbers<[1], [0], [0], [1], [0, 0, 1, 1], [], []>} : vector<128x128xbf16>, vector<128x128xbf16>, vector<128x128xf32> -> vector<128x128xf32>
      %18 = arith.truncf %14 : vector<128x128xf32> to vector<128x128xbf16>
      %c0_15 = arith.constant 0 : index
      %c0_16 = arith.constant 0 : index
      %19 = vector.load %arg6[%c0_15, %c0_16] : memref<128x128xbf16, #tpu.memory_space<vmem>>, vector<128x128xbf16>
      %cst_17 = arith.constant dense<0.000000e+00> : vector<128x128xf32>
      %20 = tpu.matmul %18, %19, %cst_17 {dimension_numbers = #tpu.dot_dimension_numbers<[1], [0], [0], [1], [0, 0, 1, 1], [], []>} : vector<128x128xbf16>, vector<128x128xbf16>, vector<128x128xf32> -> vector<128x128xf32>
      %21 = arith.addf %17, %20 : vector<128x128xf32>
      %c0_18 = arith.constant 0 : index
      %c0_19 = arith.constant 0 : index
      %22 = vector.load %arg7[%c0_18, %c0_19] : memref<1x128xf32, #tpu.memory_space<vmem>>, vector<1x128xf32>
      %23 = vector.broadcast %22 : vector<1x128xf32> to vector<128x128xf32>
      %24 = arith.addf %21, %23 : vector<128x128xf32>
      %25 = arith.addf %12, %14 : vector<128x128xf32>
      %c0_20 = arith.constant 0 : index
      %c0_21 = arith.constant 0 : index
      %26 = vector.load %arg9[%c0_20, %c0_21] : memref<128x128xf32, #tpu.memory_space<vmem>>, vector<128x128xf32>
      tpu.vector_store %arg9[%c0_20, %c0_21], %25 {strides = array<i32>} : memref<128x128xf32, #tpu.memory_space<vmem>>, vector<128x128xf32>,
      %27 = arith.truncf %25 : vector<128x128xf32> to vector<128x128xbf16>
      %c0_22 = arith.constant 0 : index
      %c0_23 = arith.constant 0 : index
      %28 = vector.load %arg10[%c0_22, %c0_23] : memref<128x128xbf16, #tpu.memory_space<vmem>>, vector<128x128xbf16>
      tpu.vector_store %arg10[%c0_22, %c0_23], %27 {strides = array<i32>} : memref<128x128xbf16, #tpu.memory_space<vmem>>, vector<128x128xbf16>,
      %c0_24 = arith.constant 0 : index
      %c0_25 = arith.constant 0 : index
      %29 = vector.load %arg8[%c0_24, %c0_25] : memref<128x128xf32, #tpu.memory_space<vmem>>, vector<128x128xf32>
      %30 = arith.addf %29, %24 : vector<128x128xf32>
      %c0_26 = arith.constant 0 : index
      %c0_27 = arith.constant 0 : index
      %31 = vector.load %arg11[%c0_26, %c0_27] : memref<128x128xf32, #tpu.memory_space<vmem>>, vector<128x128xf32>
      tpu.vector_store %arg11[%c0_26, %c0_27], %30 {strides = array<i32>} : memref<128x128xf32, #tpu.memory_space<vmem>>, vector<128x128xf32>,
    } else {
    }
    return
  }
  func.func @transform_0(%arg0: i32, %arg1: i32) -> (i32, i32) {
    %c0_i32 = arith.constant 0 : i32
    return %arg0, %arg1 : i32, i32
  }
  func.func @transform_1(%arg0: i32, %arg1: i32) -> (i32, i32) {
    %c0_i32 = arith.constant 0 : i32
    %c0_i32_0 = arith.constant 0 : i32
    return %arg1, %c0_i32 : i32, i32
  }
  func.func @transform_2(%arg0: i32, %arg1: i32) -> (i32, i32) {
    %c0_i32 = arith.constant 0 : i32
    %c0_i32_0 = arith.constant 0 : i32
    return %arg0, %c0_i32 : i32, i32
  }
  func.func @transform_3(%arg0: i32, %arg1: i32) -> (i32, i32) {
    %c0_i32 = arith.constant 0 : i32
    %c0_i32_0 = arith.constant 0 : i32
    %c0_i32_1 = arith.constant 0 : i32
    return %c0_i32, %c0_i32_0 : i32, i32
  }
  func.func @transform_4(%arg0: i32, %arg1: i32) -> (i32, i32) {
    %c0_i32 = arith.constant 0 : i32
    %c0_i32_0 = arith.constant 0 : i32
    %c0_i32_1 = arith.constant 0 : i32
    return %c0_i32, %c0_i32_0 : i32, i32
  }
  func.func @transform_5(%arg0: i32, %arg1: i32) -> (i32, i32) {
    %c0_i32 = arith.constant 0 : i32
    %c0_i32_0 = arith.constant 0 : i32
    %c0_i32_1 = arith.constant 0 : i32
    return %c0_i32, %c0_i32_0 : i32, i32
  }
  func.func @transform_6(%arg0: i32, %arg1: i32) -> (i32, i32) {
    %c0_i32 = arith.constant 0 : i32
    %c0_i32_0 = arith.constant 0 : i32
    return %arg0, %c0_i32 : i32, i32
  }
  func.func @transform_7(%arg0: i32, %arg1: i32) -> (i32, i32) {
    %c0_i32 = arith.constant 0 : i32
    %c0_i32_0 = arith.constant 0 : i32
    return %arg0, %c0_i32 : i32, i32
  }
  func.func @transform_8(%arg0: i32, %arg1: i32) -> (i32, i32) {
    %c0_i32 = arith.constant 0 : i32
    %c0_i32_0 = arith.constant 0 : i32
    return %arg0, %c0_i32 : i32, i32
  }
  func.func @transform_9(%arg0: i32, %arg1: i32) -> (i32, i32) {
    %c0_i32 = arith.constant 0 : i32
    %c0_i32_0 = arith.constant 0 : i32
    return %arg0, %c0_i32 : i32, i32
  }
}

</mosaic_0001>

<llo_original>
// kernel: _forward_jit.4
$region0: #{_forward_jit.4}
  #allocation0 [shape = 'u32[]', space=smem, size = 0x4, offset = 0x4, fixed_abs, tag = 'smem constant byte address 0x4 - core index']
  #allocation1 [shape = 'u32[144,128]{1,0:T(1,128)}', space=vmem, size = 0x12000, scoped, tag = 'internal scratch']
  %s0 = inlined_call_operand.vmem [shape: bf16[384,256], index: 0, kind: input, shape index: {}]
  %s1 = inlined_call_operand.vmem [shape: bf16[256,128], index: 1, kind: input, shape index: {}]
  %s2 = inlined_call_operand.vmem [shape: f32[384,128], index: 2, kind: input, shape index: {}]
  %s3 = inlined_call_operand.vmem [shape: bf16[128,128], index: 3, kind: input, shape index: {}]
  %s4 = inlined_call_operand.vmem [shape: bf16[128,128], index: 4, kind: input, shape index: {}]
  %s5 = inlined_call_operand.vmem [shape: f32[1,128], index: 5, kind: input, shape index: {}]
  %s6 = inlined_call_operand.vmem [shape: f32[384,128], index: 6, kind: input, shape index: {}, may-alias: {6,9}]
  %s7 = inlined_call_operand.vmem [shape: f32[384,128], index: 7, kind: output, shape index: {0}]
  %s8 = inlined_call_operand.vmem [shape: bf16[384,128], index: 8, kind: output, shape index: {1}]
  %s9 = inlined_call_operand.vmem [shape: f32[384,128], index: 9, kind: output, shape index: {2}, may-alias: {6,9}]
  %10 = xla_tuple %s7, %s8, %s9
  %s11 = sld [smem:[#allocation0]]
  $region89: #{_forward_jit.4} parent=0
    _
  %s13 = ssub.s32 1, %s11
  %s14 = scalar_select 0, %s13, %s11
  loop: start=0, step=1, limit=5
  $region2: #{_forward_jit.4} parent=0 // loop_pre_header
    _
  $region3: #{_forward_jit.4} parent=0 // loop_header
    %s16 = sphi 0, %s20
    %p17 = scmp.ge.s32.totalorder %s16, 5
    %s23 = sphi 0, %s35
    %s24 = sphi 0, %s31
    %s25 = sphi 0, %s23
    %s26 = sphi 0, %s24
    %s27 = sphi 0, %s25
    %s28 = sphi 0, %s26
    %s40 = sphi 0, %s42
    %s43 = sphi 0, %s40
    %s44 = sphi 0, %s43
    %s60 = sphi 0, %s44
    %s66 = sphi 0, %s68
    %s69 = sphi 0, %s66
    %s70 = sphi 0, %s69
    %s86 = sphi 0, %s70
    %s92 = sphi 0, %s94
    %s95 = sphi 0, %s92
    %s96 = sphi 0, %s95
    %s112 = sphi 0, %s96
    %s116 = sphi 0, %s116
    %s118 = sphi 0, %s116
    %s119 = sphi 0, %s118
    %s133 = sphi 0, %s119
    %s137 = sphi 0, %s137
    %s139 = sphi 0, %s137
    %s140 = sphi 0, %s139
    %s154 = sphi 0, %s140
    %s158 = sphi 0, %s158
    %s160 = sphi 0, %s158
    %s161 = sphi 0, %s160
    %s175 = sphi 0, %s161
    %s181 = sphi 0, %s183
    %s184 = sphi 0, %s181
    %s185 = sphi 0, %s184
    %s201 = sphi 0, %s185
    %s207 = sphi 0, %s209
    %s210 = sphi 0, %s207
    %s211 = sphi 0, %s210
    %s227 = sphi 0, %s211
    %s233 = sphi 0, %s235
    %s236 = sphi 0, %s233
    %s237 = sphi 0, %s236
    %s253 = sphi 0, %s237
    %s259 = sphi 0, %s261
    %s262 = sphi 0, %s259
    %s263 = sphi 0, %s262
    %s279 = sphi 0, %s263
  $region4: #{_forward_jit.4} parent=0 // loop_header_branch
    %19 = sbr.rel (%p17) target = $region8
  $region5: #{_forward_jit.4} parent=0 // loop_body
    %s21 = ssub.s32 %s16, 1
    %s22 = ssub.s32 %s16, 2
    %s29 = sadd.s32 1, %s24
    %p30 = scmp.ge.s32.totalorder %s29, 1
    %s31 = scalar_select %p30, 0, %s29
    %s32 = sadd.s32 1, %s23
    %s33 = scalar_select %p30, %s32, %s23
    %p34 = scmp.ge.s32.totalorder %s33, 3
    %s35 = scalar_select %p34, 0, %s33
    %s36 = ssub.s32 %s23, %s35
    %s37 = ssub.s32 %s24, %s31
    %s38 = sor.u32 %s36, %s37
    %p39 = scmp.eq.s32.totalorder %s38, 0
    %s41 = sadd.s32 %s40, 1
    %s42 = scalar_select %p39, %s40, %s41
    %p45 = pneg %p39
    %p46 = scmp.eq.s32.totalorder %s16, 2
    %p47 = por %p45, %p46
    %p48 = scmp.ne.s32.totalorder %s40, %s43
    %p49 = scmp.eq.s32.totalorder %s16, 0
    %p50 = por %p48, %p49
    %p51 = scmp.ne.s32.totalorder %s40, %s43
    %p52 = scmp.eq.s32.totalorder %s21, 2
    %p53 = por %p51, %p52
    %p54 = scmp.ne.s32.totalorder %s43, %s44
    %p55 = scmp.eq.s32.totalorder %s21, 0
    %p56 = por %p54, %p55
    %p57 = scmp.ne.s32.totalorder %s43, %s44
    %p58 = scmp.eq.s32.totalorder %s22, 2
    %p59 = por %p57, %p58
    %p61 = scmp.ne.s32.totalorder %s44, %s60
    %p62 = scmp.eq.s32.totalorder %s22, 0
    %p63 = por %p61, %p62
    %s64 = ssub.s32 %s24, %s31
    %p65 = scmp.eq.s32.totalorder %s64, 0
    %s67 = sadd.s32 %s66, 1
    %s68 = scalar_select %p65, %s66, %s67
    %p71 = pneg %p65
    %p72 = scmp.eq.s32.totalorder %s16, 2
    %p73 = por %p71, %p72
    %p74 = scmp.ne.s32.totalorder %s66, %s69
    %p75 = scmp.eq.s32.totalorder %s16, 0
    %p76 = por %p74, %p75
    %p77 = scmp.ne.s32.totalorder %s66, %s69
    %p78 = scmp.eq.s32.totalorder %s21, 2
    %p79 = por %p77, %p78
    %p80 = scmp.ne.s32.totalorder %s69, %s70
    %p81 = scmp.eq.s32.totalorder %s21, 0
    %p82 = por %p80, %p81
    %p83 = scmp.ne.s32.totalorder %s69, %s70
    %p84 = scmp.eq.s32.totalorder %s22, 2
    %p85 = por %p83, %p84
    %p87 = scmp.ne.s32.totalorder %s70, %s86
    %p88 = scmp.eq.s32.totalorder %s22, 0
    %p89 = por %p87, %p88
    %s90 = ssub.s32 %s23, %s35
    %p91 = scmp.eq.s32.totalorder %s90, 0
    %s93 = sadd.s32 %s92, 1
    %s94 = scalar_select %p91, %s92, %s93
    %p97 = pneg %p91
    %p98 = scmp.eq.s32.totalorder %s16, 2
    %p99 = por %p97, %p98
    %p100 = scmp.ne.s32.totalorder %s92, %s95
    %p101 = scmp.eq.s32.totalorder %s16, 0
    %p102 = por %p100, %p101
    %p103 = scmp.ne.s32.totalorder %s92, %s95
    %p104 = scmp.eq.s32.totalorder %s21, 2
    %p105 = por %p103, %p104
    %p106 = scmp.ne.s32.totalorder %s95, %s96
    %p107 = scmp.eq.s32.totalorder %s21, 0
    %p108 = por %p106, %p107
    %p109 = scmp.ne.s32.totalorder %s95, %s96
    %p110 = scmp.eq.s32.totalorder %s22, 2
    %p111 = por %p109, %p110
    %p113 = scmp.ne.s32.totalorder %s96, %s112
    %p114 = scmp.eq.s32.totalorder %s22, 0
    %p115 = por %p113, %p114
    %s117 = sadd.s32 %s116, 1
    %p120 = scmp.eq.s32.totalorder %s16, 2
    %p121 = scmp.ne.s32.totalorder %s116, %s118
    %p122 = scmp.eq.s32.totalorder %s16, 0
    %p123 = por %p121, %p122
    %p124 = scmp.ne.s32.totalorder %s116, %s118
    %p125 = scmp.eq.s32.totalorder %s21, 2
    %p126 = por %p124, %p125
    %p127 = scmp.ne.s32.totalorder %s118, %s119
    %p128 = scmp.eq.s32.totalorder %s21, 0
    %p129 = por %p127, %p128
    %p130 = scmp.ne.s32.totalorder %s118, %s119
    %p131 = scmp.eq.s32.totalorder %s22, 2
    %p132 = por %p130, %p131
    %p134 = scmp.ne.s32.totalorder %s119, %s133
    %p135 = scmp.eq.s32.totalorder %s22, 0
    %p136 = por %p134, %p135
    %s138 = sadd.s32 %s137, 1
    %p141 = scmp.eq.s32.totalorder %s16, 2
    %p142 = scmp.ne.s32.totalorder %s137, %s139
    %p143 = scmp.eq.s32.totalorder %s16, 0
    %p144 = por %p142, %p143
    %p145 = scmp.ne.s32.totalorder %s137, %s139
    %p146 = scmp.eq.s32.totalorder %s21, 2
    %p147 = por %p145, %p146
    %p148 = scmp.ne.s32.totalorder %s139, %s140
    %p149 = scmp.eq.s32.totalorder %s21, 0
    %p150 = por %p148, %p149
    %p151 = scmp.ne.s32.totalorder %s139, %s140
    %p152 = scmp.eq.s32.totalorder %s22, 2
    %p153 = por %p151, %p152
    %p155 = scmp.ne.s32.totalorder %s140, %s154
    %p156 = scmp.eq.s32.totalorder %s22, 0
    %p157 = por %p155, %p156
    %s159 = sadd.s32 %s158, 1
    %p162 = scmp.eq.s32.totalorder %s16, 2
    %p163 = scmp.ne.s32.totalorder %s158, %s160
    %p164 = scmp.eq.s32.totalorder %s16, 0
    %p165 = por %p163, %p164
    %p166 = scmp.ne.s32.totalorder %s158, %s160
    %p167 = scmp.eq.s32.totalorder %s21, 2
    %p168 = por %p166, %p167
    %p169 = scmp.ne.s32.totalorder %s160, %s161
    %p170 = scmp.eq.s32.totalorder %s21, 0
    %p171 = por %p169, %p170
    %p172 = scmp.ne.s32.totalorder %s160, %s161
    %p173 = scmp.eq.s32.totalorder %s22, 2
    %p174 = por %p172, %p173
    %p176 = scmp.ne.s32.totalorder %s161, %s175
    %p177 = scmp.eq.s32.totalorder %s22, 0
    %p178 = por %p176, %p177
    %s179 = ssub.s32 %s23, %s35
    %p180 = scmp.eq.s32.totalorder %s179, 0
    %s182 = sadd.s32 %s181, 1
    %s183 = scalar_select %p180, %s181, %s182
    %p186 = pneg %p180
    %p187 = scmp.eq.s32.totalorder %s16, 2
    %p188 = por %p186, %p187
    %p189 = scmp.ne.s32.totalorder %s181, %s184
    %p190 = scmp.eq.s32.totalorder %s16, 0
    %p191 = por %p189, %p190
    %p192 = scmp.ne.s32.totalorder %s181, %s184
    %p193 = scmp.eq.s32.totalorder %s21, 2
    %p194 = por %p192, %p193
    %p195 = scmp.ne.s32.totalorder %s184, %s185
    %p196 = scmp.eq.s32.totalorder %s21, 0
    %p197 = por %p195, %p196
    %p198 = scmp.ne.s32.totalorder %s184, %s185
    %p199 = scmp.eq.s32.totalorder %s22, 2
    %p200 = por %p198, %p199
    %p202 = scmp.ne.s32.totalorder %s185, %s201
    %p203 = scmp.eq.s32.totalorder %s22, 0
    %p204 = por %p202, %p203
    %s205 = ssub.s32 %s23, %s35
    %p206 = scmp.eq.s32.totalorder %s205, 0
    %s208 = sadd.s32 %s207, 1
    %s209 = scalar_select %p206, %s207, %s208
    %p212 = pneg %p206
    %p213 = scmp.eq.s32.totalorder %s16, 2
    %p214 = por %p212, %p213
    %p215 = scmp.ne.s32.totalorder %s207, %s210
    %p216 = scmp.eq.s32.totalorder %s16, 0
    %p217 = por %p215, %p216
    %p218 = scmp.ne.s32.totalorder %s207, %s210
    %p219 = scmp.eq.s32.totalorder %s21, 2
    %p220 = por %p218, %p219
    %p221 = scmp.ne.s32.totalorder %s210, %s211
    %p222 = scmp.eq.s32.totalorder %s21, 0
    %p223 = por %p221, %p222
    %p224 = scmp.ne.s32.totalorder %s210, %s211
    %p225 = scmp.eq.s32.totalorder %s22, 2
    %p226 = por %p224, %p225
    %p228 = scmp.ne.s32.totalorder %s211, %s227
    %p229 = scmp.eq.s32.totalorder %s22, 0
    %p230 = por %p228, %p229
    %s231 = ssub.s32 %s23, %s35
    %p232 = scmp.eq.s32.totalorder %s231, 0
    %s234 = sadd.s32 %s233, 1
    %s235 = scalar_select %p232, %s233, %s234
    %p238 = pneg %p232
    %p239 = scmp.eq.s32.totalorder %s16, 2
    %p240 = por %p238, %p239
    %p241 = scmp.ne.s32.totalorder %s233, %s236
    %p242 = scmp.eq.s32.totalorder %s16, 0
    %p243 = por %p241, %p242
    %p244 = scmp.ne.s32.totalorder %s233, %s236
    %p245 = scmp.eq.s32.totalorder %s21, 2
    %p246 = por %p244, %p245
    %p247 = scmp.ne.s32.totalorder %s236, %s237
    %p248 = scmp.eq.s32.totalorder %s21, 0
    %p249 = por %p247, %p248
    %p250 = scmp.ne.s32.totalorder %s236, %s237
    %p251 = scmp.eq.s32.totalorder %s22, 2
    %p252 = por %p250, %p251
    %p254 = scmp.ne.s32.totalorder %s237, %s253
    %p255 = scmp.eq.s32.totalorder %s22, 0
    %p256 = por %p254, %p255
    %s257 = ssub.s32 %s23, %s35
    %p258 = scmp.eq.s32.totalorder %s257, 0
    %s260 = sadd.s32 %s259, 1
    %s261 = scalar_select %p258, %s259, %s260
    %p264 = pneg %p258
    %p265 = scmp.eq.s32.totalorder %s16, 2
    %p266 = por %p264, %p265
    %p267 = scmp.ne.s32.totalorder %s259, %s262
    %p268 = scmp.eq.s32.totalorder %s16, 0
    %p269 = por %p267, %p268
    %p270 = scmp.ne.s32.totalorder %s259, %s262
    %p271 = scmp.eq.s32.totalorder %s21, 2
    %p272 = por %p270, %p271
    %p273 = scmp.ne.s32.totalorder %s262, %s263
    %p274 = scmp.eq.s32.totalorder %s21, 0
    %p275 = por %p273, %p274
    %p276 = scmp.ne.s32.totalorder %s262, %s263
    %p277 = scmp.eq.s32.totalorder %s22, 2
    %p278 = por %p276, %p277
    %p280 = scmp.ne.s32.totalorder %s263, %s279
    %p281 = scmp.eq.s32.totalorder %s22, 0
    %p282 = por %p280, %p281
    %p283 = scmp.le.s32.totalorder 1, %s16
    %p284 = scmp.lt.s32.totalorder %s16, 4
    %p285 = pnand %p283, %p284
    %p286 = pneg %p285
    // Predicated region
    $region9: #{_forward_jit.4} parent=5 // pred_check
      _
    $region10: #{_forward_jit.4} parent=5 // pred_check_branch
      %288 = sbr.rel (%p285) target = $region12
    $region11: #{_forward_jit.4} parent=5 // pred_region
      %s289 = ssub.s32 %s16, 1
      // Predicated region
      $region13: #{_forward_jit.4} parent=11 // pred_check
        %p290 = pneg %p82
      $region14: #{_forward_jit.4} parent=11 // pred_check_branch
        %292 = sbr.rel (%p290) target = $region16
      $region15: #{_forward_jit.4} parent=11 // pred_region
        %s293 = smul.u32 32, %s26
        %p294 = scmp.lt.s32.totalorder %s293, 31
        %s295 = scalar_select %p294, %s293, 31
        %s296 = smul.addr %s295, 4
        %s297 = scalar_lea.vmem %s1, %s296
        %s298 = smul.u32 32, %s26
      $region16: #{_forward_jit.4} parent=11 // pred_fallthru
        _
      // Predicated region
      $region17: #{_forward_jit.4} parent=11 // pred_check
        %p299 = pneg %p129
      $region18: #{_forward_jit.4} parent=11 // pred_check_branch
        %301 = sbr.rel (%p299) target = $region20
      $region19: #{_forward_jit.4} parent=11 // pred_region
        _
      $region20: #{_forward_jit.4} parent=11 // pred_fallthru
        _
      // Predicated region
      $region21: #{_forward_jit.4} parent=11 // pred_check
        %p302 = pneg %p150
      $region22: #{_forward_jit.4} parent=11 // pred_check_branch
        %304 = sbr.rel (%p302) target = $region24
      $region23: #{_forward_jit.4} parent=11 // pred_region
        _
      $region24: #{_forward_jit.4} parent=11 // pred_fallthru
        _
      // Predicated region
      $region25: #{_forward_jit.4} parent=11 // pred_check
        %p305 = pneg %p171
      $region26: #{_forward_jit.4} parent=11 // pred_check_branch
        %307 = sbr.rel (%p305) target = $region28
      $region27: #{_forward_jit.4} parent=11 // pred_region
        _
      $region28: #{_forward_jit.4} parent=11 // pred_fallthru
        _
    $region12: #{_forward_jit.4} parent=5 // pred_fallthru
      _
    %p308 = scmp.lt.s32.totalorder %s16, 3
    // Predicated region
    $region29: #{_forward_jit.4} parent=5 // pred_check
      %p309 = pneg %p308
    $region30: #{_forward_jit.4} parent=5 // pred_check_branch
      %311 = sbr.rel (%p309) target = $region32
    $region31: #{_forward_jit.4} parent=5 // pred_region
      // Predicated region
      $region33: #{_forward_jit.4} parent=31 // pred_check
        %p312 = pneg %p50
      $region34: #{_forward_jit.4} parent=31 // pred_check_branch
        %314 = sbr.rel (%p312) target = $region36
      $region35: #{_forward_jit.4} parent=31 // pred_region
        %s315 = smul.u32 16, %s23
        %s316 = smul.u32 2, %s24
        %p317 = scmp.lt.s32.totalorder %s315, 47
        %s318 = scalar_select %p317, %s315, 47
        %p319 = scmp.lt.s32.totalorder %s316, 1
        %s320 = scalar_select %p319, %s316, 1
        %s321 = smul.addr %s318, 2
        %s322 = sadd.s32 %s320, %s321
        %s323 = smul.addr %s322, 4
        %s324 = scalar_lea.vmem %s0, %s323
        %s325 = smul.u32 16, %s23
        %s326 = smul.u32 2, %s24
      $region36: #{_forward_jit.4} parent=31 // pred_fallthru
        _
      // Predicated region
      $region37: #{_forward_jit.4} parent=31 // pred_check
        %p327 = pneg %p102
      $region38: #{_forward_jit.4} parent=31 // pred_check_branch
        %329 = sbr.rel (%p327) target = $region40
      $region39: #{_forward_jit.4} parent=31 // pred_region
        %s330 = smul.u32 16, %s23
        %p331 = scmp.lt.s32.totalorder %s330, 47
        %s332 = scalar_select %p331, %s330, 47
        %s333 = smul.addr %s332, 8
        %s334 = scalar_lea.vmem %s2, %s333
        %s335 = smul.u32 16, %s23
      $region40: #{_forward_jit.4} parent=31 // pred_fallthru
        _
      // Predicated region
      $region41: #{_forward_jit.4} parent=31 // pred_check
        %p336 = pneg %p191
      $region42: #{_forward_jit.4} parent=31 // pred_check_branch
        %338 = sbr.rel (%p336) target = $region44
      $region43: #{_forward_jit.4} parent=31 // pred_region
        %s339 = smul.u32 16, %s23
        %p340 = scmp.lt.s32.totalorder %s339, 47
        %s341 = scalar_select %p340, %s339, 47
        %s342 = smul.addr %s341, 8
        %s343 = scalar_lea.vmem %s6, %s342
        %s344 = smul.u32 16, %s23
      $region44: #{_forward_jit.4} parent=31 // pred_fallthru
        _
    $region32: #{_forward_jit.4} parent=5 // pred_fallthru
      _
    %p345 = scmp.le.s32.totalorder 1, %s16
    %p346 = scmp.lt.s32.totalorder %s16, 4
    %p347 = pnand %p345, %p346
    %p348 = pneg %p347
    // Predicated region
    $region45: #{_forward_jit.4} parent=5 // pred_check
      _
    $region46: #{_forward_jit.4} parent=5 // pred_check_branch
      %350 = sbr.rel (%p347) target = $region48
    $region47: #{_forward_jit.4} parent=5 // pred_region
      %s351 = ssub.s32 %s16, 1
      %s352 = smul.u32 16, %s25
      %s353 = smul.u32 2, %s26
      %p354 = scmp.lt.s32.totalorder %s352, 47
      %s355 = scalar_select %p354, %s352, 47
      %p356 = scmp.lt.s32.totalorder %s353, 1
      %s357 = scalar_select %p356, %s353, 1
      %s358 = smul.addr %s355, 2
      %s359 = sadd.s32 %s357, %s358
      %s360 = smul.addr %s359, 4
      %s361 = scalar_lea.vmem %s0, %s360
      %p362 = pneg %p56
      %p363 = pneg %p53
      %s364 = smul.u32 32, %s26
      %p365 = scmp.lt.s32.totalorder %s364, 31
      %s366 = scalar_select %p365, %s364, 31
      %s367 = smul.addr %s366, 4
      %s368 = scalar_lea.vmem %s1, %s367
      %p369 = pneg %p82
      %p370 = pneg %p79
      %s371 = smul.u32 16, %s25
      %p372 = scmp.lt.s32.totalorder %s371, 47
      %s373 = scalar_select %p372, %s371, 47
      %s374 = smul.addr %s373, 8
      %s375 = scalar_lea.vmem %s2, %s374
      %p376 = pneg %p108
      %p377 = pneg %p105
      %p378 = pneg %p129
      %p379 = pneg %p126
      %p380 = pneg %p150
      %p381 = pneg %p147
      %p382 = pneg %p171
      %p383 = pneg %p168
      %s384 = smul.u32 16, %s25
      %p385 = scmp.lt.s32.totalorder %s384, 47
      %s386 = scalar_select %p385, %s384, 47
      %s387 = smul.addr %s386, 8
      %s388 = scalar_lea.vmem %s6, %s387
      %p389 = pneg %p197
      %p390 = pneg %p194
      %p391 = pneg %p223
      %p392 = pneg %p220
      %s393 = smul.u32 16, %s25
      %p394 = scmp.lt.s32.totalorder %s393, 47
      %s395 = scalar_select %p394, %s393, 47
      %s396 = smul.addr %s395, 8
      %s397 = scalar_lea.vmem %s7, %s396
      %p398 = pneg %p249
      %p399 = pneg %p246
      %s400 = smul.u32 16, %s25
      %p401 = scmp.lt.s32.totalorder %s400, 47
      %s402 = scalar_select %p401, %s400, 47
      %s403 = smul.addr %s402, 4
      %s404 = scalar_lea.vmem %s8, %s403
      %p405 = pneg %p275
      %p406 = pneg %p272
      %s407 = smul.u32 16, %s25
      %p408 = scmp.lt.s32.totalorder %s407, 47
      %s409 = scalar_select %p408, %s407, 47
      %s410 = smul.addr %s409, 8
      %s411 = scalar_lea.vmem %s9, %s410
      %s412 = smul.u32 16, %s25
      %s413 = smul.u32 2, %s26
      %p414 = scmp.lt.s32.totalorder %s412, 47
      %s415 = scalar_select %p414, %s412, 47
      %p416 = scmp.lt.s32.totalorder %s413, 1
      %s417 = scalar_select %p416, %s413, 1
      %s418 = smul.addr %s415, 2
      %s419 = sadd.s32 %s417, %s418
      %s420 = smul.addr %s419, 4
      %s421 = scalar_lea.vmem %s0, %s420
      %s422 = smul.u32 16, %s25
      %s423 = smul.u32 2, %s26
      %s424 = smul.u32 32, %s26
      %p425 = scmp.lt.s32.totalorder %s424, 31
      %s426 = scalar_select %p425, %s424, 31
      %s427 = smul.addr %s426, 4
      %s428 = scalar_lea.vmem %s1, %s427
      %s429 = smul.u32 32, %s26
      %s430 = smul.u32 16, %s25
      %p431 = scmp.lt.s32.totalorder %s430, 47
      %s432 = scalar_select %p431, %s430, 47
      %s433 = smul.addr %s432, 8
      %s434 = scalar_lea.vmem %s2, %s433
      %s435 = smul.u32 16, %s25
      %s436 = smul.u32 16, %s25
      %p437 = scmp.lt.s32.totalorder %s436, 47
      %s438 = scalar_select %p437, %s436, 47
      %s439 = smul.addr %s438, 8
      %s440 = scalar_lea.vmem %s6, %s439
      %s441 = smul.u32 16, %s25
      %s442 = smul.u32 16, %s25
      %p443 = scmp.lt.s32.totalorder %s442, 47
      %s444 = scalar_select %p443, %s442, 47
      %s445 = smul.addr %s444, 8
      %s446 = scalar_lea.vmem %s7, %s445
      %s447 = smul.u32 16, %s25
      %s448 = smul.u32 16, %s25
      %p449 = scmp.lt.s32.totalorder %s448, 47
      %s450 = scalar_select %p449, %s448, 47
      %s451 = smul.addr %s450, 4
      %s452 = scalar_lea.vmem %s8, %s451
      %s453 = smul.u32 16, %s25
      %s454 = smul.u32 16, %s25
      %p455 = scmp.lt.s32.totalorder %s454, 47
      %s456 = scalar_select %p455, %s454, 47
      %s457 = smul.addr %s456, 8
      %s458 = scalar_lea.vmem %s9, %s457
      %s459 = smul.u32 16, %s25
      %v461 = vld [vmem:[%s421] sm:$0xff]
      %v462 = vld [vmem:[%s421 + $0x8] sm:$0xff]
      %v463 = vld [vmem:[%s421 + $0x10] sm:$0xff]
      %v464 = vld [vmem:[%s421 + $0x18] sm:$0xff]
      %v465 = vld [vmem:[%s421 + $0x20] sm:$0xff]
      %v466 = vld [vmem:[%s421 + $0x28] sm:$0xff]
      %v467 = vld [vmem:[%s421 + $0x30] sm:$0xff]
      %v468 = vld [vmem:[%s421 + $0x38] sm:$0xff]
      %v469 = vld [vmem:[%s421 + $0x40] sm:$0xff]
      %v470 = vld [vmem:[%s421 + $0x48] sm:$0xff]
      %v471 = vld [vmem:[%s421 + $0x50] sm:$0xff]
      %v472 = vld [vmem:[%s421 + $0x58] sm:$0xff]
      %v473 = vld [vmem:[%s421 + $0x60] sm:$0xff]
      %v474 = vld [vmem:[%s421 + $0x68] sm:$0xff]
      %v475 = vld [vmem:[%s421 + $0x70] sm:$0xff]
      %v476 = vld [vmem:[%s421 + $0x78] sm:$0xff]
      %v477 = vld [vmem:[%s428] sm:$0xf]
      %v478 = vld [vmem:[%s428 + $0x4] sm:$0xf]
      %v479 = vld [vmem:[%s428 + $0x8] sm:$0xf]
      %v480 = vld [vmem:[%s428 + $0xc] sm:$0xf]
      %v481 = vld [vmem:[%s428 + $0x10] sm:$0xf]
      %v482 = vld [vmem:[%s428 + $0x14] sm:$0xf]
      %v483 = vld [vmem:[%s428 + $0x18] sm:$0xf]
      %v484 = vld [vmem:[%s428 + $0x1c] sm:$0xf]
      %v485 = vld [vmem:[%s428 + $0x20] sm:$0xf]
      %v486 = vld [vmem:[%s428 + $0x24] sm:$0xf]
      %v487 = vld [vmem:[%s428 + $0x28] sm:$0xf]
      %v488 = vld [vmem:[%s428 + $0x2c] sm:$0xf]
      %v489 = vld [vmem:[%s428 + $0x30] sm:$0xf]
      %v490 = vld [vmem:[%s428 + $0x34] sm:$0xf]
      %v491 = vld [vmem:[%s428 + $0x38] sm:$0xf]
      %v492 = vld [vmem:[%s428 + $0x3c] sm:$0xf]
      %v493 = vld [vmem:[%s428 + $0x40] sm:$0xf]
      %v494 = vld [vmem:[%s428 + $0x44] sm:$0xf]
      %v495 = vld [vmem:[%s428 + $0x48] sm:$0xf]
      %v496 = vld [vmem:[%s428 + $0x4c] sm:$0xf]
      %v497 = vld [vmem:[%s428 + $0x50] sm:$0xf]
      %v498 = vld [vmem:[%s428 + $0x54] sm:$0xf]
      %v499 = vld [vmem:[%s428 + $0x58] sm:$0xf]
      %v500 = vld [vmem:[%s428 + $0x5c] sm:$0xf]
      %v501 = vld [vmem:[%s428 + $0x60] sm:$0xf]
      %v502 = vld [vmem:[%s428 + $0x64] sm:$0xf]
      %v503 = vld [vmem:[%s428 + $0x68] sm:$0xf]
      %v504 = vld [vmem:[%s428 + $0x6c] sm:$0xf]
      %v505 = vld [vmem:[%s428 + $0x70] sm:$0xf]
      %v506 = vld [vmem:[%s428 + $0x74] sm:$0xf]
      %v507 = vld [vmem:[%s428 + $0x78] sm:$0xf]
      %v508 = vld [vmem:[%s428 + $0x7c] sm:$0xf]
      %v525 = vunpack.c.l.b16 %v461
      %v526 = vunpack.c.h.b16 %v461
      %v527 = vunpack.c.l.b16 %v462
      %v528 = vunpack.c.h.b16 %v462
      %v529 = vunpack.c.l.b16 %v463
      %v530 = vunpack.c.h.b16 %v463
      %v531 = vunpack.c.l.b16 %v464
      %v532 = vunpack.c.h.b16 %v464
      %v533 = vunpack.c.l.b16 %v465
      %v534 = vunpack.c.h.b16 %v465
      %v535 = vunpack.c.l.b16 %v466
      %v536 = vunpack.c.h.b16 %v466
      %v537 = vunpack.c.l.b16 %v467
      %v538 = vunpack.c.h.b16 %v467
      %v539 = vunpack.c.l.b16 %v468
      %v540 = vunpack.c.h.b16 %v468
      %v541 = vunpack.c.l.b16 %v469
      %v542 = vunpack.c.h.b16 %v469
      %v543 = vunpack.c.l.b16 %v470
      %v544 = vunpack.c.h.b16 %v470
      %v545 = vunpack.c.l.b16 %v471
      %v546 = vunpack.c.h.b16 %v471
      %v547 = vunpack.c.l.b16 %v472
      %v548 = vunpack.c.h.b16 %v472
      %v549 = vunpack.c.l.b16 %v473
      %v550 = vunpack.c.h.b16 %v473
      %v551 = vunpack.c.l.b16 %v474
      %v552 = vunpack.c.h.b16 %v474
      %v553 = vunpack.c.l.b16 %v475
      %v554 = vunpack.c.h.b16 %v475
      %v555 = vunpack.c.l.b16 %v476
      %v556 = vunpack.c.h.b16 %v476
      %v557 = vpack.c.b16 %v527, %v525
      %v558 = vpack.c.b16 %v528, %v526
      %v559 = vpack.c.b16 %v531, %v529
      %v560 = vpack.c.b16 %v532, %v530
      %v561 = vpack.c.b16 %v535, %v533
      %v562 = vpack.c.b16 %v536, %v534
      %v563 = vpack.c.b16 %v539, %v537
      %v564 = vpack.c.b16 %v540, %v538
      %v565 = vpack.c.b16 %v543, %v541
      %v566 = vpack.c.b16 %v544, %v542
      %v567 = vpack.c.b16 %v547, %v545
      %v568 = vpack.c.b16 %v548, %v546
      %v569 = vpack.c.b16 %v551, %v549
      %v570 = vpack.c.b16 %v552, %v550
      %v571 = vpack.c.b16 %v555, %v553
      %v572 = vpack.c.b16 %v556, %v554
      %v621 = vunpack.c.l.b16 %v477
      %v622 = vunpack.c.l.b16 %v478
      %v623 = vunpack.c.l.b16 %v479
      %v624 = vunpack.c.l.b16 %v480
      %v625 = vunpack.c.l.b16 %v481
      %v626 = vunpack.c.l.b16 %v482
      %v627 = vunpack.c.l.b16 %v483
      %v628 = vunpack.c.l.b16 %v484
      %v629 = vunpack.c.l.b16 %v485
      %v630 = vunpack.c.l.b16 %v486
      %v631 = vunpack.c.l.b16 %v487
      %v632 = vunpack.c.l.b16 %v488
      %v633 = vunpack.c.l.b16 %v489
      %v634 = vunpack.c.l.b16 %v490
      %v635 = vunpack.c.l.b16 %v491
      %v636 = vunpack.c.l.b16 %v492
      %v637 = vunpack.c.l.b16 %v493
      %v638 = vunpack.c.l.b16 %v494
      %v639 = vunpack.c.l.b16 %v495
      %v640 = vunpack.c.l.b16 %v496
      %v641 = vunpack.c.l.b16 %v497
      %v642 = vunpack.c.l.b16 %v498
      %v643 = vunpack.c.l.b16 %v499
      %v644 = vunpack.c.l.b16 %v500
      %v645 = vunpack.c.l.b16 %v501
      %v646 = vunpack.c.l.b16 %v502
      %v647 = vunpack.c.l.b16 %v503
      %v648 = vunpack.c.l.b16 %v504
      %v649 = vunpack.c.l.b16 %v505
      %v650 = vunpack.c.l.b16 %v506
      %v651 = vunpack.c.l.b16 %v507
      %v652 = vunpack.c.l.b16 %v508
      %v653 = vpack.c.b16 %v622, %v621
      %v654 = vpack.c.b16 %v624, %v623
      %v655 = vpack.c.b16 %v626, %v625
      %v656 = vpack.c.b16 %v628, %v627
      %v657 = vpack.c.b16 %v630, %v629
      %v658 = vpack.c.b16 %v632, %v631
      %v659 = vpack.c.b16 %v634, %v633
      %v660 = vpack.c.b16 %v636, %v635
      %v661 = vpack.c.b16 %v638, %v637
      %v662 = vpack.c.b16 %v640, %v639
      %v663 = vpack.c.b16 %v642, %v641
      %v664 = vpack.c.b16 %v644, %v643
      %v665 = vpack.c.b16 %v646, %v645
      %v666 = vpack.c.b16 %v648, %v647
      %v667 = vpack.c.b16 %v650, %v649
      %v668 = vpack.c.b16 %v652, %v651
      %685 = vmatprep.subr.bf16.mxu0 0
      %686 = vmatpush1.bf16.msra.mxu0 %v653
      %687 = vmatprep.subr.bf16.mxu0 0
      %688 = vmatpush1.bf16.msra.mxu0 %v654
      %689 = vmatprep.subr.bf16.mxu0 0
      %690 = vmatpush1.bf16.msra.mxu0 %v655
      %691 = vmatprep.subr.bf16.mxu0 0
      %692 = vmatpush1.bf16.msra.mxu0 %v656
      %693 = vmatprep.subr.bf16.mxu0 0
      %694 = vmatpush1.bf16.msra.mxu0 %v657
      %695 = vmatprep.subr.bf16.mxu0 0
      %696 = vmatpush1.bf16.msra.mxu0 %v658
      %697 = vmatprep.subr.bf16.mxu0 0
      %698 = vmatpush1.bf16.msra.mxu0 %v659
      %699 = vmatprep.subr.bf16.mxu0 0
      %700 = vmatpush1.bf16.msra.mxu0 %v660
      %701 = vmatprep.subr.bf16.mxu0 0
      %702 = vmatpush1.bf16.msra.mxu0 %v661
      %703 = vmatprep.subr.bf16.mxu0 0
      %704 = vmatpush1.bf16.msra.mxu0 %v662
      %705 = vmatprep.subr.bf16.mxu0 0
      %706 = vmatpush1.bf16.msra.mxu0 %v663
      %707 = vmatprep.subr.bf16.mxu0 0
      %708 = vmatpush1.bf16.msra.mxu0 %v664
      %709 = vmatprep.subr.bf16.mxu0 0
      %710 = vmatpush1.bf16.msra.mxu0 %v665
      %711 = vmatprep.subr.bf16.mxu0 0
      %712 = vmatpush1.bf16.msra.mxu0 %v666
      %713 = vmatprep.subr.bf16.mxu0 0
      %714 = vmatpush1.bf16.msra.mxu0 %v667
      %715 = vmatprep.subr.bf16.mxu0 0
      %716 = vmatpush1.bf16.msra.mxu0 %v668
      %717 = vmatprep.mubr.bf16.mxu0 %v558
      %718 = vmatmul.mubr.bf16.gmra.mrb[0].mxu0 %v557
      %v719 = vpop.f32.mrb[0].mxu0
      %v720 = vadd.f32 0.0, %v719
      %v721 = vpop.f32.mrb[0].mxu0
      %v722 = vpop.f32.mrb[0].mxu0
      %v723 = vadd.f32 0.0, %v722
      %v724 = vpop.f32.mrb[0].mxu0
      %725 = vmatprep.mubr.bf16.mxu0 %v560
      %726 = vmatmul.mubr.bf16.gmra.mrb[0].mxu0 %v559
      %v727 = vpop.f32.mrb[0].mxu0
      %v728 = vadd.f32 0.0, %v727
      %v729 = vpop.f32.mrb[0].mxu0
      %v730 = vpop.f32.mrb[0].mxu0
      %v731 = vadd.f32 0.0, %v730
      %v732 = vpop.f32.mrb[0].mxu0
      %733 = vmatprep.mubr.bf16.mxu0 %v562
      %734 = vmatmul.mubr.bf16.gmra.mrb[0].mxu0 %v561
      %v735 = vpop.f32.mrb[0].mxu0
      %v736 = vadd.f32 0.0, %v735
      %v737 = vpop.f32.mrb[0].mxu0
      %v738 = vpop.f32.mrb[0].mxu0
      %v739 = vadd.f32 0.0, %v738
      %v740 = vpop.f32.mrb[0].mxu0
      %741 = vmatprep.mubr.bf16.mxu0 %v564
      %742 = vmatmul.mubr.bf16.gmra.mrb[0].mxu0 %v563
      %v743 = vpop.f32.mrb[0].mxu0
      %v744 = vadd.f32 0.0, %v743
      %v745 = vpop.f32.mrb[0].mxu0
      %v746 = vpop.f32.mrb[0].mxu0
      %v747 = vadd.f32 0.0, %v746
      %v748 = vpop.f32.mrb[0].mxu0
      %749 = vmatprep.mubr.bf16.mxu0 %v566
      %750 = vmatmul.mubr.bf16.gmra.mrb[0].mxu0 %v565
      %v751 = vpop.f32.mrb[0].mxu0
      %v752 = vadd.f32 0.0, %v751
      %v753 = vpop.f32.mrb[0].mxu0
      %v754 = vpop.f32.mrb[0].mxu0
      %v755 = vadd.f32 0.0, %v754
      %v756 = vpop.f32.mrb[0].mxu0
      %757 = vmatprep.mubr.bf16.mxu0 %v568
      %758 = vmatmul.mubr.bf16.gmra.mrb[0].mxu0 %v567
      %v759 = vpop.f32.mrb[0].mxu0
      %v760 = vadd.f32 0.0, %v759
      %v761 = vpop.f32.mrb[0].mxu0
      %v762 = vpop.f32.mrb[0].mxu0
      %v763 = vadd.f32 0.0, %v762
      %v764 = vpop.f32.mrb[0].mxu0
      %765 = vmatprep.mubr.bf16.mxu0 %v570
      %766 = vmatmul.mubr.bf16.gmra.mrb[0].mxu0 %v569
      %v767 = vpop.f32.mrb[0].mxu0
      %v768 = vadd.f32 0.0, %v767
      %v769 = vpop.f32.mrb[0].mxu0
      %v770 = vpop.f32.mrb[0].mxu0
      %v771 = vadd.f32 0.0, %v770
      %v772 = vpop.f32.mrb[0].mxu0
      %773 = vmatprep.mubr.bf16.mxu0 %v572
      %774 = vmatmul.mubr.bf16.gmra.mrb[0].mxu0 %v571
      %v775 = vpop.f32.mrb[0].mxu0
      %v776 = vadd.f32 0.0, %v775
      %v777 = vpop.f32.mrb[0].mxu0
      %v778 = vpop.f32.mrb[0].mxu0
      %v779 = vadd.f32 0.0, %v778
      %v780 = vpop.f32.mrb[0].mxu0
      %781 = vdwg.mxu0
      %p782 = scmp.eq.s32.totalorder %s26, 0
      // Predicated region
      $region49: #{_forward_jit.4} parent=47 // pred_check
        %p783 = pneg %p782
      $region50: #{_forward_jit.4} parent=47 // pred_check_branch
        %785 = sbr.rel (%p783) target = $region52
      $region51: #{_forward_jit.4} parent=47 // pred_region
        %786 = vst [vmem:[%s446] sm:$0xff] %v720
        %787 = vst [vmem:[%s446 + $0x8] sm:$0xff] %v723
        %788 = vst [vmem:[%s446 + $0x10] sm:$0xff] %v728
        %789 = vst [vmem:[%s446 + $0x18] sm:$0xff] %v731
        %790 = vst [vmem:[%s446 + $0x20] sm:$0xff] %v736
        %791 = vst [vmem:[%s446 + $0x28] sm:$0xff] %v739
        %792 = vst [vmem:[%s446 + $0x30] sm:$0xff] %v744
        %793 = vst [vmem:[%s446 + $0x38] sm:$0xff] %v747
        %794 = vst [vmem:[%s446 + $0x40] sm:$0xff] %v752
        %795 = vst [vmem:[%s446 + $0x48] sm:$0xff] %v755
        %796 = vst [vmem:[%s446 + $0x50] sm:$0xff] %v760
        %797 = vst [vmem:[%s446 + $0x58] sm:$0xff] %v763
        %798 = vst [vmem:[%s446 + $0x60] sm:$0xff] %v768
        %799 = vst [vmem:[%s446 + $0x68] sm:$0xff] %v771
        %800 = vst [vmem:[%s446 + $0x70] sm:$0xff] %v776
        %801 = vst [vmem:[%s446 + $0x78] sm:$0xff] %v779
      $region52: #{_forward_jit.4} parent=47 // pred_fallthru
        _
      %p802 = scmp.gt.s32.totalorder %s26, 0
      // Predicated region
      $region53: #{_forward_jit.4} parent=47 // pred_check
        %p803 = pneg %p802
      $region54: #{_forward_jit.4} parent=47 // pred_check_branch
        %805 = sbr.rel (%p803) target = $region56
      $region55: #{_forward_jit.4} parent=47 // pred_region
        %v806 = vld [vmem:[%s446] sm:$0xff]
        %v807 = vld [vmem:[%s446 + $0x8] sm:$0xff]
        %v808 = vld [vmem:[%s446 + $0x10] sm:$0xff]
        %v809 = vld [vmem:[%s446 + $0x18] sm:$0xff]
        %v810 = vld [vmem:[%s446 + $0x20] sm:$0xff]
        %v811 = vld [vmem:[%s446 + $0x28] sm:$0xff]
        %v812 = vld [vmem:[%s446 + $0x30] sm:$0xff]
        %v813 = vld [vmem:[%s446 + $0x38] sm:$0xff]
        %v814 = vld [vmem:[%s446 + $0x40] sm:$0xff]
        %v815 = vld [vmem:[%s446 + $0x48] sm:$0xff]
        %v816 = vld [vmem:[%s446 + $0x50] sm:$0xff]
        %v817 = vld [vmem:[%s446 + $0x58] sm:$0xff]
        %v818 = vld [vmem:[%s446 + $0x60] sm:$0xff]
        %v819 = vld [vmem:[%s446 + $0x68] sm:$0xff]
        %v820 = vld [vmem:[%s446 + $0x70] sm:$0xff]
        %v821 = vld [vmem:[%s446 + $0x78] sm:$0xff]
        %v822 = vadd.f32 %v806, %v720
        %v823 = vadd.f32 %v807, %v723
        %v824 = vadd.f32 %v808, %v728
        %v825 = vadd.f32 %v809, %v731
        %v826 = vadd.f32 %v810, %v736
        %v827 = vadd.f32 %v811, %v739
        %v828 = vadd.f32 %v812, %v744
        %v829 = vadd.f32 %v813, %v747
        %v830 = vadd.f32 %v814, %v752
        %v831 = vadd.f32 %v815, %v755
        %v832 = vadd.f32 %v816, %v760
        %v833 = vadd.f32 %v817, %v763
        %v834 = vadd.f32 %v818, %v768
        %v835 = vadd.f32 %v819, %v771
        %v836 = vadd.f32 %v820, %v776
        %v837 = vadd.f32 %v821, %v779
        %838 = vst [vmem:[%s446] sm:$0xff] %v822
        %839 = vst [vmem:[%s446 + $0x8] sm:$0xff] %v823
        %840 = vst [vmem:[%s446 + $0x10] sm:$0xff] %v824
        %841 = vst [vmem:[%s446 + $0x18] sm:$0xff] %v825
        %842 = vst [vmem:[%s446 + $0x20] sm:$0xff] %v826
        %843 = vst [vmem:[%s446 + $0x28] sm:$0xff] %v827
        %844 = vst [vmem:[%s446 + $0x30] sm:$0xff] %v828
        %845 = vst [vmem:[%s446 + $0x38] sm:$0xff] %v829
        %846 = vst [vmem:[%s446 + $0x40] sm:$0xff] %v830
        %847 = vst [vmem:[%s446 + $0x48] sm:$0xff] %v831
        %848 = vst [vmem:[%s446 + $0x50] sm:$0xff] %v832
        %849 = vst [vmem:[%s446 + $0x58] sm:$0xff] %v833
        %850 = vst [vmem:[%s446 + $0x60] sm:$0xff] %v834
        %851 = vst [vmem:[%s446 + $0x68] sm:$0xff] %v835
        %852 = vst [vmem:[%s446 + $0x70] sm:$0xff] %v836
        %853 = vst [vmem:[%s446 + $0x78] sm:$0xff] %v837
      $region56: #{_forward_jit.4} parent=47 // pred_fallthru
        _
      // Predicated region
      $region57: #{_forward_jit.4} parent=47 // pred_check
        %p854 = pneg %p782
      $region58: #{_forward_jit.4} parent=47 // pred_check_branch
        %856 = sbr.rel (%p854) target = $region60
      $region59: #{_forward_jit.4} parent=47 // pred_region
        %v857 = vld [vmem:[%s446] sm:$0xff]
        %v858 = vld [vmem:[%s446 + $0x8] sm:$0xff]
        %v859 = vld [vmem:[%s446 + $0x10] sm:$0xff]
        %v860 = vld [vmem:[%s446 + $0x18] sm:$0xff]
        %v861 = vld [vmem:[%s446 + $0x20] sm:$0xff]
        %v862 = vld [vmem:[%s446 + $0x28] sm:$0xff]
        %v863 = vld [vmem:[%s446 + $0x30] sm:$0xff]
        %v864 = vld [vmem:[%s446 + $0x38] sm:$0xff]
        %v865 = vld [vmem:[%s446 + $0x40] sm:$0xff]
        %v866 = vld [vmem:[%s446 + $0x48] sm:$0xff]
        %v867 = vld [vmem:[%s446 + $0x50] sm:$0xff]
        %v868 = vld [vmem:[%s446 + $0x58] sm:$0xff]
        %v869 = vld [vmem:[%s446 + $0x60] sm:$0xff]
        %v870 = vld [vmem:[%s446 + $0x68] sm:$0xff]
        %v871 = vld [vmem:[%s446 + $0x70] sm:$0xff]
        %v872 = vld [vmem:[%s446 + $0x78] sm:$0xff]
        %v873 = vld [vmem:[%s434] sm:$0xff]
        %v874 = vld [vmem:[%s434 + $0x8] sm:$0xff]
        %v875 = vld [vmem:[%s434 + $0x10] sm:$0xff]
        %v876 = vld [vmem:[%s434 + $0x18] sm:$0xff]
        %v877 = vld [vmem:[%s434 + $0x20] sm:$0xff]
        %v878 = vld [vmem:[%s434 + $0x28] sm:$0xff]
        %v879 = vld [vmem:[%s434 + $0x30] sm:$0xff]
        %v880 = vld [vmem:[%s434 + $0x38] sm:$0xff]
        %v881 = vld [vmem:[%s434 + $0x40] sm:$0xff]
        %v882 = vld [vmem:[%s434 + $0x48] sm:$0xff]
        %v883 = vld [vmem:[%s434 + $0x50] sm:$0xff]
        %v884 = vld [vmem:[%s434 + $0x58] sm:$0xff]
        %v885 = vld [vmem:[%s434 + $0x60] sm:$0xff]
        %v886 = vld [vmem:[%s434 + $0x68] sm:$0xff]
        %v887 = vld [vmem:[%s434 + $0x70] sm:$0xff]
        %v888 = vld [vmem:[%s434 + $0x78] sm:$0xff]
        %v889 = vmul.f32 %v857, %v873
        %v890 = vmul.f32 %v858, %v874
        %v891 = vmul.f32 %v859, %v875
        %v892 = vmul.f32 %v860, %v876
        %v893 = vmul.f32 %v861, %v877
        %v894 = vmul.f32 %v862, %v878
        %v895 = vmul.f32 %v863, %v879
        %v896 = vmul.f32 %v864, %v880
        %v897 = vmul.f32 %v865, %v881
        %v898 = vmul.f32 %v866, %v882
        %v899 = vmul.f32 %v867, %v883
        %v900 = vmul.f32 %v868, %v884
        %v901 = vmul.f32 %v869, %v885
        %v902 = vmul.f32 %v870, %v886
        %v903 = vmul.f32 %v871, %v887
        %v904 = vmul.f32 %v872, %v888
        %v905 = vpack.c.bf16 %v858, %v857
        %v906 = vpack.c.bf16 %v860, %v859
        %v907 = vpack.c.bf16 %v862, %v861
        %v908 = vpack.c.bf16 %v864, %v863
        %v909 = vpack.c.bf16 %v866, %v865
        %v910 = vpack.c.bf16 %v868, %v867
        %v911 = vpack.c.bf16 %v870, %v869
        %v912 = vpack.c.bf16 %v872, %v871
        %v913 = vld [vmem:[%s3] sm:$0xf]
        %v914 = vld [vmem:[%s3 + $0x4] sm:$0xf]
        %v915 = vld [vmem:[%s3 + $0x8] sm:$0xf]
        %v916 = vld [vmem:[%s3 + $0xc] sm:$0xf]
        %v917 = vld [vmem:[%s3 + $0x10] sm:$0xf]
        %v918 = vld [vmem:[%s3 + $0x14] sm:$0xf]
        %v919 = vld [vmem:[%s3 + $0x18] sm:$0xf]
        %v920 = vld [vmem:[%s3 + $0x1c] sm:$0xf]
        %v921 = vld [vmem:[%s3 + $0x20] sm:$0xf]
        %v922 = vld [vmem:[%s3 + $0x24] sm:$0xf]
        %v923 = vld [vmem:[%s3 + $0x28] sm:$0xf]
        %v924 = vld [vmem:[%s3 + $0x2c] sm:$0xf]
        %v925 = vld [vmem:[%s3 + $0x30] sm:$0xf]
        %v926 = vld [vmem:[%s3 + $0x34] sm:$0xf]
        %v927 = vld [vmem:[%s3 + $0x38] sm:$0xf]
        %v928 = vld [vmem:[%s3 + $0x3c] sm:$0xf]
        %v929 = vpack.c.bf16 %v890, %v889
        %v930 = vpack.c.bf16 %v892, %v891
        %v931 = vpack.c.bf16 %v894, %v893
        %v932 = vpack.c.bf16 %v896, %v895
        %v933 = vpack.c.bf16 %v898, %v897
        %v934 = vpack.c.bf16 %v900, %v899
        %v935 = vpack.c.bf16 %v902, %v901
        %v936 = vpack.c.bf16 %v904, %v903
        %v937 = vld [vmem:[%s4] sm:$0xf]
        %v938 = vld [vmem:[%s4 + $0x4] sm:$0xf]
        %v939 = vld [vmem:[%s4 + $0x8] sm:$0xf]
        %v940 = vld [vmem:[%s4 + $0xc] sm:$0xf]
        %v941 = vld [vmem:[%s4 + $0x10] sm:$0xf]
        %v942 = vld [vmem:[%s4 + $0x14] sm:$0xf]
        %v943 = vld [vmem:[%s4 + $0x18] sm:$0xf]
        %v944 = vld [vmem:[%s4 + $0x1c] sm:$0xf]
        %v945 = vld [vmem:[%s4 + $0x20] sm:$0xf]
        %v946 = vld [vmem:[%s4 + $0x24] sm:$0xf]
        %v947 = vld [vmem:[%s4 + $0x28] sm:$0xf]
        %v948 = vld [vmem:[%s4 + $0x2c] sm:$0xf]
        %v949 = vld [vmem:[%s4 + $0x30] sm:$0xf]
        %v950 = vld [vmem:[%s4 + $0x34] sm:$0xf]
        %v951 = vld [vmem:[%s4 + $0x38] sm:$0xf]
        %v952 = vld [vmem:[%s4 + $0x3c] sm:$0xf]
        %v969 = vunpack.c.l.b16 %v937
        %v970 = vunpack.c.l.b16 %v938
        %v971 = vunpack.c.l.b16 %v939
        %v972 = vunpack.c.l.b16 %v940
        %v973 = vunpack.c.l.b16 %v941
        %v974 = vunpack.c.l.b16 %v942
        %v975 = vunpack.c.l.b16 %v943
        %v976 = vunpack.c.l.b16 %v944
        %v977 = vunpack.c.l.b16 %v945
        %v978 = vunpack.c.l.b16 %v946
        %v979 = vunpack.c.l.b16 %v947
        %v980 = vunpack.c.l.b16 %v948
        %v981 = vunpack.c.l.b16 %v949
        %v982 = vunpack.c.l.b16 %v950
        %v983 = vunpack.c.l.b16 %v951
        %v984 = vunpack.c.l.b16 %v952
        %v985 = vpack.c.b16 %v970, %v969
        %v986 = vpack.c.b16 %v972, %v971
        %v987 = vpack.c.b16 %v974, %v973
        %v988 = vpack.c.b16 %v976, %v975
        %v989 = vpack.c.b16 %v978, %v977
        %v990 = vpack.c.b16 %v980, %v979
        %v991 = vpack.c.b16 %v982, %v981
        %v992 = vpack.c.b16 %v984, %v983
        %1001 = vmatprep.subr.bf16.mxu0 0
        %1002 = vmatpush1.bf16.msra.mxu0 %v985
        %1003 = vmatprep.subr.bf16.mxu0 0
        %1004 = vmatpush1.bf16.msra.mxu0 %v986
        %1005 = vmatprep.subr.bf16.mxu0 0
        %1006 = vmatpush1.bf16.msra.mxu0 %v987
        %1007 = vmatprep.subr.bf16.mxu0 0
        %1008 = vmatpush1.bf16.msra.mxu0 %v988
        %1009 = vmatprep.subr.bf16.mxu0 0
        %1010 = vmatpush1.bf16.msra.mxu0 %v989
        %1011 = vmatprep.subr.bf16.mxu0 0
        %1012 = vmatpush1.bf16.msra.mxu0 %v990
        %1013 = vmatprep.subr.bf16.mxu0 0
        %1014 = vmatpush1.bf16.msra.mxu0 %v991
        %1015 = vmatprep.subr.bf16.mxu0 0
        %1016 = vmatpush1.bf16.msra.mxu0 %v992
        %1017 = vmatprep.subr.bf16.mxu0 0
        %1018 = vmatpush1.bf16.msra.mxu0 0
        %1019 = vmatprep.subr.bf16.mxu0 0
        %1020 = vmatpush1.bf16.msra.mxu0 0
        %1021 = vmatprep.subr.bf16.mxu0 0
        %1022 = vmatpush1.bf16.msra.mxu0 0
        %1023 = vmatprep.subr.bf16.mxu0 0
        %1024 = vmatpush1.bf16.msra.mxu0 0
        %1025 = vmatprep.subr.bf16.mxu0 0
        %1026 = vmatpush1.bf16.msra.mxu0 0
        %1027 = vmatprep.subr.bf16.mxu0 0
        %1028 = vmatpush1.bf16.msra.mxu0 0
        %1029 = vmatprep.subr.bf16.mxu0 0
        %1030 = vmatpush1.bf16.msra.mxu0 0
        %1031 = vmatprep.subr.bf16.mxu0 0
        %1032 = vmatpush1.bf16.msra.mxu0 0
        %1033 = vmatprep.mubr.bf16.mxu0 0
        %1034 = vmatmul.mubr.bf16.gmra.mrb[0].mxu0 %v929
        %v1035 = vpop.f32.mrb[0].mxu0
        %v1036 = vadd.f32 0.0, %v1035
        %v1037 = vpop.f32.mrb[0].mxu0
        %v1038 = vpop.f32.mrb[0].mxu0
        %v1039 = vadd.f32 0.0, %v1038
        %v1040 = vpop.f32.mrb[0].mxu0
        %1041 = vmatprep.mubr.bf16.mxu0 0
        %1042 = vmatmul.mubr.bf16.gmra.mrb[0].mxu0 %v930
        %v1043 = vpop.f32.mrb[0].mxu0
        %v1044 = vadd.f32 0.0, %v1043
        %v1045 = vpop.f32.mrb[0].mxu0
        %v1046 = vpop.f32.mrb[0].mxu0
        %v1047 = vadd.f32 0.0, %v1046
        %v1048 = vpop.f32.mrb[0].mxu0
        %1049 = vmatprep.mubr.bf16.mxu0 0
        %1050 = vmatmul.mubr.bf16.gmra.mrb[0].mxu0 %v931
        %v1051 = vpop.f32.mrb[0].mxu0
        %v1052 = vadd.f32 0.0, %v1051
        %v1053 = vpop.f32.mrb[0].mxu0
        %v1054 = vpop.f32.mrb[0].mxu0
        %v1055 = vadd.f32 0.0, %v1054
        %v1056 = vpop.f32.mrb[0].mxu0
        %1057 = vmatprep.mubr.bf16.mxu0 0
        %1058 = vmatmul.mubr.bf16.gmra.mrb[0].mxu0 %v932
        %v1059 = vpop.f32.mrb[0].mxu0
        %v1060 = vadd.f32 0.0, %v1059
        %v1061 = vpop.f32.mrb[0].mxu0
        %v1062 = vpop.f32.mrb[0].mxu0
        %v1063 = vadd.f32 0.0, %v1062
        %v1064 = vpop.f32.mrb[0].mxu0
        %1065 = vmatprep.mubr.bf16.mxu0 0
        %1066 = vmatmul.mubr.bf16.gmra.mrb[0].mxu0 %v933
        %v1067 = vpop.f32.mrb[0].mxu0
        %v1068 = vadd.f32 0.0, %v1067
        %v1069 = vpop.f32.mrb[0].mxu0
        %v1070 = vpop.f32.mrb[0].mxu0
        %v1071 = vadd.f32 0.0, %v1070
        %v1072 = vpop.f32.mrb[0].mxu0
        %1073 = vmatprep.mubr.bf16.mxu0 0
        %1074 = vmatmul.mubr.bf16.gmra.mrb[0].mxu0 %v934
        %v1075 = vpop.f32.mrb[0].mxu0
        %v1076 = vadd.f32 0.0, %v1075
        %v1077 = vpop.f32.mrb[0].mxu0
        %v1078 = vpop.f32.mrb[0].mxu0
        %v1079 = vadd.f32 0.0, %v1078
        %v1080 = vpop.f32.mrb[0].mxu0
        %1081 = vmatprep.mubr.bf16.mxu0 0
        %1082 = vmatmul.mubr.bf16.gmra.mrb[0].mxu0 %v935
        %v1083 = vpop.f32.mrb[0].mxu0
        %v1084 = vadd.f32 0.0, %v1083
        %v1085 = vpop.f32.mrb[0].mxu0
        %v1086 = vpop.f32.mrb[0].mxu0
        %v1087 = vadd.f32 0.0, %v1086
        %v1088 = vpop.f32.mrb[0].mxu0
        %1089 = vmatprep.mubr.bf16.mxu0 0
        %1090 = vmatmul.mubr.bf16.gmra.mrb[0].mxu0 %v936
        %v1091 = vpop.f32.mrb[0].mxu0
        %v1092 = vadd.f32 0.0, %v1091
        %v1093 = vpop.f32.mrb[0].mxu0
        %v1094 = vpop.f32.mrb[0].mxu0
        %v1095 = vadd.f32 0.0, %v1094
        %v1096 = vpop.f32.mrb[0].mxu0
        %1097 = vdwg.mxu0
        %v1114 = vunpack.c.l.b16 %v913
        %v1115 = vunpack.c.l.b16 %v914
        %v1116 = vunpack.c.l.b16 %v915
        %v1117 = vunpack.c.l.b16 %v916
        %v1118 = vunpack.c.l.b16 %v917
        %v1119 = vunpack.c.l.b16 %v918
        %v1120 = vunpack.c.l.b16 %v919
        %v1121 = vunpack.c.l.b16 %v920
        %v1122 = vunpack.c.l.b16 %v921
        %v1123 = vunpack.c.l.b16 %v922
        %v1124 = vunpack.c.l.b16 %v923
        %v1125 = vunpack.c.l.b16 %v924
        %v1126 = vunpack.c.l.b16 %v925
        %v1127 = vunpack.c.l.b16 %v926
        %v1128 = vunpack.c.l.b16 %v927
        %v1129 = vunpack.c.l.b16 %v928
        %v1130 = vpack.c.b16 %v1115, %v1114
        %v1131 = vpack.c.b16 %v1117, %v1116
        %v1132 = vpack.c.b16 %v1119, %v1118
        %v1133 = vpack.c.b16 %v1121, %v1120
        %v1134 = vpack.c.b16 %v1123, %v1122
        %v1135 = vpack.c.b16 %v1125, %v1124
        %v1136 = vpack.c.b16 %v1127, %v1126
        %v1137 = vpack.c.b16 %v1129, %v1128
        %1146 = vmatprep.subr.bf16.mxu0 0
        %1147 = vmatpush1.bf16.msra.mxu0 %v1130
        %1148 = vmatprep.subr.bf16.mxu0 0
        %1149 = vmatpush1.bf16.msra.mxu0 %v1131
        %1150 = vmatprep.subr.bf16.mxu0 0
        %1151 = vmatpush1.bf16.msra.mxu0 %v1132
        %1152 = vmatprep.subr.bf16.mxu0 0
        %1153 = vmatpush1.bf16.msra.mxu0 %v1133
        %1154 = vmatprep.subr.bf16.mxu0 0
        %1155 = vmatpush1.bf16.msra.mxu0 %v1134
        %1156 = vmatprep.subr.bf16.mxu0 0
        %1157 = vmatpush1.bf16.msra.mxu0 %v1135
        %1158 = vmatprep.subr.bf16.mxu0 0
        %1159 = vmatpush1.bf16.msra.mxu0 %v1136
        %1160 = vmatprep.subr.bf16.mxu0 0
        %1161 = vmatpush1.bf16.msra.mxu0 %v1137
        %1162 = vmatprep.subr.bf16.mxu0 0
        %1163 = vmatpush1.bf16.msra.mxu0 0
        %1164 = vmatprep.subr.bf16.mxu0 0
        %1165 = vmatpush1.bf16.msra.mxu0 0
        %1166 = vmatprep.subr.bf16.mxu0 0
        %1167 = vmatpush1.bf16.msra.mxu0 0
        %1168 = vmatprep.subr.bf16.mxu0 0
        %1169 = vmatpush1.bf16.msra.mxu0 0
        %1170 = vmatprep.subr.bf16.mxu0 0
        %1171 = vmatpush1.bf16.msra.mxu0 0
        %1172 = vmatprep.subr.bf16.mxu0 0
        %1173 = vmatpush1.bf16.msra.mxu0 0
        %1174 = vmatprep.subr.bf16.mxu0 0
        %1175 = vmatpush1.bf16.msra.mxu0 0
        %1176 = vmatprep.subr.bf16.mxu0 0
        %1177 = vmatpush1.bf16.msra.mxu0 0
        %1178 = vmatprep.mubr.bf16.mxu0 0
        %1179 = vmatmul.mubr.bf16.gmra.mrb[0].mxu0 %v905
        %v1180 = vpop.f32.mrb[0].mxu0
        %v1181 = vadd.f32 %v1036, %v1180
        %v1182 = vpop.f32.mrb[0].mxu0
        %v1183 = vpop.f32.mrb[0].mxu0
        %v1184 = vadd.f32 %v1039, %v1183
        %v1185 = vpop.f32.mrb[0].mxu0
        %1186 = vmatprep.mubr.bf16.mxu0 0
        %1187 = vmatmul.mubr.bf16.gmra.mrb[0].mxu0 %v906
        %v1188 = vpop.f32.mrb[0].mxu0
        %v1189 = vadd.f32 %v1044, %v1188
        %v1190 = vpop.f32.mrb[0].mxu0
        %v1191 = vpop.f32.mrb[0].mxu0
        %v1192 = vadd.f32 %v1047, %v1191
        %v1193 = vpop.f32.mrb[0].mxu0
        %1194 = vmatprep.mubr.bf16.mxu0 0
        %1195 = vmatmul.mubr.bf16.gmra.mrb[0].mxu0 %v907
        %v1196 = vpop.f32.mrb[0].mxu0
        %v1197 = vadd.f32 %v1052, %v1196
        %v1198 = vpop.f32.mrb[0].mxu0
        %v1199 = vpop.f32.mrb[0].mxu0
        %v1200 = vadd.f32 %v1055, %v1199
        %v1201 = vpop.f32.mrb[0].mxu0
        %1202 = vmatprep.mubr.bf16.mxu0 0
        %1203 = vmatmul.mubr.bf16.gmra.mrb[0].mxu0 %v908
        %v1204 = vpop.f32.mrb[0].mxu0
        %v1205 = vadd.f32 %v1060, %v1204
        %v1206 = vpop.f32.mrb[0].mxu0
        %v1207 = vpop.f32.mrb[0].mxu0
        %v1208 = vadd.f32 %v1063, %v1207
        %v1209 = vpop.f32.mrb[0].mxu0
        %1210 = vmatprep.mubr.bf16.mxu0 0
        %1211 = vmatmul.mubr.bf16.gmra.mrb[0].mxu0 %v909
        %v1212 = vpop.f32.mrb[0].mxu0
        %v1213 = vadd.f32 %v1068, %v1212
        %v1214 = vpop.f32.mrb[0].mxu0
        %v1215 = vpop.f32.mrb[0].mxu0
        %v1216 = vadd.f32 %v1071, %v1215
        %v1217 = vpop.f32.mrb[0].mxu0
        %1218 = vmatprep.mubr.bf16.mxu0 0
        %1219 = vmatmul.mubr.bf16.gmra.mrb[0].mxu0 %v910
        %v1220 = vpop.f32.mrb[0].mxu0
        %v1221 = vadd.f32 %v1076, %v1220
        %v1222 = vpop.f32.mrb[0].mxu0
        %v1223 = vpop.f32.mrb[0].mxu0
        %v1224 = vadd.f32 %v1079, %v1223
        %v1225 = vpop.f32.mrb[0].mxu0
        %1226 = vmatprep.mubr.bf16.mxu0 0
        %1227 = vmatmul.mubr.bf16.gmra.mrb[0].mxu0 %v911
        %v1228 = vpop.f32.mrb[0].mxu0
        %v1229 = vadd.f32 %v1084, %v1228
        %v1230 = vpop.f32.mrb[0].mxu0
        %v1231 = vpop.f32.mrb[0].mxu0
        %v1232 = vadd.f32 %v1087, %v1231
        %v1233 = vpop.f32.mrb[0].mxu0
        %1234 = vmatprep.mubr.bf16.mxu0 0
        %1235 = vmatmul.mubr.bf16.gmra.mrb[0].mxu0 %v912
        %v1236 = vpop.f32.mrb[0].mxu0
        %v1237 = vadd.f32 %v1092, %v1236
        %v1238 = vpop.f32.mrb[0].mxu0
        %v1239 = vpop.f32.mrb[0].mxu0
        %v1240 = vadd.f32 %v1095, %v1239
        %v1241 = vpop.f32.mrb[0].mxu0
        %1242 = vdwg.mxu0
        %v1243 = vld [vmem:[%s5] sm:$0x1]
        %v1245 = vlaneseq
        %v1246 = vshrl.u32 %v1245, 7
        %v1247 = vsub.s32 0, %v1246
        %v1248 = vrot.slane %v1243, %v1247
        %v1250 = vadd.f32 %v1181, %v1248
        %v1251 = vadd.f32 %v1184, %v1248
        %v1252 = vadd.f32 %v1189, %v1248
        %v1253 = vadd.f32 %v1192, %v1248
        %v1254 = vadd.f32 %v1197, %v1248
        %v1255 = vadd.f32 %v1200, %v1248
        %v1256 = vadd.f32 %v1205, %v1248
        %v1257 = vadd.f32 %v1208, %v1248
        %v1258 = vadd.f32 %v1213, %v1248
        %v1259 = vadd.f32 %v1216, %v1248
        %v1260 = vadd.f32 %v1221, %v1248
        %v1261 = vadd.f32 %v1224, %v1248
        %v1262 = vadd.f32 %v1229, %v1248
        %v1263 = vadd.f32 %v1232, %v1248
        %v1264 = vadd.f32 %v1237, %v1248
        %v1265 = vadd.f32 %v1240, %v1248
        %v1266 = vadd.f32 %v857, %v889
        %v1267 = vadd.f32 %v858, %v890
        %v1268 = vadd.f32 %v859, %v891
        %v1269 = vadd.f32 %v860, %v892
        %v1270 = vadd.f32 %v861, %v893
        %v1271 = vadd.f32 %v862, %v894
        %v1272 = vadd.f32 %v863, %v895
        %v1273 = vadd.f32 %v864, %v896
        %v1274 = vadd.f32 %v865, %v897
        %v1275 = vadd.f32 %v866, %v898
        %v1276 = vadd.f32 %v867, %v899
        %v1277 = vadd.f32 %v868, %v900
        %v1278 = vadd.f32 %v869, %v901
        %v1279 = vadd.f32 %v870, %v902
        %v1280 = vadd.f32 %v871, %v903
        %v1281 = vadd.f32 %v872, %v904
        %1282 = vst [vmem:[%s446] sm:$0xff] %v1266
        %1283 = vst [vmem:[%s446 + $0x8] sm:$0xff] %v1267
        %1284 = vst [vmem:[%s446 + $0x10] sm:$0xff] %v1268
        %1285 = vst [vmem:[%s446 + $0x18] sm:$0xff] %v1269
        %1286 = vst [vmem:[%s446 + $0x20] sm:$0xff] %v1270
        %1287 = vst [vmem:[%s446 + $0x28] sm:$0xff] %v1271
        %1288 = vst [vmem:[%s446 + $0x30] sm:$0xff] %v1272
        %1289 = vst [vmem:[%s446 + $0x38] sm:$0xff] %v1273
        %1290 = vst [vmem:[%s446 + $0x40] sm:$0xff] %v1274
        %1291 = vst [vmem:[%s446 + $0x48] sm:$0xff] %v1275
        %1292 = vst [vmem:[%s446 + $0x50] sm:$0xff] %v1276
        %1293 = vst [vmem:[%s446 + $0x58] sm:$0xff] %v1277
        %1294 = vst [vmem:[%s446 + $0x60] sm:$0xff] %v1278
        %1295 = vst [vmem:[%s446 + $0x68] sm:$0xff] %v1279
        %1296 = vst [vmem:[%s446 + $0x70] sm:$0xff] %v1280
        %1297 = vst [vmem:[%s446 + $0x78] sm:$0xff] %v1281
        %v1298 = vpack.c.bf16 %v1267, %v1266
        %v1299 = vpack.c.bf16 %v1269, %v1268
        %v1300 = vpack.c.bf16 %v1271, %v1270
        %v1301 = vpack.c.bf16 %v1273, %v1272
        %v1302 = vpack.c.bf16 %v1275, %v1274
        %v1303 = vpack.c.bf16 %v1277, %v1276
        %v1304 = vpack.c.bf16 %v1279, %v1278
        %v1305 = vpack.c.bf16 %v1281, %v1280
        %v1314 = vunpack.c.l.b16 %v1298
        %v1315 = vunpack.c.h.b16 %v1298
        %v1316 = vunpack.c.l.b16 %v1299
        %v1317 = vunpack.c.h.b16 %v1299
        %v1318 = vunpack.c.l.b16 %v1300
        %v1319 = vunpack.c.h.b16 %v1300
        %v1320 = vunpack.c.l.b16 %v1301
        %v1321 = vunpack.c.h.b16 %v1301
        %v1322 = vunpack.c.l.b16 %v1302
        %v1323 = vunpack.c.h.b16 %v1302
        %v1324 = vunpack.c.l.b16 %v1303
        %v1325 = vunpack.c.h.b16 %v1303
        %v1326 = vunpack.c.l.b16 %v1304
        %v1327 = vunpack.c.h.b16 %v1304
        %v1328 = vunpack.c.l.b16 %v1305
        %v1329 = vunpack.c.h.b16 %v1305
        %v1330 = vpack.c.b16 %v1314, %v1314
        %v1331 = vpack.c.b16 %v1315, %v1315
        %v1332 = vpack.c.b16 %v1316, %v1316
        %v1333 = vpack.c.b16 %v1317, %v1317
        %v1334 = vpack.c.b16 %v1318, %v1318
        %v1335 = vpack.c.b16 %v1319, %v1319
        %v1336 = vpack.c.b16 %v1320, %v1320
        %v1337 = vpack.c.b16 %v1321, %v1321
        %v1338 = vpack.c.b16 %v1322, %v1322
        %v1339 = vpack.c.b16 %v1323, %v1323
        %v1340 = vpack.c.b16 %v1324, %v1324
        %v1341 = vpack.c.b16 %v1325, %v1325
        %v1342 = vpack.c.b16 %v1326, %v1326
        %v1343 = vpack.c.b16 %v1327, %v1327
        %v1344 = vpack.c.b16 %v1328, %v1328
        %v1345 = vpack.c.b16 %v1329, %v1329
        %1362 = vst [vmem:[%s452] sm:$0xf] %v1330
        %1363 = vst [vmem:[%s452 + $0x4] sm:$0xf] %v1331
        %1364 = vst [vmem:[%s452 + $0x8] sm:$0xf] %v1332
        %1365 = vst [vmem:[%s452 + $0xc] sm:$0xf] %v1333
        %1366 = vst [vmem:[%s452 + $0x10] sm:$0xf] %v1334
        %1367 = vst [vmem:[%s452 + $0x14] sm:$0xf] %v1335
        %1368 = vst [vmem:[%s452 + $0x18] sm:$0xf] %v1336
        %1369 = vst [vmem:[%s452 + $0x1c] sm:$0xf] %v1337
        %1370 = vst [vmem:[%s452 + $0x20] sm:$0xf] %v1338
        %1371 = vst [vmem:[%s452 + $0x24] sm:$0xf] %v1339
        %1372 = vst [vmem:[%s452 + $0x28] sm:$0xf] %v1340
        %1373 = vst [vmem:[%s452 + $0x2c] sm:$0xf] %v1341
        %1374 = vst [vmem:[%s452 + $0x30] sm:$0xf] %v1342
        %1375 = vst [vmem:[%s452 + $0x34] sm:$0xf] %v1343
        %1376 = vst [vmem:[%s452 + $0x38] sm:$0xf] %v1344
        %1377 = vst [vmem:[%s452 + $0x3c] sm:$0xf] %v1345
        %v1378 = vld [vmem:[%s440] sm:$0xff]
        %v1379 = vld [vmem:[%s440 + $0x8] sm:$0xff]
        %v1380 = vld [vmem:[%s440 + $0x10] sm:$0xff]
        %v1381 = vld [vmem:[%s440 + $0x18] sm:$0xff]
        %v1382 = vld [vmem:[%s440 + $0x20] sm:$0xff]
        %v1383 = vld [vmem:[%s440 + $0x28] sm:$0xff]
        %v1384 = vld [vmem:[%s440 + $0x30] sm:$0xff]
        %v1385 = vld [vmem:[%s440 + $0x38] sm:$0xff]
        %v1386 = vld [vmem:[%s440 + $0x40] sm:$0xff]
        %v1387 = vld [vmem:[%s440 + $0x48] sm:$0xff]
        %v1388 = vld [vmem:[%s440 + $0x50] sm:$0xff]
        %v1389 = vld [vmem:[%s440 + $0x58] sm:$0xff]
        %v1390 = vld [vmem:[%s440 + $0x60] sm:$0xff]
        %v1391 = vld [vmem:[%s440 + $0x68] sm:$0xff]
        %v1392 = vld [vmem:[%s440 + $0x70] sm:$0xff]
        %v1393 = vld [vmem:[%s440 + $0x78] sm:$0xff]
        %v1394 = vadd.f32 %v1378, %v1250
        %v1395 = vadd.f32 %v1379, %v1251
        %v1396 = vadd.f32 %v1380, %v1252
        %v1397 = vadd.f32 %v1381, %v1253
        %v1398 = vadd.f32 %v1382, %v1254
        %v1399 = vadd.f32 %v1383, %v1255
        %v1400 = vadd.f32 %v1384, %v1256
        %v1401 = vadd.f32 %v1385, %v1257
        %v1402 = vadd.f32 %v1386, %v1258
        %v1403 = vadd.f32 %v1387, %v1259
        %v1404 = vadd.f32 %v1388, %v1260
        %v1405 = vadd.f32 %v1389, %v1261
        %v1406 = vadd.f32 %v1390, %v1262
        %v1407 = vadd.f32 %v1391, %v1263
        %v1408 = vadd.f32 %v1392, %v1264
        %v1409 = vadd.f32 %v1393, %v1265
        %1410 = vst [vmem:[%s458] sm:$0xff] %v1394
        %1411 = vst [vmem:[%s458 + $0x8] sm:$0xff] %v1395
        %1412 = vst [vmem:[%s458 + $0x10] sm:$0xff] %v1396
        %1413 = vst [vmem:[%s458 + $0x18] sm:$0xff] %v1397
        %1414 = vst [vmem:[%s458 + $0x20] sm:$0xff] %v1398
        %1415 = vst [vmem:[%s458 + $0x28] sm:$0xff] %v1399
        %1416 = vst [vmem:[%s458 + $0x30] sm:$0xff] %v1400
        %1417 = vst [vmem:[%s458 + $0x38] sm:$0xff] %v1401
        %1418 = vst [vmem:[%s458 + $0x40] sm:$0xff] %v1402
        %1419 = vst [vmem:[%s458 + $0x48] sm:$0xff] %v1403
        %1420 = vst [vmem:[%s458 + $0x50] sm:$0xff] %v1404
        %1421 = vst [vmem:[%s458 + $0x58] sm:$0xff] %v1405
        %1422 = vst [vmem:[%s458 + $0x60] sm:$0xff] %v1406
        %1423 = vst [vmem:[%s458 + $0x68] sm:$0xff] %v1407
        %1424 = vst [vmem:[%s458 + $0x70] sm:$0xff] %v1408
        %1425 = vst [vmem:[%s458 + $0x78] sm:$0xff] %v1409
      $region60: #{_forward_jit.4} parent=47 // pred_fallthru
        _
      %s1426 = smul.u32 16, %s25
      %p1427 = scmp.lt.s32.totalorder %s1426, 47
      %s1428 = scalar_select %p1427, %s1426, 47
      %s1429 = smul.addr %s1428, 8
      %s1430 = scalar_lea.vmem %s7, %s1429
      %s1431 = smul.u32 16, %s25
      %p1432 = scmp.lt.s32.totalorder %s1431, 47
      %s1433 = scalar_select %p1432, %s1431, 47
      %s1434 = smul.addr %s1433, 4
      %s1435 = scalar_lea.vmem %s8, %s1434
      %s1436 = smul.u32 16, %s25
      %p1437 = scmp.lt.s32.totalorder %s1436, 47
      %s1438 = scalar_select %p1437, %s1436, 47
      %s1439 = smul.addr %s1438, 8
      %s1440 = scalar_lea.vmem %s9, %s1439
      // Predicated region
      $region61: #{_forward_jit.4} parent=47 // pred_check
        %p1441 = pneg %p220
      $region62: #{_forward_jit.4} parent=47 // pred_check_branch
        %1443 = sbr.rel (%p1441) target = $region64
      $region63: #{_forward_jit.4} parent=47 // pred_region
        %s1444 = smul.u32 16, %s25
      $region64: #{_forward_jit.4} parent=47 // pred_fallthru
        _
      // Predicated region
      $region65: #{_forward_jit.4} parent=47 // pred_check
        %p1445 = pneg %p246
      $region66: #{_forward_jit.4} parent=47 // pred_check_branch
        %1447 = sbr.rel (%p1445) target = $region68
      $region67: #{_forward_jit.4} parent=47 // pred_region
        %s1448 = smul.u32 16, %s25
      $region68: #{_forward_jit.4} parent=47 // pred_fallthru
        _
      // Predicated region
      $region69: #{_forward_jit.4} parent=47 // pred_check
        %p1449 = pneg %p272
      $region70: #{_forward_jit.4} parent=47 // pred_check_branch
        %1451 = sbr.rel (%p1449) target = $region72
      $region71: #{_forward_jit.4} parent=47 // pred_region
        %s1452 = smul.u32 16, %s25
      $region72: #{_forward_jit.4} parent=47 // pred_fallthru
        _
    $region48: #{_forward_jit.4} parent=5 // pred_fallthru
      _
    %p1453 = scmp.le.s32.totalorder 2, %s16
    // Predicated region
    $region73: #{_forward_jit.4} parent=5 // pred_check
      %p1454 = pneg %p1453
    $region74: #{_forward_jit.4} parent=5 // pred_check_branch
      %1456 = sbr.rel (%p1454) target = $region76
    $region75: #{_forward_jit.4} parent=5 // pred_region
      %s1457 = ssub.s32 %s16, 2
      // Predicated region
      $region77: #{_forward_jit.4} parent=75 // pred_check
        %p1458 = pneg %p226
      $region78: #{_forward_jit.4} parent=75 // pred_check_branch
        %1460 = sbr.rel (%p1458) target = $region80
      $region79: #{_forward_jit.4} parent=75 // pred_region
        %s1461 = smul.u32 16, %s27
        %p1462 = scmp.lt.s32.totalorder %s1461, 47
        %s1463 = scalar_select %p1462, %s1461, 47
        %s1464 = smul.addr %s1463, 8
        %s1465 = scalar_lea.vmem %s7, %s1464
      $region80: #{_forward_jit.4} parent=75 // pred_fallthru
        _
      // Predicated region
      $region81: #{_forward_jit.4} parent=75 // pred_check
        %p1466 = pneg %p252
      $region82: #{_forward_jit.4} parent=75 // pred_check_branch
        %1468 = sbr.rel (%p1466) target = $region84
      $region83: #{_forward_jit.4} parent=75 // pred_region
        %s1469 = smul.u32 16, %s27
        %p1470 = scmp.lt.s32.totalorder %s1469, 47
        %s1471 = scalar_select %p1470, %s1469, 47
        %s1472 = smul.addr %s1471, 4
        %s1473 = scalar_lea.vmem %s8, %s1472
      $region84: #{_forward_jit.4} parent=75 // pred_fallthru
        _
      // Predicated region
      $region85: #{_forward_jit.4} parent=75 // pred_check
        %p1474 = pneg %p278
      $region86: #{_forward_jit.4} parent=75 // pred_check_branch
        %1476 = sbr.rel (%p1474) target = $region88
      $region87: #{_forward_jit.4} parent=75 // pred_region
        %s1477 = smul.u32 16, %s27
        %p1478 = scmp.lt.s32.totalorder %s1477, 47
        %s1479 = scalar_select %p1478, %s1477, 47
        %s1480 = smul.addr %s1479, 8
        %s1481 = scalar_lea.vmem %s9, %s1480
      $region88: #{_forward_jit.4} parent=75 // pred_fallthru
        _
    $region76: #{_forward_jit.4} parent=5 // pred_fallthru
      _
  $region6: #{_forward_jit.4} parent=0 // loop_footer
    %s20 = sadd.s32 1, %s16
  $region7: #{_forward_jit.4} parent=0 // loop_footer_branch
    %15 = sbr.rel target = $region3
  $region8: #{_forward_jit.4} parent=0 // loop_exit
    _

// kernel: _forward_jit.5
$region0: #{_forward_jit.5}
  #allocation0 [shape = 'u32[]', space=smem, size = 0x4, offset = 0x4, fixed_abs, tag = 'smem constant byte address 0x4 - core index']
  #allocation1 [shape = 'u32[144,128]{1,0:T(1,128)}', space=vmem, size = 0x12000, scoped, tag = 'internal scratch']
  %s0 = inlined_call_operand.vmem [shape: bf16[256,384], index: 0, kind: input, shape index: {}]
  %s1 = inlined_call_operand.vmem [shape: bf16[384,128], index: 1, kind: input, shape index: {}]
  %s2 = inlined_call_operand.vmem [shape: f32[256,128], index: 2, kind: input, shape index: {}]
  %s3 = inlined_call_operand.vmem [shape: bf16[128,128], index: 3, kind: input, shape index: {}]
  %s4 = inlined_call_operand.vmem [shape: bf16[128,128], index: 4, kind: input, shape index: {}]
  %s5 = inlined_call_operand.vmem [shape: f32[1,128], index: 5, kind: input, shape index: {}]
  %s6 = inlined_call_operand.vmem [shape: f32[256,128], index: 6, kind: input, shape index: {}, may-alias: {6,9}]
  %s7 = inlined_call_operand.vmem [shape: f32[256,128], index: 7, kind: output, shape index: {0}]
  %s8 = inlined_call_operand.vmem [shape: bf16[256,128], index: 8, kind: output, shape index: {1}]
  %s9 = inlined_call_operand.vmem [shape: f32[256,128], index: 9, kind: output, shape index: {2}, may-alias: {6,9}]
  %10 = xla_tuple %s7, %s8, %s9
  %s11 = sld [smem:[#allocation0]]
  $region89: #{_forward_jit.5} parent=0
    _
  %s13 = ssub.s32 1, %s11
  %s14 = scalar_select 0, %s13, %s11
  loop: start=0, step=1, limit=4
  $region2: #{_forward_jit.5} parent=0 // loop_pre_header
    _
  $region3: #{_forward_jit.5} parent=0 // loop_header
    %s16 = sphi 0, %s20
    %p17 = scmp.ge.s32.totalorder %s16, 4
    %s23 = sphi 0, %s35
    %s24 = sphi 0, %s31
    %s25 = sphi 0, %s23
    %s26 = sphi 0, %s24
    %s27 = sphi 0, %s25
    %s28 = sphi 0, %s26
    %s40 = sphi 0, %s42
    %s43 = sphi 0, %s40
    %s44 = sphi 0, %s43
    %s60 = sphi 0, %s44
    %s66 = sphi 0, %s68
    %s69 = sphi 0, %s66
    %s70 = sphi 0, %s69
    %s86 = sphi 0, %s70
    %s92 = sphi 0, %s94
    %s95 = sphi 0, %s92
    %s96 = sphi 0, %s95
    %s112 = sphi 0, %s96
    %s116 = sphi 0, %s116
    %s118 = sphi 0, %s116
    %s119 = sphi 0, %s118
    %s133 = sphi 0, %s119
    %s137 = sphi 0, %s137
    %s139 = sphi 0, %s137
    %s140 = sphi 0, %s139
    %s154 = sphi 0, %s140
    %s158 = sphi 0, %s158
    %s160 = sphi 0, %s158
    %s161 = sphi 0, %s160
    %s175 = sphi 0, %s161
    %s181 = sphi 0, %s183
    %s184 = sphi 0, %s181
    %s185 = sphi 0, %s184
    %s201 = sphi 0, %s185
    %s207 = sphi 0, %s209
    %s210 = sphi 0, %s207
    %s211 = sphi 0, %s210
    %s227 = sphi 0, %s211
    %s233 = sphi 0, %s235
    %s236 = sphi 0, %s233
    %s237 = sphi 0, %s236
    %s253 = sphi 0, %s237
    %s259 = sphi 0, %s261
    %s262 = sphi 0, %s259
    %s263 = sphi 0, %s262
    %s279 = sphi 0, %s263
  $region4: #{_forward_jit.5} parent=0 // loop_header_branch
    %19 = sbr.rel (%p17) target = $region8
  $region5: #{_forward_jit.5} parent=0 // loop_body
    %s21 = ssub.s32 %s16, 1
    %s22 = ssub.s32 %s16, 2
    %s29 = sadd.s32 1, %s24
    %p30 = scmp.ge.s32.totalorder %s29, 1
    %s31 = scalar_select %p30, 0, %s29
    %s32 = sadd.s32 1, %s23
    %s33 = scalar_select %p30, %s32, %s23
    %p34 = scmp.ge.s32.totalorder %s33, 2
    %s35 = scalar_select %p34, 0, %s33
    %s36 = ssub.s32 %s23, %s35
    %s37 = ssub.s32 %s24, %s31
    %s38 = sor.u32 %s36, %s37
    %p39 = scmp.eq.s32.totalorder %s38, 0
    %s41 = sadd.s32 %s40, 1
    %s42 = scalar_select %p39, %s40, %s41
    %p45 = pneg %p39
    %p46 = scmp.eq.s32.totalorder %s16, 1
    %p47 = por %p45, %p46
    %p48 = scmp.ne.s32.totalorder %s40, %s43
    %p49 = scmp.eq.s32.totalorder %s16, 0
    %p50 = por %p48, %p49
    %p51 = scmp.ne.s32.totalorder %s40, %s43
    %p52 = scmp.eq.s32.totalorder %s21, 1
    %p53 = por %p51, %p52
    %p54 = scmp.ne.s32.totalorder %s43, %s44
    %p55 = scmp.eq.s32.totalorder %s21, 0
    %p56 = por %p54, %p55
    %p57 = scmp.ne.s32.totalorder %s43, %s44
    %p58 = scmp.eq.s32.totalorder %s22, 1
    %p59 = por %p57, %p58
    %p61 = scmp.ne.s32.totalorder %s44, %s60
    %p62 = scmp.eq.s32.totalorder %s22, 0
    %p63 = por %p61, %p62
    %s64 = ssub.s32 %s24, %s31
    %p65 = scmp.eq.s32.totalorder %s64, 0
    %s67 = sadd.s32 %s66, 1
    %s68 = scalar_select %p65, %s66, %s67
    %p71 = pneg %p65
    %p72 = scmp.eq.s32.totalorder %s16, 1
    %p73 = por %p71, %p72
    %p74 = scmp.ne.s32.totalorder %s66, %s69
    %p75 = scmp.eq.s32.totalorder %s16, 0
    %p76 = por %p74, %p75
    %p77 = scmp.ne.s32.totalorder %s66, %s69
    %p78 = scmp.eq.s32.totalorder %s21, 1
    %p79 = por %p77, %p78
    %p80 = scmp.ne.s32.totalorder %s69, %s70
    %p81 = scmp.eq.s32.totalorder %s21, 0
    %p82 = por %p80, %p81
    %p83 = scmp.ne.s32.totalorder %s69, %s70
    %p84 = scmp.eq.s32.totalorder %s22, 1
    %p85 = por %p83, %p84
    %p87 = scmp.ne.s32.totalorder %s70, %s86
    %p88 = scmp.eq.s32.totalorder %s22, 0
    %p89 = por %p87, %p88
    %s90 = ssub.s32 %s23, %s35
    %p91 = scmp.eq.s32.totalorder %s90, 0
    %s93 = sadd.s32 %s92, 1
    %s94 = scalar_select %p91, %s92, %s93
    %p97 = pneg %p91
    %p98 = scmp.eq.s32.totalorder %s16, 1
    %p99 = por %p97, %p98
    %p100 = scmp.ne.s32.totalorder %s92, %s95
    %p101 = scmp.eq.s32.totalorder %s16, 0
    %p102 = por %p100, %p101
    %p103 = scmp.ne.s32.totalorder %s92, %s95
    %p104 = scmp.eq.s32.totalorder %s21, 1
    %p105 = por %p103, %p104
    %p106 = scmp.ne.s32.totalorder %s95, %s96
    %p107 = scmp.eq.s32.totalorder %s21, 0
    %p108 = por %p106, %p107
    %p109 = scmp.ne.s32.totalorder %s95, %s96
    %p110 = scmp.eq.s32.totalorder %s22, 1
    %p111 = por %p109, %p110
    %p113 = scmp.ne.s32.totalorder %s96, %s112
    %p114 = scmp.eq.s32.totalorder %s22, 0
    %p115 = por %p113, %p114
    %s117 = sadd.s32 %s116, 1
    %p120 = scmp.eq.s32.totalorder %s16, 1
    %p121 = scmp.ne.s32.totalorder %s116, %s118
    %p122 = scmp.eq.s32.totalorder %s16, 0
    %p123 = por %p121, %p122
    %p124 = scmp.ne.s32.totalorder %s116, %s118
    %p125 = scmp.eq.s32.totalorder %s21, 1
    %p126 = por %p124, %p125
    %p127 = scmp.ne.s32.totalorder %s118, %s119
    %p128 = scmp.eq.s32.totalorder %s21, 0
    %p129 = por %p127, %p128
    %p130 = scmp.ne.s32.totalorder %s118, %s119
    %p131 = scmp.eq.s32.totalorder %s22, 1
    %p132 = por %p130, %p131
    %p134 = scmp.ne.s32.totalorder %s119, %s133
    %p135 = scmp.eq.s32.totalorder %s22, 0
    %p136 = por %p134, %p135
    %s138 = sadd.s32 %s137, 1
    %p141 = scmp.eq.s32.totalorder %s16, 1
    %p142 = scmp.ne.s32.totalorder %s137, %s139
    %p143 = scmp.eq.s32.totalorder %s16, 0
    %p144 = por %p142, %p143
    %p145 = scmp.ne.s32.totalorder %s137, %s139
    %p146 = scmp.eq.s32.totalorder %s21, 1
    %p147 = por %p145, %p146
    %p148 = scmp.ne.s32.totalorder %s139, %s140
    %p149 = scmp.eq.s32.totalorder %s21, 0
    %p150 = por %p148, %p149
    %p151 = scmp.ne.s32.totalorder %s139, %s140
    %p152 = scmp.eq.s32.totalorder %s22, 1
    %p153 = por %p151, %p152
    %p155 = scmp.ne.s32.totalorder %s140, %s154
    %p156 = scmp.eq.s32.totalorder %s22, 0
    %p157 = por %p155, %p156
    %s159 = sadd.s32 %s158, 1
    %p162 = scmp.eq.s32.totalorder %s16, 1
    %p163 = scmp.ne.s32.totalorder %s158, %s160
    %p164 = scmp.eq.s32.totalorder %s16, 0
    %p165 = por %p163, %p164
    %p166 = scmp.ne.s32.totalorder %s158, %s160
    %p167 = scmp.eq.s32.totalorder %s21, 1
    %p168 = por %p166, %p167
    %p169 = scmp.ne.s32.totalorder %s160, %s161
    %p170 = scmp.eq.s32.totalorder %s21, 0
    %p171 = por %p169, %p170
    %p172 = scmp.ne.s32.totalorder %s160, %s161
    %p173 = scmp.eq.s32.totalorder %s22, 1
    %p174 = por %p172, %p173
    %p176 = scmp.ne.s32.totalorder %s161, %s175
    %p177 = scmp.eq.s32.totalorder %s22, 0
    %p178 = por %p176, %p177
    %s179 = ssub.s32 %s23, %s35
    %p180 = scmp.eq.s32.totalorder %s179, 0
    %s182 = sadd.s32 %s181, 1
    %s183 = scalar_select %p180, %s181, %s182
    %p186 = pneg %p180
    %p187 = scmp.eq.s32.totalorder %s16, 1
    %p188 = por %p186, %p187
    %p189 = scmp.ne.s32.totalorder %s181, %s184
    %p190 = scmp.eq.s32.totalorder %s16, 0
    %p191 = por %p189, %p190
    %p192 = scmp.ne.s32.totalorder %s181, %s184
    %p193 = scmp.eq.s32.totalorder %s21, 1
    %p194 = por %p192, %p193
    %p195 = scmp.ne.s32.totalorder %s184, %s185
    %p196 = scmp.eq.s32.totalorder %s21, 0
    %p197 = por %p195, %p196
    %p198 = scmp.ne.s32.totalorder %s184, %s185
    %p199 = scmp.eq.s32.totalorder %s22, 1
    %p200 = por %p198, %p199
    %p202 = scmp.ne.s32.totalorder %s185, %s201
    %p203 = scmp.eq.s32.totalorder %s22, 0
    %p204 = por %p202, %p203
    %s205 = ssub.s32 %s23, %s35
    %p206 = scmp.eq.s32.totalorder %s205, 0
    %s208 = sadd.s32 %s207, 1
    %s209 = scalar_select %p206, %s207, %s208
    %p212 = pneg %p206
    %p213 = scmp.eq.s32.totalorder %s16, 1
    %p214 = por %p212, %p213
    %p215 = scmp.ne.s32.totalorder %s207, %s210
    %p216 = scmp.eq.s32.totalorder %s16, 0
    %p217 = por %p215, %p216
    %p218 = scmp.ne.s32.totalorder %s207, %s210
    %p219 = scmp.eq.s32.totalorder %s21, 1
    %p220 = por %p218, %p219
    %p221 = scmp.ne.s32.totalorder %s210, %s211
    %p222 = scmp.eq.s32.totalorder %s21, 0
    %p223 = por %p221, %p222
    %p224 = scmp.ne.s32.totalorder %s210, %s211
    %p225 = scmp.eq.s32.totalorder %s22, 1
    %p226 = por %p224, %p225
    %p228 = scmp.ne.s32.totalorder %s211, %s227
    %p229 = scmp.eq.s32.totalorder %s22, 0
    %p230 = por %p228, %p229
    %s231 = ssub.s32 %s23, %s35
    %p232 = scmp.eq.s32.totalorder %s231, 0
    %s234 = sadd.s32 %s233, 1
    %s235 = scalar_select %p232, %s233, %s234
    %p238 = pneg %p232
    %p239 = scmp.eq.s32.totalorder %s16, 1
    %p240 = por %p238, %p239
    %p241 = scmp.ne.s32.totalorder %s233, %s236
    %p242 = scmp.eq.s32.totalorder %s16, 0
    %p243 = por %p241, %p242
    %p244 = scmp.ne.s32.totalorder %s233, %s236
    %p245 = scmp.eq.s32.totalorder %s21, 1
    %p246 = por %p244, %p245
    %p247 = scmp.ne.s32.totalorder %s236, %s237
    %p248 = scmp.eq.s32.totalorder %s21, 0
    %p249 = por %p247, %p248
    %p250 = scmp.ne.s32.totalorder %s236, %s237
    %p251 = scmp.eq.s32.totalorder %s22, 1
    %p252 = por %p250, %p251
    %p254 = scmp.ne.s32.totalorder %s237, %s253
    %p255 = scmp.eq.s32.totalorder %s22, 0
    %p256 = por %p254, %p255
    %s257 = ssub.s32 %s23, %s35
    %p258 = scmp.eq.s32.totalorder %s257, 0
    %s260 = sadd.s32 %s259, 1
    %s261 = scalar_select %p258, %s259, %s260
    %p264 = pneg %p258
    %p265 = scmp.eq.s32.totalorder %s16, 1
    %p266 = por %p264, %p265
    %p267 = scmp.ne.s32.totalorder %s259, %s262
    %p268 = scmp.eq.s32.totalorder %s16, 0
    %p269 = por %p267, %p268
    %p270 = scmp.ne.s32.totalorder %s259, %s262
    %p271 = scmp.eq.s32.totalorder %s21, 1
    %p272 = por %p270, %p271
    %p273 = scmp.ne.s32.totalorder %s262, %s263
    %p274 = scmp.eq.s32.totalorder %s21, 0
    %p275 = por %p273, %p274
    %p276 = scmp.ne.s32.totalorder %s262, %s263
    %p277 = scmp.eq.s32.totalorder %s22, 1
    %p278 = por %p276, %p277
    %p280 = scmp.ne.s32.totalorder %s263, %s279
    %p281 = scmp.eq.s32.totalorder %s22, 0
    %p282 = por %p280, %p281
    %p283 = scmp.le.s32.totalorder 1, %s16
    %p284 = scmp.lt.s32.totalorder %s16, 3
    %p285 = pnand %p283, %p284
    %p286 = pneg %p285
    // Predicated region
    $region9: #{_forward_jit.5} parent=5 // pred_check
      _
    $region10: #{_forward_jit.5} parent=5 // pred_check_branch
      %288 = sbr.rel (%p285) target = $region12
    $region11: #{_forward_jit.5} parent=5 // pred_region
      %s289 = ssub.s32 %s16, 1
      // Predicated region
      $region13: #{_forward_jit.5} parent=11 // pred_check
        %p290 = pneg %p82
      $region14: #{_forward_jit.5} parent=11 // pred_check_branch
        %292 = sbr.rel (%p290) target = $region16
      $region15: #{_forward_jit.5} parent=11 // pred_region
        %s293 = smul.u32 48, %s26
        %p294 = scmp.lt.s32.totalorder %s293, 47
        %s295 = scalar_select %p294, %s293, 47
        %s296 = smul.addr %s295, 4
        %s297 = scalar_lea.vmem %s1, %s296
        %s298 = smul.u32 48, %s26
      $region16: #{_forward_jit.5} parent=11 // pred_fallthru
        _
      // Predicated region
      $region17: #{_forward_jit.5} parent=11 // pred_check
        %p299 = pneg %p129
      $region18: #{_forward_jit.5} parent=11 // pred_check_branch
        %301 = sbr.rel (%p299) target = $region20
      $region19: #{_forward_jit.5} parent=11 // pred_region
        _
      $region20: #{_forward_jit.5} parent=11 // pred_fallthru
        _
      // Predicated region
      $region21: #{_forward_jit.5} parent=11 // pred_check
        %p302 = pneg %p150
      $region22: #{_forward_jit.5} parent=11 // pred_check_branch
        %304 = sbr.rel (%p302) target = $region24
      $region23: #{_forward_jit.5} parent=11 // pred_region
        _
      $region24: #{_forward_jit.5} parent=11 // pred_fallthru
        _
      // Predicated region
      $region25: #{_forward_jit.5} parent=11 // pred_check
        %p305 = pneg %p171
      $region26: #{_forward_jit.5} parent=11 // pred_check_branch
        %307 = sbr.rel (%p305) target = $region28
      $region27: #{_forward_jit.5} parent=11 // pred_region
        _
      $region28: #{_forward_jit.5} parent=11 // pred_fallthru
        _
    $region12: #{_forward_jit.5} parent=5 // pred_fallthru
      _
    %p308 = scmp.lt.s32.totalorder %s16, 2
    // Predicated region
    $region29: #{_forward_jit.5} parent=5 // pred_check
      %p309 = pneg %p308
    $region30: #{_forward_jit.5} parent=5 // pred_check_branch
      %311 = sbr.rel (%p309) target = $region32
    $region31: #{_forward_jit.5} parent=5 // pred_region
      // Predicated region
      $region33: #{_forward_jit.5} parent=31 // pred_check
        %p312 = pneg %p50
      $region34: #{_forward_jit.5} parent=31 // pred_check_branch
        %314 = sbr.rel (%p312) target = $region36
      $region35: #{_forward_jit.5} parent=31 // pred_region
        %s315 = smul.u32 16, %s23
        %s316 = smul.u32 3, %s24
        %p317 = scmp.lt.s32.totalorder %s315, 31
        %s318 = scalar_select %p317, %s315, 31
        %p319 = scmp.lt.s32.totalorder %s316, 2
        %s320 = scalar_select %p319, %s316, 2
        %s321 = smul.addr %s318, 3
        %s322 = sadd.s32 %s320, %s321
        %s323 = smul.addr %s322, 4
        %s324 = scalar_lea.vmem %s0, %s323
        %s325 = smul.u32 16, %s23
        %s326 = smul.u32 3, %s24
      $region36: #{_forward_jit.5} parent=31 // pred_fallthru
        _
      // Predicated region
      $region37: #{_forward_jit.5} parent=31 // pred_check
        %p327 = pneg %p102
      $region38: #{_forward_jit.5} parent=31 // pred_check_branch
        %329 = sbr.rel (%p327) target = $region40
      $region39: #{_forward_jit.5} parent=31 // pred_region
        %s330 = smul.u32 16, %s23
        %p331 = scmp.lt.s32.totalorder %s330, 31
        %s332 = scalar_select %p331, %s330, 31
        %s333 = smul.addr %s332, 8
        %s334 = scalar_lea.vmem %s2, %s333
        %s335 = smul.u32 16, %s23
      $region40: #{_forward_jit.5} parent=31 // pred_fallthru
        _
      // Predicated region
      $region41: #{_forward_jit.5} parent=31 // pred_check
        %p336 = pneg %p191
      $region42: #{_forward_jit.5} parent=31 // pred_check_branch
        %338 = sbr.rel (%p336) target = $region44
      $region43: #{_forward_jit.5} parent=31 // pred_region
        %s339 = smul.u32 16, %s23
        %p340 = scmp.lt.s32.totalorder %s339, 31
        %s341 = scalar_select %p340, %s339, 31
        %s342 = smul.addr %s341, 8
        %s343 = scalar_lea.vmem %s6, %s342
        %s344 = smul.u32 16, %s23
      $region44: #{_forward_jit.5} parent=31 // pred_fallthru
        _
    $region32: #{_forward_jit.5} parent=5 // pred_fallthru
      _
    %p345 = scmp.le.s32.totalorder 1, %s16
    %p346 = scmp.lt.s32.totalorder %s16, 3
    %p347 = pnand %p345, %p346
    %p348 = pneg %p347
    // Predicated region
    $region45: #{_forward_jit.5} parent=5 // pred_check
      _
    $region46: #{_forward_jit.5} parent=5 // pred_check_branch
      %350 = sbr.rel (%p347) target = $region48
    $region47: #{_forward_jit.5} parent=5 // pred_region
      %s351 = ssub.s32 %s16, 1
      %s352 = smul.u32 16, %s25
      %s353 = smul.u32 3, %s26
      %p354 = scmp.lt.s32.totalorder %s352, 31
      %s355 = scalar_select %p354, %s352, 31
      %p356 = scmp.lt.s32.totalorder %s353, 2
      %s357 = scalar_select %p356, %s353, 2
      %s358 = smul.addr %s355, 3
      %s359 = sadd.s32 %s357, %s358
      %s360 = smul.addr %s359, 4
      %s361 = scalar_lea.vmem %s0, %s360
      %p362 = pneg %p56
      %p363 = pneg %p53
      %s364 = smul.u32 48, %s26
      %p365 = scmp.lt.s32.totalorder %s364, 47
      %s366 = scalar_select %p365, %s364, 47
      %s367 = smul.addr %s366, 4
      %s368 = scalar_lea.vmem %s1, %s367
      %p369 = pneg %p82
      %p370 = pneg %p79
      %s371 = smul.u32 16, %s25
      %p372 = scmp.lt.s32.totalorder %s371, 31
      %s373 = scalar_select %p372, %s371, 31
      %s374 = smul.addr %s373, 8
      %s375 = scalar_lea.vmem %s2, %s374
      %p376 = pneg %p108
      %p377 = pneg %p105
      %p378 = pneg %p129
      %p379 = pneg %p126
      %p380 = pneg %p150
      %p381 = pneg %p147
      %p382 = pneg %p171
      %p383 = pneg %p168
      %s384 = smul.u32 16, %s25
      %p385 = scmp.lt.s32.totalorder %s384, 31
      %s386 = scalar_select %p385, %s384, 31
      %s387 = smul.addr %s386, 8
      %s388 = scalar_lea.vmem %s6, %s387
      %p389 = pneg %p197
      %p390 = pneg %p194
      %p391 = pneg %p223
      %p392 = pneg %p220
      %s393 = smul.u32 16, %s25
      %p394 = scmp.lt.s32.totalorder %s393, 31
      %s395 = scalar_select %p394, %s393, 31
      %s396 = smul.addr %s395, 8
      %s397 = scalar_lea.vmem %s7, %s396
      %p398 = pneg %p249
      %p399 = pneg %p246
      %s400 = smul.u32 16, %s25
      %p401 = scmp.lt.s32.totalorder %s400, 31
      %s402 = scalar_select %p401, %s400, 31
      %s403 = smul.addr %s402, 4
      %s404 = scalar_lea.vmem %s8, %s403
      %p405 = pneg %p275
      %p406 = pneg %p272
      %s407 = smul.u32 16, %s25
      %p408 = scmp.lt.s32.totalorder %s407, 31
      %s409 = scalar_select %p408, %s407, 31
      %s410 = smul.addr %s409, 8
      %s411 = scalar_lea.vmem %s9, %s410
      %s412 = smul.u32 16, %s25
      %s413 = smul.u32 3, %s26
      %p414 = scmp.lt.s32.totalorder %s412, 31
      %s415 = scalar_select %p414, %s412, 31
      %p416 = scmp.lt.s32.totalorder %s413, 2
      %s417 = scalar_select %p416, %s413, 2
      %s418 = smul.addr %s415, 3
      %s419 = sadd.s32 %s417, %s418
      %s420 = smul.addr %s419, 4
      %s421 = scalar_lea.vmem %s0, %s420
      %s422 = smul.u32 16, %s25
      %s423 = smul.u32 3, %s26
      %s424 = smul.u32 48, %s26
      %p425 = scmp.lt.s32.totalorder %s424, 47
      %s426 = scalar_select %p425, %s424, 47
      %s427 = smul.addr %s426, 4
      %s428 = scalar_lea.vmem %s1, %s427
      %s429 = smul.u32 48, %s26
      %s430 = smul.u32 16, %s25
      %p431 = scmp.lt.s32.totalorder %s430, 31
      %s432 = scalar_select %p431, %s430, 31
      %s433 = smul.addr %s432, 8
      %s434 = scalar_lea.vmem %s2, %s433
      %s435 = smul.u32 16, %s25
      %s436 = smul.u32 16, %s25
      %p437 = scmp.lt.s32.totalorder %s436, 31
      %s438 = scalar_select %p437, %s436, 31
      %s439 = smul.addr %s438, 8
      %s440 = scalar_lea.vmem %s6, %s439
      %s441 = smul.u32 16, %s25
      %s442 = smul.u32 16, %s25
      %p443 = scmp.lt.s32.totalorder %s442, 31
      %s444 = scalar_select %p443, %s442, 31
      %s445 = smul.addr %s444, 8
      %s446 = scalar_lea.vmem %s7, %s445
      %s447 = smul.u32 16, %s25
      %s448 = smul.u32 16, %s25
      %p449 = scmp.lt.s32.totalorder %s448, 31
      %s450 = scalar_select %p449, %s448, 31
      %s451 = smul.addr %s450, 4
      %s452 = scalar_lea.vmem %s8, %s451
      %s453 = smul.u32 16, %s25
      %s454 = smul.u32 16, %s25
      %p455 = scmp.lt.s32.totalorder %s454, 31
      %s456 = scalar_select %p455, %s454, 31
      %s457 = smul.addr %s456, 8
      %s458 = scalar_lea.vmem %s9, %s457
      %s459 = smul.u32 16, %s25
      %v461 = vld [vmem:[%s421] sm:$0xff]
      %v462 = vld [vmem:[%s421 + $0x8] sm:$0xf]
      %v463 = vld [vmem:[%s421 + $0xc] sm:$0xff]
      %v464 = vld [vmem:[%s421 + $0x14] sm:$0xf]
      %v465 = vld [vmem:[%s421 + $0x18] sm:$0xff]
      %v466 = vld [vmem:[%s421 + $0x20] sm:$0xf]
      %v467 = vld [vmem:[%s421 + $0x24] sm:$0xff]
      %v468 = vld [vmem:[%s421 + $0x2c] sm:$0xf]
      %v469 = vld [vmem:[%s421 + $0x30] sm:$0xff]
      %v470 = vld [vmem:[%s421 + $0x38] sm:$0xf]
      %v471 = vld [vmem:[%s421 + $0x3c] sm:$0xff]
      %v472 = vld [vmem:[%s421 + $0x44] sm:$0xf]
      %v473 = vld [vmem:[%s421 + $0x48] sm:$0xff]
      %v474 = vld [vmem:[%s421 + $0x50] sm:$0xf]
      %v475 = vld [vmem:[%s421 + $0x54] sm:$0xff]
      %v476 = vld [vmem:[%s421 + $0x5c] sm:$0xf]
      %v477 = vld [vmem:[%s421 + $0x60] sm:$0xff]
      %v478 = vld [vmem:[%s421 + $0x68] sm:$0xf]
      %v479 = vld [vmem:[%s421 + $0x6c] sm:$0xff]
      %v480 = vld [vmem:[%s421 + $0x74] sm:$0xf]
      %v481 = vld [vmem:[%s421 + $0x78] sm:$0xff]
      %v482 = vld [vmem:[%s421 + $0x80] sm:$0xf]
      %v483 = vld [vmem:[%s421 + $0x84] sm:$0xff]
      %v484 = vld [vmem:[%s421 + $0x8c] sm:$0xf]
      %v485 = vld [vmem:[%s421 + $0x90] sm:$0xff]
      %v486 = vld [vmem:[%s421 + $0x98] sm:$0xf]
      %v487 = vld [vmem:[%s421 + $0x9c] sm:$0xff]
      %v488 = vld [vmem:[%s421 + $0xa4] sm:$0xf]
      %v489 = vld [vmem:[%s421 + $0xa8] sm:$0xff]
      %v490 = vld [vmem:[%s421 + $0xb0] sm:$0xf]
      %v491 = vld [vmem:[%s421 + $0xb4] sm:$0xff]
      %v492 = vld [vmem:[%s421 + $0xbc] sm:$0xf]
      %v493 = vld [vmem:[%s428] sm:$0xf]
      %v494 = vld [vmem:[%s428 + $0x4] sm:$0xf]
      %v495 = vld [vmem:[%s428 + $0x8] sm:$0xf]
      %v496 = vld [vmem:[%s428 + $0xc] sm:$0xf]
      %v497 = vld [vmem:[%s428 + $0x10] sm:$0xf]
      %v498 = vld [vmem:[%s428 + $0x14] sm:$0xf]
      %v499 = vld [vmem:[%s428 + $0x18] sm:$0xf]
      %v500 = vld [vmem:[%s428 + $0x1c] sm:$0xf]
      %v501 = vld [vmem:[%s428 + $0x20] sm:$0xf]
      %v502 = vld [vmem:[%s428 + $0x24] sm:$0xf]
      %v503 = vld [vmem:[%s428 + $0x28] sm:$0xf]
      %v504 = vld [vmem:[%s428 + $0x2c] sm:$0xf]
      %v505 = vld [vmem:[%s428 + $0x30] sm:$0xf]
      %v506 = vld [vmem:[%s428 + $0x34] sm:$0xf]
      %v507 = vld [vmem:[%s428 + $0x38] sm:$0xf]
      %v508 = vld [vmem:[%s428 + $0x3c] sm:$0xf]
      %v509 = vld [vmem:[%s428 + $0x40] sm:$0xf]
      %v510 = vld [vmem:[%s428 + $0x44] sm:$0xf]
      %v511 = vld [vmem:[%s428 + $0x48] sm:$0xf]
      %v512 = vld [vmem:[%s428 + $0x4c] sm:$0xf]
      %v513 = vld [vmem:[%s428 + $0x50] sm:$0xf]
      %v514 = vld [vmem:[%s428 + $0x54] sm:$0xf]
      %v515 = vld [vmem:[%s428 + $0x58] sm:$0xf]
      %v516 = vld [vmem:[%s428 + $0x5c] sm:$0xf]
      %v517 = vld [vmem:[%s428 + $0x60] sm:$0xf]
      %v518 = vld [vmem:[%s428 + $0x64] sm:$0xf]
      %v519 = vld [vmem:[%s428 + $0x68] sm:$0xf]
      %v520 = vld [vmem:[%s428 + $0x6c] sm:$0xf]
      %v521 = vld [vmem:[%s428 + $0x70] sm:$0xf]
      %v522 = vld [vmem:[%s428 + $0x74] sm:$0xf]
      %v523 = vld [vmem:[%s428 + $0x78] sm:$0xf]
      %v524 = vld [vmem:[%s428 + $0x7c] sm:$0xf]
      %v525 = vld [vmem:[%s428 + $0x80] sm:$0xf]
      %v526 = vld [vmem:[%s428 + $0x84] sm:$0xf]
      %v527 = vld [vmem:[%s428 + $0x88] sm:$0xf]
      %v528 = vld [vmem:[%s428 + $0x8c] sm:$0xf]
      %v529 = vld [vmem:[%s428 + $0x90] sm:$0xf]
      %v530 = vld [vmem:[%s428 + $0x94] sm:$0xf]
      %v531 = vld [vmem:[%s428 + $0x98] sm:$0xf]
      %v532 = vld [vmem:[%s428 + $0x9c] sm:$0xf]
      %v533 = vld [vmem:[%s428 + $0xa0] sm:$0xf]
      %v534 = vld [vmem:[%s428 + $0xa4] sm:$0xf]
      %v535 = vld [vmem:[%s428 + $0xa8] sm:$0xf]
      %v536 = vld [vmem:[%s428 + $0xac] sm:$0xf]
      %v537 = vld [vmem:[%s428 + $0xb0] sm:$0xf]
      %v538 = vld [vmem:[%s428 + $0xb4] sm:$0xf]
      %v539 = vld [vmem:[%s428 + $0xb8] sm:$0xf]
      %v540 = vld [vmem:[%s428 + $0xbc] sm:$0xf]
      %v573 = vunpack.c.l.b16 %v461
      %v574 = vunpack.c.h.b16 %v461
      %v575 = vunpack.c.l.b16 %v462
      %v576 = vunpack.c.l.b16 %v463
      %v577 = vunpack.c.h.b16 %v463
      %v578 = vunpack.c.l.b16 %v464
      %v579 = vunpack.c.l.b16 %v465
      %v580 = vunpack.c.h.b16 %v465
      %v581 = vunpack.c.l.b16 %v466
      %v582 = vunpack.c.l.b16 %v467
      %v583 = vunpack.c.h.b16 %v467
      %v584 = vunpack.c.l.b16 %v468
      %v585 = vunpack.c.l.b16 %v469
      %v586 = vunpack.c.h.b16 %v469
      %v587 = vunpack.c.l.b16 %v470
      %v588 = vunpack.c.l.b16 %v471
      %v589 = vunpack.c.h.b16 %v471
      %v590 = vunpack.c.l.b16 %v472
      %v591 = vunpack.c.l.b16 %v473
      %v592 = vunpack.c.h.b16 %v473
      %v593 = vunpack.c.l.b16 %v474
      %v594 = vunpack.c.l.b16 %v475
      %v595 = vunpack.c.h.b16 %v475
      %v596 = vunpack.c.l.b16 %v476
      %v597 = vunpack.c.l.b16 %v477
      %v598 = vunpack.c.h.b16 %v477
      %v599 = vunpack.c.l.b16 %v478
      %v600 = vunpack.c.l.b16 %v479
      %v601 = vunpack.c.h.b16 %v479
      %v602 = vunpack.c.l.b16 %v480
      %v603 = vunpack.c.l.b16 %v481
      %v604 = vunpack.c.h.b16 %v481
      %v605 = vunpack.c.l.b16 %v482
      %v606 = vunpack.c.l.b16 %v483
      %v607 = vunpack.c.h.b16 %v483
      %v608 = vunpack.c.l.b16 %v484
      %v609 = vunpack.c.l.b16 %v485
      %v610 = vunpack.c.h.b16 %v485
      %v611 = vunpack.c.l.b16 %v486
      %v612 = vunpack.c.l.b16 %v487
      %v613 = vunpack.c.h.b16 %v487
      %v614 = vunpack.c.l.b16 %v488
      %v615 = vunpack.c.l.b16 %v489
      %v616 = vunpack.c.h.b16 %v489
      %v617 = vunpack.c.l.b16 %v490
      %v618 = vunpack.c.l.b16 %v491
      %v619 = vunpack.c.h.b16 %v491
      %v620 = vunpack.c.l.b16 %v492
      %v621 = vpack.c.b16 %v576, %v573
      %v622 = vpack.c.b16 %v577, %v574
      %v623 = vpack.c.b16 %v578, %v575
      %v624 = vpack.c.b16 %v582, %v579
      %v625 = vpack.c.b16 %v583, %v580
      %v626 = vpack.c.b16 %v584, %v581
      %v627 = vpack.c.b16 %v588, %v585
      %v628 = vpack.c.b16 %v589, %v586
      %v629 = vpack.c.b16 %v590, %v587
      %v630 = vpack.c.b16 %v594, %v591
      %v631 = vpack.c.b16 %v595, %v592
      %v632 = vpack.c.b16 %v596, %v593
      %v633 = vpack.c.b16 %v600, %v597
      %v634 = vpack.c.b16 %v601, %v598
      %v635 = vpack.c.b16 %v602, %v599
      %v636 = vpack.c.b16 %v606, %v603
      %v637 = vpack.c.b16 %v607, %v604
      %v638 = vpack.c.b16 %v608, %v605
      %v639 = vpack.c.b16 %v612, %v609
      %v640 = vpack.c.b16 %v613, %v610
      %v641 = vpack.c.b16 %v614, %v611
      %v642 = vpack.c.b16 %v618, %v615
      %v643 = vpack.c.b16 %v619, %v616
      %v644 = vpack.c.b16 %v620, %v617
      %v717 = vunpack.c.l.b16 %v493
      %v718 = vunpack.c.l.b16 %v494
      %v719 = vunpack.c.l.b16 %v495
      %v720 = vunpack.c.l.b16 %v496
      %v721 = vunpack.c.l.b16 %v497
      %v722 = vunpack.c.l.b16 %v498
      %v723 = vunpack.c.l.b16 %v499
      %v724 = vunpack.c.l.b16 %v500
      %v725 = vunpack.c.l.b16 %v501
      %v726 = vunpack.c.l.b16 %v502
      %v727 = vunpack.c.l.b16 %v503
      %v728 = vunpack.c.l.b16 %v504
      %v729 = vunpack.c.l.b16 %v505
      %v730 = vunpack.c.l.b16 %v506
      %v731 = vunpack.c.l.b16 %v507
      %v732 = vunpack.c.l.b16 %v508
      %v733 = vunpack.c.l.b16 %v509
      %v734 = vunpack.c.l.b16 %v510
      %v735 = vunpack.c.l.b16 %v511
      %v736 = vunpack.c.l.b16 %v512
      %v737 = vunpack.c.l.b16 %v513
      %v738 = vunpack.c.l.b16 %v514
      %v739 = vunpack.c.l.b16 %v515
      %v740 = vunpack.c.l.b16 %v516
      %v741 = vunpack.c.l.b16 %v517
      %v742 = vunpack.c.l.b16 %v518
      %v743 = vunpack.c.l.b16 %v519
      %v744 = vunpack.c.l.b16 %v520
      %v745 = vunpack.c.l.b16 %v521
      %v746 = vunpack.c.l.b16 %v522
      %v747 = vunpack.c.l.b16 %v523
      %v748 = vunpack.c.l.b16 %v524
      %v749 = vunpack.c.l.b16 %v525
      %v750 = vunpack.c.l.b16 %v526
      %v751 = vunpack.c.l.b16 %v527
      %v752 = vunpack.c.l.b16 %v528
      %v753 = vunpack.c.l.b16 %v529
      %v754 = vunpack.c.l.b16 %v530
      %v755 = vunpack.c.l.b16 %v531
      %v756 = vunpack.c.l.b16 %v532
      %v757 = vunpack.c.l.b16 %v533
      %v758 = vunpack.c.l.b16 %v534
      %v759 = vunpack.c.l.b16 %v535
      %v760 = vunpack.c.l.b16 %v536
      %v761 = vunpack.c.l.b16 %v537
      %v762 = vunpack.c.l.b16 %v538
      %v763 = vunpack.c.l.b16 %v539
      %v764 = vunpack.c.l.b16 %v540
      %v765 = vpack.c.b16 %v718, %v717
      %v766 = vpack.c.b16 %v720, %v719
      %v767 = vpack.c.b16 %v722, %v721
      %v768 = vpack.c.b16 %v724, %v723
      %v769 = vpack.c.b16 %v726, %v725
      %v770 = vpack.c.b16 %v728, %v727
      %v771 = vpack.c.b16 %v730, %v729
      %v772 = vpack.c.b16 %v732, %v731
      %v773 = vpack.c.b16 %v734, %v733
      %v774 = vpack.c.b16 %v736, %v735
      %v775 = vpack.c.b16 %v738, %v737
      %v776 = vpack.c.b16 %v740, %v739
      %v777 = vpack.c.b16 %v742, %v741
      %v778 = vpack.c.b16 %v744, %v743
      %v779 = vpack.c.b16 %v746, %v745
      %v780 = vpack.c.b16 %v748, %v747
      %v781 = vpack.c.b16 %v750, %v749
      %v782 = vpack.c.b16 %v752, %v751
      %v783 = vpack.c.b16 %v754, %v753
      %v784 = vpack.c.b16 %v756, %v755
      %v785 = vpack.c.b16 %v758, %v757
      %v786 = vpack.c.b16 %v760, %v759
      %v787 = vpack.c.b16 %v762, %v761
      %v788 = vpack.c.b16 %v764, %v763
      %813 = vmatprep.subr.bf16.mxu0 0
      %814 = vmatpush1.bf16.msra.mxu0 %v765
      %815 = vmatprep.subr.bf16.mxu0 0
      %816 = vmatpush1.bf16.msra.mxu0 %v766
      %817 = vmatprep.subr.bf16.mxu0 0
      %818 = vmatpush1.bf16.msra.mxu0 %v767
      %819 = vmatprep.subr.bf16.mxu0 0
      %820 = vmatpush1.bf16.msra.mxu0 %v768
      %821 = vmatprep.subr.bf16.mxu0 0
      %822 = vmatpush1.bf16.msra.mxu0 %v769
      %823 = vmatprep.subr.bf16.mxu0 0
      %824 = vmatpush1.bf16.msra.mxu0 %v770
      %825 = vmatprep.subr.bf16.mxu0 0
      %826 = vmatpush1.bf16.msra.mxu0 %v771
      %827 = vmatprep.subr.bf16.mxu0 0
      %828 = vmatpush1.bf16.msra.mxu0 %v772
      %829 = vmatprep.subr.bf16.mxu0 0
      %830 = vmatpush1.bf16.msra.mxu0 %v773
      %831 = vmatprep.subr.bf16.mxu0 0
      %832 = vmatpush1.bf16.msra.mxu0 %v774
      %833 = vmatprep.subr.bf16.mxu0 0
      %834 = vmatpush1.bf16.msra.mxu0 %v775
      %835 = vmatprep.subr.bf16.mxu0 0
      %836 = vmatpush1.bf16.msra.mxu0 %v776
      %837 = vmatprep.subr.bf16.mxu0 0
      %838 = vmatpush1.bf16.msra.mxu0 %v777
      %839 = vmatprep.subr.bf16.mxu0 0
      %840 = vmatpush1.bf16.msra.mxu0 %v778
      %841 = vmatprep.subr.bf16.mxu0 0
      %842 = vmatpush1.bf16.msra.mxu0 %v779
      %843 = vmatprep.subr.bf16.mxu0 0
      %844 = vmatpush1.bf16.msra.mxu0 %v780
      %845 = vmatprep.mubr.bf16.mxu0 %v622
      %846 = vmatmul.mubr.bf16.gmra.mrb[0].mxu0 %v621
      %v847 = vpop.f32.mrb[0].mxu0
      %v848 = vadd.f32 0.0, %v847
      %v849 = vpop.f32.mrb[0].mxu0
      %v850 = vpop.f32.mrb[0].mxu0
      %v851 = vadd.f32 0.0, %v850
      %v852 = vpop.f32.mrb[0].mxu0
      %853 = vmatprep.mubr.bf16.mxu0 %v625
      %854 = vmatmul.mubr.bf16.gmra.mrb[0].mxu0 %v624
      %v855 = vpop.f32.mrb[0].mxu0
      %v856 = vadd.f32 0.0, %v855
      %v857 = vpop.f32.mrb[0].mxu0
      %v858 = vpop.f32.mrb[0].mxu0
      %v859 = vadd.f32 0.0, %v858
      %v860 = vpop.f32.mrb[0].mxu0
      %861 = vmatprep.mubr.bf16.mxu0 %v628
      %862 = vmatmul.mubr.bf16.gmra.mrb[0].mxu0 %v627
      %v863 = vpop.f32.mrb[0].mxu0
      %v864 = vadd.f32 0.0, %v863
      %v865 = vpop.f32.mrb[0].mxu0
      %v866 = vpop.f32.mrb[0].mxu0
      %v867 = vadd.f32 0.0, %v866
      %v868 = vpop.f32.mrb[0].mxu0
      %869 = vmatprep.mubr.bf16.mxu0 %v631
      %870 = vmatmul.mubr.bf16.gmra.mrb[0].mxu0 %v630
      %v871 = vpop.f32.mrb[0].mxu0
      %v872 = vadd.f32 0.0, %v871
      %v873 = vpop.f32.mrb[0].mxu0
      %v874 = vpop.f32.mrb[0].mxu0
      %v875 = vadd.f32 0.0, %v874
      %v876 = vpop.f32.mrb[0].mxu0
      %877 = vmatprep.mubr.bf16.mxu0 %v634
      %878 = vmatmul.mubr.bf16.gmra.mrb[0].mxu0 %v633
      %v879 = vpop.f32.mrb[0].mxu0
      %v880 = vadd.f32 0.0, %v879
      %v881 = vpop.f32.mrb[0].mxu0
      %v882 = vpop.f32.mrb[0].mxu0
      %v883 = vadd.f32 0.0, %v882
      %v884 = vpop.f32.mrb[0].mxu0
      %885 = vmatprep.mubr.bf16.mxu0 %v637
      %886 = vmatmul.mubr.bf16.gmra.mrb[0].mxu0 %v636
      %v887 = vpop.f32.mrb[0].mxu0
      %v888 = vadd.f32 0.0, %v887
      %v889 = vpop.f32.mrb[0].mxu0
      %v890 = vpop.f32.mrb[0].mxu0
      %v891 = vadd.f32 0.0, %v890
      %v892 = vpop.f32.mrb[0].mxu0
      %893 = vmatprep.mubr.bf16.mxu0 %v640
      %894 = vmatmul.mubr.bf16.gmra.mrb[0].mxu0 %v639
      %v895 = vpop.f32.mrb[0].mxu0
      %v896 = vadd.f32 0.0, %v895
      %v897 = vpop.f32.mrb[0].mxu0
      %v898 = vpop.f32.mrb[0].mxu0
      %v899 = vadd.f32 0.0, %v898
      %v900 = vpop.f32.mrb[0].mxu0
      %901 = vmatprep.mubr.bf16.mxu0 %v643
      %902 = vmatmul.mubr.bf16.gmra.mrb[0].mxu0 %v642
      %v903 = vpop.f32.mrb[0].mxu0
      %v904 = vadd.f32 0.0, %v903
      %v905 = vpop.f32.mrb[0].mxu0
      %v906 = vpop.f32.mrb[0].mxu0
      %v907 = vadd.f32 0.0, %v906
      %v908 = vpop.f32.mrb[0].mxu0
      %909 = vdwg.mxu0
      %910 = vmatprep.subr.bf16.mxu0 0
      %911 = vmatpush1.bf16.msra.mxu0 %v781
      %912 = vmatprep.subr.bf16.mxu0 0
      %913 = vmatpush1.bf16.msra.mxu0 %v782
      %914 = vmatprep.subr.bf16.mxu0 0
      %915 = vmatpush1.bf16.msra.mxu0 %v783
      %916 = vmatprep.subr.bf16.mxu0 0
      %917 = vmatpush1.bf16.msra.mxu0 %v784
      %918 = vmatprep.subr.bf16.mxu0 0
      %919 = vmatpush1.bf16.msra.mxu0 %v785
      %920 = vmatprep.subr.bf16.mxu0 0
      %921 = vmatpush1.bf16.msra.mxu0 %v786
      %922 = vmatprep.subr.bf16.mxu0 0
      %923 = vmatpush1.bf16.msra.mxu0 %v787
      %924 = vmatprep.subr.bf16.mxu0 0
      %925 = vmatpush1.bf16.msra.mxu0 %v788
      %926 = vmatprep.subr.bf16.mxu0 0
      %927 = vmatpush1.bf16.msra.mxu0 0
      %928 = vmatprep.subr.bf16.mxu0 0
      %929 = vmatpush1.bf16.msra.mxu0 0
      %930 = vmatprep.subr.bf16.mxu0 0
      %931 = vmatpush1.bf16.msra.mxu0 0
      %932 = vmatprep.subr.bf16.mxu0 0
      %933 = vmatpush1.bf16.msra.mxu0 0
      %934 = vmatprep.subr.bf16.mxu0 0
      %935 = vmatpush1.bf16.msra.mxu0 0
      %936 = vmatprep.subr.bf16.mxu0 0
      %937 = vmatpush1.bf16.msra.mxu0 0
      %938 = vmatprep.subr.bf16.mxu0 0
      %939 = vmatpush1.bf16.msra.mxu0 0
      %940 = vmatprep.subr.bf16.mxu0 0
      %941 = vmatpush1.bf16.msra.mxu0 0
      %942 = vmatprep.mubr.bf16.mxu0 0
      %943 = vmatmul.mubr.bf16.gmra.mrb[0].mxu0 %v623
      %v944 = vpop.f32.mrb[0].mxu0
      %v945 = vadd.f32 %v848, %v944
      %v946 = vpop.f32.mrb[0].mxu0
      %v947 = vpop.f32.mrb[0].mxu0
      %v948 = vadd.f32 %v851, %v947
      %v949 = vpop.f32.mrb[0].mxu0
      %950 = vmatprep.mubr.bf16.mxu0 0
      %951 = vmatmul.mubr.bf16.gmra.mrb[0].mxu0 %v626
      %v952 = vpop.f32.mrb[0].mxu0
      %v953 = vadd.f32 %v856, %v952
      %v954 = vpop.f32.mrb[0].mxu0
      %v955 = vpop.f32.mrb[0].mxu0
      %v956 = vadd.f32 %v859, %v955
      %v957 = vpop.f32.mrb[0].mxu0
      %958 = vmatprep.mubr.bf16.mxu0 0
      %959 = vmatmul.mubr.bf16.gmra.mrb[0].mxu0 %v629
      %v960 = vpop.f32.mrb[0].mxu0
      %v961 = vadd.f32 %v864, %v960
      %v962 = vpop.f32.mrb[0].mxu0
      %v963 = vpop.f32.mrb[0].mxu0
      %v964 = vadd.f32 %v867, %v963
      %v965 = vpop.f32.mrb[0].mxu0
      %966 = vmatprep.mubr.bf16.mxu0 0
      %967 = vmatmul.mubr.bf16.gmra.mrb[0].mxu0 %v632
      %v968 = vpop.f32.mrb[0].mxu0
      %v969 = vadd.f32 %v872, %v968
      %v970 = vpop.f32.mrb[0].mxu0
      %v971 = vpop.f32.mrb[0].mxu0
      %v972 = vadd.f32 %v875, %v971
      %v973 = vpop.f32.mrb[0].mxu0
      %974 = vmatprep.mubr.bf16.mxu0 0
      %975 = vmatmul.mubr.bf16.gmra.mrb[0].mxu0 %v635
      %v976 = vpop.f32.mrb[0].mxu0
      %v977 = vadd.f32 %v880, %v976
      %v978 = vpop.f32.mrb[0].mxu0
      %v979 = vpop.f32.mrb[0].mxu0
      %v980 = vadd.f32 %v883, %v979
      %v981 = vpop.f32.mrb[0].mxu0
      %982 = vmatprep.mubr.bf16.mxu0 0
      %983 = vmatmul.mubr.bf16.gmra.mrb[0].mxu0 %v638
      %v984 = vpop.f32.mrb[0].mxu0
      %v985 = vadd.f32 %v888, %v984
      %v986 = vpop.f32.mrb[0].mxu0
      %v987 = vpop.f32.mrb[0].mxu0
      %v988 = vadd.f32 %v891, %v987
      %v989 = vpop.f32.mrb[0].mxu0
      %990 = vmatprep.mubr.bf16.mxu0 0
      %991 = vmatmul.mubr.bf16.gmra.mrb[0].mxu0 %v641
      %v992 = vpop.f32.mrb[0].mxu0
      %v993 = vadd.f32 %v896, %v992
      %v994 = vpop.f32.mrb[0].mxu0
      %v995 = vpop.f32.mrb[0].mxu0
      %v996 = vadd.f32 %v899, %v995
      %v997 = vpop.f32.mrb[0].mxu0
      %998 = vmatprep.mubr.bf16.mxu0 0
      %999 = vmatmul.mubr.bf16.gmra.mrb[0].mxu0 %v644
      %v1000 = vpop.f32.mrb[0].mxu0
      %v1001 = vadd.f32 %v904, %v1000
      %v1002 = vpop.f32.mrb[0].mxu0
      %v1003 = vpop.f32.mrb[0].mxu0
      %v1004 = vadd.f32 %v907, %v1003
      %v1005 = vpop.f32.mrb[0].mxu0
      %1006 = vdwg.mxu0
      %p1007 = scmp.eq.s32.totalorder %s26, 0
      // Predicated region
      $region49: #{_forward_jit.5} parent=47 // pred_check
        %p1008 = pneg %p1007
      $region50: #{_forward_jit.5} parent=47 // pred_check_branch
        %1010 = sbr.rel (%p1008) target = $region52
      $region51: #{_forward_jit.5} parent=47 // pred_region
        %1011 = vst [vmem:[%s446] sm:$0xff] %v945
        %1012 = vst [vmem:[%s446 + $0x8] sm:$0xff] %v948
        %1013 = vst [vmem:[%s446 + $0x10] sm:$0xff] %v953
        %1014 = vst [vmem:[%s446 + $0x18] sm:$0xff] %v956
        %1015 = vst [vmem:[%s446 + $0x20] sm:$0xff] %v961
        %1016 = vst [vmem:[%s446 + $0x28] sm:$0xff] %v964
        %1017 = vst [vmem:[%s446 + $0x30] sm:$0xff] %v969
        %1018 = vst [vmem:[%s446 + $0x38] sm:$0xff] %v972
        %1019 = vst [vmem:[%s446 + $0x40] sm:$0xff] %v977
        %1020 = vst [vmem:[%s446 + $0x48] sm:$0xff] %v980
        %1021 = vst [vmem:[%s446 + $0x50] sm:$0xff] %v985
        %1022 = vst [vmem:[%s446 + $0x58] sm:$0xff] %v988
        %1023 = vst [vmem:[%s446 + $0x60] sm:$0xff] %v993
        %1024 = vst [vmem:[%s446 + $0x68] sm:$0xff] %v996
        %1025 = vst [vmem:[%s446 + $0x70] sm:$0xff] %v1001
        %1026 = vst [vmem:[%s446 + $0x78] sm:$0xff] %v1004
      $region52: #{_forward_jit.5} parent=47 // pred_fallthru
        _
      %p1027 = scmp.gt.s32.totalorder %s26, 0
      // Predicated region
      $region53: #{_forward_jit.5} parent=47 // pred_check
        %p1028 = pneg %p1027
      $region54: #{_forward_jit.5} parent=47 // pred_check_branch
        %1030 = sbr.rel (%p1028) target = $region56
      $region55: #{_forward_jit.5} parent=47 // pred_region
        %v1031 = vld [vmem:[%s446] sm:$0xff]
        %v1032 = vld [vmem:[%s446 + $0x8] sm:$0xff]
        %v1033 = vld [vmem:[%s446 + $0x10] sm:$0xff]
        %v1034 = vld [vmem:[%s446 + $0x18] sm:$0xff]
        %v1035 = vld [vmem:[%s446 + $0x20] sm:$0xff]
        %v1036 = vld [vmem:[%s446 + $0x28] sm:$0xff]
        %v1037 = vld [vmem:[%s446 + $0x30] sm:$0xff]
        %v1038 = vld [vmem:[%s446 + $0x38] sm:$0xff]
        %v1039 = vld [vmem:[%s446 + $0x40] sm:$0xff]
        %v1040 = vld [vmem:[%s446 + $0x48] sm:$0xff]
        %v1041 = vld [vmem:[%s446 + $0x50] sm:$0xff]
        %v1042 = vld [vmem:[%s446 + $0x58] sm:$0xff]
        %v1043 = vld [vmem:[%s446 + $0x60] sm:$0xff]
        %v1044 = vld [vmem:[%s446 + $0x68] sm:$0xff]
        %v1045 = vld [vmem:[%s446 + $0x70] sm:$0xff]
        %v1046 = vld [vmem:[%s446 + $0x78] sm:$0xff]
        %v1047 = vadd.f32 %v1031, %v945
        %v1048 = vadd.f32 %v1032, %v948
        %v1049 = vadd.f32 %v1033, %v953
        %v1050 = vadd.f32 %v1034, %v956
        %v1051 = vadd.f32 %v1035, %v961
        %v1052 = vadd.f32 %v1036, %v964
        %v1053 = vadd.f32 %v1037, %v969
        %v1054 = vadd.f32 %v1038, %v972
        %v1055 = vadd.f32 %v1039, %v977
        %v1056 = vadd.f32 %v1040, %v980
        %v1057 = vadd.f32 %v1041, %v985
        %v1058 = vadd.f32 %v1042, %v988
        %v1059 = vadd.f32 %v1043, %v993
        %v1060 = vadd.f32 %v1044, %v996
        %v1061 = vadd.f32 %v1045, %v1001
        %v1062 = vadd.f32 %v1046, %v1004
        %1063 = vst [vmem:[%s446] sm:$0xff] %v1047
        %1064 = vst [vmem:[%s446 + $0x8] sm:$0xff] %v1048
        %1065 = vst [vmem:[%s446 + $0x10] sm:$0xff] %v1049
        %1066 = vst [vmem:[%s446 + $0x18] sm:$0xff] %v1050
        %1067 = vst [vmem:[%s446 + $0x20] sm:$0xff] %v1051
        %1068 = vst [vmem:[%s446 + $0x28] sm:$0xff] %v1052
        %1069 = vst [vmem:[%s446 + $0x30] sm:$0xff] %v1053
        %1070 = vst [vmem:[%s446 + $0x38] sm:$0xff] %v1054
        %1071 = vst [vmem:[%s446 + $0x40] sm:$0xff] %v1055
        %1072 = vst [vmem:[%s446 + $0x48] sm:$0xff] %v1056
        %1073 = vst [vmem:[%s446 + $0x50] sm:$0xff] %v1057
        %1074 = vst [vmem:[%s446 + $0x58] sm:$0xff] %v1058
        %1075 = vst [vmem:[%s446 + $0x60] sm:$0xff] %v1059
        %1076 = vst [vmem:[%s446 + $0x68] sm:$0xff] %v1060
        %1077 = vst [vmem:[%s446 + $0x70] sm:$0xff] %v1061
        %1078 = vst [vmem:[%s446 + $0x78] sm:$0xff] %v1062
      $region56: #{_forward_jit.5} parent=47 // pred_fallthru
        _
      // Predicated region
      $region57: #{_forward_jit.5} parent=47 // pred_check
        %p1079 = pneg %p1007
      $region58: #{_forward_jit.5} parent=47 // pred_check_branch
        %1081 = sbr.rel (%p1079) target = $region60
      $region59: #{_forward_jit.5} parent=47 // pred_region
        %v1082 = vld [vmem:[%s446] sm:$0xff]
        %v1083 = vld [vmem:[%s446 + $0x8] sm:$0xff]
        %v1084 = vld [vmem:[%s446 + $0x10] sm:$0xff]
        %v1085 = vld [vmem:[%s446 + $0x18] sm:$0xff]
        %v1086 = vld [vmem:[%s446 + $0x20] sm:$0xff]
        %v1087 = vld [vmem:[%s446 + $0x28] sm:$0xff]
        %v1088 = vld [vmem:[%s446 + $0x30] sm:$0xff]
        %v1089 = vld [vmem:[%s446 + $0x38] sm:$0xff]
        %v1090 = vld [vmem:[%s446 + $0x40] sm:$0xff]
        %v1091 = vld [vmem:[%s446 + $0x48] sm:$0xff]
        %v1092 = vld [vmem:[%s446 + $0x50] sm:$0xff]
        %v1093 = vld [vmem:[%s446 + $0x58] sm:$0xff]
        %v1094 = vld [vmem:[%s446 + $0x60] sm:$0xff]
        %v1095 = vld [vmem:[%s446 + $0x68] sm:$0xff]
        %v1096 = vld [vmem:[%s446 + $0x70] sm:$0xff]
        %v1097 = vld [vmem:[%s446 + $0x78] sm:$0xff]
        %v1098 = vld [vmem:[%s434] sm:$0xff]
        %v1099 = vld [vmem:[%s434 + $0x8] sm:$0xff]
        %v1100 = vld [vmem:[%s434 + $0x10] sm:$0xff]
        %v1101 = vld [vmem:[%s434 + $0x18] sm:$0xff]
        %v1102 = vld [vmem:[%s434 + $0x20] sm:$0xff]
        %v1103 = vld [vmem:[%s434 + $0x28] sm:$0xff]
        %v1104 = vld [vmem:[%s434 + $0x30] sm:$0xff]
        %v1105 = vld [vmem:[%s434 + $0x38] sm:$0xff]
        %v1106 = vld [vmem:[%s434 + $0x40] sm:$0xff]
        %v1107 = vld [vmem:[%s434 + $0x48] sm:$0xff]
        %v1108 = vld [vmem:[%s434 + $0x50] sm:$0xff]
        %v1109 = vld [vmem:[%s434 + $0x58] sm:$0xff]
        %v1110 = vld [vmem:[%s434 + $0x60] sm:$0xff]
        %v1111 = vld [vmem:[%s434 + $0x68] sm:$0xff]
        %v1112 = vld [vmem:[%s434 + $0x70] sm:$0xff]
        %v1113 = vld [vmem:[%s434 + $0x78] sm:$0xff]
        %v1114 = vmul.f32 %v1082, %v1098
        %v1115 = vmul.f32 %v1083, %v1099
        %v1116 = vmul.f32 %v1084, %v1100
        %v1117 = vmul.f32 %v1085, %v1101
        %v1118 = vmul.f32 %v1086, %v1102
        %v1119 = vmul.f32 %v1087, %v1103
        %v1120 = vmul.f32 %v1088, %v1104
        %v1121 = vmul.f32 %v1089, %v1105
        %v1122 = vmul.f32 %v1090, %v1106
        %v1123 = vmul.f32 %v1091, %v1107
        %v1124 = vmul.f32 %v1092, %v1108
        %v1125 = vmul.f32 %v1093, %v1109
        %v1126 = vmul.f32 %v1094, %v1110
        %v1127 = vmul.f32 %v1095, %v1111
        %v1128 = vmul.f32 %v1096, %v1112
        %v1129 = vmul.f32 %v1097, %v1113
        %v1130 = vpack.c.bf16 %v1083, %v1082
        %v1131 = vpack.c.bf16 %v1085, %v1084
        %v1132 = vpack.c.bf16 %v1087, %v1086
        %v1133 = vpack.c.bf16 %v1089, %v1088
        %v1134 = vpack.c.bf16 %v1091, %v1090
        %v1135 = vpack.c.bf16 %v1093, %v1092
        %v1136 = vpack.c.bf16 %v1095, %v1094
        %v1137 = vpack.c.bf16 %v1097, %v1096
        %v1138 = vld [vmem:[%s3] sm:$0xf]
        %v1139 = vld [vmem:[%s3 + $0x4] sm:$0xf]
        %v1140 = vld [vmem:[%s3 + $0x8] sm:$0xf]
        %v1141 = vld [vmem:[%s3 + $0xc] sm:$0xf]
        %v1142 = vld [vmem:[%s3 + $0x10] sm:$0xf]
        %v1143 = vld [vmem:[%s3 + $0x14] sm:$0xf]
        %v1144 = vld [vmem:[%s3 + $0x18] sm:$0xf]
        %v1145 = vld [vmem:[%s3 + $0x1c] sm:$0xf]
        %v1146 = vld [vmem:[%s3 + $0x20] sm:$0xf]
        %v1147 = vld [vmem:[%s3 + $0x24] sm:$0xf]
        %v1148 = vld [vmem:[%s3 + $0x28] sm:$0xf]
        %v1149 = vld [vmem:[%s3 + $0x2c] sm:$0xf]
        %v1150 = vld [vmem:[%s3 + $0x30] sm:$0xf]
        %v1151 = vld [vmem:[%s3 + $0x34] sm:$0xf]
        %v1152 = vld [vmem:[%s3 + $0x38] sm:$0xf]
        %v1153 = vld [vmem:[%s3 + $0x3c] sm:$0xf]
        %v1154 = vpack.c.bf16 %v1115, %v1114
        %v1155 = vpack.c.bf16 %v1117, %v1116
        %v1156 = vpack.c.bf16 %v1119, %v1118
        %v1157 = vpack.c.bf16 %v1121, %v1120
        %v1158 = vpack.c.bf16 %v1123, %v1122
        %v1159 = vpack.c.bf16 %v1125, %v1124
        %v1160 = vpack.c.bf16 %v1127, %v1126
        %v1161 = vpack.c.bf16 %v1129, %v1128
        %v1162 = vld [vmem:[%s4] sm:$0xf]
        %v1163 = vld [vmem:[%s4 + $0x4] sm:$0xf]
        %v1164 = vld [vmem:[%s4 + $0x8] sm:$0xf]
        %v1165 = vld [vmem:[%s4 + $0xc] sm:$0xf]
        %v1166 = vld [vmem:[%s4 + $0x10] sm:$0xf]
        %v1167 = vld [vmem:[%s4 + $0x14] sm:$0xf]
        %v1168 = vld [vmem:[%s4 + $0x18] sm:$0xf]
        %v1169 = vld [vmem:[%s4 + $0x1c] sm:$0xf]
        %v1170 = vld [vmem:[%s4 + $0x20] sm:$0xf]
        %v1171 = vld [vmem:[%s4 + $0x24] sm:$0xf]
        %v1172 = vld [vmem:[%s4 + $0x28] sm:$0xf]
        %v1173 = vld [vmem:[%s4 + $0x2c] sm:$0xf]
        %v1174 = vld [vmem:[%s4 + $0x30] sm:$0xf]
        %v1175 = vld [vmem:[%s4 + $0x34] sm:$0xf]
        %v1176 = vld [vmem:[%s4 + $0x38] sm:$0xf]
        %v1177 = vld [vmem:[%s4 + $0x3c] sm:$0xf]
        %v1194 = vunpack.c.l.b16 %v1162
        %v1195 = vunpack.c.l.b16 %v1163
        %v1196 = vunpack.c.l.b16 %v1164
        %v1197 = vunpack.c.l.b16 %v1165
        %v1198 = vunpack.c.l.b16 %v1166
        %v1199 = vunpack.c.l.b16 %v1167
        %v1200 = vunpack.c.l.b16 %v1168
        %v1201 = vunpack.c.l.b16 %v1169
        %v1202 = vunpack.c.l.b16 %v1170
        %v1203 = vunpack.c.l.b16 %v1171
        %v1204 = vunpack.c.l.b16 %v1172
        %v1205 = vunpack.c.l.b16 %v1173
        %v1206 = vunpack.c.l.b16 %v1174
        %v1207 = vunpack.c.l.b16 %v1175
        %v1208 = vunpack.c.l.b16 %v1176
        %v1209 = vunpack.c.l.b16 %v1177
        %v1210 = vpack.c.b16 %v1195, %v1194
        %v1211 = vpack.c.b16 %v1197, %v1196
        %v1212 = vpack.c.b16 %v1199, %v1198
        %v1213 = vpack.c.b16 %v1201, %v1200
        %v1214 = vpack.c.b16 %v1203, %v1202
        %v1215 = vpack.c.b16 %v1205, %v1204
        %v1216 = vpack.c.b16 %v1207, %v1206
        %v1217 = vpack.c.b16 %v1209, %v1208
        %1226 = vmatprep.subr.bf16.mxu0 0
        %1227 = vmatpush1.bf16.msra.mxu0 %v1210
        %1228 = vmatprep.subr.bf16.mxu0 0
        %1229 = vmatpush1.bf16.msra.mxu0 %v1211
        %1230 = vmatprep.subr.bf16.mxu0 0
        %1231 = vmatpush1.bf16.msra.mxu0 %v1212
        %1232 = vmatprep.subr.bf16.mxu0 0
        %1233 = vmatpush1.bf16.msra.mxu0 %v1213
        %1234 = vmatprep.subr.bf16.mxu0 0
        %1235 = vmatpush1.bf16.msra.mxu0 %v1214
        %1236 = vmatprep.subr.bf16.mxu0 0
        %1237 = vmatpush1.bf16.msra.mxu0 %v1215
        %1238 = vmatprep.subr.bf16.mxu0 0
        %1239 = vmatpush1.bf16.msra.mxu0 %v1216
        %1240 = vmatprep.subr.bf16.mxu0 0
        %1241 = vmatpush1.bf16.msra.mxu0 %v1217
        %1242 = vmatprep.subr.bf16.mxu0 0
        %1243 = vmatpush1.bf16.msra.mxu0 0
        %1244 = vmatprep.subr.bf16.mxu0 0
        %1245 = vmatpush1.bf16.msra.mxu0 0
        %1246 = vmatprep.subr.bf16.mxu0 0
        %1247 = vmatpush1.bf16.msra.mxu0 0
        %1248 = vmatprep.subr.bf16.mxu0 0
        %1249 = vmatpush1.bf16.msra.mxu0 0
        %1250 = vmatprep.subr.bf16.mxu0 0
        %1251 = vmatpush1.bf16.msra.mxu0 0
        %1252 = vmatprep.subr.bf16.mxu0 0
        %1253 = vmatpush1.bf16.msra.mxu0 0
        %1254 = vmatprep.subr.bf16.mxu0 0
        %1255 = vmatpush1.bf16.msra.mxu0 0
        %1256 = vmatprep.subr.bf16.mxu0 0
        %1257 = vmatpush1.bf16.msra.mxu0 0
        %1258 = vmatprep.mubr.bf16.mxu0 0
        %1259 = vmatmul.mubr.bf16.gmra.mrb[0].mxu0 %v1154
        %v1260 = vpop.f32.mrb[0].mxu0
        %v1261 = vadd.f32 0.0, %v1260
        %v1262 = vpop.f32.mrb[0].mxu0
        %v1263 = vpop.f32.mrb[0].mxu0
        %v1264 = vadd.f32 0.0, %v1263
        %v1265 = vpop.f32.mrb[0].mxu0
        %1266 = vmatprep.mubr.bf16.mxu0 0
        %1267 = vmatmul.mubr.bf16.gmra.mrb[0].mxu0 %v1155
        %v1268 = vpop.f32.mrb[0].mxu0
        %v1269 = vadd.f32 0.0, %v1268
        %v1270 = vpop.f32.mrb[0].mxu0
        %v1271 = vpop.f32.mrb[0].mxu0
        %v1272 = vadd.f32 0.0, %v1271
        %v1273 = vpop.f32.mrb[0].mxu0
        %1274 = vmatprep.mubr.bf16.mxu0 0
        %1275 = vmatmul.mubr.bf16.gmra.mrb[0].mxu0 %v1156
        %v1276 = vpop.f32.mrb[0].mxu0
        %v1277 = vadd.f32 0.0, %v1276
        %v1278 = vpop.f32.mrb[0].mxu0
        %v1279 = vpop.f32.mrb[0].mxu0
        %v1280 = vadd.f32 0.0, %v1279
        %v1281 = vpop.f32.mrb[0].mxu0
        %1282 = vmatprep.mubr.bf16.mxu0 0
        %1283 = vmatmul.mubr.bf16.gmra.mrb[0].mxu0 %v1157
        %v1284 = vpop.f32.mrb[0].mxu0
        %v1285 = vadd.f32 0.0, %v1284
        %v1286 = vpop.f32.mrb[0].mxu0
        %v1287 = vpop.f32.mrb[0].mxu0
        %v1288 = vadd.f32 0.0, %v1287
        %v1289 = vpop.f32.mrb[0].mxu0
        %1290 = vmatprep.mubr.bf16.mxu0 0
        %1291 = vmatmul.mubr.bf16.gmra.mrb[0].mxu0 %v1158
        %v1292 = vpop.f32.mrb[0].mxu0
        %v1293 = vadd.f32 0.0, %v1292
        %v1294 = vpop.f32.mrb[0].mxu0
        %v1295 = vpop.f32.mrb[0].mxu0
        %v1296 = vadd.f32 0.0, %v1295
        %v1297 = vpop.f32.mrb[0].mxu0
        %1298 = vmatprep.mubr.bf16.mxu0 0
        %1299 = vmatmul.mubr.bf16.gmra.mrb[0].mxu0 %v1159
        %v1300 = vpop.f32.mrb[0].mxu0
        %v1301 = vadd.f32 0.0, %v1300
        %v1302 = vpop.f32.mrb[0].mxu0
        %v1303 = vpop.f32.mrb[0].mxu0
        %v1304 = vadd.f32 0.0, %v1303
        %v1305 = vpop.f32.mrb[0].mxu0
        %1306 = vmatprep.mubr.bf16.mxu0 0
        %1307 = vmatmul.mubr.bf16.gmra.mrb[0].mxu0 %v1160
        %v1308 = vpop.f32.mrb[0].mxu0
        %v1309 = vadd.f32 0.0, %v1308
        %v1310 = vpop.f32.mrb[0].mxu0
        %v1311 = vpop.f32.mrb[0].mxu0
        %v1312 = vadd.f32 0.0, %v1311
        %v1313 = vpop.f32.mrb[0].mxu0
        %1314 = vmatprep.mubr.bf16.mxu0 0
        %1315 = vmatmul.mubr.bf16.gmra.mrb[0].mxu0 %v1161
        %v1316 = vpop.f32.mrb[0].mxu0
        %v1317 = vadd.f32 0.0, %v1316
        %v1318 = vpop.f32.mrb[0].mxu0
        %v1319 = vpop.f32.mrb[0].mxu0
        %v1320 = vadd.f32 0.0, %v1319
        %v1321 = vpop.f32.mrb[0].mxu0
        %1322 = vdwg.mxu0
        %v1339 = vunpack.c.l.b16 %v1138
        %v1340 = vunpack.c.l.b16 %v1139
        %v1341 = vunpack.c.l.b16 %v1140
        %v1342 = vunpack.c.l.b16 %v1141
        %v1343 = vunpack.c.l.b16 %v1142
        %v1344 = vunpack.c.l.b16 %v1143
        %v1345 = vunpack.c.l.b16 %v1144
        %v1346 = vunpack.c.l.b16 %v1145
        %v1347 = vunpack.c.l.b16 %v1146
        %v1348 = vunpack.c.l.b16 %v1147
        %v1349 = vunpack.c.l.b16 %v1148
        %v1350 = vunpack.c.l.b16 %v1149
        %v1351 = vunpack.c.l.b16 %v1150
        %v1352 = vunpack.c.l.b16 %v1151
        %v1353 = vunpack.c.l.b16 %v1152
        %v1354 = vunpack.c.l.b16 %v1153
        %v1355 = vpack.c.b16 %v1340, %v1339
        %v1356 = vpack.c.b16 %v1342, %v1341
        %v1357 = vpack.c.b16 %v1344, %v1343
        %v1358 = vpack.c.b16 %v1346, %v1345
        %v1359 = vpack.c.b16 %v1348, %v1347
        %v1360 = vpack.c.b16 %v1350, %v1349
        %v1361 = vpack.c.b16 %v1352, %v1351
        %v1362 = vpack.c.b16 %v1354, %v1353
        %1371 = vmatprep.subr.bf16.mxu0 0
        %1372 = vmatpush1.bf16.msra.mxu0 %v1355
        %1373 = vmatprep.subr.bf16.mxu0 0
        %1374 = vmatpush1.bf16.msra.mxu0 %v1356
        %1375 = vmatprep.subr.bf16.mxu0 0
        %1376 = vmatpush1.bf16.msra.mxu0 %v1357
        %1377 = vmatprep.subr.bf16.mxu0 0
        %1378 = vmatpush1.bf16.msra.mxu0 %v1358
        %1379 = vmatprep.subr.bf16.mxu0 0
        %1380 = vmatpush1.bf16.msra.mxu0 %v1359
        %1381 = vmatprep.subr.bf16.mxu0 0
        %1382 = vmatpush1.bf16.msra.mxu0 %v1360
        %1383 = vmatprep.subr.bf16.mxu0 0
        %1384 = vmatpush1.bf16.msra.mxu0 %v1361
        %1385 = vmatprep.subr.bf16.mxu0 0
        %1386 = vmatpush1.bf16.msra.mxu0 %v1362
        %1387 = vmatprep.subr.bf16.mxu0 0
        %1388 = vmatpush1.bf16.msra.mxu0 0
        %1389 = vmatprep.subr.bf16.mxu0 0
        %1390 = vmatpush1.bf16.msra.mxu0 0
        %1391 = vmatprep.subr.bf16.mxu0 0
        %1392 = vmatpush1.bf16.msra.mxu0 0
        %1393 = vmatprep.subr.bf16.mxu0 0
        %1394 = vmatpush1.bf16.msra.mxu0 0
        %1395 = vmatprep.subr.bf16.mxu0 0
        %1396 = vmatpush1.bf16.msra.mxu0 0
        %1397 = vmatprep.subr.bf16.mxu0 0
        %1398 = vmatpush1.bf16.msra.mxu0 0
        %1399 = vmatprep.subr.bf16.mxu0 0
        %1400 = vmatpush1.bf16.msra.mxu0 0
        %1401 = vmatprep.subr.bf16.mxu0 0
        %1402 = vmatpush1.bf16.msra.mxu0 0
        %1403 = vmatprep.mubr.bf16.mxu0 0
        %1404 = vmatmul.mubr.bf16.gmra.mrb[0].mxu0 %v1130
        %v1405 = vpop.f32.mrb[0].mxu0
        %v1406 = vadd.f32 %v1261, %v1405
        %v1407 = vpop.f32.mrb[0].mxu0
        %v1408 = vpop.f32.mrb[0].mxu0
        %v1409 = vadd.f32 %v1264, %v1408
        %v1410 = vpop.f32.mrb[0].mxu0
        %1411 = vmatprep.mubr.bf16.mxu0 0
        %1412 = vmatmul.mubr.bf16.gmra.mrb[0].mxu0 %v1131
        %v1413 = vpop.f32.mrb[0].mxu0
        %v1414 = vadd.f32 %v1269, %v1413
        %v1415 = vpop.f32.mrb[0].mxu0
        %v1416 = vpop.f32.mrb[0].mxu0
        %v1417 = vadd.f32 %v1272, %v1416
        %v1418 = vpop.f32.mrb[0].mxu0
        %1419 = vmatprep.mubr.bf16.mxu0 0
        %1420 = vmatmul.mubr.bf16.gmra.mrb[0].mxu0 %v1132
        %v1421 = vpop.f32.mrb[0].mxu0
        %v1422 = vadd.f32 %v1277, %v1421
        %v1423 = vpop.f32.mrb[0].mxu0
        %v1424 = vpop.f32.mrb[0].mxu0
        %v1425 = vadd.f32 %v1280, %v1424
        %v1426 = vpop.f32.mrb[0].mxu0
        %1427 = vmatprep.mubr.bf16.mxu0 0
        %1428 = vmatmul.mubr.bf16.gmra.mrb[0].mxu0 %v1133
        %v1429 = vpop.f32.mrb[0].mxu0
        %v1430 = vadd.f32 %v1285, %v1429
        %v1431 = vpop.f32.mrb[0].mxu0
        %v1432 = vpop.f32.mrb[0].mxu0
        %v1433 = vadd.f32 %v1288, %v1432
        %v1434 = vpop.f32.mrb[0].mxu0
        %1435 = vmatprep.mubr.bf16.mxu0 0
        %1436 = vmatmul.mubr.bf16.gmra.mrb[0].mxu0 %v1134
        %v1437 = vpop.f32.mrb[0].mxu0
        %v1438 = vadd.f32 %v1293, %v1437
        %v1439 = vpop.f32.mrb[0].mxu0
        %v1440 = vpop.f32.mrb[0].mxu0
        %v1441 = vadd.f32 %v1296, %v1440
        %v1442 = vpop.f32.mrb[0].mxu0
        %1443 = vmatprep.mubr.bf16.mxu0 0
        %1444 = vmatmul.mubr.bf16.gmra.mrb[0].mxu0 %v1135
        %v1445 = vpop.f32.mrb[0].mxu0
        %v1446 = vadd.f32 %v1301, %v1445
        %v1447 = vpop.f32.mrb[0].mxu0
        %v1448 = vpop.f32.mrb[0].mxu0
        %v1449 = vadd.f32 %v1304, %v1448
        %v1450 = vpop.f32.mrb[0].mxu0
        %1451 = vmatprep.mubr.bf16.mxu0 0
        %1452 = vmatmul.mubr.bf16.gmra.mrb[0].mxu0 %v1136
        %v1453 = vpop.f32.mrb[0].mxu0
        %v1454 = vadd.f32 %v1309, %v1453
        %v1455 = vpop.f32.mrb[0].mxu0
        %v1456 = vpop.f32.mrb[0].mxu0
        %v1457 = vadd.f32 %v1312, %v1456
        %v1458 = vpop.f32.mrb[0].mxu0
        %1459 = vmatprep.mubr.bf16.mxu0 0
        %1460 = vmatmul.mubr.bf16.gmra.mrb[0].mxu0 %v1137
        %v1461 = vpop.f32.mrb[0].mxu0
        %v1462 = vadd.f32 %v1317, %v1461
        %v1463 = vpop.f32.mrb[0].mxu0
        %v1464 = vpop.f32.mrb[0].mxu0
        %v1465 = vadd.f32 %v1320, %v1464
        %v1466 = vpop.f32.mrb[0].mxu0
        %1467 = vdwg.mxu0
        %v1468 = vld [vmem:[%s5] sm:$0x1]
        %v1470 = vlaneseq
        %v1471 = vshrl.u32 %v1470, 7
        %v1472 = vsub.s32 0, %v1471
        %v1473 = vrot.slane %v1468, %v1472
        %v1475 = vadd.f32 %v1406, %v1473
        %v1476 = vadd.f32 %v1409, %v1473
        %v1477 = vadd.f32 %v1414, %v1473
        %v1478 = vadd.f32 %v1417, %v1473
        %v1479 = vadd.f32 %v1422, %v1473
        %v1480 = vadd.f32 %v1425, %v1473
        %v1481 = vadd.f32 %v1430, %v1473
        %v1482 = vadd.f32 %v1433, %v1473
        %v1483 = vadd.f32 %v1438, %v1473
        %v1484 = vadd.f32 %v1441, %v1473
        %v1485 = vadd.f32 %v1446, %v1473
        %v1486 = vadd.f32 %v1449, %v1473
        %v1487 = vadd.f32 %v1454, %v1473
        %v1488 = vadd.f32 %v1457, %v1473
        %v1489 = vadd.f32 %v1462, %v1473
        %v1490 = vadd.f32 %v1465, %v1473
        %v1491 = vadd.f32 %v1082, %v1114
        %v1492 = vadd.f32 %v1083, %v1115
        %v1493 = vadd.f32 %v1084, %v1116
        %v1494 = vadd.f32 %v1085, %v1117
        %v1495 = vadd.f32 %v1086, %v1118
        %v1496 = vadd.f32 %v1087, %v1119
        %v1497 = vadd.f32 %v1088, %v1120
        %v1498 = vadd.f32 %v1089, %v1121
        %v1499 = vadd.f32 %v1090, %v1122
        %v1500 = vadd.f32 %v1091, %v1123
        %v1501 = vadd.f32 %v1092, %v1124
        %v1502 = vadd.f32 %v1093, %v1125
        %v1503 = vadd.f32 %v1094, %v1126
        %v1504 = vadd.f32 %v1095, %v1127
        %v1505 = vadd.f32 %v1096, %v1128
        %v1506 = vadd.f32 %v1097, %v1129
        %1507 = vst [vmem:[%s446] sm:$0xff] %v1491
        %1508 = vst [vmem:[%s446 + $0x8] sm:$0xff] %v1492
        %1509 = vst [vmem:[%s446 + $0x10] sm:$0xff] %v1493
        %1510 = vst [vmem:[%s446 + $0x18] sm:$0xff] %v1494
        %1511 = vst [vmem:[%s446 + $0x20] sm:$0xff] %v1495
        %1512 = vst [vmem:[%s446 + $0x28] sm:$0xff] %v1496
        %1513 = vst [vmem:[%s446 + $0x30] sm:$0xff] %v1497
        %1514 = vst [vmem:[%s446 + $0x38] sm:$0xff] %v1498
        %1515 = vst [vmem:[%s446 + $0x40] sm:$0xff] %v1499
        %1516 = vst [vmem:[%s446 + $0x48] sm:$0xff] %v1500
        %1517 = vst [vmem:[%s446 + $0x50] sm:$0xff] %v1501
        %1518 = vst [vmem:[%s446 + $0x58] sm:$0xff] %v1502
        %1519 = vst [vmem:[%s446 + $0x60] sm:$0xff] %v1503
        %1520 = vst [vmem:[%s446 + $0x68] sm:$0xff] %v1504
        %1521 = vst [vmem:[%s446 + $0x70] sm:$0xff] %v1505
        %1522 = vst [vmem:[%s446 + $0x78] sm:$0xff] %v1506
        %v1523 = vpack.c.bf16 %v1492, %v1491
        %v1524 = vpack.c.bf16 %v1494, %v1493
        %v1525 = vpack.c.bf16 %v1496, %v1495
        %v1526 = vpack.c.bf16 %v1498, %v1497
        %v1527 = vpack.c.bf16 %v1500, %v1499
        %v1528 = vpack.c.bf16 %v1502, %v1501
        %v1529 = vpack.c.bf16 %v1504, %v1503
        %v1530 = vpack.c.bf16 %v1506, %v1505
        %v1539 = vunpack.c.l.b16 %v1523
        %v1540 = vunpack.c.h.b16 %v1523
        %v1541 = vunpack.c.l.b16 %v1524
        %v1542 = vunpack.c.h.b16 %v1524
        %v1543 = vunpack.c.l.b16 %v1525
        %v1544 = vunpack.c.h.b16 %v1525
        %v1545 = vunpack.c.l.b16 %v1526
        %v1546 = vunpack.c.h.b16 %v1526
        %v1547 = vunpack.c.l.b16 %v1527
        %v1548 = vunpack.c.h.b16 %v1527
        %v1549 = vunpack.c.l.b16 %v1528
        %v1550 = vunpack.c.h.b16 %v1528
        %v1551 = vunpack.c.l.b16 %v1529
        %v1552 = vunpack.c.h.b16 %v1529
        %v1553 = vunpack.c.l.b16 %v1530
        %v1554 = vunpack.c.h.b16 %v1530
        %v1555 = vpack.c.b16 %v1539, %v1539
        %v1556 = vpack.c.b16 %v1540, %v1540
        %v1557 = vpack.c.b16 %v1541, %v1541
        %v1558 = vpack.c.b16 %v1542, %v1542
        %v1559 = vpack.c.b16 %v1543, %v1543
        %v1560 = vpack.c.b16 %v1544, %v1544
        %v1561 = vpack.c.b16 %v1545, %v1545
        %v1562 = vpack.c.b16 %v1546, %v1546
        %v1563 = vpack.c.b16 %v1547, %v1547
        %v1564 = vpack.c.b16 %v1548, %v1548
        %v1565 = vpack.c.b16 %v1549, %v1549
        %v1566 = vpack.c.b16 %v1550, %v1550
        %v1567 = vpack.c.b16 %v1551, %v1551
        %v1568 = vpack.c.b16 %v1552, %v1552
        %v1569 = vpack.c.b16 %v1553, %v1553
        %v1570 = vpack.c.b16 %v1554, %v1554
        %1587 = vst [vmem:[%s452] sm:$0xf] %v1555
        %1588 = vst [vmem:[%s452 + $0x4] sm:$0xf] %v1556
        %1589 = vst [vmem:[%s452 + $0x8] sm:$0xf] %v1557
        %1590 = vst [vmem:[%s452 + $0xc] sm:$0xf] %v1558
        %1591 = vst [vmem:[%s452 + $0x10] sm:$0xf] %v1559
        %1592 = vst [vmem:[%s452 + $0x14] sm:$0xf] %v1560
        %1593 = vst [vmem:[%s452 + $0x18] sm:$0xf] %v1561
        %1594 = vst [vmem:[%s452 + $0x1c] sm:$0xf] %v1562
        %1595 = vst [vmem:[%s452 + $0x20] sm:$0xf] %v1563
        %1596 = vst [vmem:[%s452 + $0x24] sm:$0xf] %v1564
        %1597 = vst [vmem:[%s452 + $0x28] sm:$0xf] %v1565
        %1598 = vst [vmem:[%s452 + $0x2c] sm:$0xf] %v1566
        %1599 = vst [vmem:[%s452 + $0x30] sm:$0xf] %v1567
        %1600 = vst [vmem:[%s452 + $0x34] sm:$0xf] %v1568
        %1601 = vst [vmem:[%s452 + $0x38] sm:$0xf] %v1569
        %1602 = vst [vmem:[%s452 + $0x3c] sm:$0xf] %v1570
        %v1603 = vld [vmem:[%s440] sm:$0xff]
        %v1604 = vld [vmem:[%s440 + $0x8] sm:$0xff]
        %v1605 = vld [vmem:[%s440 + $0x10] sm:$0xff]
        %v1606 = vld [vmem:[%s440 + $0x18] sm:$0xff]
        %v1607 = vld [vmem:[%s440 + $0x20] sm:$0xff]
        %v1608 = vld [vmem:[%s440 + $0x28] sm:$0xff]
        %v1609 = vld [vmem:[%s440 + $0x30] sm:$0xff]
        %v1610 = vld [vmem:[%s440 + $0x38] sm:$0xff]
        %v1611 = vld [vmem:[%s440 + $0x40] sm:$0xff]
        %v1612 = vld [vmem:[%s440 + $0x48] sm:$0xff]
        %v1613 = vld [vmem:[%s440 + $0x50] sm:$0xff]
        %v1614 = vld [vmem:[%s440 + $0x58] sm:$0xff]
        %v1615 = vld [vmem:[%s440 + $0x60] sm:$0xff]
        %v1616 = vld [vmem:[%s440 + $0x68] sm:$0xff]
        %v1617 = vld [vmem:[%s440 + $0x70] sm:$0xff]
        %v1618 = vld [vmem:[%s440 + $0x78] sm:$0xff]
        %v1619 = vadd.f32 %v1603, %v1475
        %v1620 = vadd.f32 %v1604, %v1476
        %v1621 = vadd.f32 %v1605, %v1477
        %v1622 = vadd.f32 %v1606, %v1478
        %v1623 = vadd.f32 %v1607, %v1479
        %v1624 = vadd.f32 %v1608, %v1480
        %v1625 = vadd.f32 %v1609, %v1481
        %v1626 = vadd.f32 %v1610, %v1482
        %v1627 = vadd.f32 %v1611, %v1483
        %v1628 = vadd.f32 %v1612, %v1484
        %v1629 = vadd.f32 %v1613, %v1485
        %v1630 = vadd.f32 %v1614, %v1486
        %v1631 = vadd.f32 %v1615, %v1487
        %v1632 = vadd.f32 %v1616, %v1488
        %v1633 = vadd.f32 %v1617, %v1489
        %v1634 = vadd.f32 %v1618, %v1490
        %1635 = vst [vmem:[%s458] sm:$0xff] %v1619
        %1636 = vst [vmem:[%s458 + $0x8] sm:$0xff] %v1620
        %1637 = vst [vmem:[%s458 + $0x10] sm:$0xff] %v1621
        %1638 = vst [vmem:[%s458 + $0x18] sm:$0xff] %v1622
        %1639 = vst [vmem:[%s458 + $0x20] sm:$0xff] %v1623
        %1640 = vst [vmem:[%s458 + $0x28] sm:$0xff] %v1624
        %1641 = vst [vmem:[%s458 + $0x30] sm:$0xff] %v1625
        %1642 = vst [vmem:[%s458 + $0x38] sm:$0xff] %v1626
        %1643 = vst [vmem:[%s458 + $0x40] sm:$0xff] %v1627
        %1644 = vst [vmem:[%s458 + $0x48] sm:$0xff] %v1628
        %1645 = vst [vmem:[%s458 + $0x50] sm:$0xff] %v1629
        %1646 = vst [vmem:[%s458 + $0x58] sm:$0xff] %v1630
        %1647 = vst [vmem:[%s458 + $0x60] sm:$0xff] %v1631
        %1648 = vst [vmem:[%s458 + $0x68] sm:$0xff] %v1632
        %1649 = vst [vmem:[%s458 + $0x70] sm:$0xff] %v1633
        %1650 = vst [vmem:[%s458 + $0x78] sm:$0xff] %v1634
      $region60: #{_forward_jit.5} parent=47 // pred_fallthru
        _
      %s1651 = smul.u32 16, %s25
      %p1652 = scmp.lt.s32.totalorder %s1651, 31
      %s1653 = scalar_select %p1652, %s1651, 31
      %s1654 = smul.addr %s1653, 8
      %s1655 = scalar_lea.vmem %s7, %s1654
      %s1656 = smul.u32 16, %s25
      %p1657 = scmp.lt.s32.totalorder %s1656, 31
      %s1658 = scalar_select %p1657, %s1656, 31
      %s1659 = smul.addr %s1658, 4
      %s1660 = scalar_lea.vmem %s8, %s1659
      %s1661 = smul.u32 16, %s25
      %p1662 = scmp.lt.s32.totalorder %s1661, 31
      %s1663 = scalar_select %p1662, %s1661, 31
      %s1664 = smul.addr %s1663, 8
      %s1665 = scalar_lea.vmem %s9, %s1664
      // Predicated region
      $region61: #{_forward_jit.5} parent=47 // pred_check
        %p1666 = pneg %p220
      $region62: #{_forward_jit.5} parent=47 // pred_check_branch
        %1668 = sbr.rel (%p1666) target = $region64
      $region63: #{_forward_jit.5} parent=47 // pred_region
        %s1669 = smul.u32 16, %s25
      $region64: #{_forward_jit.5} parent=47 // pred_fallthru
        _
      // Predicated region
      $region65: #{_forward_jit.5} parent=47 // pred_check
        %p1670 = pneg %p246
      $region66: #{_forward_jit.5} parent=47 // pred_check_branch
        %1672 = sbr.rel (%p1670) target = $region68
      $region67: #{_forward_jit.5} parent=47 // pred_region
        %s1673 = smul.u32 16, %s25
      $region68: #{_forward_jit.5} parent=47 // pred_fallthru
        _
      // Predicated region
      $region69: #{_forward_jit.5} parent=47 // pred_check
        %p1674 = pneg %p272
      $region70: #{_forward_jit.5} parent=47 // pred_check_branch
        %1676 = sbr.rel (%p1674) target = $region72
      $region71: #{_forward_jit.5} parent=47 // pred_region
        %s1677 = smul.u32 16, %s25
      $region72: #{_forward_jit.5} parent=47 // pred_fallthru
        _
    $region48: #{_forward_jit.5} parent=5 // pred_fallthru
      _
    %p1678 = scmp.le.s32.totalorder 2, %s16
    // Predicated region
    $region73: #{_forward_jit.5} parent=5 // pred_check
      %p1679 = pneg %p1678
    $region74: #{_forward_jit.5} parent=5 // pred_check_branch
      %1681 = sbr.rel (%p1679) target = $region76
    $region75: #{_forward_jit.5} parent=5 // pred_region
      %s1682 = ssub.s32 %s16, 2
      // Predicated region
      $region77: #{_forward_jit.5} parent=75 // pred_check
        %p1683 = pneg %p226
      $region78: #{_forward_jit.5} parent=75 // pred_check_branch
        %1685 = sbr.rel (%p1683) target = $region80
      $region79: #{_forward_jit.5} parent=75 // pred_region
        %s1686 = smul.u32 16, %s27
        %p1687 = scmp.lt.s32.totalorder %s1686, 31
        %s1688 = scalar_select %p1687, %s1686, 31
        %s1689 = smul.addr %s1688, 8
        %s1690 = scalar_lea.vmem %s7, %s1689
      $region80: #{_forward_jit.5} parent=75 // pred_fallthru
        _
      // Predicated region
      $region81: #{_forward_jit.5} parent=75 // pred_check
        %p1691 = pneg %p252
      $region82: #{_forward_jit.5} parent=75 // pred_check_branch
        %1693 = sbr.rel (%p1691) target = $region84
      $region83: #{_forward_jit.5} parent=75 // pred_region
        %s1694 = smul.u32 16, %s27
        %p1695 = scmp.lt.s32.totalorder %s1694, 31
        %s1696 = scalar_select %p1695, %s1694, 31
        %s1697 = smul.addr %s1696, 4
        %s1698 = scalar_lea.vmem %s8, %s1697
      $region84: #{_forward_jit.5} parent=75 // pred_fallthru
        _
      // Predicated region
      $region85: #{_forward_jit.5} parent=75 // pred_check
        %p1699 = pneg %p278
      $region86: #{_forward_jit.5} parent=75 // pred_check_branch
        %1701 = sbr.rel (%p1699) target = $region88
      $region87: #{_forward_jit.5} parent=75 // pred_region
        %s1702 = smul.u32 16, %s27
        %p1703 = scmp.lt.s32.totalorder %s1702, 31
        %s1704 = scalar_select %p1703, %s1702, 31
        %s1705 = smul.addr %s1704, 8
        %s1706 = scalar_lea.vmem %s9, %s1705
      $region88: #{_forward_jit.5} parent=75 // pred_fallthru
        _
    $region76: #{_forward_jit.5} parent=5 // pred_fallthru
      _
  $region6: #{_forward_jit.5} parent=0 // loop_footer
    %s20 = sadd.s32 1, %s16
  $region7: #{_forward_jit.5} parent=0 // loop_footer_branch
    %15 = sbr.rel target = $region3
  $region8: #{_forward_jit.5} parent=0 // loop_exit
    _

// kernel: _forward_jit.7
$region0: #{_forward_jit.7}
  #allocation0 [shape = 'u32[]', space=smem, size = 0x4, offset = 0x4, fixed_abs, tag = 'smem constant byte address 0x4 - core index']
  #allocation1 [shape = 'u32[144,128]{1,0:T(1,128)}', space=vmem, size = 0x12000, scoped, tag = 'internal scratch']
  %s0 = inlined_call_operand.vmem [shape: bf16[256,384], index: 0, kind: input, shape index: {}]
  %s1 = inlined_call_operand.vmem [shape: bf16[384,128], index: 1, kind: input, shape index: {}]
  %s2 = inlined_call_operand.vmem [shape: f32[256,128], index: 2, kind: input, shape index: {}]
  %s3 = inlined_call_operand.vmem [shape: bf16[128,128], index: 3, kind: input, shape index: {}]
  %s4 = inlined_call_operand.vmem [shape: bf16[128,128], index: 4, kind: input, shape index: {}]
  %s5 = inlined_call_operand.vmem [shape: f32[1,128], index: 5, kind: input, shape index: {}]
  %s6 = inlined_call_operand.vmem [shape: f32[256,128], index: 6, kind: input, shape index: {}, may-alias: {6,9}]
  %s7 = inlined_call_operand.hbm [shape: f32[256,128], index: 7, kind: output, shape index: {0}]
  %s8 = inlined_call_operand.hbm [shape: bf16[256,128], index: 8, kind: output, shape index: {1}]
  %s9 = inlined_call_operand.vmem [shape: f32[256,128], index: 9, kind: output, shape index: {2}, may-alias: {6,9}]
  %10 = xla_tuple %s7, %s8, %s9
  %s11 = sld [smem:[#allocation0]]
  $region89: #{_forward_jit.7} parent=0
    _
  %s13 = ssub.s32 1, %s11
  %s14 = scalar_select 0, %s13, %s11
  $region1: #{_forward_jit.7} parent=0
    #allocation2 [shape = 'u8[131072]{0}', space=vmem, size = 0x20000, scoped, tag = 'output window, operand 0']
    #allocation3 [shape = 's32[2]{0}', space=sflag, size = 0x8, scoped, tag = 'scoped memory for _forward_jit.7']
    #allocation4 [shape = 'u8[65536]{0}', space=vmem, size = 0x10000, scoped, tag = 'output window, operand 1']
    #allocation5 [shape = 's32[2]{0}', space=sflag, size = 0x8, scoped, tag = 'scoped memory for _forward_jit.7']
    %15 = vsyncpa [#allocation3], 0
    %s16 = scalar_lea.sflag [#allocation3], 1
    %17 = vsyncpa %s16, 0
    %18 = vsyncpa [#allocation5], 0
    %s19 = scalar_lea.sflag [#allocation5], 1
    %20 = vsyncpa %s19, 0
    loop: start=0, step=1, limit=4
    $region2: #{_forward_jit.7} parent=1 // loop_pre_header
      _
    $region3: #{_forward_jit.7} parent=1 // loop_header
      %s22 = sphi 0, %s26
      %p23 = scmp.ge.s32.totalorder %s22, 4
      %s29 = sphi 0, %s41
      %s30 = sphi 0, %s37
      %s31 = sphi 0, %s29
      %s32 = sphi 0, %s30
      %s33 = sphi 0, %s31
      %s34 = sphi 0, %s32
      %s46 = sphi 0, %s48
      %s49 = sphi 0, %s46
      %s50 = sphi 0, %s49
      %s66 = sphi 0, %s50
      %s72 = sphi 0, %s74
      %s75 = sphi 0, %s72
      %s76 = sphi 0, %s75
      %s92 = sphi 0, %s76
      %s98 = sphi 0, %s100
      %s101 = sphi 0, %s98
      %s102 = sphi 0, %s101
      %s118 = sphi 0, %s102
      %s122 = sphi 0, %s122
      %s124 = sphi 0, %s122
      %s125 = sphi 0, %s124
      %s139 = sphi 0, %s125
      %s143 = sphi 0, %s143
      %s145 = sphi 0, %s143
      %s146 = sphi 0, %s145
      %s160 = sphi 0, %s146
      %s164 = sphi 0, %s164
      %s166 = sphi 0, %s164
      %s167 = sphi 0, %s166
      %s181 = sphi 0, %s167
      %s187 = sphi 0, %s189
      %s190 = sphi 0, %s187
      %s191 = sphi 0, %s190
      %s207 = sphi 0, %s191
      %s213 = sphi 0, %s215
      %s216 = sphi 0, %s213
      %s217 = sphi 0, %s216
      %s233 = sphi 0, %s217
      %s239 = sphi 0, %s241
      %s242 = sphi 0, %s239
      %s243 = sphi 0, %s242
      %s259 = sphi 0, %s243
      %s265 = sphi 0, %s267
      %s268 = sphi 0, %s265
      %s269 = sphi 0, %s268
      %s285 = sphi 0, %s269
    $region4: #{_forward_jit.7} parent=1 // loop_header_branch
      %25 = sbr.rel (%p23) target = $region8
    $region5: #{_forward_jit.7} parent=1 // loop_body
      %s27 = ssub.s32 %s22, 1
      %s28 = ssub.s32 %s22, 2
      %s35 = sadd.s32 1, %s30
      %p36 = scmp.ge.s32.totalorder %s35, 1
      %s37 = scalar_select %p36, 0, %s35
      %s38 = sadd.s32 1, %s29
      %s39 = scalar_select %p36, %s38, %s29
      %p40 = scmp.ge.s32.totalorder %s39, 2
      %s41 = scalar_select %p40, 0, %s39
      %s42 = ssub.s32 %s29, %s41
      %s43 = ssub.s32 %s30, %s37
      %s44 = sor.u32 %s42, %s43
      %p45 = scmp.eq.s32.totalorder %s44, 0
      %s47 = sadd.s32 %s46, 1
      %s48 = scalar_select %p45, %s46, %s47
      %p51 = pneg %p45
      %p52 = scmp.eq.s32.totalorder %s22, 1
      %p53 = por %p51, %p52
      %p54 = scmp.ne.s32.totalorder %s46, %s49
      %p55 = scmp.eq.s32.totalorder %s22, 0
      %p56 = por %p54, %p55
      %p57 = scmp.ne.s32.totalorder %s46, %s49
      %p58 = scmp.eq.s32.totalorder %s27, 1
      %p59 = por %p57, %p58
      %p60 = scmp.ne.s32.totalorder %s49, %s50
      %p61 = scmp.eq.s32.totalorder %s27, 0
      %p62 = por %p60, %p61
      %p63 = scmp.ne.s32.totalorder %s49, %s50
      %p64 = scmp.eq.s32.totalorder %s28, 1
      %p65 = por %p63, %p64
      %p67 = scmp.ne.s32.totalorder %s50, %s66
      %p68 = scmp.eq.s32.totalorder %s28, 0
      %p69 = por %p67, %p68
      %s70 = ssub.s32 %s30, %s37
      %p71 = scmp.eq.s32.totalorder %s70, 0
      %s73 = sadd.s32 %s72, 1
      %s74 = scalar_select %p71, %s72, %s73
      %p77 = pneg %p71
      %p78 = scmp.eq.s32.totalorder %s22, 1
      %p79 = por %p77, %p78
      %p80 = scmp.ne.s32.totalorder %s72, %s75
      %p81 = scmp.eq.s32.totalorder %s22, 0
      %p82 = por %p80, %p81
      %p83 = scmp.ne.s32.totalorder %s72, %s75
      %p84 = scmp.eq.s32.totalorder %s27, 1
      %p85 = por %p83, %p84
      %p86 = scmp.ne.s32.totalorder %s75, %s76
      %p87 = scmp.eq.s32.totalorder %s27, 0
      %p88 = por %p86, %p87
      %p89 = scmp.ne.s32.totalorder %s75, %s76
      %p90 = scmp.eq.s32.totalorder %s28, 1
      %p91 = por %p89, %p90
      %p93 = scmp.ne.s32.totalorder %s76, %s92
      %p94 = scmp.eq.s32.totalorder %s28, 0
      %p95 = por %p93, %p94
      %s96 = ssub.s32 %s29, %s41
      %p97 = scmp.eq.s32.totalorder %s96, 0
      %s99 = sadd.s32 %s98, 1
      %s100 = scalar_select %p97, %s98, %s99
      %p103 = pneg %p97
      %p104 = scmp.eq.s32.totalorder %s22, 1
      %p105 = por %p103, %p104
      %p106 = scmp.ne.s32.totalorder %s98, %s101
      %p107 = scmp.eq.s32.totalorder %s22, 0
      %p108 = por %p106, %p107
      %p109 = scmp.ne.s32.totalorder %s98, %s101
      %p110 = scmp.eq.s32.totalorder %s27, 1
      %p111 = por %p109, %p110
      %p112 = scmp.ne.s32.totalorder %s101, %s102
      %p113 = scmp.eq.s32.totalorder %s27, 0
      %p114 = por %p112, %p113
      %p115 = scmp.ne.s32.totalorder %s101, %s102
      %p116 = scmp.eq.s32.totalorder %s28, 1
      %p117 = por %p115, %p116
      %p119 = scmp.ne.s32.totalorder %s102, %s118
      %p120 = scmp.eq.s32.totalorder %s28, 0
      %p121 = por %p119, %p120
      %s123 = sadd.s32 %s122, 1
      %p126 = scmp.eq.s32.totalorder %s22, 1
      %p127 = scmp.ne.s32.totalorder %s122, %s124
      %p128 = scmp.eq.s32.totalorder %s22, 0
      %p129 = por %p127, %p128
      %p130 = scmp.ne.s32.totalorder %s122, %s124
      %p131 = scmp.eq.s32.totalorder %s27, 1
      %p132 = por %p130, %p131
      %p133 = scmp.ne.s32.totalorder %s124, %s125
      %p134 = scmp.eq.s32.totalorder %s27, 0
      %p135 = por %p133, %p134
      %p136 = scmp.ne.s32.totalorder %s124, %s125
      %p137 = scmp.eq.s32.totalorder %s28, 1
      %p138 = por %p136, %p137
      %p140 = scmp.ne.s32.totalorder %s125, %s139
      %p141 = scmp.eq.s32.totalorder %s28, 0
      %p142 = por %p140, %p141
      %s144 = sadd.s32 %s143, 1
      %p147 = scmp.eq.s32.totalorder %s22, 1
      %p148 = scmp.ne.s32.totalorder %s143, %s145
      %p149 = scmp.eq.s32.totalorder %s22, 0
      %p150 = por %p148, %p149
      %p151 = scmp.ne.s32.totalorder %s143, %s145
      %p152 = scmp.eq.s32.totalorder %s27, 1
      %p153 = por %p151, %p152
      %p154 = scmp.ne.s32.totalorder %s145, %s146
      %p155 = scmp.eq.s32.totalorder %s27, 0
      %p156 = por %p154, %p155
      %p157 = scmp.ne.s32.totalorder %s145, %s146
      %p158 = scmp.eq.s32.totalorder %s28, 1
      %p159 = por %p157, %p158
      %p161 = scmp.ne.s32.totalorder %s146, %s160
      %p162 = scmp.eq.s32.totalorder %s28, 0
      %p163 = por %p161, %p162
      %s165 = sadd.s32 %s164, 1
      %p168 = scmp.eq.s32.totalorder %s22, 1
      %p169 = scmp.ne.s32.totalorder %s164, %s166
      %p170 = scmp.eq.s32.totalorder %s22, 0
      %p171 = por %p169, %p170
      %p172 = scmp.ne.s32.totalorder %s164, %s166
      %p173 = scmp.eq.s32.totalorder %s27, 1
      %p174 = por %p172, %p173
      %p175 = scmp.ne.s32.totalorder %s166, %s167
      %p176 = scmp.eq.s32.totalorder %s27, 0
      %p177 = por %p175, %p176
      %p178 = scmp.ne.s32.totalorder %s166, %s167
      %p179 = scmp.eq.s32.totalorder %s28, 1
      %p180 = por %p178, %p179
      %p182 = scmp.ne.s32.totalorder %s167, %s181
      %p183 = scmp.eq.s32.totalorder %s28, 0
      %p184 = por %p182, %p183
      %s185 = ssub.s32 %s29, %s41
      %p186 = scmp.eq.s32.totalorder %s185, 0
      %s188 = sadd.s32 %s187, 1
      %s189 = scalar_select %p186, %s187, %s188
      %p192 = pneg %p186
      %p193 = scmp.eq.s32.totalorder %s22, 1
      %p194 = por %p192, %p193
      %p195 = scmp.ne.s32.totalorder %s187, %s190
      %p196 = scmp.eq.s32.totalorder %s22, 0
      %p197 = por %p195, %p196
      %p198 = scmp.ne.s32.totalorder %s187, %s190
      %p199 = scmp.eq.s32.totalorder %s27, 1
      %p200 = por %p198, %p199
      %p201 = scmp.ne.s32.totalorder %s190, %s191
      %p202 = scmp.eq.s32.totalorder %s27, 0
      %p203 = por %p201, %p202
      %p204 = scmp.ne.s32.totalorder %s190, %s191
      %p205 = scmp.eq.s32.totalorder %s28, 1
      %p206 = por %p204, %p205
      %p208 = scmp.ne.s32.totalorder %s191, %s207
      %p209 = scmp.eq.s32.totalorder %s28, 0
      %p210 = por %p208, %p209
      %s211 = ssub.s32 %s29, %s41
      %p212 = scmp.eq.s32.totalorder %s211, 0
      %s214 = sadd.s32 %s213, 1
      %s215 = scalar_select %p212, %s213, %s214
      %p218 = pneg %p212
      %p219 = scmp.eq.s32.totalorder %s22, 1
      %p220 = por %p218, %p219
      %p221 = scmp.ne.s32.totalorder %s213, %s216
      %p222 = scmp.eq.s32.totalorder %s22, 0
      %p223 = por %p221, %p222
      %p224 = scmp.ne.s32.totalorder %s213, %s216
      %p225 = scmp.eq.s32.totalorder %s27, 1
      %p226 = por %p224, %p225
      %p227 = scmp.ne.s32.totalorder %s216, %s217
      %p228 = scmp.eq.s32.totalorder %s27, 0
      %p229 = por %p227, %p228
      %p230 = scmp.ne.s32.totalorder %s216, %s217
      %p231 = scmp.eq.s32.totalorder %s28, 1
      %p232 = por %p230, %p231
      %p234 = scmp.ne.s32.totalorder %s217, %s233
      %p235 = scmp.eq.s32.totalorder %s28, 0
      %p236 = por %p234, %p235
      %s237 = ssub.s32 %s29, %s41
      %p238 = scmp.eq.s32.totalorder %s237, 0
      %s240 = sadd.s32 %s239, 1
      %s241 = scalar_select %p238, %s239, %s240
      %p244 = pneg %p238
      %p245 = scmp.eq.s32.totalorder %s22, 1
      %p246 = por %p244, %p245
      %p247 = scmp.ne.s32.totalorder %s239, %s242
      %p248 = scmp.eq.s32.totalorder %s22, 0
      %p249 = por %p247, %p248
      %p250 = scmp.ne.s32.totalorder %s239, %s242
      %p251 = scmp.eq.s32.totalorder %s27, 1
      %p252 = por %p250, %p251
      %p253 = scmp.ne.s32.totalorder %s242, %s243
      %p254 = scmp.eq.s32.totalorder %s27, 0
      %p255 = por %p253, %p254
      %p256 = scmp.ne.s32.totalorder %s242, %s243
      %p257 = scmp.eq.s32.totalorder %s28, 1
      %p258 = por %p256, %p257
      %p260 = scmp.ne.s32.totalorder %s243, %s259
      %p261 = scmp.eq.s32.totalorder %s28, 0
      %p262 = por %p260, %p261
      %s263 = ssub.s32 %s29, %s41
      %p264 = scmp.eq.s32.totalorder %s263, 0
      %s266 = sadd.s32 %s265, 1
      %s267 = scalar_select %p264, %s265, %s266
      %p270 = pneg %p264
      %p271 = scmp.eq.s32.totalorder %s22, 1
      %p272 = por %p270, %p271
      %p273 = scmp.ne.s32.totalorder %s265, %s268
      %p274 = scmp.eq.s32.totalorder %s22, 0
      %p275 = por %p273, %p274
      %p276 = scmp.ne.s32.totalorder %s265, %s268
      %p277 = scmp.eq.s32.totalorder %s27, 1
      %p278 = por %p276, %p277
      %p279 = scmp.ne.s32.totalorder %s268, %s269
      %p280 = scmp.eq.s32.totalorder %s27, 0
      %p281 = por %p279, %p280
      %p282 = scmp.ne.s32.totalorder %s268, %s269
      %p283 = scmp.eq.s32.totalorder %s28, 1
      %p284 = por %p282, %p283
      %p286 = scmp.ne.s32.totalorder %s269, %s285
      %p287 = scmp.eq.s32.totalorder %s28, 0
      %p288 = por %p286, %p287
      %p289 = scmp.le.s32.totalorder 1, %s22
      %p290 = scmp.lt.s32.totalorder %s22, 3
      %p291 = pnand %p289, %p290
      %p292 = pneg %p291
      // Predicated region
      $region9: #{_forward_jit.7} parent=5 // pred_check
        _
      $region10: #{_forward_jit.7} parent=5 // pred_check_branch
        %294 = sbr.rel (%p291) target = $region12
      $region11: #{_forward_jit.7} parent=5 // pred_region
        %s295 = ssub.s32 %s22, 1
        // Predicated region
        $region13: #{_forward_jit.7} parent=11 // pred_check
          %p296 = pneg %p88
        $region14: #{_forward_jit.7} parent=11 // pred_check_branch
          %298 = sbr.rel (%p296) target = $region16
        $region15: #{_forward_jit.7} parent=11 // pred_region
          %s299 = smul.u32 48, %s32
          %p300 = scmp.lt.s32.totalorder %s299, 47
          %s301 = scalar_select %p300, %s299, 47
          %s302 = smul.addr %s301, 4
          %s303 = scalar_lea.vmem %s1, %s302
          %s304 = smul.u32 48, %s32
        $region16: #{_forward_jit.7} parent=11 // pred_fallthru
          _
        // Predicated region
        $region17: #{_forward_jit.7} parent=11 // pred_check
          %p305 = pneg %p135
        $region18: #{_forward_jit.7} parent=11 // pred_check_branch
          %307 = sbr.rel (%p305) target = $region20
        $region19: #{_forward_jit.7} parent=11 // pred_region
          _
        $region20: #{_forward_jit.7} parent=11 // pred_fallthru
          _
        // Predicated region
        $region21: #{_forward_jit.7} parent=11 // pred_check
          %p308 = pneg %p156
        $region22: #{_forward_jit.7} parent=11 // pred_check_branch
          %310 = sbr.rel (%p308) target = $region24
        $region23: #{_forward_jit.7} parent=11 // pred_region
          _
        $region24: #{_forward_jit.7} parent=11 // pred_fallthru
          _
        // Predicated region
        $region25: #{_forward_jit.7} parent=11 // pred_check
          %p311 = pneg %p177
        $region26: #{_forward_jit.7} parent=11 // pred_check_branch
          %313 = sbr.rel (%p311) target = $region28
        $region27: #{_forward_jit.7} parent=11 // pred_region
          _
        $region28: #{_forward_jit.7} parent=11 // pred_fallthru
          _
      $region12: #{_forward_jit.7} parent=5 // pred_fallthru
        _
      %p314 = scmp.lt.s32.totalorder %s22, 2
      // Predicated region
      $region29: #{_forward_jit.7} parent=5 // pred_check
        %p315 = pneg %p314
      $region30: #{_forward_jit.7} parent=5 // pred_check_branch
        %317 = sbr.rel (%p315) target = $region32
      $region31: #{_forward_jit.7} parent=5 // pred_region
        // Predicated region
        $region33: #{_forward_jit.7} parent=31 // pred_check
          %p318 = pneg %p56
        $region34: #{_forward_jit.7} parent=31 // pred_check_branch
          %320 = sbr.rel (%p318) target = $region36
        $region35: #{_forward_jit.7} parent=31 // pred_region
          %s321 = smul.u32 16, %s29
          %s322 = smul.u32 3, %s30
          %p323 = scmp.lt.s32.totalorder %s321, 31
          %s324 = scalar_select %p323, %s321, 31
          %p325 = scmp.lt.s32.totalorder %s322, 2
          %s326 = scalar_select %p325, %s322, 2
          %s327 = smul.addr %s324, 3
          %s328 = sadd.s32 %s326, %s327
          %s329 = smul.addr %s328, 4
          %s330 = scalar_lea.vmem %s0, %s329
          %s331 = smul.u32 16, %s29
          %s332 = smul.u32 3, %s30
        $region36: #{_forward_jit.7} parent=31 // pred_fallthru
          _
        // Predicated region
        $region37: #{_forward_jit.7} parent=31 // pred_check
          %p333 = pneg %p108
        $region38: #{_forward_jit.7} parent=31 // pred_check_branch
          %335 = sbr.rel (%p333) target = $region40
        $region39: #{_forward_jit.7} parent=31 // pred_region
          %s336 = smul.u32 16, %s29
          %p337 = scmp.lt.s32.totalorder %s336, 31
          %s338 = scalar_select %p337, %s336, 31
          %s339 = smul.addr %s338, 8
          %s340 = scalar_lea.vmem %s2, %s339
          %s341 = smul.u32 16, %s29
        $region40: #{_forward_jit.7} parent=31 // pred_fallthru
          _
        // Predicated region
        $region41: #{_forward_jit.7} parent=31 // pred_check
          %p342 = pneg %p197
        $region42: #{_forward_jit.7} parent=31 // pred_check_branch
          %344 = sbr.rel (%p342) target = $region44
        $region43: #{_forward_jit.7} parent=31 // pred_region
          %s345 = smul.u32 16, %s29
          %p346 = scmp.lt.s32.totalorder %s345, 31
          %s347 = scalar_select %p346, %s345, 31
          %s348 = smul.addr %s347, 8
          %s349 = scalar_lea.vmem %s6, %s348
          %s350 = smul.u32 16, %s29
        $region44: #{_forward_jit.7} parent=31 // pred_fallthru
          _
      $region32: #{_forward_jit.7} parent=5 // pred_fallthru
        _
      %p351 = scmp.le.s32.totalorder 1, %s22
      %p352 = scmp.lt.s32.totalorder %s22, 3
      %p353 = pnand %p351, %p352
      %p354 = pneg %p353
      // Predicated region
      $region45: #{_forward_jit.7} parent=5 // pred_check
        _
      $region46: #{_forward_jit.7} parent=5 // pred_check_branch
        %356 = sbr.rel (%p353) target = $region48
      $region47: #{_forward_jit.7} parent=5 // pred_region
        %s357 = ssub.s32 %s22, 1
        %s358 = smul.u32 16, %s31
        %s359 = smul.u32 3, %s32
        %p360 = scmp.lt.s32.totalorder %s358, 31
        %s361 = scalar_select %p360, %s358, 31
        %p362 = scmp.lt.s32.totalorder %s359, 2
        %s363 = scalar_select %p362, %s359, 2
        %s364 = smul.addr %s361, 3
        %s365 = sadd.s32 %s363, %s364
        %s366 = smul.addr %s365, 4
        %s367 = scalar_lea.vmem %s0, %s366
        %p368 = pneg %p62
        %p369 = pneg %p59
        %s370 = smul.u32 48, %s32
        %p371 = scmp.lt.s32.totalorder %s370, 47
        %s372 = scalar_select %p371, %s370, 47
        %s373 = smul.addr %s372, 4
        %s374 = scalar_lea.vmem %s1, %s373
        %p375 = pneg %p88
        %p376 = pneg %p85
        %s377 = smul.u32 16, %s31
        %p378 = scmp.lt.s32.totalorder %s377, 31
        %s379 = scalar_select %p378, %s377, 31
        %s380 = smul.addr %s379, 8
        %s381 = scalar_lea.vmem %s2, %s380
        %p382 = pneg %p114
        %p383 = pneg %p111
        %p384 = pneg %p135
        %p385 = pneg %p132
        %p386 = pneg %p156
        %p387 = pneg %p153
        %p388 = pneg %p177
        %p389 = pneg %p174
        %s390 = smul.u32 16, %s31
        %p391 = scmp.lt.s32.totalorder %s390, 31
        %s392 = scalar_select %p391, %s390, 31
        %s393 = smul.addr %s392, 8
        %s394 = scalar_lea.vmem %s6, %s393
        %p395 = pneg %p203
        %p396 = pneg %p200
        %p397 = pneg %p229
        %p398 = pneg %p226
        %s399 = sand.u32 %s216, 1
        %s400 = scalar_lea.sflag [#allocation3], %s399
        %s401 = sand.u32 %s216, 1
        %s402 = smul.addr %s401, 128
        %s403 = scalar_lea.vmem [#allocation2], %s402
        %p404 = pneg %p255
        %p405 = pneg %p252
        %s406 = sand.u32 %s242, 1
        %s407 = scalar_lea.sflag [#allocation5], %s406
        %s408 = sand.u32 %s242, 1
        %s409 = smul.addr %s408, 64
        %s410 = scalar_lea.vmem [#allocation4], %s409
        %p411 = pneg %p281
        %p412 = pneg %p278
        %s413 = smul.u32 16, %s31
        %p414 = scmp.lt.s32.totalorder %s413, 31
        %s415 = scalar_select %p414, %s413, 31
        %s416 = smul.addr %s415, 8
        %s417 = scalar_lea.vmem %s9, %s416
        %s418 = smul.u32 16, %s31
        %s419 = smul.u32 3, %s32
        %p420 = scmp.lt.s32.totalorder %s418, 31
        %s421 = scalar_select %p420, %s418, 31
        %p422 = scmp.lt.s32.totalorder %s419, 2
        %s423 = scalar_select %p422, %s419, 2
        %s424 = smul.addr %s421, 3
        %s425 = sadd.s32 %s423, %s424
        %s426 = smul.addr %s425, 4
        %s427 = scalar_lea.vmem %s0, %s426
        %s428 = smul.u32 16, %s31
        %s429 = smul.u32 3, %s32
        %s430 = smul.u32 48, %s32
        %p431 = scmp.lt.s32.totalorder %s430, 47
        %s432 = scalar_select %p431, %s430, 47
        %s433 = smul.addr %s432, 4
        %s434 = scalar_lea.vmem %s1, %s433
        %s435 = smul.u32 48, %s32
        %s436 = smul.u32 16, %s31
        %p437 = scmp.lt.s32.totalorder %s436, 31
        %s438 = scalar_select %p437, %s436, 31
        %s439 = smul.addr %s438, 8
        %s440 = scalar_lea.vmem %s2, %s439
        %s441 = smul.u32 16, %s31
        %s442 = smul.u32 16, %s31
        %p443 = scmp.lt.s32.totalorder %s442, 31
        %s444 = scalar_select %p443, %s442, 31
        %s445 = smul.addr %s444, 8
        %s446 = scalar_lea.vmem %s6, %s445
        %s447 = smul.u32 16, %s31
        %s448 = smul.u32 16, %s31
        %s449 = smul.u32 16, %s31
        %s450 = smul.u32 16, %s31
        %p451 = scmp.lt.s32.totalorder %s450, 31
        %s452 = scalar_select %p451, %s450, 31
        %s453 = smul.addr %s452, 8
        %s454 = scalar_lea.vmem %s9, %s453
        %s455 = smul.u32 16, %s31
        %v457 = vld [vmem:[%s427] sm:$0xff]
        %v458 = vld [vmem:[%s427 + $0x8] sm:$0xf]
        %v459 = vld [vmem:[%s427 + $0xc] sm:$0xff]
        %v460 = vld [vmem:[%s427 + $0x14] sm:$0xf]
        %v461 = vld [vmem:[%s427 + $0x18] sm:$0xff]
        %v462 = vld [vmem:[%s427 + $0x20] sm:$0xf]
        %v463 = vld [vmem:[%s427 + $0x24] sm:$0xff]
        %v464 = vld [vmem:[%s427 + $0x2c] sm:$0xf]
        %v465 = vld [vmem:[%s427 + $0x30] sm:$0xff]
        %v466 = vld [vmem:[%s427 + $0x38] sm:$0xf]
        %v467 = vld [vmem:[%s427 + $0x3c] sm:$0xff]
        %v468 = vld [vmem:[%s427 + $0x44] sm:$0xf]
        %v469 = vld [vmem:[%s427 + $0x48] sm:$0xff]
        %v470 = vld [vmem:[%s427 + $0x50] sm:$0xf]
        %v471 = vld [vmem:[%s427 + $0x54] sm:$0xff]
        %v472 = vld [vmem:[%s427 + $0x5c] sm:$0xf]
        %v473 = vld [vmem:[%s427 + $0x60] sm:$0xff]
        %v474 = vld [vmem:[%s427 + $0x68] sm:$0xf]
        %v475 = vld [vmem:[%s427 + $0x6c] sm:$0xff]
        %v476 = vld [vmem:[%s427 + $0x74] sm:$0xf]
        %v477 = vld [vmem:[%s427 + $0x78] sm:$0xff]
        %v478 = vld [vmem:[%s427 + $0x80] sm:$0xf]
        %v479 = vld [vmem:[%s427 + $0x84] sm:$0xff]
        %v480 = vld [vmem:[%s427 + $0x8c] sm:$0xf]
        %v481 = vld [vmem:[%s427 + $0x90] sm:$0xff]
        %v482 = vld [vmem:[%s427 + $0x98] sm:$0xf]
        %v483 = vld [vmem:[%s427 + $0x9c] sm:$0xff]
        %v484 = vld [vmem:[%s427 + $0xa4] sm:$0xf]
        %v485 = vld [vmem:[%s427 + $0xa8] sm:$0xff]
        %v486 = vld [vmem:[%s427 + $0xb0] sm:$0xf]
        %v487 = vld [vmem:[%s427 + $0xb4] sm:$0xff]
        %v488 = vld [vmem:[%s427 + $0xbc] sm:$0xf]
        %v489 = vld [vmem:[%s434] sm:$0xf]
        %v490 = vld [vmem:[%s434 + $0x4] sm:$0xf]
        %v491 = vld [vmem:[%s434 + $0x8] sm:$0xf]
        %v492 = vld [vmem:[%s434 + $0xc] sm:$0xf]
        %v493 = vld [vmem:[%s434 + $0x10] sm:$0xf]
        %v494 = vld [vmem:[%s434 + $0x14] sm:$0xf]
        %v495 = vld [vmem:[%s434 + $0x18] sm:$0xf]
        %v496 = vld [vmem:[%s434 + $0x1c] sm:$0xf]
        %v497 = vld [vmem:[%s434 + $0x20] sm:$0xf]
        %v498 = vld [vmem:[%s434 + $0x24] sm:$0xf]
        %v499 = vld [vmem:[%s434 + $0x28] sm:$0xf]
        %v500 = vld [vmem:[%s434 + $0x2c] sm:$0xf]
        %v501 = vld [vmem:[%s434 + $0x30] sm:$0xf]
        %v502 = vld [vmem:[%s434 + $0x34] sm:$0xf]
        %v503 = vld [vmem:[%s434 + $0x38] sm:$0xf]
        %v504 = vld [vmem:[%s434 + $0x3c] sm:$0xf]
        %v505 = vld [vmem:[%s434 + $0x40] sm:$0xf]
        %v506 = vld [vmem:[%s434 + $0x44] sm:$0xf]
        %v507 = vld [vmem:[%s434 + $0x48] sm:$0xf]
        %v508 = vld [vmem:[%s434 + $0x4c] sm:$0xf]
        %v509 = vld [vmem:[%s434 + $0x50] sm:$0xf]
        %v510 = vld [vmem:[%s434 + $0x54] sm:$0xf]
        %v511 = vld [vmem:[%s434 + $0x58] sm:$0xf]
        %v512 = vld [vmem:[%s434 + $0x5c] sm:$0xf]
        %v513 = vld [vmem:[%s434 + $0x60] sm:$0xf]
        %v514 = vld [vmem:[%s434 + $0x64] sm:$0xf]
        %v515 = vld [vmem:[%s434 + $0x68] sm:$0xf]
        %v516 = vld [vmem:[%s434 + $0x6c] sm:$0xf]
        %v517 = vld [vmem:[%s434 + $0x70] sm:$0xf]
        %v518 = vld [vmem:[%s434 + $0x74] sm:$0xf]
        %v519 = vld [vmem:[%s434 + $0x78] sm:$0xf]
        %v520 = vld [vmem:[%s434 + $0x7c] sm:$0xf]
        %v521 = vld [vmem:[%s434 + $0x80] sm:$0xf]
        %v522 = vld [vmem:[%s434 + $0x84] sm:$0xf]
        %v523 = vld [vmem:[%s434 + $0x88] sm:$0xf]
        %v524 = vld [vmem:[%s434 + $0x8c] sm:$0xf]
        %v525 = vld [vmem:[%s434 + $0x90] sm:$0xf]
        %v526 = vld [vmem:[%s434 + $0x94] sm:$0xf]
        %v527 = vld [vmem:[%s434 + $0x98] sm:$0xf]
        %v528 = vld [vmem:[%s434 + $0x9c] sm:$0xf]
        %v529 = vld [vmem:[%s434 + $0xa0] sm:$0xf]
        %v530 = vld [vmem:[%s434 + $0xa4] sm:$0xf]
        %v531 = vld [vmem:[%s434 + $0xa8] sm:$0xf]
        %v532 = vld [vmem:[%s434 + $0xac] sm:$0xf]
        %v533 = vld [vmem:[%s434 + $0xb0] sm:$0xf]
        %v534 = vld [vmem:[%s434 + $0xb4] sm:$0xf]
        %v535 = vld [vmem:[%s434 + $0xb8] sm:$0xf]
        %v536 = vld [vmem:[%s434 + $0xbc] sm:$0xf]
        %v569 = vunpack.c.l.b16 %v457
        %v570 = vunpack.c.h.b16 %v457
        %v571 = vunpack.c.l.b16 %v458
        %v572 = vunpack.c.l.b16 %v459
        %v573 = vunpack.c.h.b16 %v459
        %v574 = vunpack.c.l.b16 %v460
        %v575 = vunpack.c.l.b16 %v461
        %v576 = vunpack.c.h.b16 %v461
        %v577 = vunpack.c.l.b16 %v462
        %v578 = vunpack.c.l.b16 %v463
        %v579 = vunpack.c.h.b16 %v463
        %v580 = vunpack.c.l.b16 %v464
        %v581 = vunpack.c.l.b16 %v465
        %v582 = vunpack.c.h.b16 %v465
        %v583 = vunpack.c.l.b16 %v466
        %v584 = vunpack.c.l.b16 %v467
        %v585 = vunpack.c.h.b16 %v467
        %v586 = vunpack.c.l.b16 %v468
        %v587 = vunpack.c.l.b16 %v469
        %v588 = vunpack.c.h.b16 %v469
        %v589 = vunpack.c.l.b16 %v470
        %v590 = vunpack.c.l.b16 %v471
        %v591 = vunpack.c.h.b16 %v471
        %v592 = vunpack.c.l.b16 %v472
        %v593 = vunpack.c.l.b16 %v473
        %v594 = vunpack.c.h.b16 %v473
        %v595 = vunpack.c.l.b16 %v474
        %v596 = vunpack.c.l.b16 %v475
        %v597 = vunpack.c.h.b16 %v475
        %v598 = vunpack.c.l.b16 %v476
        %v599 = vunpack.c.l.b16 %v477
        %v600 = vunpack.c.h.b16 %v477
        %v601 = vunpack.c.l.b16 %v478
        %v602 = vunpack.c.l.b16 %v479
        %v603 = vunpack.c.h.b16 %v479
        %v604 = vunpack.c.l.b16 %v480
        %v605 = vunpack.c.l.b16 %v481
        %v606 = vunpack.c.h.b16 %v481
        %v607 = vunpack.c.l.b16 %v482
        %v608 = vunpack.c.l.b16 %v483
        %v609 = vunpack.c.h.b16 %v483
        %v610 = vunpack.c.l.b16 %v484
        %v611 = vunpack.c.l.b16 %v485
        %v612 = vunpack.c.h.b16 %v485
        %v613 = vunpack.c.l.b16 %v486
        %v614 = vunpack.c.l.b16 %v487
        %v615 = vunpack.c.h.b16 %v487
        %v616 = vunpack.c.l.b16 %v488
        %v617 = vpack.c.b16 %v572, %v569
        %v618 = vpack.c.b16 %v573, %v570
        %v619 = vpack.c.b16 %v574, %v571
        %v620 = vpack.c.b16 %v578, %v575
        %v621 = vpack.c.b16 %v579, %v576
        %v622 = vpack.c.b16 %v580, %v577
        %v623 = vpack.c.b16 %v584, %v581
        %v624 = vpack.c.b16 %v585, %v582
        %v625 = vpack.c.b16 %v586, %v583
        %v626 = vpack.c.b16 %v590, %v587
        %v627 = vpack.c.b16 %v591, %v588
        %v628 = vpack.c.b16 %v592, %v589
        %v629 = vpack.c.b16 %v596, %v593
        %v630 = vpack.c.b16 %v597, %v594
        %v631 = vpack.c.b16 %v598, %v595
        %v632 = vpack.c.b16 %v602, %v599
        %v633 = vpack.c.b16 %v603, %v600
        %v634 = vpack.c.b16 %v604, %v601
        %v635 = vpack.c.b16 %v608, %v605
        %v636 = vpack.c.b16 %v609, %v606
        %v637 = vpack.c.b16 %v610, %v607
        %v638 = vpack.c.b16 %v614, %v611
        %v639 = vpack.c.b16 %v615, %v612
        %v640 = vpack.c.b16 %v616, %v613
        %v713 = vunpack.c.l.b16 %v489
        %v714 = vunpack.c.l.b16 %v490
        %v715 = vunpack.c.l.b16 %v491
        %v716 = vunpack.c.l.b16 %v492
        %v717 = vunpack.c.l.b16 %v493
        %v718 = vunpack.c.l.b16 %v494
        %v719 = vunpack.c.l.b16 %v495
        %v720 = vunpack.c.l.b16 %v496
        %v721 = vunpack.c.l.b16 %v497
        %v722 = vunpack.c.l.b16 %v498
        %v723 = vunpack.c.l.b16 %v499
        %v724 = vunpack.c.l.b16 %v500
        %v725 = vunpack.c.l.b16 %v501
        %v726 = vunpack.c.l.b16 %v502
        %v727 = vunpack.c.l.b16 %v503
        %v728 = vunpack.c.l.b16 %v504
        %v729 = vunpack.c.l.b16 %v505
        %v730 = vunpack.c.l.b16 %v506
        %v731 = vunpack.c.l.b16 %v507
        %v732 = vunpack.c.l.b16 %v508
        %v733 = vunpack.c.l.b16 %v509
        %v734 = vunpack.c.l.b16 %v510
        %v735 = vunpack.c.l.b16 %v511
        %v736 = vunpack.c.l.b16 %v512
        %v737 = vunpack.c.l.b16 %v513
        %v738 = vunpack.c.l.b16 %v514
        %v739 = vunpack.c.l.b16 %v515
        %v740 = vunpack.c.l.b16 %v516
        %v741 = vunpack.c.l.b16 %v517
        %v742 = vunpack.c.l.b16 %v518
        %v743 = vunpack.c.l.b16 %v519
        %v744 = vunpack.c.l.b16 %v520
        %v745 = vunpack.c.l.b16 %v521
        %v746 = vunpack.c.l.b16 %v522
        %v747 = vunpack.c.l.b16 %v523
        %v748 = vunpack.c.l.b16 %v524
        %v749 = vunpack.c.l.b16 %v525
        %v750 = vunpack.c.l.b16 %v526
        %v751 = vunpack.c.l.b16 %v527
        %v752 = vunpack.c.l.b16 %v528
        %v753 = vunpack.c.l.b16 %v529
        %v754 = vunpack.c.l.b16 %v530
        %v755 = vunpack.c.l.b16 %v531
        %v756 = vunpack.c.l.b16 %v532
        %v757 = vunpack.c.l.b16 %v533
        %v758 = vunpack.c.l.b16 %v534
        %v759 = vunpack.c.l.b16 %v535
        %v760 = vunpack.c.l.b16 %v536
        %v761 = vpack.c.b16 %v714, %v713
        %v762 = vpack.c.b16 %v716, %v715
        %v763 = vpack.c.b16 %v718, %v717
        %v764 = vpack.c.b16 %v720, %v719
        %v765 = vpack.c.b16 %v722, %v721
        %v766 = vpack.c.b16 %v724, %v723
        %v767 = vpack.c.b16 %v726, %v725
        %v768 = vpack.c.b16 %v728, %v727
        %v769 = vpack.c.b16 %v730, %v729
        %v770 = vpack.c.b16 %v732, %v731
        %v771 = vpack.c.b16 %v734, %v733
        %v772 = vpack.c.b16 %v736, %v735
        %v773 = vpack.c.b16 %v738, %v737
        %v774 = vpack.c.b16 %v740, %v739
        %v775 = vpack.c.b16 %v742, %v741
        %v776 = vpack.c.b16 %v744, %v743
        %v777 = vpack.c.b16 %v746, %v745
        %v778 = vpack.c.b16 %v748, %v747
        %v779 = vpack.c.b16 %v750, %v749
        %v780 = vpack.c.b16 %v752, %v751
        %v781 = vpack.c.b16 %v754, %v753
        %v782 = vpack.c.b16 %v756, %v755
        %v783 = vpack.c.b16 %v758, %v757
        %v784 = vpack.c.b16 %v760, %v759
        %809 = vmatprep.subr.bf16.mxu0 0
        %810 = vmatpush1.bf16.msra.mxu0 %v761
        %811 = vmatprep.subr.bf16.mxu0 0
        %812 = vmatpush1.bf16.msra.mxu0 %v762
        %813 = vmatprep.subr.bf16.mxu0 0
        %814 = vmatpush1.bf16.msra.mxu0 %v763
        %815 = vmatprep.subr.bf16.mxu0 0
        %816 = vmatpush1.bf16.msra.mxu0 %v764
        %817 = vmatprep.subr.bf16.mxu0 0
        %818 = vmatpush1.bf16.msra.mxu0 %v765
        %819 = vmatprep.subr.bf16.mxu0 0
        %820 = vmatpush1.bf16.msra.mxu0 %v766
        %821 = vmatprep.subr.bf16.mxu0 0
        %822 = vmatpush1.bf16.msra.mxu0 %v767
        %823 = vmatprep.subr.bf16.mxu0 0
        %824 = vmatpush1.bf16.msra.mxu0 %v768
        %825 = vmatprep.subr.bf16.mxu0 0
        %826 = vmatpush1.bf16.msra.mxu0 %v769
        %827 = vmatprep.subr.bf16.mxu0 0
        %828 = vmatpush1.bf16.msra.mxu0 %v770
        %829 = vmatprep.subr.bf16.mxu0 0
        %830 = vmatpush1.bf16.msra.mxu0 %v771
        %831 = vmatprep.subr.bf16.mxu0 0
        %832 = vmatpush1.bf16.msra.mxu0 %v772
        %833 = vmatprep.subr.bf16.mxu0 0
        %834 = vmatpush1.bf16.msra.mxu0 %v773
        %835 = vmatprep.subr.bf16.mxu0 0
        %836 = vmatpush1.bf16.msra.mxu0 %v774
        %837 = vmatprep.subr.bf16.mxu0 0
        %838 = vmatpush1.bf16.msra.mxu0 %v775
        %839 = vmatprep.subr.bf16.mxu0 0
        %840 = vmatpush1.bf16.msra.mxu0 %v776
        %841 = vmatprep.mubr.bf16.mxu0 %v618
        %842 = vmatmul.mubr.bf16.gmra.mrb[0].mxu0 %v617
        %v843 = vpop.f32.mrb[0].mxu0
        %v844 = vadd.f32 0.0, %v843
        %v845 = vpop.f32.mrb[0].mxu0
        %v846 = vpop.f32.mrb[0].mxu0
        %v847 = vadd.f32 0.0, %v846
        %v848 = vpop.f32.mrb[0].mxu0
        %849 = vmatprep.mubr.bf16.mxu0 %v621
        %850 = vmatmul.mubr.bf16.gmra.mrb[0].mxu0 %v620
        %v851 = vpop.f32.mrb[0].mxu0
        %v852 = vadd.f32 0.0, %v851
        %v853 = vpop.f32.mrb[0].mxu0
        %v854 = vpop.f32.mrb[0].mxu0
        %v855 = vadd.f32 0.0, %v854
        %v856 = vpop.f32.mrb[0].mxu0
        %857 = vmatprep.mubr.bf16.mxu0 %v624
        %858 = vmatmul.mubr.bf16.gmra.mrb[0].mxu0 %v623
        %v859 = vpop.f32.mrb[0].mxu0
        %v860 = vadd.f32 0.0, %v859
        %v861 = vpop.f32.mrb[0].mxu0
        %v862 = vpop.f32.mrb[0].mxu0
        %v863 = vadd.f32 0.0, %v862
        %v864 = vpop.f32.mrb[0].mxu0
        %865 = vmatprep.mubr.bf16.mxu0 %v627
        %866 = vmatmul.mubr.bf16.gmra.mrb[0].mxu0 %v626
        %v867 = vpop.f32.mrb[0].mxu0
        %v868 = vadd.f32 0.0, %v867
        %v869 = vpop.f32.mrb[0].mxu0
        %v870 = vpop.f32.mrb[0].mxu0
        %v871 = vadd.f32 0.0, %v870
        %v872 = vpop.f32.mrb[0].mxu0
        %873 = vmatprep.mubr.bf16.mxu0 %v630
        %874 = vmatmul.mubr.bf16.gmra.mrb[0].mxu0 %v629
        %v875 = vpop.f32.mrb[0].mxu0
        %v876 = vadd.f32 0.0, %v875
        %v877 = vpop.f32.mrb[0].mxu0
        %v878 = vpop.f32.mrb[0].mxu0
        %v879 = vadd.f32 0.0, %v878
        %v880 = vpop.f32.mrb[0].mxu0
        %881 = vmatprep.mubr.bf16.mxu0 %v633
        %882 = vmatmul.mubr.bf16.gmra.mrb[0].mxu0 %v632
        %v883 = vpop.f32.mrb[0].mxu0
        %v884 = vadd.f32 0.0, %v883
        %v885 = vpop.f32.mrb[0].mxu0
        %v886 = vpop.f32.mrb[0].mxu0
        %v887 = vadd.f32 0.0, %v886
        %v888 = vpop.f32.mrb[0].mxu0
        %889 = vmatprep.mubr.bf16.mxu0 %v636
        %890 = vmatmul.mubr.bf16.gmra.mrb[0].mxu0 %v635
        %v891 = vpop.f32.mrb[0].mxu0
        %v892 = vadd.f32 0.0, %v891
        %v893 = vpop.f32.mrb[0].mxu0
        %v894 = vpop.f32.mrb[0].mxu0
        %v895 = vadd.f32 0.0, %v894
        %v896 = vpop.f32.mrb[0].mxu0
        %897 = vmatprep.mubr.bf16.mxu0 %v639
        %898 = vmatmul.mubr.bf16.gmra.mrb[0].mxu0 %v638
        %v899 = vpop.f32.mrb[0].mxu0
        %v900 = vadd.f32 0.0, %v899
        %v901 = vpop.f32.mrb[0].mxu0
        %v902 = vpop.f32.mrb[0].mxu0
        %v903 = vadd.f32 0.0, %v902
        %v904 = vpop.f32.mrb[0].mxu0
        %905 = vdwg.mxu0
        %906 = vmatprep.subr.bf16.mxu0 0
        %907 = vmatpush1.bf16.msra.mxu0 %v777
        %908 = vmatprep.subr.bf16.mxu0 0
        %909 = vmatpush1.bf16.msra.mxu0 %v778
        %910 = vmatprep.subr.bf16.mxu0 0
        %911 = vmatpush1.bf16.msra.mxu0 %v779
        %912 = vmatprep.subr.bf16.mxu0 0
        %913 = vmatpush1.bf16.msra.mxu0 %v780
        %914 = vmatprep.subr.bf16.mxu0 0
        %915 = vmatpush1.bf16.msra.mxu0 %v781
        %916 = vmatprep.subr.bf16.mxu0 0
        %917 = vmatpush1.bf16.msra.mxu0 %v782
        %918 = vmatprep.subr.bf16.mxu0 0
        %919 = vmatpush1.bf16.msra.mxu0 %v783
        %920 = vmatprep.subr.bf16.mxu0 0
        %921 = vmatpush1.bf16.msra.mxu0 %v784
        %922 = vmatprep.subr.bf16.mxu0 0
        %923 = vmatpush1.bf16.msra.mxu0 0
        %924 = vmatprep.subr.bf16.mxu0 0
        %925 = vmatpush1.bf16.msra.mxu0 0
        %926 = vmatprep.subr.bf16.mxu0 0
        %927 = vmatpush1.bf16.msra.mxu0 0
        %928 = vmatprep.subr.bf16.mxu0 0
        %929 = vmatpush1.bf16.msra.mxu0 0
        %930 = vmatprep.subr.bf16.mxu0 0
        %931 = vmatpush1.bf16.msra.mxu0 0
        %932 = vmatprep.subr.bf16.mxu0 0
        %933 = vmatpush1.bf16.msra.mxu0 0
        %934 = vmatprep.subr.bf16.mxu0 0
        %935 = vmatpush1.bf16.msra.mxu0 0
        %936 = vmatprep.subr.bf16.mxu0 0
        %937 = vmatpush1.bf16.msra.mxu0 0
        %938 = vmatprep.mubr.bf16.mxu0 0
        %939 = vmatmul.mubr.bf16.gmra.mrb[0].mxu0 %v619
        %v940 = vpop.f32.mrb[0].mxu0
        %v941 = vadd.f32 %v844, %v940
        %v942 = vpop.f32.mrb[0].mxu0
        %v943 = vpop.f32.mrb[0].mxu0
        %v944 = vadd.f32 %v847, %v943
        %v945 = vpop.f32.mrb[0].mxu0
        %946 = vmatprep.mubr.bf16.mxu0 0
        %947 = vmatmul.mubr.bf16.gmra.mrb[0].mxu0 %v622
        %v948 = vpop.f32.mrb[0].mxu0
        %v949 = vadd.f32 %v852, %v948
        %v950 = vpop.f32.mrb[0].mxu0
        %v951 = vpop.f32.mrb[0].mxu0
        %v952 = vadd.f32 %v855, %v951
        %v953 = vpop.f32.mrb[0].mxu0
        %954 = vmatprep.mubr.bf16.mxu0 0
        %955 = vmatmul.mubr.bf16.gmra.mrb[0].mxu0 %v625
        %v956 = vpop.f32.mrb[0].mxu0
        %v957 = vadd.f32 %v860, %v956
        %v958 = vpop.f32.mrb[0].mxu0
        %v959 = vpop.f32.mrb[0].mxu0
        %v960 = vadd.f32 %v863, %v959
        %v961 = vpop.f32.mrb[0].mxu0
        %962 = vmatprep.mubr.bf16.mxu0 0
        %963 = vmatmul.mubr.bf16.gmra.mrb[0].mxu0 %v628
        %v964 = vpop.f32.mrb[0].mxu0
        %v965 = vadd.f32 %v868, %v964
        %v966 = vpop.f32.mrb[0].mxu0
        %v967 = vpop.f32.mrb[0].mxu0
        %v968 = vadd.f32 %v871, %v967
        %v969 = vpop.f32.mrb[0].mxu0
        %970 = vmatprep.mubr.bf16.mxu0 0
        %971 = vmatmul.mubr.bf16.gmra.mrb[0].mxu0 %v631
        %v972 = vpop.f32.mrb[0].mxu0
        %v973 = vadd.f32 %v876, %v972
        %v974 = vpop.f32.mrb[0].mxu0
        %v975 = vpop.f32.mrb[0].mxu0
        %v976 = vadd.f32 %v879, %v975
        %v977 = vpop.f32.mrb[0].mxu0
        %978 = vmatprep.mubr.bf16.mxu0 0
        %979 = vmatmul.mubr.bf16.gmra.mrb[0].mxu0 %v634
        %v980 = vpop.f32.mrb[0].mxu0
        %v981 = vadd.f32 %v884, %v980
        %v982 = vpop.f32.mrb[0].mxu0
        %v983 = vpop.f32.mrb[0].mxu0
        %v984 = vadd.f32 %v887, %v983
        %v985 = vpop.f32.mrb[0].mxu0
        %986 = vmatprep.mubr.bf16.mxu0 0
        %987 = vmatmul.mubr.bf16.gmra.mrb[0].mxu0 %v637
        %v988 = vpop.f32.mrb[0].mxu0
        %v989 = vadd.f32 %v892, %v988
        %v990 = vpop.f32.mrb[0].mxu0
        %v991 = vpop.f32.mrb[0].mxu0
        %v992 = vadd.f32 %v895, %v991
        %v993 = vpop.f32.mrb[0].mxu0
        %994 = vmatprep.mubr.bf16.mxu0 0
        %995 = vmatmul.mubr.bf16.gmra.mrb[0].mxu0 %v640
        %v996 = vpop.f32.mrb[0].mxu0
        %v997 = vadd.f32 %v900, %v996
        %v998 = vpop.f32.mrb[0].mxu0
        %v999 = vpop.f32.mrb[0].mxu0
        %v1000 = vadd.f32 %v903, %v999
        %v1001 = vpop.f32.mrb[0].mxu0
        %1002 = vdwg.mxu0
        %p1003 = scmp.eq.s32.totalorder %s32, 0
        // Predicated region
        $region49: #{_forward_jit.7} parent=47 // pred_check
          %p1004 = pneg %p1003
        $region50: #{_forward_jit.7} parent=47 // pred_check_branch
          %1006 = sbr.rel (%p1004) target = $region52
        $region51: #{_forward_jit.7} parent=47 // pred_region
          %1007 = vst [vmem:[%s403] sm:$0xff] %v941
          %1008 = vst [vmem:[%s403 + $0x8] sm:$0xff] %v944
          %1009 = vst [vmem:[%s403 + $0x10] sm:$0xff] %v949
          %1010 = vst [vmem:[%s403 + $0x18] sm:$0xff] %v952
          %1011 = vst [vmem:[%s403 + $0x20] sm:$0xff] %v957
          %1012 = vst [vmem:[%s403 + $0x28] sm:$0xff] %v960
          %1013 = vst [vmem:[%s403 + $0x30] sm:$0xff] %v965
          %1014 = vst [vmem:[%s403 + $0x38] sm:$0xff] %v968
          %1015 = vst [vmem:[%s403 + $0x40] sm:$0xff] %v973
          %1016 = vst [vmem:[%s403 + $0x48] sm:$0xff] %v976
          %1017 = vst [vmem:[%s403 + $0x50] sm:$0xff] %v981
          %1018 = vst [vmem:[%s403 + $0x58] sm:$0xff] %v984
          %1019 = vst [vmem:[%s403 + $0x60] sm:$0xff] %v989
          %1020 = vst [vmem:[%s403 + $0x68] sm:$0xff] %v992
          %1021 = vst [vmem:[%s403 + $0x70] sm:$0xff] %v997
          %1022 = vst [vmem:[%s403 + $0x78] sm:$0xff] %v1000
        $region52: #{_forward_jit.7} parent=47 // pred_fallthru
          _
        %p1023 = scmp.gt.s32.totalorder %s32, 0
        // Predicated region
        $region53: #{_forward_jit.7} parent=47 // pred_check
          %p1024 = pneg %p1023
        $region54: #{_forward_jit.7} parent=47 // pred_check_branch
          %1026 = sbr.rel (%p1024) target = $region56
        $region55: #{_forward_jit.7} parent=47 // pred_region
          %v1027 = vld [vmem:[%s403] sm:$0xff]
          %v1028 = vld [vmem:[%s403 + $0x8] sm:$0xff]
          %v1029 = vld [vmem:[%s403 + $0x10] sm:$0xff]
          %v1030 = vld [vmem:[%s403 + $0x18] sm:$0xff]
          %v1031 = vld [vmem:[%s403 + $0x20] sm:$0xff]
          %v1032 = vld [vmem:[%s403 + $0x28] sm:$0xff]
          %v1033 = vld [vmem:[%s403 + $0x30] sm:$0xff]
          %v1034 = vld [vmem:[%s403 + $0x38] sm:$0xff]
          %v1035 = vld [vmem:[%s403 + $0x40] sm:$0xff]
          %v1036 = vld [vmem:[%s403 + $0x48] sm:$0xff]
          %v1037 = vld [vmem:[%s403 + $0x50] sm:$0xff]
          %v1038 = vld [vmem:[%s403 + $0x58] sm:$0xff]
          %v1039 = vld [vmem:[%s403 + $0x60] sm:$0xff]
          %v1040 = vld [vmem:[%s403 + $0x68] sm:$0xff]
          %v1041 = vld [vmem:[%s403 + $0x70] sm:$0xff]
          %v1042 = vld [vmem:[%s403 + $0x78] sm:$0xff]
          %v1043 = vadd.f32 %v1027, %v941
          %v1044 = vadd.f32 %v1028, %v944
          %v1045 = vadd.f32 %v1029, %v949
          %v1046 = vadd.f32 %v1030, %v952
          %v1047 = vadd.f32 %v1031, %v957
          %v1048 = vadd.f32 %v1032, %v960
          %v1049 = vadd.f32 %v1033, %v965
          %v1050 = vadd.f32 %v1034, %v968
          %v1051 = vadd.f32 %v1035, %v973
          %v1052 = vadd.f32 %v1036, %v976
          %v1053 = vadd.f32 %v1037, %v981
          %v1054 = vadd.f32 %v1038, %v984
          %v1055 = vadd.f32 %v1039, %v989
          %v1056 = vadd.f32 %v1040, %v992
          %v1057 = vadd.f32 %v1041, %v997
          %v1058 = vadd.f32 %v1042, %v1000
          %1059 = vst [vmem:[%s403] sm:$0xff] %v1043
          %1060 = vst [vmem:[%s403 + $0x8] sm:$0xff] %v1044
          %1061 = vst [vmem:[%s403 + $0x10] sm:$0xff] %v1045
          %1062 = vst [vmem:[%s403 + $0x18] sm:$0xff] %v1046
          %1063 = vst [vmem:[%s403 + $0x20] sm:$0xff] %v1047
          %1064 = vst [vmem:[%s403 + $0x28] sm:$0xff] %v1048
          %1065 = vst [vmem:[%s403 + $0x30] sm:$0xff] %v1049
          %1066 = vst [vmem:[%s403 + $0x38] sm:$0xff] %v1050
          %1067 = vst [vmem:[%s403 + $0x40] sm:$0xff] %v1051
          %1068 = vst [vmem:[%s403 + $0x48] sm:$0xff] %v1052
          %1069 = vst [vmem:[%s403 + $0x50] sm:$0xff] %v1053
          %1070 = vst [vmem:[%s403 + $0x58] sm:$0xff] %v1054
          %1071 = vst [vmem:[%s403 + $0x60] sm:$0xff] %v1055
          %1072 = vst [vmem:[%s403 + $0x68] sm:$0xff] %v1056
          %1073 = vst [vmem:[%s403 + $0x70] sm:$0xff] %v1057
          %1074 = vst [vmem:[%s403 + $0x78] sm:$0xff] %v1058
        $region56: #{_forward_jit.7} parent=47 // pred_fallthru
          _
        // Predicated region
        $region57: #{_forward_jit.7} parent=47 // pred_check
          %p1075 = pneg %p1003
        $region58: #{_forward_jit.7} parent=47 // pred_check_branch
          %1077 = sbr.rel (%p1075) target = $region60
        $region59: #{_forward_jit.7} parent=47 // pred_region
          %v1078 = vld [vmem:[%s403] sm:$0xff]
          %v1079 = vld [vmem:[%s403 + $0x8] sm:$0xff]
          %v1080 = vld [vmem:[%s403 + $0x10] sm:$0xff]
          %v1081 = vld [vmem:[%s403 + $0x18] sm:$0xff]
          %v1082 = vld [vmem:[%s403 + $0x20] sm:$0xff]
          %v1083 = vld [vmem:[%s403 + $0x28] sm:$0xff]
          %v1084 = vld [vmem:[%s403 + $0x30] sm:$0xff]
          %v1085 = vld [vmem:[%s403 + $0x38] sm:$0xff]
          %v1086 = vld [vmem:[%s403 + $0x40] sm:$0xff]
          %v1087 = vld [vmem:[%s403 + $0x48] sm:$0xff]
          %v1088 = vld [vmem:[%s403 + $0x50] sm:$0xff]
          %v1089 = vld [vmem:[%s403 + $0x58] sm:$0xff]
          %v1090 = vld [vmem:[%s403 + $0x60] sm:$0xff]
          %v1091 = vld [vmem:[%s403 + $0x68] sm:$0xff]
          %v1092 = vld [vmem:[%s403 + $0x70] sm:$0xff]
          %v1093 = vld [vmem:[%s403 + $0x78] sm:$0xff]
          %v1094 = vld [vmem:[%s440] sm:$0xff]
          %v1095 = vld [vmem:[%s440 + $0x8] sm:$0xff]
          %v1096 = vld [vmem:[%s440 + $0x10] sm:$0xff]
          %v1097 = vld [vmem:[%s440 + $0x18] sm:$0xff]
          %v1098 = vld [vmem:[%s440 + $0x20] sm:$0xff]
          %v1099 = vld [vmem:[%s440 + $0x28] sm:$0xff]
          %v1100 = vld [vmem:[%s440 + $0x30] sm:$0xff]
          %v1101 = vld [vmem:[%s440 + $0x38] sm:$0xff]
          %v1102 = vld [vmem:[%s440 + $0x40] sm:$0xff]
          %v1103 = vld [vmem:[%s440 + $0x48] sm:$0xff]
          %v1104 = vld [vmem:[%s440 + $0x50] sm:$0xff]
          %v1105 = vld [vmem:[%s440 + $0x58] sm:$0xff]
          %v1106 = vld [vmem:[%s440 + $0x60] sm:$0xff]
          %v1107 = vld [vmem:[%s440 + $0x68] sm:$0xff]
          %v1108 = vld [vmem:[%s440 + $0x70] sm:$0xff]
          %v1109 = vld [vmem:[%s440 + $0x78] sm:$0xff]
          %v1110 = vmul.f32 %v1078, %v1094
          %v1111 = vmul.f32 %v1079, %v1095
          %v1112 = vmul.f32 %v1080, %v1096
          %v1113 = vmul.f32 %v1081, %v1097
          %v1114 = vmul.f32 %v1082, %v1098
          %v1115 = vmul.f32 %v1083, %v1099
          %v1116 = vmul.f32 %v1084, %v1100
          %v1117 = vmul.f32 %v1085, %v1101
          %v1118 = vmul.f32 %v1086, %v1102
          %v1119 = vmul.f32 %v1087, %v1103
          %v1120 = vmul.f32 %v1088, %v1104
          %v1121 = vmul.f32 %v1089, %v1105
          %v1122 = vmul.f32 %v1090, %v1106
          %v1123 = vmul.f32 %v1091, %v1107
          %v1124 = vmul.f32 %v1092, %v1108
          %v1125 = vmul.f32 %v1093, %v1109
          %v1126 = vpack.c.bf16 %v1079, %v1078
          %v1127 = vpack.c.bf16 %v1081, %v1080
          %v1128 = vpack.c.bf16 %v1083, %v1082
          %v1129 = vpack.c.bf16 %v1085, %v1084
          %v1130 = vpack.c.bf16 %v1087, %v1086
          %v1131 = vpack.c.bf16 %v1089, %v1088
          %v1132 = vpack.c.bf16 %v1091, %v1090
          %v1133 = vpack.c.bf16 %v1093, %v1092
          %v1134 = vld [vmem:[%s3] sm:$0xf]
          %v1135 = vld [vmem:[%s3 + $0x4] sm:$0xf]
          %v1136 = vld [vmem:[%s3 + $0x8] sm:$0xf]
          %v1137 = vld [vmem:[%s3 + $0xc] sm:$0xf]
          %v1138 = vld [vmem:[%s3 + $0x10] sm:$0xf]
          %v1139 = vld [vmem:[%s3 + $0x14] sm:$0xf]
          %v1140 = vld [vmem:[%s3 + $0x18] sm:$0xf]
          %v1141 = vld [vmem:[%s3 + $0x1c] sm:$0xf]
          %v1142 = vld [vmem:[%s3 + $0x20] sm:$0xf]
          %v1143 = vld [vmem:[%s3 + $0x24] sm:$0xf]
          %v1144 = vld [vmem:[%s3 + $0x28] sm:$0xf]
          %v1145 = vld [vmem:[%s3 + $0x2c] sm:$0xf]
          %v1146 = vld [vmem:[%s3 + $0x30] sm:$0xf]
          %v1147 = vld [vmem:[%s3 + $0x34] sm:$0xf]
          %v1148 = vld [vmem:[%s3 + $0x38] sm:$0xf]
          %v1149 = vld [vmem:[%s3 + $0x3c] sm:$0xf]
          %v1150 = vpack.c.bf16 %v1111, %v1110
          %v1151 = vpack.c.bf16 %v1113, %v1112
          %v1152 = vpack.c.bf16 %v1115, %v1114
          %v1153 = vpack.c.bf16 %v1117, %v1116
          %v1154 = vpack.c.bf16 %v1119, %v1118
          %v1155 = vpack.c.bf16 %v1121, %v1120
          %v1156 = vpack.c.bf16 %v1123, %v1122
          %v1157 = vpack.c.bf16 %v1125, %v1124
          %v1158 = vld [vmem:[%s4] sm:$0xf]
          %v1159 = vld [vmem:[%s4 + $0x4] sm:$0xf]
          %v1160 = vld [vmem:[%s4 + $0x8] sm:$0xf]
          %v1161 = vld [vmem:[%s4 + $0xc] sm:$0xf]
          %v1162 = vld [vmem:[%s4 + $0x10] sm:$0xf]
          %v1163 = vld [vmem:[%s4 + $0x14] sm:$0xf]
          %v1164 = vld [vmem:[%s4 + $0x18] sm:$0xf]
          %v1165 = vld [vmem:[%s4 + $0x1c] sm:$0xf]
          %v1166 = vld [vmem:[%s4 + $0x20] sm:$0xf]
          %v1167 = vld [vmem:[%s4 + $0x24] sm:$0xf]
          %v1168 = vld [vmem:[%s4 + $0x28] sm:$0xf]
          %v1169 = vld [vmem:[%s4 + $0x2c] sm:$0xf]
          %v1170 = vld [vmem:[%s4 + $0x30] sm:$0xf]
          %v1171 = vld [vmem:[%s4 + $0x34] sm:$0xf]
          %v1172 = vld [vmem:[%s4 + $0x38] sm:$0xf]
          %v1173 = vld [vmem:[%s4 + $0x3c] sm:$0xf]
          %v1190 = vunpack.c.l.b16 %v1158
          %v1191 = vunpack.c.l.b16 %v1159
          %v1192 = vunpack.c.l.b16 %v1160
          %v1193 = vunpack.c.l.b16 %v1161
          %v1194 = vunpack.c.l.b16 %v1162
          %v1195 = vunpack.c.l.b16 %v1163
          %v1196 = vunpack.c.l.b16 %v1164
          %v1197 = vunpack.c.l.b16 %v1165
          %v1198 = vunpack.c.l.b16 %v1166
          %v1199 = vunpack.c.l.b16 %v1167
          %v1200 = vunpack.c.l.b16 %v1168
          %v1201 = vunpack.c.l.b16 %v1169
          %v1202 = vunpack.c.l.b16 %v1170
          %v1203 = vunpack.c.l.b16 %v1171
          %v1204 = vunpack.c.l.b16 %v1172
          %v1205 = vunpack.c.l.b16 %v1173
          %v1206 = vpack.c.b16 %v1191, %v1190
          %v1207 = vpack.c.b16 %v1193, %v1192
          %v1208 = vpack.c.b16 %v1195, %v1194
          %v1209 = vpack.c.b16 %v1197, %v1196
          %v1210 = vpack.c.b16 %v1199, %v1198
          %v1211 = vpack.c.b16 %v1201, %v1200
          %v1212 = vpack.c.b16 %v1203, %v1202
          %v1213 = vpack.c.b16 %v1205, %v1204
          %1222 = vmatprep.subr.bf16.mxu0 0
          %1223 = vmatpush1.bf16.msra.mxu0 %v1206
          %1224 = vmatprep.subr.bf16.mxu0 0
          %1225 = vmatpush1.bf16.msra.mxu0 %v1207
          %1226 = vmatprep.subr.bf16.mxu0 0
          %1227 = vmatpush1.bf16.msra.mxu0 %v1208
          %1228 = vmatprep.subr.bf16.mxu0 0
          %1229 = vmatpush1.bf16.msra.mxu0 %v1209
          %1230 = vmatprep.subr.bf16.mxu0 0
          %1231 = vmatpush1.bf16.msra.mxu0 %v1210
          %1232 = vmatprep.subr.bf16.mxu0 0
          %1233 = vmatpush1.bf16.msra.mxu0 %v1211
          %1234 = vmatprep.subr.bf16.mxu0 0
          %1235 = vmatpush1.bf16.msra.mxu0 %v1212
          %1236 = vmatprep.subr.bf16.mxu0 0
          %1237 = vmatpush1.bf16.msra.mxu0 %v1213
          %1238 = vmatprep.subr.bf16.mxu0 0
          %1239 = vmatpush1.bf16.msra.mxu0 0
          %1240 = vmatprep.subr.bf16.mxu0 0
          %1241 = vmatpush1.bf16.msra.mxu0 0
          %1242 = vmatprep.subr.bf16.mxu0 0
          %1243 = vmatpush1.bf16.msra.mxu0 0
          %1244 = vmatprep.subr.bf16.mxu0 0
          %1245 = vmatpush1.bf16.msra.mxu0 0
          %1246 = vmatprep.subr.bf16.mxu0 0
          %1247 = vmatpush1.bf16.msra.mxu0 0
          %1248 = vmatprep.subr.bf16.mxu0 0
          %1249 = vmatpush1.bf16.msra.mxu0 0
          %1250 = vmatprep.subr.bf16.mxu0 0
          %1251 = vmatpush1.bf16.msra.mxu0 0
          %1252 = vmatprep.subr.bf16.mxu0 0
          %1253 = vmatpush1.bf16.msra.mxu0 0
          %1254 = vmatprep.mubr.bf16.mxu0 0
          %1255 = vmatmul.mubr.bf16.gmra.mrb[0].mxu0 %v1150
          %v1256 = vpop.f32.mrb[0].mxu0
          %v1257 = vadd.f32 0.0, %v1256
          %v1258 = vpop.f32.mrb[0].mxu0
          %v1259 = vpop.f32.mrb[0].mxu0
          %v1260 = vadd.f32 0.0, %v1259
          %v1261 = vpop.f32.mrb[0].mxu0
          %1262 = vmatprep.mubr.bf16.mxu0 0
          %1263 = vmatmul.mubr.bf16.gmra.mrb[0].mxu0 %v1151
          %v1264 = vpop.f32.mrb[0].mxu0
          %v1265 = vadd.f32 0.0, %v1264
          %v1266 = vpop.f32.mrb[0].mxu0
          %v1267 = vpop.f32.mrb[0].mxu0
          %v1268 = vadd.f32 0.0, %v1267
          %v1269 = vpop.f32.mrb[0].mxu0
          %1270 = vmatprep.mubr.bf16.mxu0 0
          %1271 = vmatmul.mubr.bf16.gmra.mrb[0].mxu0 %v1152
          %v1272 = vpop.f32.mrb[0].mxu0
          %v1273 = vadd.f32 0.0, %v1272
          %v1274 = vpop.f32.mrb[0].mxu0
          %v1275 = vpop.f32.mrb[0].mxu0
          %v1276 = vadd.f32 0.0, %v1275
          %v1277 = vpop.f32.mrb[0].mxu0
          %1278 = vmatprep.mubr.bf16.mxu0 0
          %1279 = vmatmul.mubr.bf16.gmra.mrb[0].mxu0 %v1153
          %v1280 = vpop.f32.mrb[0].mxu0
          %v1281 = vadd.f32 0.0, %v1280
          %v1282 = vpop.f32.mrb[0].mxu0
          %v1283 = vpop.f32.mrb[0].mxu0
          %v1284 = vadd.f32 0.0, %v1283
          %v1285 = vpop.f32.mrb[0].mxu0
          %1286 = vmatprep.mubr.bf16.mxu0 0
          %1287 = vmatmul.mubr.bf16.gmra.mrb[0].mxu0 %v1154
          %v1288 = vpop.f32.mrb[0].mxu0
          %v1289 = vadd.f32 0.0, %v1288
          %v1290 = vpop.f32.mrb[0].mxu0
          %v1291 = vpop.f32.mrb[0].mxu0
          %v1292 = vadd.f32 0.0, %v1291
          %v1293 = vpop.f32.mrb[0].mxu0
          %1294 = vmatprep.mubr.bf16.mxu0 0
          %1295 = vmatmul.mubr.bf16.gmra.mrb[0].mxu0 %v1155
          %v1296 = vpop.f32.mrb[0].mxu0
          %v1297 = vadd.f32 0.0, %v1296
          %v1298 = vpop.f32.mrb[0].mxu0
          %v1299 = vpop.f32.mrb[0].mxu0
          %v1300 = vadd.f32 0.0, %v1299
          %v1301 = vpop.f32.mrb[0].mxu0
          %1302 = vmatprep.mubr.bf16.mxu0 0
          %1303 = vmatmul.mubr.bf16.gmra.mrb[0].mxu0 %v1156
          %v1304 = vpop.f32.mrb[0].mxu0
          %v1305 = vadd.f32 0.0, %v1304
          %v1306 = vpop.f32.mrb[0].mxu0
          %v1307 = vpop.f32.mrb[0].mxu0
          %v1308 = vadd.f32 0.0, %v1307
          %v1309 = vpop.f32.mrb[0].mxu0
          %1310 = vmatprep.mubr.bf16.mxu0 0
          %1311 = vmatmul.mubr.bf16.gmra.mrb[0].mxu0 %v1157
          %v1312 = vpop.f32.mrb[0].mxu0
          %v1313 = vadd.f32 0.0, %v1312
          %v1314 = vpop.f32.mrb[0].mxu0
          %v1315 = vpop.f32.mrb[0].mxu0
          %v1316 = vadd.f32 0.0, %v1315
          %v1317 = vpop.f32.mrb[0].mxu0
          %1318 = vdwg.mxu0
          %v1335 = vunpack.c.l.b16 %v1134
          %v1336 = vunpack.c.l.b16 %v1135
          %v1337 = vunpack.c.l.b16 %v1136
          %v1338 = vunpack.c.l.b16 %v1137
          %v1339 = vunpack.c.l.b16 %v1138
          %v1340 = vunpack.c.l.b16 %v1139
          %v1341 = vunpack.c.l.b16 %v1140
          %v1342 = vunpack.c.l.b16 %v1141
          %v1343 = vunpack.c.l.b16 %v1142
          %v1344 = vunpack.c.l.b16 %v1143
          %v1345 = vunpack.c.l.b16 %v1144
          %v1346 = vunpack.c.l.b16 %v1145
          %v1347 = vunpack.c.l.b16 %v1146
          %v1348 = vunpack.c.l.b16 %v1147
          %v1349 = vunpack.c.l.b16 %v1148
          %v1350 = vunpack.c.l.b16 %v1149
          %v1351 = vpack.c.b16 %v1336, %v1335
          %v1352 = vpack.c.b16 %v1338, %v1337
          %v1353 = vpack.c.b16 %v1340, %v1339
          %v1354 = vpack.c.b16 %v1342, %v1341
          %v1355 = vpack.c.b16 %v1344, %v1343
          %v1356 = vpack.c.b16 %v1346, %v1345
          %v1357 = vpack.c.b16 %v1348, %v1347
          %v1358 = vpack.c.b16 %v1350, %v1349
          %1367 = vmatprep.subr.bf16.mxu0 0
          %1368 = vmatpush1.bf16.msra.mxu0 %v1351
          %1369 = vmatprep.subr.bf16.mxu0 0
          %1370 = vmatpush1.bf16.msra.mxu0 %v1352
          %1371 = vmatprep.subr.bf16.mxu0 0
          %1372 = vmatpush1.bf16.msra.mxu0 %v1353
          %1373 = vmatprep.subr.bf16.mxu0 0
          %1374 = vmatpush1.bf16.msra.mxu0 %v1354
          %1375 = vmatprep.subr.bf16.mxu0 0
          %1376 = vmatpush1.bf16.msra.mxu0 %v1355
          %1377 = vmatprep.subr.bf16.mxu0 0
          %1378 = vmatpush1.bf16.msra.mxu0 %v1356
          %1379 = vmatprep.subr.bf16.mxu0 0
          %1380 = vmatpush1.bf16.msra.mxu0 %v1357
          %1381 = vmatprep.subr.bf16.mxu0 0
          %1382 = vmatpush1.bf16.msra.mxu0 %v1358
          %1383 = vmatprep.subr.bf16.mxu0 0
          %1384 = vmatpush1.bf16.msra.mxu0 0
          %1385 = vmatprep.subr.bf16.mxu0 0
          %1386 = vmatpush1.bf16.msra.mxu0 0
          %1387 = vmatprep.subr.bf16.mxu0 0
          %1388 = vmatpush1.bf16.msra.mxu0 0
          %1389 = vmatprep.subr.bf16.mxu0 0
          %1390 = vmatpush1.bf16.msra.mxu0 0
          %1391 = vmatprep.subr.bf16.mxu0 0
          %1392 = vmatpush1.bf16.msra.mxu0 0
          %1393 = vmatprep.subr.bf16.mxu0 0
          %1394 = vmatpush1.bf16.msra.mxu0 0
          %1395 = vmatprep.subr.bf16.mxu0 0
          %1396 = vmatpush1.bf16.msra.mxu0 0
          %1397 = vmatprep.subr.bf16.mxu0 0
          %1398 = vmatpush1.bf16.msra.mxu0 0
          %1399 = vmatprep.mubr.bf16.mxu0 0
          %1400 = vmatmul.mubr.bf16.gmra.mrb[0].mxu0 %v1126
          %v1401 = vpop.f32.mrb[0].mxu0
          %v1402 = vadd.f32 %v1257, %v1401
          %v1403 = vpop.f32.mrb[0].mxu0
          %v1404 = vpop.f32.mrb[0].mxu0
          %v1405 = vadd.f32 %v1260, %v1404
          %v1406 = vpop.f32.mrb[0].mxu0
          %1407 = vmatprep.mubr.bf16.mxu0 0
          %1408 = vmatmul.mubr.bf16.gmra.mrb[0].mxu0 %v1127
          %v1409 = vpop.f32.mrb[0].mxu0
          %v1410 = vadd.f32 %v1265, %v1409
          %v1411 = vpop.f32.mrb[0].mxu0
          %v1412 = vpop.f32.mrb[0].mxu0
          %v1413 = vadd.f32 %v1268, %v1412
          %v1414 = vpop.f32.mrb[0].mxu0
          %1415 = vmatprep.mubr.bf16.mxu0 0
          %1416 = vmatmul.mubr.bf16.gmra.mrb[0].mxu0 %v1128
          %v1417 = vpop.f32.mrb[0].mxu0
          %v1418 = vadd.f32 %v1273, %v1417
          %v1419 = vpop.f32.mrb[0].mxu0
          %v1420 = vpop.f32.mrb[0].mxu0
          %v1421 = vadd.f32 %v1276, %v1420
          %v1422 = vpop.f32.mrb[0].mxu0
          %1423 = vmatprep.mubr.bf16.mxu0 0
          %1424 = vmatmul.mubr.bf16.gmra.mrb[0].mxu0 %v1129
          %v1425 = vpop.f32.mrb[0].mxu0
          %v1426 = vadd.f32 %v1281, %v1425
          %v1427 = vpop.f32.mrb[0].mxu0
          %v1428 = vpop.f32.mrb[0].mxu0
          %v1429 = vadd.f32 %v1284, %v1428
          %v1430 = vpop.f32.mrb[0].mxu0
          %1431 = vmatprep.mubr.bf16.mxu0 0
          %1432 = vmatmul.mubr.bf16.gmra.mrb[0].mxu0 %v1130
          %v1433 = vpop.f32.mrb[0].mxu0
          %v1434 = vadd.f32 %v1289, %v1433
          %v1435 = vpop.f32.mrb[0].mxu0
          %v1436 = vpop.f32.mrb[0].mxu0
          %v1437 = vadd.f32 %v1292, %v1436
          %v1438 = vpop.f32.mrb[0].mxu0
          %1439 = vmatprep.mubr.bf16.mxu0 0
          %1440 = vmatmul.mubr.bf16.gmra.mrb[0].mxu0 %v1131
          %v1441 = vpop.f32.mrb[0].mxu0
          %v1442 = vadd.f32 %v1297, %v1441
          %v1443 = vpop.f32.mrb[0].mxu0
          %v1444 = vpop.f32.mrb[0].mxu0
          %v1445 = vadd.f32 %v1300, %v1444
          %v1446 = vpop.f32.mrb[0].mxu0
          %1447 = vmatprep.mubr.bf16.mxu0 0
          %1448 = vmatmul.mubr.bf16.gmra.mrb[0].mxu0 %v1132
          %v1449 = vpop.f32.mrb[0].mxu0
          %v1450 = vadd.f32 %v1305, %v1449
          %v1451 = vpop.f32.mrb[0].mxu0
          %v1452 = vpop.f32.mrb[0].mxu0
          %v1453 = vadd.f32 %v1308, %v1452
          %v1454 = vpop.f32.mrb[0].mxu0
          %1455 = vmatprep.mubr.bf16.mxu0 0
          %1456 = vmatmul.mubr.bf16.gmra.mrb[0].mxu0 %v1133
          %v1457 = vpop.f32.mrb[0].mxu0
          %v1458 = vadd.f32 %v1313, %v1457
          %v1459 = vpop.f32.mrb[0].mxu0
          %v1460 = vpop.f32.mrb[0].mxu0
          %v1461 = vadd.f32 %v1316, %v1460
          %v1462 = vpop.f32.mrb[0].mxu0
          %1463 = vdwg.mxu0
          %v1464 = vld [vmem:[%s5] sm:$0x1]
          %v1466 = vlaneseq
          %v1467 = vshrl.u32 %v1466, 7
          %v1468 = vsub.s32 0, %v1467
          %v1469 = vrot.slane %v1464, %v1468
          %v1471 = vadd.f32 %v1402, %v1469
          %v1472 = vadd.f32 %v1405, %v1469
          %v1473 = vadd.f32 %v1410, %v1469
          %v1474 = vadd.f32 %v1413, %v1469
          %v1475 = vadd.f32 %v1418, %v1469
          %v1476 = vadd.f32 %v1421, %v1469
          %v1477 = vadd.f32 %v1426, %v1469
          %v1478 = vadd.f32 %v1429, %v1469
          %v1479 = vadd.f32 %v1434, %v1469
          %v1480 = vadd.f32 %v1437, %v1469
          %v1481 = vadd.f32 %v1442, %v1469
          %v1482 = vadd.f32 %v1445, %v1469
          %v1483 = vadd.f32 %v1450, %v1469
          %v1484 = vadd.f32 %v1453, %v1469
          %v1485 = vadd.f32 %v1458, %v1469
          %v1486 = vadd.f32 %v1461, %v1469
          %v1487 = vadd.f32 %v1078, %v1110
          %v1488 = vadd.f32 %v1079, %v1111
          %v1489 = vadd.f32 %v1080, %v1112
          %v1490 = vadd.f32 %v1081, %v1113
          %v1491 = vadd.f32 %v1082, %v1114
          %v1492 = vadd.f32 %v1083, %v1115
          %v1493 = vadd.f32 %v1084, %v1116
          %v1494 = vadd.f32 %v1085, %v1117
          %v1495 = vadd.f32 %v1086, %v1118
          %v1496 = vadd.f32 %v1087, %v1119
          %v1497 = vadd.f32 %v1088, %v1120
          %v1498 = vadd.f32 %v1089, %v1121
          %v1499 = vadd.f32 %v1090, %v1122
          %v1500 = vadd.f32 %v1091, %v1123
          %v1501 = vadd.f32 %v1092, %v1124
          %v1502 = vadd.f32 %v1093, %v1125
          %1503 = vst [vmem:[%s403] sm:$0xff] %v1487
          %1504 = vst [vmem:[%s403 + $0x8] sm:$0xff] %v1488
          %1505 = vst [vmem:[%s403 + $0x10] sm:$0xff] %v1489
          %1506 = vst [vmem:[%s403 + $0x18] sm:$0xff] %v1490
          %1507 = vst [vmem:[%s403 + $0x20] sm:$0xff] %v1491
          %1508 = vst [vmem:[%s403 + $0x28] sm:$0xff] %v1492
          %1509 = vst [vmem:[%s403 + $0x30] sm:$0xff] %v1493
          %1510 = vst [vmem:[%s403 + $0x38] sm:$0xff] %v1494
          %1511 = vst [vmem:[%s403 + $0x40] sm:$0xff] %v1495
          %1512 = vst [vmem:[%s403 + $0x48] sm:$0xff] %v1496
          %1513 = vst [vmem:[%s403 + $0x50] sm:$0xff] %v1497
          %1514 = vst [vmem:[%s403 + $0x58] sm:$0xff] %v1498
          %1515 = vst [vmem:[%s403 + $0x60] sm:$0xff] %v1499
          %1516 = vst [vmem:[%s403 + $0x68] sm:$0xff] %v1500
          %1517 = vst [vmem:[%s403 + $0x70] sm:$0xff] %v1501
          %1518 = vst [vmem:[%s403 + $0x78] sm:$0xff] %v1502
          %v1519 = vpack.c.bf16 %v1488, %v1487
          %v1520 = vpack.c.bf16 %v1490, %v1489
          %v1521 = vpack.c.bf16 %v1492, %v1491
          %v1522 = vpack.c.bf16 %v1494, %v1493
          %v1523 = vpack.c.bf16 %v1496, %v1495
          %v1524 = vpack.c.bf16 %v1498, %v1497
          %v1525 = vpack.c.bf16 %v1500, %v1499
          %v1526 = vpack.c.bf16 %v1502, %v1501
          %v1535 = vunpack.c.l.b16 %v1519
          %v1536 = vunpack.c.h.b16 %v1519
          %v1537 = vunpack.c.l.b16 %v1520
          %v1538 = vunpack.c.h.b16 %v1520
          %v1539 = vunpack.c.l.b16 %v1521
          %v1540 = vunpack.c.h.b16 %v1521
          %v1541 = vunpack.c.l.b16 %v1522
          %v1542 = vunpack.c.h.b16 %v1522
          %v1543 = vunpack.c.l.b16 %v1523
          %v1544 = vunpack.c.h.b16 %v1523
          %v1545 = vunpack.c.l.b16 %v1524
          %v1546 = vunpack.c.h.b16 %v1524
          %v1547 = vunpack.c.l.b16 %v1525
          %v1548 = vunpack.c.h.b16 %v1525
          %v1549 = vunpack.c.l.b16 %v1526
          %v1550 = vunpack.c.h.b16 %v1526
          %v1551 = vpack.c.b16 %v1535, %v1535
          %v1552 = vpack.c.b16 %v1536, %v1536
          %v1553 = vpack.c.b16 %v1537, %v1537
          %v1554 = vpack.c.b16 %v1538, %v1538
          %v1555 = vpack.c.b16 %v1539, %v1539
          %v1556 = vpack.c.b16 %v1540, %v1540
          %v1557 = vpack.c.b16 %v1541, %v1541
          %v1558 = vpack.c.b16 %v1542, %v1542
          %v1559 = vpack.c.b16 %v1543, %v1543
          %v1560 = vpack.c.b16 %v1544, %v1544
          %v1561 = vpack.c.b16 %v1545, %v1545
          %v1562 = vpack.c.b16 %v1546, %v1546
          %v1563 = vpack.c.b16 %v1547, %v1547
          %v1564 = vpack.c.b16 %v1548, %v1548
          %v1565 = vpack.c.b16 %v1549, %v1549
          %v1566 = vpack.c.b16 %v1550, %v1550
          %1583 = vst [vmem:[%s410] sm:$0xf] %v1551
          %1584 = vst [vmem:[%s410 + $0x4] sm:$0xf] %v1552
          %1585 = vst [vmem:[%s410 + $0x8] sm:$0xf] %v1553
          %1586 = vst [vmem:[%s410 + $0xc] sm:$0xf] %v1554
          %1587 = vst [vmem:[%s410 + $0x10] sm:$0xf] %v1555
          %1588 = vst [vmem:[%s410 + $0x14] sm:$0xf] %v1556
          %1589 = vst [vmem:[%s410 + $0x18] sm:$0xf] %v1557
          %1590 = vst [vmem:[%s410 + $0x1c] sm:$0xf] %v1558
          %1591 = vst [vmem:[%s410 + $0x20] sm:$0xf] %v1559
          %1592 = vst [vmem:[%s410 + $0x24] sm:$0xf] %v1560
          %1593 = vst [vmem:[%s410 + $0x28] sm:$0xf] %v1561
          %1594 = vst [vmem:[%s410 + $0x2c] sm:$0xf] %v1562
          %1595 = vst [vmem:[%s410 + $0x30] sm:$0xf] %v1563
          %1596 = vst [vmem:[%s410 + $0x34] sm:$0xf] %v1564
          %1597 = vst [vmem:[%s410 + $0x38] sm:$0xf] %v1565
          %1598 = vst [vmem:[%s410 + $0x3c] sm:$0xf] %v1566
          %v1599 = vld [vmem:[%s446] sm:$0xff]
          %v1600 = vld [vmem:[%s446 + $0x8] sm:$0xff]
          %v1601 = vld [vmem:[%s446 + $0x10] sm:$0xff]
          %v1602 = vld [vmem:[%s446 + $0x18] sm:$0xff]
          %v1603 = vld [vmem:[%s446 + $0x20] sm:$0xff]
          %v1604 = vld [vmem:[%s446 + $0x28] sm:$0xff]
          %v1605 = vld [vmem:[%s446 + $0x30] sm:$0xff]
          %v1606 = vld [vmem:[%s446 + $0x38] sm:$0xff]
          %v1607 = vld [vmem:[%s446 + $0x40] sm:$0xff]
          %v1608 = vld [vmem:[%s446 + $0x48] sm:$0xff]
          %v1609 = vld [vmem:[%s446 + $0x50] sm:$0xff]
          %v1610 = vld [vmem:[%s446 + $0x58] sm:$0xff]
          %v1611 = vld [vmem:[%s446 + $0x60] sm:$0xff]
          %v1612 = vld [vmem:[%s446 + $0x68] sm:$0xff]
          %v1613 = vld [vmem:[%s446 + $0x70] sm:$0xff]
          %v1614 = vld [vmem:[%s446 + $0x78] sm:$0xff]
          %v1615 = vadd.f32 %v1599, %v1471
          %v1616 = vadd.f32 %v1600, %v1472
          %v1617 = vadd.f32 %v1601, %v1473
          %v1618 = vadd.f32 %v1602, %v1474
          %v1619 = vadd.f32 %v1603, %v1475
          %v1620 = vadd.f32 %v1604, %v1476
          %v1621 = vadd.f32 %v1605, %v1477
          %v1622 = vadd.f32 %v1606, %v1478
          %v1623 = vadd.f32 %v1607, %v1479
          %v1624 = vadd.f32 %v1608, %v1480
          %v1625 = vadd.f32 %v1609, %v1481
          %v1626 = vadd.f32 %v1610, %v1482
          %v1627 = vadd.f32 %v1611, %v1483
          %v1628 = vadd.f32 %v1612, %v1484
          %v1629 = vadd.f32 %v1613, %v1485
          %v1630 = vadd.f32 %v1614, %v1486
          %1631 = vst [vmem:[%s454] sm:$0xff] %v1615
          %1632 = vst [vmem:[%s454 + $0x8] sm:$0xff] %v1616
          %1633 = vst [vmem:[%s454 + $0x10] sm:$0xff] %v1617
          %1634 = vst [vmem:[%s454 + $0x18] sm:$0xff] %v1618
          %1635 = vst [vmem:[%s454 + $0x20] sm:$0xff] %v1619
          %1636 = vst [vmem:[%s454 + $0x28] sm:$0xff] %v1620
          %1637 = vst [vmem:[%s454 + $0x30] sm:$0xff] %v1621
          %1638 = vst [vmem:[%s454 + $0x38] sm:$0xff] %v1622
          %1639 = vst [vmem:[%s454 + $0x40] sm:$0xff] %v1623
          %1640 = vst [vmem:[%s454 + $0x48] sm:$0xff] %v1624
          %1641 = vst [vmem:[%s454 + $0x50] sm:$0xff] %v1625
          %1642 = vst [vmem:[%s454 + $0x58] sm:$0xff] %v1626
          %1643 = vst [vmem:[%s454 + $0x60] sm:$0xff] %v1627
          %1644 = vst [vmem:[%s454 + $0x68] sm:$0xff] %v1628
          %1645 = vst [vmem:[%s454 + $0x70] sm:$0xff] %v1629
          %1646 = vst [vmem:[%s454 + $0x78] sm:$0xff] %v1630
        $region60: #{_forward_jit.7} parent=47 // pred_fallthru
          _
        %s1647 = sand.u32 %s216, 1
        %s1648 = scalar_lea.sflag [#allocation3], %s1647
        %s1649 = sand.u32 %s216, 1
        %s1650 = smul.addr %s1649, 128
        %s1651 = scalar_lea.vmem [#allocation2], %s1650
        %s1652 = sand.u32 %s242, 1
        %s1653 = scalar_lea.sflag [#allocation5], %s1652
        %s1654 = sand.u32 %s242, 1
        %s1655 = smul.addr %s1654, 64
        %s1656 = scalar_lea.vmem [#allocation4], %s1655
        %s1657 = smul.u32 16, %s31
        %p1658 = scmp.lt.s32.totalorder %s1657, 31
        %s1659 = scalar_select %p1658, %s1657, 31
        %s1660 = smul.addr %s1659, 8
        %s1661 = scalar_lea.vmem %s9, %s1660
        // Predicated region
        $region61: #{_forward_jit.7} parent=47 // pred_check
          %p1662 = pneg %p226
        $region62: #{_forward_jit.7} parent=47 // pred_check_branch
          %1664 = sbr.rel (%p1662) target = $region64
        $region63: #{_forward_jit.7} parent=47 // pred_region
          %s1665 = smul.u32 16, %s31
          %s1667 = ssub.s32 2048, 2048
          %1668 = vsyncadd %s1648, %s1667
          %s1669 = smul.addr %s1665, 128
          %s1670 = scalar_lea.hbm %s7, %s1669
          %s1671 = sshll.u32 %s1651, 4
          %s1672 = int_to_ptr.vmem [resolvable:$true] %s1671
          %1677 = dma.vmem_to_hbm [thread:$0]  %s1672, 2048, %s1670, %s1648, 128, 128, 8
        $region64: #{_forward_jit.7} parent=47 // pred_fallthru
          _
        // Predicated region
        $region65: #{_forward_jit.7} parent=47 // pred_check
          %p1678 = pneg %p252
        $region66: #{_forward_jit.7} parent=47 // pred_check_branch
          %1680 = sbr.rel (%p1678) target = $region68
        $region67: #{_forward_jit.7} parent=47 // pred_region
          %s1681 = smul.u32 16, %s31
          %s1683 = ssub.s32 1024, 1024
          %1684 = vsyncadd %s1653, %s1683
          %s1685 = smul.addr %s1681, 64
          %s1686 = scalar_lea.hbm %s8, %s1685
          %s1687 = sshll.u32 %s1656, 4
          %s1688 = int_to_ptr.vmem [resolvable:$true] %s1687
          %1693 = dma.vmem_to_hbm [thread:$0]  %s1688, 1024, %s1686, %s1653, 64, 64, 4
        $region68: #{_forward_jit.7} parent=47 // pred_fallthru
          _
        // Predicated region
        $region69: #{_forward_jit.7} parent=47 // pred_check
          %p1694 = pneg %p278
        $region70: #{_forward_jit.7} parent=47 // pred_check_branch
          %1696 = sbr.rel (%p1694) target = $region72
        $region71: #{_forward_jit.7} parent=47 // pred_region
          %s1697 = smul.u32 16, %s31
        $region72: #{_forward_jit.7} parent=47 // pred_fallthru
          _
      $region48: #{_forward_jit.7} parent=5 // pred_fallthru
        _
      %p1698 = scmp.le.s32.totalorder 2, %s22
      // Predicated region
      $region73: #{_forward_jit.7} parent=5 // pred_check
        %p1699 = pneg %p1698
      $region74: #{_forward_jit.7} parent=5 // pred_check_branch
        %1701 = sbr.rel (%p1699) target = $region76
      $region75: #{_forward_jit.7} parent=5 // pred_region
        %s1702 = ssub.s32 %s22, 2
        // Predicated region
        $region77: #{_forward_jit.7} parent=75 // pred_check
          %p1703 = pneg %p232
        $region78: #{_forward_jit.7} parent=75 // pred_check_branch
          %1705 = sbr.rel (%p1703) target = $region80
        $region79: #{_forward_jit.7} parent=75 // pred_region
          %s1706 = sand.u32 %s217, 1
          %s1707 = scalar_lea.sflag [#allocation3], %s1706
          %s1708 = sand.u32 %s217, 1
          %s1709 = smul.addr %s1708, 128
          %s1710 = scalar_lea.vmem [#allocation2], %s1709
          %1711 = dma.done %s1707, 2048
        $region80: #{_forward_jit.7} parent=75 // pred_fallthru
          _
        // Predicated region
        $region81: #{_forward_jit.7} parent=75 // pred_check
          %p1712 = pneg %p258
        $region82: #{_forward_jit.7} parent=75 // pred_check_branch
          %1714 = sbr.rel (%p1712) target = $region84
        $region83: #{_forward_jit.7} parent=75 // pred_region
          %s1715 = sand.u32 %s243, 1
          %s1716 = scalar_lea.sflag [#allocation5], %s1715
          %s1717 = sand.u32 %s243, 1
          %s1718 = smul.addr %s1717, 64
          %s1719 = scalar_lea.vmem [#allocation4], %s1718
          %1720 = dma.done %s1716, 1024
        $region84: #{_forward_jit.7} parent=75 // pred_fallthru
          _
        // Predicated region
        $region85: #{_forward_jit.7} parent=75 // pred_check
          %p1721 = pneg %p284
        $region86: #{_forward_jit.7} parent=75 // pred_check_branch
          %1723 = sbr.rel (%p1721) target = $region88
        $region87: #{_forward_jit.7} parent=75 // pred_region
          %s1724 = smul.u32 16, %s33
          %p1725 = scmp.lt.s32.totalorder %s1724, 31
          %s1726 = scalar_select %p1725, %s1724, 31
          %s1727 = smul.addr %s1726, 8
          %s1728 = scalar_lea.vmem %s9, %s1727
        $region88: #{_forward_jit.7} parent=75 // pred_fallthru
          _
      $region76: #{_forward_jit.7} parent=5 // pred_fallthru
        _
    $region6: #{_forward_jit.7} parent=1 // loop_footer
      %s26 = sadd.s32 1, %s22
    $region7: #{_forward_jit.7} parent=1 // loop_footer_branch
      %21 = sbr.rel target = $region3
    $region8: #{_forward_jit.7} parent=1 // loop_exit
      _
    %1729 = vsyncpa [#allocation3], 1
    %s1730 = scalar_lea.sflag [#allocation3], 1
    %1731 = vsyncpa %s1730, 1
    %1732 = vsyncpa [#allocation5], 1
    %s1733 = scalar_lea.sflag [#allocation5], 1
    %1734 = vsyncpa %s1733, 1

// kernel: _forward_jit.6
$region0: #{_forward_jit.6}
  #allocation0 [shape = 'u32[]', space=smem, size = 0x4, offset = 0x4, fixed_abs, tag = 'smem constant byte address 0x4 - core index']
  #allocation1 [shape = 'u32[144,128]{1,0:T(1,128)}', space=vmem, size = 0x12000, scoped, tag = 'internal scratch']
  %s0 = inlined_call_operand.vmem [shape: bf16[384,256], index: 0, kind: input, shape index: {}]
  %s1 = inlined_call_operand.vmem [shape: bf16[256,128], index: 1, kind: input, shape index: {}]
  %s2 = inlined_call_operand.vmem [shape: f32[384,128], index: 2, kind: input, shape index: {}]
  %s3 = inlined_call_operand.vmem [shape: bf16[128,128], index: 3, kind: input, shape index: {}]
  %s4 = inlined_call_operand.vmem [shape: bf16[128,128], index: 4, kind: input, shape index: {}]
  %s5 = inlined_call_operand.vmem [shape: f32[1,128], index: 5, kind: input, shape index: {}]
  %s6 = inlined_call_operand.vmem [shape: f32[384,128], index: 6, kind: input, shape index: {}, may-alias: {6,9}]
  %s7 = inlined_call_operand.hbm [shape: f32[384,128], index: 7, kind: output, shape index: {0}]
  %s8 = inlined_call_operand.hbm [shape: bf16[384,128], index: 8, kind: output, shape index: {1}]
  %s9 = inlined_call_operand.vmem [shape: f32[384,128], index: 9, kind: output, shape index: {2}, may-alias: {6,9}]
  %10 = xla_tuple %s7, %s8, %s9
  %s11 = sld [smem:[#allocation0]]
  $region89: #{_forward_jit.6} parent=0
    _
  %s13 = ssub.s32 1, %s11
  %s14 = scalar_select 0, %s13, %s11
  $region1: #{_forward_jit.6} parent=0
    #allocation2 [shape = 'u8[131072]{0}', space=vmem, size = 0x20000, scoped, tag = 'output window, operand 0']
    #allocation3 [shape = 's32[2]{0}', space=sflag, size = 0x8, scoped, tag = 'scoped memory for _forward_jit.6']
    #allocation4 [shape = 'u8[65536]{0}', space=vmem, size = 0x10000, scoped, tag = 'output window, operand 1']
    #allocation5 [shape = 's32[2]{0}', space=sflag, size = 0x8, scoped, tag = 'scoped memory for _forward_jit.6']
    %15 = vsyncpa [#allocation3], 0
    %s16 = scalar_lea.sflag [#allocation3], 1
    %17 = vsyncpa %s16, 0
    %18 = vsyncpa [#allocation5], 0
    %s19 = scalar_lea.sflag [#allocation5], 1
    %20 = vsyncpa %s19, 0
    loop: start=0, step=1, limit=5
    $region2: #{_forward_jit.6} parent=1 // loop_pre_header
      _
    $region3: #{_forward_jit.6} parent=1 // loop_header
      %s22 = sphi 0, %s26
      %p23 = scmp.ge.s32.totalorder %s22, 5
      %s29 = sphi 0, %s41
      %s30 = sphi 0, %s37
      %s31 = sphi 0, %s29
      %s32 = sphi 0, %s30
      %s33 = sphi 0, %s31
      %s34 = sphi 0, %s32
      %s46 = sphi 0, %s48
      %s49 = sphi 0, %s46
      %s50 = sphi 0, %s49
      %s66 = sphi 0, %s50
      %s72 = sphi 0, %s74
      %s75 = sphi 0, %s72
      %s76 = sphi 0, %s75
      %s92 = sphi 0, %s76
      %s98 = sphi 0, %s100
      %s101 = sphi 0, %s98
      %s102 = sphi 0, %s101
      %s118 = sphi 0, %s102
      %s122 = sphi 0, %s122
      %s124 = sphi 0, %s122
      %s125 = sphi 0, %s124
      %s139 = sphi 0, %s125
      %s143 = sphi 0, %s143
      %s145 = sphi 0, %s143
      %s146 = sphi 0, %s145
      %s160 = sphi 0, %s146
      %s164 = sphi 0, %s164
      %s166 = sphi 0, %s164
      %s167 = sphi 0, %s166
      %s181 = sphi 0, %s167
      %s187 = sphi 0, %s189
      %s190 = sphi 0, %s187
      %s191 = sphi 0, %s190
      %s207 = sphi 0, %s191
      %s213 = sphi 0, %s215
      %s216 = sphi 0, %s213
      %s217 = sphi 0, %s216
      %s233 = sphi 0, %s217
      %s239 = sphi 0, %s241
      %s242 = sphi 0, %s239
      %s243 = sphi 0, %s242
      %s259 = sphi 0, %s243
      %s265 = sphi 0, %s267
      %s268 = sphi 0, %s265
      %s269 = sphi 0, %s268
      %s285 = sphi 0, %s269
    $region4: #{_forward_jit.6} parent=1 // loop_header_branch
      %25 = sbr.rel (%p23) target = $region8
    $region5: #{_forward_jit.6} parent=1 // loop_body
      %s27 = ssub.s32 %s22, 1
      %s28 = ssub.s32 %s22, 2
      %s35 = sadd.s32 1, %s30
      %p36 = scmp.ge.s32.totalorder %s35, 1
      %s37 = scalar_select %p36, 0, %s35
      %s38 = sadd.s32 1, %s29
      %s39 = scalar_select %p36, %s38, %s29
      %p40 = scmp.ge.s32.totalorder %s39, 3
      %s41 = scalar_select %p40, 0, %s39
      %s42 = ssub.s32 %s29, %s41
      %s43 = ssub.s32 %s30, %s37
      %s44 = sor.u32 %s42, %s43
      %p45 = scmp.eq.s32.totalorder %s44, 0
      %s47 = sadd.s32 %s46, 1
      %s48 = scalar_select %p45, %s46, %s47
      %p51 = pneg %p45
      %p52 = scmp.eq.s32.totalorder %s22, 2
      %p53 = por %p51, %p52
      %p54 = scmp.ne.s32.totalorder %s46, %s49
      %p55 = scmp.eq.s32.totalorder %s22, 0
      %p56 = por %p54, %p55
      %p57 = scmp.ne.s32.totalorder %s46, %s49
      %p58 = scmp.eq.s32.totalorder %s27, 2
      %p59 = por %p57, %p58
      %p60 = scmp.ne.s32.totalorder %s49, %s50
      %p61 = scmp.eq.s32.totalorder %s27, 0
      %p62 = por %p60, %p61
      %p63 = scmp.ne.s32.totalorder %s49, %s50
      %p64 = scmp.eq.s32.totalorder %s28, 2
      %p65 = por %p63, %p64
      %p67 = scmp.ne.s32.totalorder %s50, %s66
      %p68 = scmp.eq.s32.totalorder %s28, 0
      %p69 = por %p67, %p68
      %s70 = ssub.s32 %s30, %s37
      %p71 = scmp.eq.s32.totalorder %s70, 0
      %s73 = sadd.s32 %s72, 1
      %s74 = scalar_select %p71, %s72, %s73
      %p77 = pneg %p71
      %p78 = scmp.eq.s32.totalorder %s22, 2
      %p79 = por %p77, %p78
      %p80 = scmp.ne.s32.totalorder %s72, %s75
      %p81 = scmp.eq.s32.totalorder %s22, 0
      %p82 = por %p80, %p81
      %p83 = scmp.ne.s32.totalorder %s72, %s75
      %p84 = scmp.eq.s32.totalorder %s27, 2
      %p85 = por %p83, %p84
      %p86 = scmp.ne.s32.totalorder %s75, %s76
      %p87 = scmp.eq.s32.totalorder %s27, 0
      %p88 = por %p86, %p87
      %p89 = scmp.ne.s32.totalorder %s75, %s76
      %p90 = scmp.eq.s32.totalorder %s28, 2
      %p91 = por %p89, %p90
      %p93 = scmp.ne.s32.totalorder %s76, %s92
      %p94 = scmp.eq.s32.totalorder %s28, 0
      %p95 = por %p93, %p94
      %s96 = ssub.s32 %s29, %s41
      %p97 = scmp.eq.s32.totalorder %s96, 0
      %s99 = sadd.s32 %s98, 1
      %s100 = scalar_select %p97, %s98, %s99
      %p103 = pneg %p97
      %p104 = scmp.eq.s32.totalorder %s22, 2
      %p105 = por %p103, %p104
      %p106 = scmp.ne.s32.totalorder %s98, %s101
      %p107 = scmp.eq.s32.totalorder %s22, 0
      %p108 = por %p106, %p107
      %p109 = scmp.ne.s32.totalorder %s98, %s101
      %p110 = scmp.eq.s32.totalorder %s27, 2
      %p111 = por %p109, %p110
      %p112 = scmp.ne.s32.totalorder %s101, %s102
      %p113 = scmp.eq.s32.totalorder %s27, 0
      %p114 = por %p112, %p113
      %p115 = scmp.ne.s32.totalorder %s101, %s102
      %p116 = scmp.eq.s32.totalorder %s28, 2
      %p117 = por %p115, %p116
      %p119 = scmp.ne.s32.totalorder %s102, %s118
      %p120 = scmp.eq.s32.totalorder %s28, 0
      %p121 = por %p119, %p120
      %s123 = sadd.s32 %s122, 1
      %p126 = scmp.eq.s32.totalorder %s22, 2
      %p127 = scmp.ne.s32.totalorder %s122, %s124
      %p128 = scmp.eq.s32.totalorder %s22, 0
      %p129 = por %p127, %p128
      %p130 = scmp.ne.s32.totalorder %s122, %s124
      %p131 = scmp.eq.s32.totalorder %s27, 2
      %p132 = por %p130, %p131
      %p133 = scmp.ne.s32.totalorder %s124, %s125
      %p134 = scmp.eq.s32.totalorder %s27, 0
      %p135 = por %p133, %p134
      %p136 = scmp.ne.s32.totalorder %s124, %s125
      %p137 = scmp.eq.s32.totalorder %s28, 2
      %p138 = por %p136, %p137
      %p140 = scmp.ne.s32.totalorder %s125, %s139
      %p141 = scmp.eq.s32.totalorder %s28, 0
      %p142 = por %p140, %p141
      %s144 = sadd.s32 %s143, 1
      %p147 = scmp.eq.s32.totalorder %s22, 2
      %p148 = scmp.ne.s32.totalorder %s143, %s145
      %p149 = scmp.eq.s32.totalorder %s22, 0
      %p150 = por %p148, %p149
      %p151 = scmp.ne.s32.totalorder %s143, %s145
      %p152 = scmp.eq.s32.totalorder %s27, 2
      %p153 = por %p151, %p152
      %p154 = scmp.ne.s32.totalorder %s145, %s146
      %p155 = scmp.eq.s32.totalorder %s27, 0
      %p156 = por %p154, %p155
      %p157 = scmp.ne.s32.totalorder %s145, %s146
      %p158 = scmp.eq.s32.totalorder %s28, 2
      %p159 = por %p157, %p158
      %p161 = scmp.ne.s32.totalorder %s146, %s160
      %p162 = scmp.eq.s32.totalorder %s28, 0
      %p163 = por %p161, %p162
      %s165 = sadd.s32 %s164, 1
      %p168 = scmp.eq.s32.totalorder %s22, 2
      %p169 = scmp.ne.s32.totalorder %s164, %s166
      %p170 = scmp.eq.s32.totalorder %s22, 0
      %p171 = por %p169, %p170
      %p172 = scmp.ne.s32.totalorder %s164, %s166
      %p173 = scmp.eq.s32.totalorder %s27, 2
      %p174 = por %p172, %p173
      %p175 = scmp.ne.s32.totalorder %s166, %s167
      %p176 = scmp.eq.s32.totalorder %s27, 0
      %p177 = por %p175, %p176
      %p178 = scmp.ne.s32.totalorder %s166, %s167
      %p179 = scmp.eq.s32.totalorder %s28, 2
      %p180 = por %p178, %p179
      %p182 = scmp.ne.s32.totalorder %s167, %s181
      %p183 = scmp.eq.s32.totalorder %s28, 0
      %p184 = por %p182, %p183
      %s185 = ssub.s32 %s29, %s41
      %p186 = scmp.eq.s32.totalorder %s185, 0
      %s188 = sadd.s32 %s187, 1
      %s189 = scalar_select %p186, %s187, %s188
      %p192 = pneg %p186
      %p193 = scmp.eq.s32.totalorder %s22, 2
      %p194 = por %p192, %p193
      %p195 = scmp.ne.s32.totalorder %s187, %s190
      %p196 = scmp.eq.s32.totalorder %s22, 0
      %p197 = por %p195, %p196
      %p198 = scmp.ne.s32.totalorder %s187, %s190
      %p199 = scmp.eq.s32.totalorder %s27, 2
      %p200 = por %p198, %p199
      %p201 = scmp.ne.s32.totalorder %s190, %s191
      %p202 = scmp.eq.s32.totalorder %s27, 0
      %p203 = por %p201, %p202
      %p204 = scmp.ne.s32.totalorder %s190, %s191
      %p205 = scmp.eq.s32.totalorder %s28, 2
      %p206 = por %p204, %p205
      %p208 = scmp.ne.s32.totalorder %s191, %s207
      %p209 = scmp.eq.s32.totalorder %s28, 0
      %p210 = por %p208, %p209
      %s211 = ssub.s32 %s29, %s41
      %p212 = scmp.eq.s32.totalorder %s211, 0
      %s214 = sadd.s32 %s213, 1
      %s215 = scalar_select %p212, %s213, %s214
      %p218 = pneg %p212
      %p219 = scmp.eq.s32.totalorder %s22, 2
      %p220 = por %p218, %p219
      %p221 = scmp.ne.s32.totalorder %s213, %s216
      %p222 = scmp.eq.s32.totalorder %s22, 0
      %p223 = por %p221, %p222
      %p224 = scmp.ne.s32.totalorder %s213, %s216
      %p225 = scmp.eq.s32.totalorder %s27, 2
      %p226 = por %p224, %p225
      %p227 = scmp.ne.s32.totalorder %s216, %s217
      %p228 = scmp.eq.s32.totalorder %s27, 0
      %p229 = por %p227, %p228
      %p230 = scmp.ne.s32.totalorder %s216, %s217
      %p231 = scmp.eq.s32.totalorder %s28, 2
      %p232 = por %p230, %p231
      %p234 = scmp.ne.s32.totalorder %s217, %s233
      %p235 = scmp.eq.s32.totalorder %s28, 0
      %p236 = por %p234, %p235
      %s237 = ssub.s32 %s29, %s41
      %p238 = scmp.eq.s32.totalorder %s237, 0
      %s240 = sadd.s32 %s239, 1
      %s241 = scalar_select %p238, %s239, %s240
      %p244 = pneg %p238
      %p245 = scmp.eq.s32.totalorder %s22, 2
      %p246 = por %p244, %p245
      %p247 = scmp.ne.s32.totalorder %s239, %s242
      %p248 = scmp.eq.s32.totalorder %s22, 0
      %p249 = por %p247, %p248
      %p250 = scmp.ne.s32.totalorder %s239, %s242
      %p251 = scmp.eq.s32.totalorder %s27, 2
      %p252 = por %p250, %p251
      %p253 = scmp.ne.s32.totalorder %s242, %s243
      %p254 = scmp.eq.s32.totalorder %s27, 0
      %p255 = por %p253, %p254
      %p256 = scmp.ne.s32.totalorder %s242, %s243
      %p257 = scmp.eq.s32.totalorder %s28, 2
      %p258 = por %p256, %p257
      %p260 = scmp.ne.s32.totalorder %s243, %s259
      %p261 = scmp.eq.s32.totalorder %s28, 0
      %p262 = por %p260, %p261
      %s263 = ssub.s32 %s29, %s41
      %p264 = scmp.eq.s32.totalorder %s263, 0
      %s266 = sadd.s32 %s265, 1
      %s267 = scalar_select %p264, %s265, %s266
      %p270 = pneg %p264
      %p271 = scmp.eq.s32.totalorder %s22, 2
      %p272 = por %p270, %p271
      %p273 = scmp.ne.s32.totalorder %s265, %s268
      %p274 = scmp.eq.s32.totalorder %s22, 0
      %p275 = por %p273, %p274
      %p276 = scmp.ne.s32.totalorder %s265, %s268
      %p277 = scmp.eq.s32.totalorder %s27, 2
      %p278 = por %p276, %p277
      %p279 = scmp.ne.s32.totalorder %s268, %s269
      %p280 = scmp.eq.s32.totalorder %s27, 0
      %p281 = por %p279, %p280
      %p282 = scmp.ne.s32.totalorder %s268, %s269
      %p283 = scmp.eq.s32.totalorder %s28, 2
      %p284 = por %p282, %p283
      %p286 = scmp.ne.s32.totalorder %s269, %s285
      %p287 = scmp.eq.s32.totalorder %s28, 0
      %p288 = por %p286, %p287
      %p289 = scmp.le.s32.totalorder 1, %s22
      %p290 = scmp.lt.s32.totalorder %s22, 4
      %p291 = pnand %p289, %p290
      %p292 = pneg %p291
      // Predicated region
      $region9: #{_forward_jit.6} parent=5 // pred_check
        _
      $region10: #{_forward_jit.6} parent=5 // pred_check_branch
        %294 = sbr.rel (%p291) target = $region12
      $region11: #{_forward_jit.6} parent=5 // pred_region
        %s295 = ssub.s32 %s22, 1
        // Predicated region
        $region13: #{_forward_jit.6} parent=11 // pred_check
          %p296 = pneg %p88
        $region14: #{_forward_jit.6} parent=11 // pred_check_branch
          %298 = sbr.rel (%p296) target = $region16
        $region15: #{_forward_jit.6} parent=11 // pred_region
          %s299 = smul.u32 32, %s32
          %p300 = scmp.lt.s32.totalorder %s299, 31
          %s301 = scalar_select %p300, %s299, 31
          %s302 = smul.addr %s301, 4
          %s303 = scalar_lea.vmem %s1, %s302
          %s304 = smul.u32 32, %s32
        $region16: #{_forward_jit.6} parent=11 // pred_fallthru
          _
        // Predicated region
        $region17: #{_forward_jit.6} parent=11 // pred_check
          %p305 = pneg %p135
        $region18: #{_forward_jit.6} parent=11 // pred_check_branch
          %307 = sbr.rel (%p305) target = $region20
        $region19: #{_forward_jit.6} parent=11 // pred_region
          _
        $region20: #{_forward_jit.6} parent=11 // pred_fallthru
          _
        // Predicated region
        $region21: #{_forward_jit.6} parent=11 // pred_check
          %p308 = pneg %p156
        $region22: #{_forward_jit.6} parent=11 // pred_check_branch
          %310 = sbr.rel (%p308) target = $region24
        $region23: #{_forward_jit.6} parent=11 // pred_region
          _
        $region24: #{_forward_jit.6} parent=11 // pred_fallthru
          _
        // Predicated region
        $region25: #{_forward_jit.6} parent=11 // pred_check
          %p311 = pneg %p177
        $region26: #{_forward_jit.6} parent=11 // pred_check_branch
          %313 = sbr.rel (%p311) target = $region28
        $region27: #{_forward_jit.6} parent=11 // pred_region
          _
        $region28: #{_forward_jit.6} parent=11 // pred_fallthru
          _
      $region12: #{_forward_jit.6} parent=5 // pred_fallthru
        _
      %p314 = scmp.lt.s32.totalorder %s22, 3
      // Predicated region
      $region29: #{_forward_jit.6} parent=5 // pred_check
        %p315 = pneg %p314
      $region30: #{_forward_jit.6} parent=5 // pred_check_branch
        %317 = sbr.rel (%p315) target = $region32
      $region31: #{_forward_jit.6} parent=5 // pred_region
        // Predicated region
        $region33: #{_forward_jit.6} parent=31 // pred_check
          %p318 = pneg %p56
        $region34: #{_forward_jit.6} parent=31 // pred_check_branch
          %320 = sbr.rel (%p318) target = $region36
        $region35: #{_forward_jit.6} parent=31 // pred_region
          %s321 = smul.u32 16, %s29
          %s322 = smul.u32 2, %s30
          %p323 = scmp.lt.s32.totalorder %s321, 47
          %s324 = scalar_select %p323, %s321, 47
          %p325 = scmp.lt.s32.totalorder %s322, 1
          %s326 = scalar_select %p325, %s322, 1
          %s327 = smul.addr %s324, 2
          %s328 = sadd.s32 %s326, %s327
          %s329 = smul.addr %s328, 4
          %s330 = scalar_lea.vmem %s0, %s329
          %s331 = smul.u32 16, %s29
          %s332 = smul.u32 2, %s30
        $region36: #{_forward_jit.6} parent=31 // pred_fallthru
          _
        // Predicated region
        $region37: #{_forward_jit.6} parent=31 // pred_check
          %p333 = pneg %p108
        $region38: #{_forward_jit.6} parent=31 // pred_check_branch
          %335 = sbr.rel (%p333) target = $region40
        $region39: #{_forward_jit.6} parent=31 // pred_region
          %s336 = smul.u32 16, %s29
          %p337 = scmp.lt.s32.totalorder %s336, 47
          %s338 = scalar_select %p337, %s336, 47
          %s339 = smul.addr %s338, 8
          %s340 = scalar_lea.vmem %s2, %s339
          %s341 = smul.u32 16, %s29
        $region40: #{_forward_jit.6} parent=31 // pred_fallthru
          _
        // Predicated region
        $region41: #{_forward_jit.6} parent=31 // pred_check
          %p342 = pneg %p197
        $region42: #{_forward_jit.6} parent=31 // pred_check_branch
          %344 = sbr.rel (%p342) target = $region44
        $region43: #{_forward_jit.6} parent=31 // pred_region
          %s345 = smul.u32 16, %s29
          %p346 = scmp.lt.s32.totalorder %s345, 47
          %s347 = scalar_select %p346, %s345, 47
          %s348 = smul.addr %s347, 8
          %s349 = scalar_lea.vmem %s6, %s348
          %s350 = smul.u32 16, %s29
        $region44: #{_forward_jit.6} parent=31 // pred_fallthru
          _
      $region32: #{_forward_jit.6} parent=5 // pred_fallthru
        _
      %p351 = scmp.le.s32.totalorder 1, %s22
      %p352 = scmp.lt.s32.totalorder %s22, 4
      %p353 = pnand %p351, %p352
      %p354 = pneg %p353
      // Predicated region
      $region45: #{_forward_jit.6} parent=5 // pred_check
        _
      $region46: #{_forward_jit.6} parent=5 // pred_check_branch
        %356 = sbr.rel (%p353) target = $region48
      $region47: #{_forward_jit.6} parent=5 // pred_region
        %s357 = ssub.s32 %s22, 1
        %s358 = smul.u32 16, %s31
        %s359 = smul.u32 2, %s32
        %p360 = scmp.lt.s32.totalorder %s358, 47
        %s361 = scalar_select %p360, %s358, 47
        %p362 = scmp.lt.s32.totalorder %s359, 1
        %s363 = scalar_select %p362, %s359, 1
        %s364 = smul.addr %s361, 2
        %s365 = sadd.s32 %s363, %s364
        %s366 = smul.addr %s365, 4
        %s367 = scalar_lea.vmem %s0, %s366
        %p368 = pneg %p62
        %p369 = pneg %p59
        %s370 = smul.u32 32, %s32
        %p371 = scmp.lt.s32.totalorder %s370, 31
        %s372 = scalar_select %p371, %s370, 31
        %s373 = smul.addr %s372, 4
        %s374 = scalar_lea.vmem %s1, %s373
        %p375 = pneg %p88
        %p376 = pneg %p85
        %s377 = smul.u32 16, %s31
        %p378 = scmp.lt.s32.totalorder %s377, 47
        %s379 = scalar_select %p378, %s377, 47
        %s380 = smul.addr %s379, 8
        %s381 = scalar_lea.vmem %s2, %s380
        %p382 = pneg %p114
        %p383 = pneg %p111
        %p384 = pneg %p135
        %p385 = pneg %p132
        %p386 = pneg %p156
        %p387 = pneg %p153
        %p388 = pneg %p177
        %p389 = pneg %p174
        %s390 = smul.u32 16, %s31
        %p391 = scmp.lt.s32.totalorder %s390, 47
        %s392 = scalar_select %p391, %s390, 47
        %s393 = smul.addr %s392, 8
        %s394 = scalar_lea.vmem %s6, %s393
        %p395 = pneg %p203
        %p396 = pneg %p200
        %p397 = pneg %p229
        %p398 = pneg %p226
        %s399 = sand.u32 %s216, 1
        %s400 = scalar_lea.sflag [#allocation3], %s399
        %s401 = sand.u32 %s216, 1
        %s402 = smul.addr %s401, 128
        %s403 = scalar_lea.vmem [#allocation2], %s402
        %p404 = pneg %p255
        %p405 = pneg %p252
        %s406 = sand.u32 %s242, 1
        %s407 = scalar_lea.sflag [#allocation5], %s406
        %s408 = sand.u32 %s242, 1
        %s409 = smul.addr %s408, 64
        %s410 = scalar_lea.vmem [#allocation4], %s409
        %p411 = pneg %p281
        %p412 = pneg %p278
        %s413 = smul.u32 16, %s31
        %p414 = scmp.lt.s32.totalorder %s413, 47
        %s415 = scalar_select %p414, %s413, 47
        %s416 = smul.addr %s415, 8
        %s417 = scalar_lea.vmem %s9, %s416
        %s418 = smul.u32 16, %s31
        %s419 = smul.u32 2, %s32
        %p420 = scmp.lt.s32.totalorder %s418, 47
        %s421 = scalar_select %p420, %s418, 47
        %p422 = scmp.lt.s32.totalorder %s419, 1
        %s423 = scalar_select %p422, %s419, 1
        %s424 = smul.addr %s421, 2
        %s425 = sadd.s32 %s423, %s424
        %s426 = smul.addr %s425, 4
        %s427 = scalar_lea.vmem %s0, %s426
        %s428 = smul.u32 16, %s31
        %s429 = smul.u32 2, %s32
        %s430 = smul.u32 32, %s32
        %p431 = scmp.lt.s32.totalorder %s430, 31
        %s432 = scalar_select %p431, %s430, 31
        %s433 = smul.addr %s432, 4
        %s434 = scalar_lea.vmem %s1, %s433
        %s435 = smul.u32 32, %s32
        %s436 = smul.u32 16, %s31
        %p437 = scmp.lt.s32.totalorder %s436, 47
        %s438 = scalar_select %p437, %s436, 47
        %s439 = smul.addr %s438, 8
        %s440 = scalar_lea.vmem %s2, %s439
        %s441 = smul.u32 16, %s31
        %s442 = smul.u32 16, %s31
        %p443 = scmp.lt.s32.totalorder %s442, 47
        %s444 = scalar_select %p443, %s442, 47
        %s445 = smul.addr %s444, 8
        %s446 = scalar_lea.vmem %s6, %s445
        %s447 = smul.u32 16, %s31
        %s448 = smul.u32 16, %s31
        %s449 = smul.u32 16, %s31
        %s450 = smul.u32 16, %s31
        %p451 = scmp.lt.s32.totalorder %s450, 47
        %s452 = scalar_select %p451, %s450, 47
        %s453 = smul.addr %s452, 8
        %s454 = scalar_lea.vmem %s9, %s453
        %s455 = smul.u32 16, %s31
        %v457 = vld [vmem:[%s427] sm:$0xff]
        %v458 = vld [vmem:[%s427 + $0x8] sm:$0xff]
        %v459 = vld [vmem:[%s427 + $0x10] sm:$0xff]
        %v460 = vld [vmem:[%s427 + $0x18] sm:$0xff]
        %v461 = vld [vmem:[%s427 + $0x20] sm:$0xff]
        %v462 = vld [vmem:[%s427 + $0x28] sm:$0xff]
        %v463 = vld [vmem:[%s427 + $0x30] sm:$0xff]
        %v464 = vld [vmem:[%s427 + $0x38] sm:$0xff]
        %v465 = vld [vmem:[%s427 + $0x40] sm:$0xff]
        %v466 = vld [vmem:[%s427 + $0x48] sm:$0xff]
        %v467 = vld [vmem:[%s427 + $0x50] sm:$0xff]
        %v468 = vld [vmem:[%s427 + $0x58] sm:$0xff]
        %v469 = vld [vmem:[%s427 + $0x60] sm:$0xff]
        %v470 = vld [vmem:[%s427 + $0x68] sm:$0xff]
        %v471 = vld [vmem:[%s427 + $0x70] sm:$0xff]
        %v472 = vld [vmem:[%s427 + $0x78] sm:$0xff]
        %v473 = vld [vmem:[%s434] sm:$0xf]
        %v474 = vld [vmem:[%s434 + $0x4] sm:$0xf]
        %v475 = vld [vmem:[%s434 + $0x8] sm:$0xf]
        %v476 = vld [vmem:[%s434 + $0xc] sm:$0xf]
        %v477 = vld [vmem:[%s434 + $0x10] sm:$0xf]
        %v478 = vld [vmem:[%s434 + $0x14] sm:$0xf]
        %v479 = vld [vmem:[%s434 + $0x18] sm:$0xf]
        %v480 = vld [vmem:[%s434 + $0x1c] sm:$0xf]
        %v481 = vld [vmem:[%s434 + $0x20] sm:$0xf]
        %v482 = vld [vmem:[%s434 + $0x24] sm:$0xf]
        %v483 = vld [vmem:[%s434 + $0x28] sm:$0xf]
        %v484 = vld [vmem:[%s434 + $0x2c] sm:$0xf]
        %v485 = vld [vmem:[%s434 + $0x30] sm:$0xf]
        %v486 = vld [vmem:[%s434 + $0x34] sm:$0xf]
        %v487 = vld [vmem:[%s434 + $0x38] sm:$0xf]
        %v488 = vld [vmem:[%s434 + $0x3c] sm:$0xf]
        %v489 = vld [vmem:[%s434 + $0x40] sm:$0xf]
        %v490 = vld [vmem:[%s434 + $0x44] sm:$0xf]
        %v491 = vld [vmem:[%s434 + $0x48] sm:$0xf]
        %v492 = vld [vmem:[%s434 + $0x4c] sm:$0xf]
        %v493 = vld [vmem:[%s434 + $0x50] sm:$0xf]
        %v494 = vld [vmem:[%s434 + $0x54] sm:$0xf]
        %v495 = vld [vmem:[%s434 + $0x58] sm:$0xf]
        %v496 = vld [vmem:[%s434 + $0x5c] sm:$0xf]
        %v497 = vld [vmem:[%s434 + $0x60] sm:$0xf]
        %v498 = vld [vmem:[%s434 + $0x64] sm:$0xf]
        %v499 = vld [vmem:[%s434 + $0x68] sm:$0xf]
        %v500 = vld [vmem:[%s434 + $0x6c] sm:$0xf]
        %v501 = vld [vmem:[%s434 + $0x70] sm:$0xf]
        %v502 = vld [vmem:[%s434 + $0x74] sm:$0xf]
        %v503 = vld [vmem:[%s434 + $0x78] sm:$0xf]
        %v504 = vld [vmem:[%s434 + $0x7c] sm:$0xf]
        %v521 = vunpack.c.l.b16 %v457
        %v522 = vunpack.c.h.b16 %v457
        %v523 = vunpack.c.l.b16 %v458
        %v524 = vunpack.c.h.b16 %v458
        %v525 = vunpack.c.l.b16 %v459
        %v526 = vunpack.c.h.b16 %v459
        %v527 = vunpack.c.l.b16 %v460
        %v528 = vunpack.c.h.b16 %v460
        %v529 = vunpack.c.l.b16 %v461
        %v530 = vunpack.c.h.b16 %v461
        %v531 = vunpack.c.l.b16 %v462
        %v532 = vunpack.c.h.b16 %v462
        %v533 = vunpack.c.l.b16 %v463
        %v534 = vunpack.c.h.b16 %v463
        %v535 = vunpack.c.l.b16 %v464
        %v536 = vunpack.c.h.b16 %v464
        %v537 = vunpack.c.l.b16 %v465
        %v538 = vunpack.c.h.b16 %v465
        %v539 = vunpack.c.l.b16 %v466
        %v540 = vunpack.c.h.b16 %v466
        %v541 = vunpack.c.l.b16 %v467
        %v542 = vunpack.c.h.b16 %v467
        %v543 = vunpack.c.l.b16 %v468
        %v544 = vunpack.c.h.b16 %v468
        %v545 = vunpack.c.l.b16 %v469
        %v546 = vunpack.c.h.b16 %v469
        %v547 = vunpack.c.l.b16 %v470
        %v548 = vunpack.c.h.b16 %v470
        %v549 = vunpack.c.l.b16 %v471
        %v550 = vunpack.c.h.b16 %v471
        %v551 = vunpack.c.l.b16 %v472
        %v552 = vunpack.c.h.b16 %v472
        %v553 = vpack.c.b16 %v523, %v521
        %v554 = vpack.c.b16 %v524, %v522
        %v555 = vpack.c.b16 %v527, %v525
        %v556 = vpack.c.b16 %v528, %v526
        %v557 = vpack.c.b16 %v531, %v529
        %v558 = vpack.c.b16 %v532, %v530
        %v559 = vpack.c.b16 %v535, %v533
        %v560 = vpack.c.b16 %v536, %v534
        %v561 = vpack.c.b16 %v539, %v537
        %v562 = vpack.c.b16 %v540, %v538
        %v563 = vpack.c.b16 %v543, %v541
        %v564 = vpack.c.b16 %v544, %v542
        %v565 = vpack.c.b16 %v547, %v545
        %v566 = vpack.c.b16 %v548, %v546
        %v567 = vpack.c.b16 %v551, %v549
        %v568 = vpack.c.b16 %v552, %v550
        %v617 = vunpack.c.l.b16 %v473
        %v618 = vunpack.c.l.b16 %v474
        %v619 = vunpack.c.l.b16 %v475
        %v620 = vunpack.c.l.b16 %v476
        %v621 = vunpack.c.l.b16 %v477
        %v622 = vunpack.c.l.b16 %v478
        %v623 = vunpack.c.l.b16 %v479
        %v624 = vunpack.c.l.b16 %v480
        %v625 = vunpack.c.l.b16 %v481
        %v626 = vunpack.c.l.b16 %v482
        %v627 = vunpack.c.l.b16 %v483
        %v628 = vunpack.c.l.b16 %v484
        %v629 = vunpack.c.l.b16 %v485
        %v630 = vunpack.c.l.b16 %v486
        %v631 = vunpack.c.l.b16 %v487
        %v632 = vunpack.c.l.b16 %v488
        %v633 = vunpack.c.l.b16 %v489
        %v634 = vunpack.c.l.b16 %v490
        %v635 = vunpack.c.l.b16 %v491
        %v636 = vunpack.c.l.b16 %v492
        %v637 = vunpack.c.l.b16 %v493
        %v638 = vunpack.c.l.b16 %v494
        %v639 = vunpack.c.l.b16 %v495
        %v640 = vunpack.c.l.b16 %v496
        %v641 = vunpack.c.l.b16 %v497
        %v642 = vunpack.c.l.b16 %v498
        %v643 = vunpack.c.l.b16 %v499
        %v644 = vunpack.c.l.b16 %v500
        %v645 = vunpack.c.l.b16 %v501
        %v646 = vunpack.c.l.b16 %v502
        %v647 = vunpack.c.l.b16 %v503
        %v648 = vunpack.c.l.b16 %v504
        %v649 = vpack.c.b16 %v618, %v617
        %v650 = vpack.c.b16 %v620, %v619
        %v651 = vpack.c.b16 %v622, %v621
        %v652 = vpack.c.b16 %v624, %v623
        %v653 = vpack.c.b16 %v626, %v625
        %v654 = vpack.c.b16 %v628, %v627
        %v655 = vpack.c.b16 %v630, %v629
        %v656 = vpack.c.b16 %v632, %v631
        %v657 = vpack.c.b16 %v634, %v633
        %v658 = vpack.c.b16 %v636, %v635
        %v659 = vpack.c.b16 %v638, %v637
        %v660 = vpack.c.b16 %v640, %v639
        %v661 = vpack.c.b16 %v642, %v641
        %v662 = vpack.c.b16 %v644, %v643
        %v663 = vpack.c.b16 %v646, %v645
        %v664 = vpack.c.b16 %v648, %v647
        %681 = vmatprep.subr.bf16.mxu0 0
        %682 = vmatpush1.bf16.msra.mxu0 %v649
        %683 = vmatprep.subr.bf16.mxu0 0
        %684 = vmatpush1.bf16.msra.mxu0 %v650
        %685 = vmatprep.subr.bf16.mxu0 0
        %686 = vmatpush1.bf16.msra.mxu0 %v651
        %687 = vmatprep.subr.bf16.mxu0 0
        %688 = vmatpush1.bf16.msra.mxu0 %v652
        %689 = vmatprep.subr.bf16.mxu0 0
        %690 = vmatpush1.bf16.msra.mxu0 %v653
        %691 = vmatprep.subr.bf16.mxu0 0
        %692 = vmatpush1.bf16.msra.mxu0 %v654
        %693 = vmatprep.subr.bf16.mxu0 0
        %694 = vmatpush1.bf16.msra.mxu0 %v655
        %695 = vmatprep.subr.bf16.mxu0 0
        %696 = vmatpush1.bf16.msra.mxu0 %v656
        %697 = vmatprep.subr.bf16.mxu0 0
        %698 = vmatpush1.bf16.msra.mxu0 %v657
        %699 = vmatprep.subr.bf16.mxu0 0
        %700 = vmatpush1.bf16.msra.mxu0 %v658
        %701 = vmatprep.subr.bf16.mxu0 0
        %702 = vmatpush1.bf16.msra.mxu0 %v659
        %703 = vmatprep.subr.bf16.mxu0 0
        %704 = vmatpush1.bf16.msra.mxu0 %v660
        %705 = vmatprep.subr.bf16.mxu0 0
        %706 = vmatpush1.bf16.msra.mxu0 %v661
        %707 = vmatprep.subr.bf16.mxu0 0
        %708 = vmatpush1.bf16.msra.mxu0 %v662
        %709 = vmatprep.subr.bf16.mxu0 0
        %710 = vmatpush1.bf16.msra.mxu0 %v663
        %711 = vmatprep.subr.bf16.mxu0 0
        %712 = vmatpush1.bf16.msra.mxu0 %v664
        %713 = vmatprep.mubr.bf16.mxu0 %v554
        %714 = vmatmul.mubr.bf16.gmra.mrb[0].mxu0 %v553
        %v715 = vpop.f32.mrb[0].mxu0
        %v716 = vadd.f32 0.0, %v715
        %v717 = vpop.f32.mrb[0].mxu0
        %v718 = vpop.f32.mrb[0].mxu0
        %v719 = vadd.f32 0.0, %v718
        %v720 = vpop.f32.mrb[0].mxu0
        %721 = vmatprep.mubr.bf16.mxu0 %v556
        %722 = vmatmul.mubr.bf16.gmra.mrb[0].mxu0 %v555
        %v723 = vpop.f32.mrb[0].mxu0
        %v724 = vadd.f32 0.0, %v723
        %v725 = vpop.f32.mrb[0].mxu0
        %v726 = vpop.f32.mrb[0].mxu0
        %v727 = vadd.f32 0.0, %v726
        %v728 = vpop.f32.mrb[0].mxu0
        %729 = vmatprep.mubr.bf16.mxu0 %v558
        %730 = vmatmul.mubr.bf16.gmra.mrb[0].mxu0 %v557
        %v731 = vpop.f32.mrb[0].mxu0
        %v732 = vadd.f32 0.0, %v731
        %v733 = vpop.f32.mrb[0].mxu0
        %v734 = vpop.f32.mrb[0].mxu0
        %v735 = vadd.f32 0.0, %v734
        %v736 = vpop.f32.mrb[0].mxu0
        %737 = vmatprep.mubr.bf16.mxu0 %v560
        %738 = vmatmul.mubr.bf16.gmra.mrb[0].mxu0 %v559
        %v739 = vpop.f32.mrb[0].mxu0
        %v740 = vadd.f32 0.0, %v739
        %v741 = vpop.f32.mrb[0].mxu0
        %v742 = vpop.f32.mrb[0].mxu0
        %v743 = vadd.f32 0.0, %v742
        %v744 = vpop.f32.mrb[0].mxu0
        %745 = vmatprep.mubr.bf16.mxu0 %v562
        %746 = vmatmul.mubr.bf16.gmra.mrb[0].mxu0 %v561
        %v747 = vpop.f32.mrb[0].mxu0
        %v748 = vadd.f32 0.0, %v747
        %v749 = vpop.f32.mrb[0].mxu0
        %v750 = vpop.f32.mrb[0].mxu0
        %v751 = vadd.f32 0.0, %v750
        %v752 = vpop.f32.mrb[0].mxu0
        %753 = vmatprep.mubr.bf16.mxu0 %v564
        %754 = vmatmul.mubr.bf16.gmra.mrb[0].mxu0 %v563
        %v755 = vpop.f32.mrb[0].mxu0
        %v756 = vadd.f32 0.0, %v755
        %v757 = vpop.f32.mrb[0].mxu0
        %v758 = vpop.f32.mrb[0].mxu0
        %v759 = vadd.f32 0.0, %v758
        %v760 = vpop.f32.mrb[0].mxu0
        %761 = vmatprep.mubr.bf16.mxu0 %v566
        %762 = vmatmul.mubr.bf16.gmra.mrb[0].mxu0 %v565
        %v763 = vpop.f32.mrb[0].mxu0
        %v764 = vadd.f32 0.0, %v763
        %v765 = vpop.f32.mrb[0].mxu0
        %v766 = vpop.f32.mrb[0].mxu0
        %v767 = vadd.f32 0.0, %v766
        %v768 = vpop.f32.mrb[0].mxu0
        %769 = vmatprep.mubr.bf16.mxu0 %v568
        %770 = vmatmul.mubr.bf16.gmra.mrb[0].mxu0 %v567
        %v771 = vpop.f32.mrb[0].mxu0
        %v772 = vadd.f32 0.0, %v771
        %v773 = vpop.f32.mrb[0].mxu0
        %v774 = vpop.f32.mrb[0].mxu0
        %v775 = vadd.f32 0.0, %v774
        %v776 = vpop.f32.mrb[0].mxu0
        %777 = vdwg.mxu0
        %p778 = scmp.eq.s32.totalorder %s32, 0
        // Predicated region
        $region49: #{_forward_jit.6} parent=47 // pred_check
          %p779 = pneg %p778
        $region50: #{_forward_jit.6} parent=47 // pred_check_branch
          %781 = sbr.rel (%p779) target = $region52
        $region51: #{_forward_jit.6} parent=47 // pred_region
          %782 = vst [vmem:[%s403] sm:$0xff] %v716
          %783 = vst [vmem:[%s403 + $0x8] sm:$0xff] %v719
          %784 = vst [vmem:[%s403 + $0x10] sm:$0xff] %v724
          %785 = vst [vmem:[%s403 + $0x18] sm:$0xff] %v727
          %786 = vst [vmem:[%s403 + $0x20] sm:$0xff] %v732
          %787 = vst [vmem:[%s403 + $0x28] sm:$0xff] %v735
          %788 = vst [vmem:[%s403 + $0x30] sm:$0xff] %v740
          %789 = vst [vmem:[%s403 + $0x38] sm:$0xff] %v743
          %790 = vst [vmem:[%s403 + $0x40] sm:$0xff] %v748
          %791 = vst [vmem:[%s403 + $0x48] sm:$0xff] %v751
          %792 = vst [vmem:[%s403 + $0x50] sm:$0xff] %v756
          %793 = vst [vmem:[%s403 + $0x58] sm:$0xff] %v759
          %794 = vst [vmem:[%s403 + $0x60] sm:$0xff] %v764
          %795 = vst [vmem:[%s403 + $0x68] sm:$0xff] %v767
          %796 = vst [vmem:[%s403 + $0x70] sm:$0xff] %v772
          %797 = vst [vmem:[%s403 + $0x78] sm:$0xff] %v775
        $region52: #{_forward_jit.6} parent=47 // pred_fallthru
          _
        %p798 = scmp.gt.s32.totalorder %s32, 0
        // Predicated region
        $region53: #{_forward_jit.6} parent=47 // pred_check
          %p799 = pneg %p798
        $region54: #{_forward_jit.6} parent=47 // pred_check_branch
          %801 = sbr.rel (%p799) target = $region56
        $region55: #{_forward_jit.6} parent=47 // pred_region
          %v802 = vld [vmem:[%s403] sm:$0xff]
          %v803 = vld [vmem:[%s403 + $0x8] sm:$0xff]
          %v804 = vld [vmem:[%s403 + $0x10] sm:$0xff]
          %v805 = vld [vmem:[%s403 + $0x18] sm:$0xff]
          %v806 = vld [vmem:[%s403 + $0x20] sm:$0xff]
          %v807 = vld [vmem:[%s403 + $0x28] sm:$0xff]
          %v808 = vld [vmem:[%s403 + $0x30] sm:$0xff]
          %v809 = vld [vmem:[%s403 + $0x38] sm:$0xff]
          %v810 = vld [vmem:[%s403 + $0x40] sm:$0xff]
          %v811 = vld [vmem:[%s403 + $0x48] sm:$0xff]
          %v812 = vld [vmem:[%s403 + $0x50] sm:$0xff]
          %v813 = vld [vmem:[%s403 + $0x58] sm:$0xff]
          %v814 = vld [vmem:[%s403 + $0x60] sm:$0xff]
          %v815 = vld [vmem:[%s403 + $0x68] sm:$0xff]
          %v816 = vld [vmem:[%s403 + $0x70] sm:$0xff]
          %v817 = vld [vmem:[%s403 + $0x78] sm:$0xff]
          %v818 = vadd.f32 %v802, %v716
          %v819 = vadd.f32 %v803, %v719
          %v820 = vadd.f32 %v804, %v724
          %v821 = vadd.f32 %v805, %v727
          %v822 = vadd.f32 %v806, %v732
          %v823 = vadd.f32 %v807, %v735
          %v824 = vadd.f32 %v808, %v740
          %v825 = vadd.f32 %v809, %v743
          %v826 = vadd.f32 %v810, %v748
          %v827 = vadd.f32 %v811, %v751
          %v828 = vadd.f32 %v812, %v756
          %v829 = vadd.f32 %v813, %v759
          %v830 = vadd.f32 %v814, %v764
          %v831 = vadd.f32 %v815, %v767
          %v832 = vadd.f32 %v816, %v772
          %v833 = vadd.f32 %v817, %v775
          %834 = vst [vmem:[%s403] sm:$0xff] %v818
          %835 = vst [vmem:[%s403 + $0x8] sm:$0xff] %v819
          %836 = vst [vmem:[%s403 + $0x10] sm:$0xff] %v820
          %837 = vst [vmem:[%s403 + $0x18] sm:$0xff] %v821
          %838 = vst [vmem:[%s403 + $0x20] sm:$0xff] %v822
          %839 = vst [vmem:[%s403 + $0x28] sm:$0xff] %v823
          %840 = vst [vmem:[%s403 + $0x30] sm:$0xff] %v824
          %841 = vst [vmem:[%s403 + $0x38] sm:$0xff] %v825
          %842 = vst [vmem:[%s403 + $0x40] sm:$0xff] %v826
          %843 = vst [vmem:[%s403 + $0x48] sm:$0xff] %v827
          %844 = vst [vmem:[%s403 + $0x50] sm:$0xff] %v828
          %845 = vst [vmem:[%s403 + $0x58] sm:$0xff] %v829
          %846 = vst [vmem:[%s403 + $0x60] sm:$0xff] %v830
          %847 = vst [vmem:[%s403 + $0x68] sm:$0xff] %v831
          %848 = vst [vmem:[%s403 + $0x70] sm:$0xff] %v832
          %849 = vst [vmem:[%s403 + $0x78] sm:$0xff] %v833
        $region56: #{_forward_jit.6} parent=47 // pred_fallthru
          _
        // Predicated region
        $region57: #{_forward_jit.6} parent=47 // pred_check
          %p850 = pneg %p778
        $region58: #{_forward_jit.6} parent=47 // pred_check_branch
          %852 = sbr.rel (%p850) target = $region60
        $region59: #{_forward_jit.6} parent=47 // pred_region
          %v853 = vld [vmem:[%s403] sm:$0xff]
          %v854 = vld [vmem:[%s403 + $0x8] sm:$0xff]
          %v855 = vld [vmem:[%s403 + $0x10] sm:$0xff]
          %v856 = vld [vmem:[%s403 + $0x18] sm:$0xff]
          %v857 = vld [vmem:[%s403 + $0x20] sm:$0xff]
          %v858 = vld [vmem:[%s403 + $0x28] sm:$0xff]
          %v859 = vld [vmem:[%s403 + $0x30] sm:$0xff]
          %v860 = vld [vmem:[%s403 + $0x38] sm:$0xff]
          %v861 = vld [vmem:[%s403 + $0x40] sm:$0xff]
          %v862 = vld [vmem:[%s403 + $0x48] sm:$0xff]
          %v863 = vld [vmem:[%s403 + $0x50] sm:$0xff]
          %v864 = vld [vmem:[%s403 + $0x58] sm:$0xff]
          %v865 = vld [vmem:[%s403 + $0x60] sm:$0xff]
          %v866 = vld [vmem:[%s403 + $0x68] sm:$0xff]
          %v867 = vld [vmem:[%s403 + $0x70] sm:$0xff]
          %v868 = vld [vmem:[%s403 + $0x78] sm:$0xff]
          %v869 = vld [vmem:[%s440] sm:$0xff]
          %v870 = vld [vmem:[%s440 + $0x8] sm:$0xff]
          %v871 = vld [vmem:[%s440 + $0x10] sm:$0xff]
          %v872 = vld [vmem:[%s440 + $0x18] sm:$0xff]
          %v873 = vld [vmem:[%s440 + $0x20] sm:$0xff]
          %v874 = vld [vmem:[%s440 + $0x28] sm:$0xff]
          %v875 = vld [vmem:[%s440 + $0x30] sm:$0xff]
          %v876 = vld [vmem:[%s440 + $0x38] sm:$0xff]
          %v877 = vld [vmem:[%s440 + $0x40] sm:$0xff]
          %v878 = vld [vmem:[%s440 + $0x48] sm:$0xff]
          %v879 = vld [vmem:[%s440 + $0x50] sm:$0xff]
          %v880 = vld [vmem:[%s440 + $0x58] sm:$0xff]
          %v881 = vld [vmem:[%s440 + $0x60] sm:$0xff]
          %v882 = vld [vmem:[%s440 + $0x68] sm:$0xff]
          %v883 = vld [vmem:[%s440 + $0x70] sm:$0xff]
          %v884 = vld [vmem:[%s440 + $0x78] sm:$0xff]
          %v885 = vmul.f32 %v853, %v869
          %v886 = vmul.f32 %v854, %v870
          %v887 = vmul.f32 %v855, %v871
          %v888 = vmul.f32 %v856, %v872
          %v889 = vmul.f32 %v857, %v873
          %v890 = vmul.f32 %v858, %v874
          %v891 = vmul.f32 %v859, %v875
          %v892 = vmul.f32 %v860, %v876
          %v893 = vmul.f32 %v861, %v877
          %v894 = vmul.f32 %v862, %v878
          %v895 = vmul.f32 %v863, %v879
          %v896 = vmul.f32 %v864, %v880
          %v897 = vmul.f32 %v865, %v881
          %v898 = vmul.f32 %v866, %v882
          %v899 = vmul.f32 %v867, %v883
          %v900 = vmul.f32 %v868, %v884
          %v901 = vpack.c.bf16 %v854, %v853
          %v902 = vpack.c.bf16 %v856, %v855
          %v903 = vpack.c.bf16 %v858, %v857
          %v904 = vpack.c.bf16 %v860, %v859
          %v905 = vpack.c.bf16 %v862, %v861
          %v906 = vpack.c.bf16 %v864, %v863
          %v907 = vpack.c.bf16 %v866, %v865
          %v908 = vpack.c.bf16 %v868, %v867
          %v909 = vld [vmem:[%s3] sm:$0xf]
          %v910 = vld [vmem:[%s3 + $0x4] sm:$0xf]
          %v911 = vld [vmem:[%s3 + $0x8] sm:$0xf]
          %v912 = vld [vmem:[%s3 + $0xc] sm:$0xf]
          %v913 = vld [vmem:[%s3 + $0x10] sm:$0xf]
          %v914 = vld [vmem:[%s3 + $0x14] sm:$0xf]
          %v915 = vld [vmem:[%s3 + $0x18] sm:$0xf]
          %v916 = vld [vmem:[%s3 + $0x1c] sm:$0xf]
          %v917 = vld [vmem:[%s3 + $0x20] sm:$0xf]
          %v918 = vld [vmem:[%s3 + $0x24] sm:$0xf]
          %v919 = vld [vmem:[%s3 + $0x28] sm:$0xf]
          %v920 = vld [vmem:[%s3 + $0x2c] sm:$0xf]
          %v921 = vld [vmem:[%s3 + $0x30] sm:$0xf]
          %v922 = vld [vmem:[%s3 + $0x34] sm:$0xf]
          %v923 = vld [vmem:[%s3 + $0x38] sm:$0xf]
          %v924 = vld [vmem:[%s3 + $0x3c] sm:$0xf]
          %v925 = vpack.c.bf16 %v886, %v885
          %v926 = vpack.c.bf16 %v888, %v887
          %v927 = vpack.c.bf16 %v890, %v889
          %v928 = vpack.c.bf16 %v892, %v891
          %v929 = vpack.c.bf16 %v894, %v893
          %v930 = vpack.c.bf16 %v896, %v895
          %v931 = vpack.c.bf16 %v898, %v897
          %v932 = vpack.c.bf16 %v900, %v899
          %v933 = vld [vmem:[%s4] sm:$0xf]
          %v934 = vld [vmem:[%s4 + $0x4] sm:$0xf]
          %v935 = vld [vmem:[%s4 + $0x8] sm:$0xf]
          %v936 = vld [vmem:[%s4 + $0xc] sm:$0xf]
          %v937 = vld [vmem:[%s4 + $0x10] sm:$0xf]
          %v938 = vld [vmem:[%s4 + $0x14] sm:$0xf]
          %v939 = vld [vmem:[%s4 + $0x18] sm:$0xf]
          %v940 = vld [vmem:[%s4 + $0x1c] sm:$0xf]
          %v941 = vld [vmem:[%s4 + $0x20] sm:$0xf]
          %v942 = vld [vmem:[%s4 + $0x24] sm:$0xf]
          %v943 = vld [vmem:[%s4 + $0x28] sm:$0xf]
          %v944 = vld [vmem:[%s4 + $0x2c] sm:$0xf]
          %v945 = vld [vmem:[%s4 + $0x30] sm:$0xf]
          %v946 = vld [vmem:[%s4 + $0x34] sm:$0xf]
          %v947 = vld [vmem:[%s4 + $0x38] sm:$0xf]
          %v948 = vld [vmem:[%s4 + $0x3c] sm:$0xf]
          %v965 = vunpack.c.l.b16 %v933
          %v966 = vunpack.c.l.b16 %v934
          %v967 = vunpack.c.l.b16 %v935
          %v968 = vunpack.c.l.b16 %v936
          %v969 = vunpack.c.l.b16 %v937
          %v970 = vunpack.c.l.b16 %v938
          %v971 = vunpack.c.l.b16 %v939
          %v972 = vunpack.c.l.b16 %v940
          %v973 = vunpack.c.l.b16 %v941
          %v974 = vunpack.c.l.b16 %v942
          %v975 = vunpack.c.l.b16 %v943
          %v976 = vunpack.c.l.b16 %v944
          %v977 = vunpack.c.l.b16 %v945
          %v978 = vunpack.c.l.b16 %v946
          %v979 = vunpack.c.l.b16 %v947
          %v980 = vunpack.c.l.b16 %v948
          %v981 = vpack.c.b16 %v966, %v965
          %v982 = vpack.c.b16 %v968, %v967
          %v983 = vpack.c.b16 %v970, %v969
          %v984 = vpack.c.b16 %v972, %v971
          %v985 = vpack.c.b16 %v974, %v973
          %v986 = vpack.c.b16 %v976, %v975
          %v987 = vpack.c.b16 %v978, %v977
          %v988 = vpack.c.b16 %v980, %v979
          %997 = vmatprep.subr.bf16.mxu0 0
          %998 = vmatpush1.bf16.msra.mxu0 %v981
          %999 = vmatprep.subr.bf16.mxu0 0
          %1000 = vmatpush1.bf16.msra.mxu0 %v982
          %1001 = vmatprep.subr.bf16.mxu0 0
          %1002 = vmatpush1.bf16.msra.mxu0 %v983
          %1003 = vmatprep.subr.bf16.mxu0 0
          %1004 = vmatpush1.bf16.msra.mxu0 %v984
          %1005 = vmatprep.subr.bf16.mxu0 0
          %1006 = vmatpush1.bf16.msra.mxu0 %v985
          %1007 = vmatprep.subr.bf16.mxu0 0
          %1008 = vmatpush1.bf16.msra.mxu0 %v986
          %1009 = vmatprep.subr.bf16.mxu0 0
          %1010 = vmatpush1.bf16.msra.mxu0 %v987
          %1011 = vmatprep.subr.bf16.mxu0 0
          %1012 = vmatpush1.bf16.msra.mxu0 %v988
          %1013 = vmatprep.subr.bf16.mxu0 0
          %1014 = vmatpush1.bf16.msra.mxu0 0
          %1015 = vmatprep.subr.bf16.mxu0 0
          %1016 = vmatpush1.bf16.msra.mxu0 0
          %1017 = vmatprep.subr.bf16.mxu0 0
          %1018 = vmatpush1.bf16.msra.mxu0 0
          %1019 = vmatprep.subr.bf16.mxu0 0
          %1020 = vmatpush1.bf16.msra.mxu0 0
          %1021 = vmatprep.subr.bf16.mxu0 0
          %1022 = vmatpush1.bf16.msra.mxu0 0
          %1023 = vmatprep.subr.bf16.mxu0 0
          %1024 = vmatpush1.bf16.msra.mxu0 0
          %1025 = vmatprep.subr.bf16.mxu0 0
          %1026 = vmatpush1.bf16.msra.mxu0 0
          %1027 = vmatprep.subr.bf16.mxu0 0
          %1028 = vmatpush1.bf16.msra.mxu0 0
          %1029 = vmatprep.mubr.bf16.mxu0 0
          %1030 = vmatmul.mubr.bf16.gmra.mrb[0].mxu0 %v925
          %v1031 = vpop.f32.mrb[0].mxu0
          %v1032 = vadd.f32 0.0, %v1031
          %v1033 = vpop.f32.mrb[0].mxu0
          %v1034 = vpop.f32.mrb[0].mxu0
          %v1035 = vadd.f32 0.0, %v1034
          %v1036 = vpop.f32.mrb[0].mxu0
          %1037 = vmatprep.mubr.bf16.mxu0 0
          %1038 = vmatmul.mubr.bf16.gmra.mrb[0].mxu0 %v926
          %v1039 = vpop.f32.mrb[0].mxu0
          %v1040 = vadd.f32 0.0, %v1039
          %v1041 = vpop.f32.mrb[0].mxu0
          %v1042 = vpop.f32.mrb[0].mxu0
          %v1043 = vadd.f32 0.0, %v1042
          %v1044 = vpop.f32.mrb[0].mxu0
          %1045 = vmatprep.mubr.bf16.mxu0 0
          %1046 = vmatmul.mubr.bf16.gmra.mrb[0].mxu0 %v927
          %v1047 = vpop.f32.mrb[0].mxu0
          %v1048 = vadd.f32 0.0, %v1047
          %v1049 = vpop.f32.mrb[0].mxu0
          %v1050 = vpop.f32.mrb[0].mxu0
          %v1051 = vadd.f32 0.0, %v1050
          %v1052 = vpop.f32.mrb[0].mxu0
          %1053 = vmatprep.mubr.bf16.mxu0 0
          %1054 = vmatmul.mubr.bf16.gmra.mrb[0].mxu0 %v928
          %v1055 = vpop.f32.mrb[0].mxu0
          %v1056 = vadd.f32 0.0, %v1055
          %v1057 = vpop.f32.mrb[0].mxu0
          %v1058 = vpop.f32.mrb[0].mxu0
          %v1059 = vadd.f32 0.0, %v1058
          %v1060 = vpop.f32.mrb[0].mxu0
          %1061 = vmatprep.mubr.bf16.mxu0 0
          %1062 = vmatmul.mubr.bf16.gmra.mrb[0].mxu0 %v929
          %v1063 = vpop.f32.mrb[0].mxu0
          %v1064 = vadd.f32 0.0, %v1063
          %v1065 = vpop.f32.mrb[0].mxu0
          %v1066 = vpop.f32.mrb[0].mxu0
          %v1067 = vadd.f32 0.0, %v1066
          %v1068 = vpop.f32.mrb[0].mxu0
          %1069 = vmatprep.mubr.bf16.mxu0 0
          %1070 = vmatmul.mubr.bf16.gmra.mrb[0].mxu0 %v930
          %v1071 = vpop.f32.mrb[0].mxu0
          %v1072 = vadd.f32 0.0, %v1071
          %v1073 = vpop.f32.mrb[0].mxu0
          %v1074 = vpop.f32.mrb[0].mxu0
          %v1075 = vadd.f32 0.0, %v1074
          %v1076 = vpop.f32.mrb[0].mxu0
          %1077 = vmatprep.mubr.bf16.mxu0 0
          %1078 = vmatmul.mubr.bf16.gmra.mrb[0].mxu0 %v931
          %v1079 = vpop.f32.mrb[0].mxu0
          %v1080 = vadd.f32 0.0, %v1079
          %v1081 = vpop.f32.mrb[0].mxu0
          %v1082 = vpop.f32.mrb[0].mxu0
          %v1083 = vadd.f32 0.0, %v1082
          %v1084 = vpop.f32.mrb[0].mxu0
          %1085 = vmatprep.mubr.bf16.mxu0 0
          %1086 = vmatmul.mubr.bf16.gmra.mrb[0].mxu0 %v932
          %v1087 = vpop.f32.mrb[0].mxu0
          %v1088 = vadd.f32 0.0, %v1087
          %v1089 = vpop.f32.mrb[0].mxu0
          %v1090 = vpop.f32.mrb[0].mxu0
          %v1091 = vadd.f32 0.0, %v1090
          %v1092 = vpop.f32.mrb[0].mxu0
          %1093 = vdwg.mxu0
          %v1110 = vunpack.c.l.b16 %v909
          %v1111 = vunpack.c.l.b16 %v910
          %v1112 = vunpack.c.l.b16 %v911
          %v1113 = vunpack.c.l.b16 %v912
          %v1114 = vunpack.c.l.b16 %v913
          %v1115 = vunpack.c.l.b16 %v914
          %v1116 = vunpack.c.l.b16 %v915
          %v1117 = vunpack.c.l.b16 %v916
          %v1118 = vunpack.c.l.b16 %v917
          %v1119 = vunpack.c.l.b16 %v918
          %v1120 = vunpack.c.l.b16 %v919
          %v1121 = vunpack.c.l.b16 %v920
          %v1122 = vunpack.c.l.b16 %v921
          %v1123 = vunpack.c.l.b16 %v922
          %v1124 = vunpack.c.l.b16 %v923
          %v1125 = vunpack.c.l.b16 %v924
          %v1126 = vpack.c.b16 %v1111, %v1110
          %v1127 = vpack.c.b16 %v1113, %v1112
          %v1128 = vpack.c.b16 %v1115, %v1114
          %v1129 = vpack.c.b16 %v1117, %v1116
          %v1130 = vpack.c.b16 %v1119, %v1118
          %v1131 = vpack.c.b16 %v1121, %v1120
          %v1132 = vpack.c.b16 %v1123, %v1122
          %v1133 = vpack.c.b16 %v1125, %v1124
          %1142 = vmatprep.subr.bf16.mxu0 0
          %1143 = vmatpush1.bf16.msra.mxu0 %v1126
          %1144 = vmatprep.subr.bf16.mxu0 0
          %1145 = vmatpush1.bf16.msra.mxu0 %v1127
          %1146 = vmatprep.subr.bf16.mxu0 0
          %1147 = vmatpush1.bf16.msra.mxu0 %v1128
          %1148 = vmatprep.subr.bf16.mxu0 0
          %1149 = vmatpush1.bf16.msra.mxu0 %v1129
          %1150 = vmatprep.subr.bf16.mxu0 0
          %1151 = vmatpush1.bf16.msra.mxu0 %v1130
          %1152 = vmatprep.subr.bf16.mxu0 0
          %1153 = vmatpush1.bf16.msra.mxu0 %v1131
          %1154 = vmatprep.subr.bf16.mxu0 0
          %1155 = vmatpush1.bf16.msra.mxu0 %v1132
          %1156 = vmatprep.subr.bf16.mxu0 0
          %1157 = vmatpush1.bf16.msra.mxu0 %v1133
          %1158 = vmatprep.subr.bf16.mxu0 0
          %1159 = vmatpush1.bf16.msra.mxu0 0
          %1160 = vmatprep.subr.bf16.mxu0 0
          %1161 = vmatpush1.bf16.msra.mxu0 0
          %1162 = vmatprep.subr.bf16.mxu0 0
          %1163 = vmatpush1.bf16.msra.mxu0 0
          %1164 = vmatprep.subr.bf16.mxu0 0
          %1165 = vmatpush1.bf16.msra.mxu0 0
          %1166 = vmatprep.subr.bf16.mxu0 0
          %1167 = vmatpush1.bf16.msra.mxu0 0
          %1168 = vmatprep.subr.bf16.mxu0 0
          %1169 = vmatpush1.bf16.msra.mxu0 0
          %1170 = vmatprep.subr.bf16.mxu0 0
          %1171 = vmatpush1.bf16.msra.mxu0 0
          %1172 = vmatprep.subr.bf16.mxu0 0
          %1173 = vmatpush1.bf16.msra.mxu0 0
          %1174 = vmatprep.mubr.bf16.mxu0 0
          %1175 = vmatmul.mubr.bf16.gmra.mrb[0].mxu0 %v901
          %v1176 = vpop.f32.mrb[0].mxu0
          %v1177 = vadd.f32 %v1032, %v1176
          %v1178 = vpop.f32.mrb[0].mxu0
          %v1179 = vpop.f32.mrb[0].mxu0
          %v1180 = vadd.f32 %v1035, %v1179
          %v1181 = vpop.f32.mrb[0].mxu0
          %1182 = vmatprep.mubr.bf16.mxu0 0
          %1183 = vmatmul.mubr.bf16.gmra.mrb[0].mxu0 %v902
          %v1184 = vpop.f32.mrb[0].mxu0
          %v1185 = vadd.f32 %v1040, %v1184
          %v1186 = vpop.f32.mrb[0].mxu0
          %v1187 = vpop.f32.mrb[0].mxu0
          %v1188 = vadd.f32 %v1043, %v1187
          %v1189 = vpop.f32.mrb[0].mxu0
          %1190 = vmatprep.mubr.bf16.mxu0 0
          %1191 = vmatmul.mubr.bf16.gmra.mrb[0].mxu0 %v903
          %v1192 = vpop.f32.mrb[0].mxu0
          %v1193 = vadd.f32 %v1048, %v1192
          %v1194 = vpop.f32.mrb[0].mxu0
          %v1195 = vpop.f32.mrb[0].mxu0
          %v1196 = vadd.f32 %v1051, %v1195
          %v1197 = vpop.f32.mrb[0].mxu0
          %1198 = vmatprep.mubr.bf16.mxu0 0
          %1199 = vmatmul.mubr.bf16.gmra.mrb[0].mxu0 %v904
          %v1200 = vpop.f32.mrb[0].mxu0
          %v1201 = vadd.f32 %v1056, %v1200
          %v1202 = vpop.f32.mrb[0].mxu0
          %v1203 = vpop.f32.mrb[0].mxu0
          %v1204 = vadd.f32 %v1059, %v1203
          %v1205 = vpop.f32.mrb[0].mxu0
          %1206 = vmatprep.mubr.bf16.mxu0 0
          %1207 = vmatmul.mubr.bf16.gmra.mrb[0].mxu0 %v905
          %v1208 = vpop.f32.mrb[0].mxu0
          %v1209 = vadd.f32 %v1064, %v1208
          %v1210 = vpop.f32.mrb[0].mxu0
          %v1211 = vpop.f32.mrb[0].mxu0
          %v1212 = vadd.f32 %v1067, %v1211
          %v1213 = vpop.f32.mrb[0].mxu0
          %1214 = vmatprep.mubr.bf16.mxu0 0
          %1215 = vmatmul.mubr.bf16.gmra.mrb[0].mxu0 %v906
          %v1216 = vpop.f32.mrb[0].mxu0
          %v1217 = vadd.f32 %v1072, %v1216
          %v1218 = vpop.f32.mrb[0].mxu0
          %v1219 = vpop.f32.mrb[0].mxu0
          %v1220 = vadd.f32 %v1075, %v1219
          %v1221 = vpop.f32.mrb[0].mxu0
          %1222 = vmatprep.mubr.bf16.mxu0 0
          %1223 = vmatmul.mubr.bf16.gmra.mrb[0].mxu0 %v907
          %v1224 = vpop.f32.mrb[0].mxu0
          %v1225 = vadd.f32 %v1080, %v1224
          %v1226 = vpop.f32.mrb[0].mxu0
          %v1227 = vpop.f32.mrb[0].mxu0
          %v1228 = vadd.f32 %v1083, %v1227
          %v1229 = vpop.f32.mrb[0].mxu0
          %1230 = vmatprep.mubr.bf16.mxu0 0
          %1231 = vmatmul.mubr.bf16.gmra.mrb[0].mxu0 %v908
          %v1232 = vpop.f32.mrb[0].mxu0
          %v1233 = vadd.f32 %v1088, %v1232
          %v1234 = vpop.f32.mrb[0].mxu0
          %v1235 = vpop.f32.mrb[0].mxu0
          %v1236 = vadd.f32 %v1091, %v1235
          %v1237 = vpop.f32.mrb[0].mxu0
          %1238 = vdwg.mxu0
          %v1239 = vld [vmem:[%s5] sm:$0x1]
          %v1241 = vlaneseq
          %v1242 = vshrl.u32 %v1241, 7
          %v1243 = vsub.s32 0, %v1242
          %v1244 = vrot.slane %v1239, %v1243
          %v1246 = vadd.f32 %v1177, %v1244
          %v1247 = vadd.f32 %v1180, %v1244
          %v1248 = vadd.f32 %v1185, %v1244
          %v1249 = vadd.f32 %v1188, %v1244
          %v1250 = vadd.f32 %v1193, %v1244
          %v1251 = vadd.f32 %v1196, %v1244
          %v1252 = vadd.f32 %v1201, %v1244
          %v1253 = vadd.f32 %v1204, %v1244
          %v1254 = vadd.f32 %v1209, %v1244
          %v1255 = vadd.f32 %v1212, %v1244
          %v1256 = vadd.f32 %v1217, %v1244
          %v1257 = vadd.f32 %v1220, %v1244
          %v1258 = vadd.f32 %v1225, %v1244
          %v1259 = vadd.f32 %v1228, %v1244
          %v1260 = vadd.f32 %v1233, %v1244
          %v1261 = vadd.f32 %v1236, %v1244
          %v1262 = vadd.f32 %v853, %v885
          %v1263 = vadd.f32 %v854, %v886
          %v1264 = vadd.f32 %v855, %v887
          %v1265 = vadd.f32 %v856, %v888
          %v1266 = vadd.f32 %v857, %v889
          %v1267 = vadd.f32 %v858, %v890
          %v1268 = vadd.f32 %v859, %v891
          %v1269 = vadd.f32 %v860, %v892
          %v1270 = vadd.f32 %v861, %v893
          %v1271 = vadd.f32 %v862, %v894
          %v1272 = vadd.f32 %v863, %v895
          %v1273 = vadd.f32 %v864, %v896
          %v1274 = vadd.f32 %v865, %v897
          %v1275 = vadd.f32 %v866, %v898
          %v1276 = vadd.f32 %v867, %v899
          %v1277 = vadd.f32 %v868, %v900
          %1278 = vst [vmem:[%s403] sm:$0xff] %v1262
          %1279 = vst [vmem:[%s403 + $0x8] sm:$0xff] %v1263
          %1280 = vst [vmem:[%s403 + $0x10] sm:$0xff] %v1264
          %1281 = vst [vmem:[%s403 + $0x18] sm:$0xff] %v1265
          %1282 = vst [vmem:[%s403 + $0x20] sm:$0xff] %v1266
          %1283 = vst [vmem:[%s403 + $0x28] sm:$0xff] %v1267
          %1284 = vst [vmem:[%s403 + $0x30] sm:$0xff] %v1268
          %1285 = vst [vmem:[%s403 + $0x38] sm:$0xff] %v1269
          %1286 = vst [vmem:[%s403 + $0x40] sm:$0xff] %v1270
          %1287 = vst [vmem:[%s403 + $0x48] sm:$0xff] %v1271
          %1288 = vst [vmem:[%s403 + $0x50] sm:$0xff] %v1272
          %1289 = vst [vmem:[%s403 + $0x58] sm:$0xff] %v1273
          %1290 = vst [vmem:[%s403 + $0x60] sm:$0xff] %v1274
          %1291 = vst [vmem:[%s403 + $0x68] sm:$0xff] %v1275
          %1292 = vst [vmem:[%s403 + $0x70] sm:$0xff] %v1276
          %1293 = vst [vmem:[%s403 + $0x78] sm:$0xff] %v1277
          %v1294 = vpack.c.bf16 %v1263, %v1262
          %v1295 = vpack.c.bf16 %v1265, %v1264
          %v1296 = vpack.c.bf16 %v1267, %v1266
          %v1297 = vpack.c.bf16 %v1269, %v1268
          %v1298 = vpack.c.bf16 %v1271, %v1270
          %v1299 = vpack.c.bf16 %v1273, %v1272
          %v1300 = vpack.c.bf16 %v1275, %v1274
          %v1301 = vpack.c.bf16 %v1277, %v1276
          %v1310 = vunpack.c.l.b16 %v1294
          %v1311 = vunpack.c.h.b16 %v1294
          %v1312 = vunpack.c.l.b16 %v1295
          %v1313 = vunpack.c.h.b16 %v1295
          %v1314 = vunpack.c.l.b16 %v1296
          %v1315 = vunpack.c.h.b16 %v1296
          %v1316 = vunpack.c.l.b16 %v1297
          %v1317 = vunpack.c.h.b16 %v1297
          %v1318 = vunpack.c.l.b16 %v1298
          %v1319 = vunpack.c.h.b16 %v1298
          %v1320 = vunpack.c.l.b16 %v1299
          %v1321 = vunpack.c.h.b16 %v1299
          %v1322 = vunpack.c.l.b16 %v1300
          %v1323 = vunpack.c.h.b16 %v1300
          %v1324 = vunpack.c.l.b16 %v1301
          %v1325 = vunpack.c.h.b16 %v1301
          %v1326 = vpack.c.b16 %v1310, %v1310
          %v1327 = vpack.c.b16 %v1311, %v1311
          %v1328 = vpack.c.b16 %v1312, %v1312
          %v1329 = vpack.c.b16 %v1313, %v1313
          %v1330 = vpack.c.b16 %v1314, %v1314
          %v1331 = vpack.c.b16 %v1315, %v1315
          %v1332 = vpack.c.b16 %v1316, %v1316
          %v1333 = vpack.c.b16 %v1317, %v1317
          %v1334 = vpack.c.b16 %v1318, %v1318
          %v1335 = vpack.c.b16 %v1319, %v1319
          %v1336 = vpack.c.b16 %v1320, %v1320
          %v1337 = vpack.c.b16 %v1321, %v1321
          %v1338 = vpack.c.b16 %v1322, %v1322
          %v1339 = vpack.c.b16 %v1323, %v1323
          %v1340 = vpack.c.b16 %v1324, %v1324
          %v1341 = vpack.c.b16 %v1325, %v1325
          %1358 = vst [vmem:[%s410] sm:$0xf] %v1326
          %1359 = vst [vmem:[%s410 + $0x4] sm:$0xf] %v1327
          %1360 = vst [vmem:[%s410 + $0x8] sm:$0xf] %v1328
          %1361 = vst [vmem:[%s410 + $0xc] sm:$0xf] %v1329
          %1362 = vst [vmem:[%s410 + $0x10] sm:$0xf] %v1330
          %1363 = vst [vmem:[%s410 + $0x14] sm:$0xf] %v1331
          %1364 = vst [vmem:[%s410 + $0x18] sm:$0xf] %v1332
          %1365 = vst [vmem:[%s410 + $0x1c] sm:$0xf] %v1333
          %1366 = vst [vmem:[%s410 + $0x20] sm:$0xf] %v1334
          %1367 = vst [vmem:[%s410 + $0x24] sm:$0xf] %v1335
          %1368 = vst [vmem:[%s410 + $0x28] sm:$0xf] %v1336
          %1369 = vst [vmem:[%s410 + $0x2c] sm:$0xf] %v1337
          %1370 = vst [vmem:[%s410 + $0x30] sm:$0xf] %v1338
          %1371 = vst [vmem:[%s410 + $0x34] sm:$0xf] %v1339
          %1372 = vst [vmem:[%s410 + $0x38] sm:$0xf] %v1340
          %1373 = vst [vmem:[%s410 + $0x3c] sm:$0xf] %v1341
          %v1374 = vld [vmem:[%s446] sm:$0xff]
          %v1375 = vld [vmem:[%s446 + $0x8] sm:$0xff]
          %v1376 = vld [vmem:[%s446 + $0x10] sm:$0xff]
          %v1377 = vld [vmem:[%s446 + $0x18] sm:$0xff]
          %v1378 = vld [vmem:[%s446 + $0x20] sm:$0xff]
          %v1379 = vld [vmem:[%s446 + $0x28] sm:$0xff]
          %v1380 = vld [vmem:[%s446 + $0x30] sm:$0xff]
          %v1381 = vld [vmem:[%s446 + $0x38] sm:$0xff]
          %v1382 = vld [vmem:[%s446 + $0x40] sm:$0xff]
          %v1383 = vld [vmem:[%s446 + $0x48] sm:$0xff]
          %v1384 = vld [vmem:[%s446 + $0x50] sm:$0xff]
          %v1385 = vld [vmem:[%s446 + $0x58] sm:$0xff]
          %v1386 = vld [vmem:[%s446 + $0x60] sm:$0xff]
          %v1387 = vld [vmem:[%s446 + $0x68] sm:$0xff]
          %v1388 = vld [vmem:[%s446 + $0x70] sm:$0xff]
          %v1389 = vld [vmem:[%s446 + $0x78] sm:$0xff]
          %v1390 = vadd.f32 %v1374, %v1246
          %v1391 = vadd.f32 %v1375, %v1247
          %v1392 = vadd.f32 %v1376, %v1248
          %v1393 = vadd.f32 %v1377, %v1249
          %v1394 = vadd.f32 %v1378, %v1250
          %v1395 = vadd.f32 %v1379, %v1251
          %v1396 = vadd.f32 %v1380, %v1252
          %v1397 = vadd.f32 %v1381, %v1253
          %v1398 = vadd.f32 %v1382, %v1254
          %v1399 = vadd.f32 %v1383, %v1255
          %v1400 = vadd.f32 %v1384, %v1256
          %v1401 = vadd.f32 %v1385, %v1257
          %v1402 = vadd.f32 %v1386, %v1258
          %v1403 = vadd.f32 %v1387, %v1259
          %v1404 = vadd.f32 %v1388, %v1260
          %v1405 = vadd.f32 %v1389, %v1261
          %1406 = vst [vmem:[%s454] sm:$0xff] %v1390
          %1407 = vst [vmem:[%s454 + $0x8] sm:$0xff] %v1391
          %1408 = vst [vmem:[%s454 + $0x10] sm:$0xff] %v1392
          %1409 = vst [vmem:[%s454 + $0x18] sm:$0xff] %v1393
          %1410 = vst [vmem:[%s454 + $0x20] sm:$0xff] %v1394
          %1411 = vst [vmem:[%s454 + $0x28] sm:$0xff] %v1395
          %1412 = vst [vmem:[%s454 + $0x30] sm:$0xff] %v1396
          %1413 = vst [vmem:[%s454 + $0x38] sm:$0xff] %v1397
          %1414 = vst [vmem:[%s454 + $0x40] sm:$0xff] %v1398
          %1415 = vst [vmem:[%s454 + $0x48] sm:$0xff] %v1399
          %1416 = vst [vmem:[%s454 + $0x50] sm:$0xff] %v1400
          %1417 = vst [vmem:[%s454 + $0x58] sm:$0xff] %v1401
          %1418 = vst [vmem:[%s454 + $0x60] sm:$0xff] %v1402
          %1419 = vst [vmem:[%s454 + $0x68] sm:$0xff] %v1403
          %1420 = vst [vmem:[%s454 + $0x70] sm:$0xff] %v1404
          %1421 = vst [vmem:[%s454 + $0x78] sm:$0xff] %v1405
        $region60: #{_forward_jit.6} parent=47 // pred_fallthru
          _
        %s1422 = sand.u32 %s216, 1
        %s1423 = scalar_lea.sflag [#allocation3], %s1422
        %s1424 = sand.u32 %s216, 1
        %s1425 = smul.addr %s1424, 128
        %s1426 = scalar_lea.vmem [#allocation2], %s1425
        %s1427 = sand.u32 %s242, 1
        %s1428 = scalar_lea.sflag [#allocation5], %s1427
        %s1429 = sand.u32 %s242, 1
        %s1430 = smul.addr %s1429, 64
        %s1431 = scalar_lea.vmem [#allocation4], %s1430
        %s1432 = smul.u32 16, %s31
        %p1433 = scmp.lt.s32.totalorder %s1432, 47
        %s1434 = scalar_select %p1433, %s1432, 47
        %s1435 = smul.addr %s1434, 8
        %s1436 = scalar_lea.vmem %s9, %s1435
        // Predicated region
        $region61: #{_forward_jit.6} parent=47 // pred_check
          %p1437 = pneg %p226
        $region62: #{_forward_jit.6} parent=47 // pred_check_branch
          %1439 = sbr.rel (%p1437) target = $region64
        $region63: #{_forward_jit.6} parent=47 // pred_region
          %s1440 = smul.u32 16, %s31
          %s1442 = ssub.s32 2048, 2048
          %1443 = vsyncadd %s1423, %s1442
          %s1444 = smul.addr %s1440, 128
          %s1445 = scalar_lea.hbm %s7, %s1444
          %s1446 = sshll.u32 %s1426, 4
          %s1447 = int_to_ptr.vmem [resolvable:$true] %s1446
          %1452 = dma.vmem_to_hbm [thread:$0]  %s1447, 2048, %s1445, %s1423, 128, 128, 8
        $region64: #{_forward_jit.6} parent=47 // pred_fallthru
          _
        // Predicated region
        $region65: #{_forward_jit.6} parent=47 // pred_check
          %p1453 = pneg %p252
        $region66: #{_forward_jit.6} parent=47 // pred_check_branch
          %1455 = sbr.rel (%p1453) target = $region68
        $region67: #{_forward_jit.6} parent=47 // pred_region
          %s1456 = smul.u32 16, %s31
          %s1458 = ssub.s32 1024, 1024
          %1459 = vsyncadd %s1428, %s1458
          %s1460 = smul.addr %s1456, 64
          %s1461 = scalar_lea.hbm %s8, %s1460
          %s1462 = sshll.u32 %s1431, 4
          %s1463 = int_to_ptr.vmem [resolvable:$true] %s1462
          %1468 = dma.vmem_to_hbm [thread:$0]  %s1463, 1024, %s1461, %s1428, 64, 64, 4
        $region68: #{_forward_jit.6} parent=47 // pred_fallthru
          _
        // Predicated region
        $region69: #{_forward_jit.6} parent=47 // pred_check
          %p1469 = pneg %p278
        $region70: #{_forward_jit.6} parent=47 // pred_check_branch
          %1471 = sbr.rel (%p1469) target = $region72
        $region71: #{_forward_jit.6} parent=47 // pred_region
          %s1472 = smul.u32 16, %s31
        $region72: #{_forward_jit.6} parent=47 // pred_fallthru
          _
      $region48: #{_forward_jit.6} parent=5 // pred_fallthru
        _
      %p1473 = scmp.le.s32.totalorder 2, %s22
      // Predicated region
      $region73: #{_forward_jit.6} parent=5 // pred_check
        %p1474 = pneg %p1473
      $region74: #{_forward_jit.6} parent=5 // pred_check_branch
        %1476 = sbr.rel (%p1474) target = $region76
      $region75: #{_forward_jit.6} parent=5 // pred_region
        %s1477 = ssub.s32 %s22, 2
        // Predicated region
        $region77: #{_forward_jit.6} parent=75 // pred_check
          %p1478 = pneg %p232
        $region78: #{_forward_jit.6} parent=75 // pred_check_branch
          %1480 = sbr.rel (%p1478) target = $region80
        $region79: #{_forward_jit.6} parent=75 // pred_region
          %s1481 = sand.u32 %s217, 1
          %s1482 = scalar_lea.sflag [#allocation3], %s1481
          %s1483 = sand.u32 %s217, 1
          %s1484 = smul.addr %s1483, 128
          %s1485 = scalar_lea.vmem [#allocation2], %s1484
          %1486 = dma.done %s1482, 2048
        $region80: #{_forward_jit.6} parent=75 // pred_fallthru
          _
        // Predicated region
        $region81: #{_forward_jit.6} parent=75 // pred_check
          %p1487 = pneg %p258
        $region82: #{_forward_jit.6} parent=75 // pred_check_branch
          %1489 = sbr.rel (%p1487) target = $region84
        $region83: #{_forward_jit.6} parent=75 // pred_region
          %s1490 = sand.u32 %s243, 1
          %s1491 = scalar_lea.sflag [#allocation5], %s1490
          %s1492 = sand.u32 %s243, 1
          %s1493 = smul.addr %s1492, 64
          %s1494 = scalar_lea.vmem [#allocation4], %s1493
          %1495 = dma.done %s1491, 1024
        $region84: #{_forward_jit.6} parent=75 // pred_fallthru
          _
        // Predicated region
        $region85: #{_forward_jit.6} parent=75 // pred_check
          %p1496 = pneg %p284
        $region86: #{_forward_jit.6} parent=75 // pred_check_branch
          %1498 = sbr.rel (%p1496) target = $region88
        $region87: #{_forward_jit.6} parent=75 // pred_region
          %s1499 = smul.u32 16, %s33
          %p1500 = scmp.lt.s32.totalorder %s1499, 47
          %s1501 = scalar_select %p1500, %s1499, 47
          %s1502 = smul.addr %s1501, 8
          %s1503 = scalar_lea.vmem %s9, %s1502
        $region88: #{_forward_jit.6} parent=75 // pred_fallthru
          _
      $region76: #{_forward_jit.6} parent=5 // pred_fallthru
        _
    $region6: #{_forward_jit.6} parent=1 // loop_footer
      %s26 = sadd.s32 1, %s22
    $region7: #{_forward_jit.6} parent=1 // loop_footer_branch
      %21 = sbr.rel target = $region3
    $region8: #{_forward_jit.6} parent=1 // loop_exit
      _
    %1504 = vsyncpa [#allocation3], 1
    %s1505 = scalar_lea.sflag [#allocation3], 1
    %1506 = vsyncpa %s1505, 1
    %1507 = vsyncpa [#allocation5], 1
    %s1508 = scalar_lea.sflag [#allocation5], 1
    %1509 = vsyncpa %s1508, 1

</llo_original>
